<compile_context>
chip_gen: v7x
topology: tpu7x:2x2x1
jax: 0.10.0
libtpu: 0.0.40
codegen_flags: <defaults>
</compile_context>

<pallas_src>
import jax
import jax.numpy as jnp
import numpy as np
from jax.experimental import pallas as pl
from jax.experimental.pallas import tpu as pltpu


# ---------------------------------------------------------------------------
# The single fused LeNet kernel (one image per grid step).
#
# Activation layout inside the kernel is always 2-D  [rows, width*channels]
# (rows on sublanes, width*channels dense on lanes):
#   input      x : [32, 96]    (96 = 32*3,  col = 3*w + c)
#   conv1 out    : [28, 168]   (168 = 28*6, col = 6*w + c)
#   pool1  (p1)  : [14, 162]   valid data at col = 12*w + c   (c < 6)
#   conv2 out    : [10, 160]   (col = 16*w + c)
#   pool2  (p2)  : [ 5, 144]   valid data at col = 32*w + c   (c < 16)
# The "holes" left by pooling (odd column groups) are never compacted; the
# next layer's pre-expanded weight simply has zero rows there.
# ---------------------------------------------------------------------------
def _lenet_kernel(x_ref, w1_ref, b1_ref, w2_ref, b2_ref,
                  wf1_ref, bf1_ref, wf2_ref, bf2_ref, wf3_ref, bf3_ref,
                  o_ref, p1_ref, p2_ref):
    f32 = jnp.float32
    bf16 = jnp.bfloat16

    x = x_ref[0]                                                  # [32, 96] f32

    # ---- conv1 (5x5, 3->6) + folded BN + ReLU: 25 shifted matmuls ----------
    acc1 = jnp.zeros((28, 168), f32)
    for di in range(5):
        for dj in range(5):
            t = di * 5 + dj
            slab = x[di:di + 28, 3 * dj:3 * dj + 84].astype(bf16)   # [28, 84]
            acc1 = acc1 + jnp.dot(slab, w1_ref[t],
                                  preferred_element_type=f32)       # [28,168]
    acc1 = jnp.maximum(acc1 + b1_ref[...], 0.0)                      # f32 epilogue

    # ---- fused 2x2/2 maxpool:  p1[i, 12*jj + c] = pool1(i, jj, c) ----------
    for i in range(14):
        r = jnp.maximum(acc1[2 * i:2 * i + 1, :], acc1[2 * i + 1:2 * i + 2, :])
        p1_ref[i:i + 1, :] = jnp.maximum(r[:, :162], r[:, 6:])

    # ---- conv2 (5x5, 6->16) + folded BN + ReLU -----------------------------
    acc2 = jnp.zeros((10, 160), f32)
    for di in range(5):
        for dj in range(5):
            t = di * 5 + dj
            slab = p1_ref[di:di + 10, 12 * dj:12 * dj + 114].astype(bf16)
            acc2 = acc2 + jnp.dot(slab, w2_ref[t],
                                  preferred_element_type=f32)       # [10,160]
    acc2 = jnp.maximum(acc2 + b2_ref[...], 0.0)

    # ---- fused 2x2/2 maxpool:  p2[i, 32*jj + c] = pool2(i, jj, c) ----------
    for i in range(5):
        r = jnp.maximum(acc2[2 * i:2 * i + 1, :], acc2[2 * i + 1:2 * i + 2, :])
        p2_ref[i:i + 1, :] = jnp.maximum(r[:, :144], r[:, 16:])

    # ---- classifier: fc1+BN+ReLU, fc2+BN+ReLU, Dropout(id), fc3 ------------
    h = jnp.zeros((1, 120), f32)
    for i in range(5):                      # sum over the 5 pooled rows
        h = h + jnp.dot(p2_ref[i:i + 1, :].astype(bf16), wf1_ref[i],
                        preferred_element_type=f32)
    h = jnp.maximum(h + bf1_ref[...], 0.0).astype(bf16)              # [1,120]
    h = jnp.maximum(jnp.dot(h, wf2_ref[...], preferred_element_type=f32)
                    + bf2_ref[...], 0.0).astype(bf16)                # [1, 84]
    # TODO(synk): Dropout(p=0.5) is identity at inference; training-mode RNG
    # mask is intentionally not reproduced.
    logits = jnp.dot(h, wf3_ref[...], preferred_element_type=f32) + bf3_ref[...]
    o_ref[0] = logits.astype(o_ref.dtype)                            # [1, nc]


def _resident(arr):
    """Full-array block that stays VMEM-resident across the batch grid."""
    nd = arr.ndim
    return pl.BlockSpec(arr.shape, lambda *_: (0,) * nd)


@jax.jit
def lenet_forward(x_nchw, q):
    """x_nchw: [N, 3, 32, 32] float32  ->  logits [N, n_classes] float32."""
    n = x_nchw.shape[0]
    assert x_nchw.shape[1:] == (3, 32, 32)
    nc = q["wf3"].shape[1]

    # Single cheap layout transform: NCHW -> NHWC -> [N, 32, 32*3].
    x = jnp.transpose(x_nchw, (0, 2, 3, 1)).reshape(n, 32, 96)

    out = pl.pallas_call(
        _lenet_kernel,
        out_shape=jax.ShapeDtypeStruct((n, 1, nc), jnp.float32),
        grid=(n,),
        in_specs=[
            pl.BlockSpec((1, 32, 96), lambda b: (b, 0, 0)),
            _resident(q["w1"]), _resident(q["b1"]),
            _resident(q["w2"]), _resident(q["b2"]),
            _resident(q["wf1"]), _resident(q["bf1"]),
            _resident(q["wf2"]), _resident(q["bf2"]),
            _resident(q["wf3"]), _resident(q["bf3"]),
        ],
        out_specs=pl.BlockSpec((1, 1, nc), lambda b: (b, 0, 0)),
        scratch_shapes=[
            pltpu.VMEM((14, 162), jnp.float32),   # pooled conv1 map
            pltpu.VMEM((5, 144), jnp.float32),    # pooled conv2 map
        ],
        compiler_params=pltpu.CompilerParams(
            dimension_semantics=("parallel",),
            vmem_limit_bytes=32 << 20,
        ),
    )(x, q["w1"], q["b1"], q["w2"], q["b2"],
      q["wf1"], q["bf1"], q["wf2"], q["bf2"], q["wf3"], q["bf3"])
    return out.reshape(n, nc)


# ---------------------------------------------------------------------------
# Torch-style parameters (shapes match the nn.Module) + one-time prep.
# ---------------------------------------------------------------------------
def init_params(key, n_classes):
    ks = jax.random.split(key, 16)
    p = {}
    p["w1"] = 0.1 * jax.random.normal(ks[0], (6, 3, 5, 5), jnp.float32)
    p["b1"] = 0.1 * jax.random.normal(ks[1], (6,), jnp.float32)
    p["g1"], p["be1"] = 1.0 + 0.1 * jax.random.normal(ks[2], (6,)), 0.1 * jax.random.normal(ks[3], (6,))
    p["m1"], p["v1"] = 0.1 * jax.random.normal(ks[4], (6,)), jax.random.uniform(ks[5], (6,), minval=0.5, maxval=1.5)

    p["w2"] = 0.1 * jax.random.normal(ks[6], (16, 6, 5, 5), jnp.float32)
    p["b2"] = 0.1 * jax.random.normal(ks[7], (16,), jnp.float32)
    p["g2"], p["be2"] = 1.0 + 0.1 * jax.random.normal(ks[8], (16,)), 0.1 * jax.random.normal(ks[9], (16,))
    p["m2"], p["v2"] = 0.1 * jax.random.normal(ks[10], (16,)), jax.random.uniform(ks[11], (16,), minval=0.5, maxval=1.5)

    kf = jax.random.split(ks[12], 12)
    p["wf1"] = 0.1 * jax.random.normal(kf[0], (120, 16 * 5 * 5), jnp.float32)   # torch Linear [out, in]
    p["bf1"] = 0.1 * jax.random.normal(kf[1], (120,), jnp.float32)
    p["g3"], p["be3"] = 1.0 + 0.1 * jax.random.normal(kf[2], (120,)), 0.1 * jax.random.normal(kf[3], (120,))
    p["m3"], p["v3"] = 0.1 * jax.random.normal(kf[4], (120,)), jax.random.uniform(kf[5], (120,), minval=0.5, maxval=1.5)

    p["wf2"] = 0.1 * jax.random.normal(kf[6], (84, 120), jnp.float32)
    p["bf2"] = 0.1 * jax.random.normal(kf[7], (84,), jnp.float32)
    p["g4"], p["be4"] = 1.0 + 0.1 * jax.random.normal(kf[8], (84,)), 0.1 * jax.random.normal(kf[9], (84,))
    p["m4"], p["v4"] = 0.1 * jax.random.normal(kf[10], (84,)), jax.random.uniform(kf[11], (84,), minval=0.5, maxval=1.5)

    kl = jax.random.split(ks[13], 2)
    p["wf3"] = 0.1 * jax.random.normal(kl[0], (n_classes, 84), jnp.float32)
    p["bf3"] = 0.1 * jax.random.normal(kl[1], (n_classes,), jnp.float32)
    return p


def prepare_params(p, eps=1e-5):
    """One-time prep: fold eval-mode BN into weights/bias, pre-expand the conv
    weights into per-tap block-diagonal matmul matrices (kron(I, w_tap)), lay
    the fc1 weight out against the in-kernel pooled layout, cast to bf16."""
    def fold(g, be, m, v):
        s = g / jnp.sqrt(v + eps)
        return s, be - m * s

    q = {}

    # conv1: W1[t=5*di+dj][3*j + c, 6*j + o] = w1[o, c, di, dj] * s1[o]
    s1, t1 = fold(p["g1"], p["be1"], p["m1"], p["v1"])
    w1_eff = p["w1"] * s1[:, None, None, None]                       # [6,3,5,5]
    blocks1 = jnp.transpose(w1_eff, (2, 3, 1, 0)).reshape(25, 3, 6)  # [t,c,o]
    q["w1"] = jnp.einsum("jk,tco->tjcko", jnp.eye(28, dtype=jnp.float32),
                         blocks1).reshape(25, 84, 168).astype(jnp.bfloat16)
    q["b1"] = jnp.tile(p["b1"] * s1 + t1, 28).reshape(1, 168).astype(jnp.float32)

    # conv2: input groups are 12 wide (pooled layout); rows 6..11 of each
    # block are zero so the pooling "holes" are multiplied away.
    s2, t2 = fold(p["g2"], p["be2"], p["m2"], p["v2"])
    w2_eff = p["w2"] * s2[:, None, None, None]                       # [16,6,5,5]
    blocks2 = jnp.transpose(w2_eff, (2, 3, 1, 0)).reshape(25, 6, 16)
    blocks2 = jnp.pad(blocks2, ((0, 0), (0, 6), (0, 0)))             # [25,12,16]
    w2_big = jnp.einsum("jk,tco->tjcko", jnp.eye(10, dtype=jnp.float32),
                        blocks2).reshape(25, 120, 160)
    q["w2"] = w2_big[:, :114, :].astype(jnp.bfloat16)
    q["b2"] = jnp.tile(p["b2"] * s2 + t2, 10).reshape(1, 160).astype(jnp.float32)

    # fc1: torch flatten order is (c, h, w); pooled activations live at
    # p2[i, 32*jj + c]  ->  Wf1[i][32*jj + c, o] = wf1[o, c*25 + i*5 + jj]*s3[o]
    s3, t3 = fold(p["g3"], p["be3"], p["m3"], p["v3"])
    wf1_eff = (p["wf1"] * s3[:, None]).reshape(120, 16, 5, 5)        # [o,c,i,jj]
    wf1_k = jnp.transpose(wf1_eff, (2, 3, 1, 0))                     # [i,jj,c,o]
    wf1_k = jnp.pad(wf1_k, ((0, 0), (0, 0), (0, 16), (0, 0)))        # [5,5,32,o]
    q["wf1"] = wf1_k.reshape(5, 160, 120)[:, :144, :].astype(jnp.bfloat16)
    q["bf1"] = (p["bf1"] * s3 + t3).reshape(1, 120).astype(jnp.float32)

    # fc2
    s4, t4 = fold(p["g4"], p["be4"], p["m4"], p["v4"])
    q["wf2"] = (p["wf2"] * s4[:, None]).T.astype(jnp.bfloat16)       # [120,84]
    q["bf2"] = (p["bf2"] * s4 + t4).reshape(1, 84).astype(jnp.float32)

    # fc3 (no BN)
    q["wf3"] = p["wf3"].T.astype(jnp.bfloat16)                       # [84,nc]
    q["bf3"] = p["bf3"].reshape(1, -1).astype(jnp.float32)
    return q


# ---------------------------------------------------------------------------
# Pure-JAX f32 reference (eval-mode semantics) for a correctness check.
# ---------------------------------------------------------------------------
def lenet_reference(x, p, eps=1e-5):
    def bn_c(z, g, be, m, v):
        s = g / jnp.sqrt(v + eps)
        return z * s[None, :, None, None] + (be - m * s)[None, :, None, None]

    def bn_f(z, g, be, m, v):
        s = g / jnp.sqrt(v + eps)
        return z * s[None, :] + (be - m * s)[None, :]

    y = jax.lax.conv_general_dilated(x, p["w1"], (1, 1), "VALID",
                                     dimension_numbers=("NCHW", "OIHW", "NCHW"))
    y = y + p["b1"][None, :, None, None]
    y = jnp.maximum(bn_c(y, p["g1"], p["be1"], p["m1"], p["v1"]), 0.0)
    n, c, h, w = y.shape
    y = y.reshape(n, c, h // 2, 2, w // 2, 2).max(axis=(3, 5))

    y = jax.lax.conv_general_dilated(y, p["w2"], (1, 1), "VALID",
                                     dimension_numbers=("NCHW", "OIHW", "NCHW"))
    y = y + p["b2"][None, :, None, None]
    y = jnp.maximum(bn_c(y, p["g2"], p["be2"], p["m2"], p["v2"]), 0.0)
    n, c, h, w = y.shape
    y = y.reshape(n, c, h // 2, 2, w // 2, 2).max(axis=(3, 5))

    f = y.reshape(n, -1)                                  # (c, h, w) order
    z = f @ p["wf1"].T + p["bf1"]
    z = jnp.maximum(bn_f(z, p["g3"], p["be3"], p["m3"], p["v3"]), 0.0)
    z = z @ p["wf2"].T + p["bf2"]
    z = jnp.maximum(bn_f(z, p["g4"], p["be4"], p["m4"], p["v4"]), 0.0)
    return z @ p["wf3"].T + p["bf3"]


if __name__ == "__main__":
    n_classes = 10
    batch = 2
    key = jax.random.PRNGKey(0)
    kx, kp = jax.random.split(key)

    x = jax.random.normal(kx, (batch, 3, 32, 32), jnp.float32)   # NCHW, as in torch
    raw_params = init_params(kp, n_classes)
    params = prepare_params(raw_params)       # BN folding / layouts / bf16, once

    logits = jax.block_until_ready(lenet_forward(x, params))

    assert logits.shape == (batch, n_classes), logits.shape
    assert logits.dtype == jnp.float32
    assert bool(jnp.all(jnp.isfinite(logits)))

    # Correctness vs. an f32 reference. Matmul inputs are bf16 inside the
    # kernel, so only loose tolerances apply (documented inference trade-off).
    ref = lenet_reference(x, raw_params)
    np.testing.assert_allclose(np.asarray(logits), np.asarray(ref),
                               rtol=0.05, atol=0.3)
    print("KERNEL_OK")
</pallas_src>

<mosaic_0001>
module attributes {stable_mosaic.version = 11 : i64} {
  func.func @_lenet_kernel(%arg0: i32, %arg1: memref<1x32x96xf32, #tpu.memory_space<vmem>>, %arg2: memref<25x84x168xbf16, #tpu.memory_space<vmem>>, %arg3: memref<1x168xf32, #tpu.memory_space<vmem>>, %arg4: memref<25x114x160xbf16, #tpu.memory_space<vmem>>, %arg5: memref<1x160xf32, #tpu.memory_space<vmem>>, %arg6: memref<5x144x120xbf16, #tpu.memory_space<vmem>>, %arg7: memref<1x120xf32, #tpu.memory_space<vmem>>, %arg8: memref<120x84xbf16, #tpu.memory_space<vmem>>, %arg9: memref<1x84xf32, #tpu.memory_space<vmem>>, %arg10: memref<84x10xbf16, #tpu.memory_space<vmem>>, %arg11: memref<1x10xf32, #tpu.memory_space<vmem>>, %arg12: memref<1x1x10xf32, #tpu.memory_space<vmem>>, %arg13: memref<14x162xf32, #tpu.memory_space<vmem>>, %arg14: memref<5x144xf32, #tpu.memory_space<vmem>>) attributes {dimension_semantics = [#tpu.dimension_semantics<parallel>], iteration_bounds = array<i64: 2>, scalar_prefetch = 0 : i64, scratch_operands = 2 : i64, tpu.core_type = #tpu.core_type<tc>, window_params = [{transform_indices = @transform_0, window_bounds = array<i64: 1, 32, 96>}, {pipeline_mode = #tpu.pipeline_mode<synchronous>, transform_indices = @transform_1, window_bounds = array<i64: 25, 84, 168>}, {pipeline_mode = #tpu.pipeline_mode<synchronous>, transform_indices = @transform_2, window_bounds = array<i64: 1, 168>}, {pipeline_mode = #tpu.pipeline_mode<synchronous>, transform_indices = @transform_3, window_bounds = array<i64: 25, 114, 160>}, {pipeline_mode = #tpu.pipeline_mode<synchronous>, transform_indices = @transform_4, window_bounds = array<i64: 1, 160>}, {pipeline_mode = #tpu.pipeline_mode<synchronous>, transform_indices = @transform_5, window_bounds = array<i64: 5, 144, 120>}, {pipeline_mode = #tpu.pipeline_mode<synchronous>, transform_indices = @transform_6, window_bounds = array<i64: 1, 120>}, {pipeline_mode = #tpu.pipeline_mode<synchronous>, transform_indices = @transform_7, window_bounds = array<i64: 120, 84>}, {pipeline_mode = #tpu.pipeline_mode<synchronous>, transform_indices = @transform_8, window_bounds = array<i64: 1, 84>}, {pipeline_mode = #tpu.pipeline_mode<synchronous>, transform_indices = @transform_9, window_bounds = array<i64: 84, 10>}, {pipeline_mode = #tpu.pipeline_mode<synchronous>, transform_indices = @transform_10, window_bounds = array<i64: 1, 10>}, {transform_indices = @transform_11, window_bounds = array<i64: 1, 1, 10>}]} {
    %c0 = arith.constant 0 : index
    %c0_0 = arith.constant 0 : index
    %c0_1 = arith.constant 0 : index
    %0 = vector.load %arg1[%c0, %c0_0, %c0_1] : memref<1x32x96xf32, #tpu.memory_space<vmem>>, vector<1x32x96xf32>
    %1 = vector.shape_cast %0 : vector<1x32x96xf32> to vector<32x96xf32>
    %cst = arith.constant 0.000000e+00 : f32
    %2 = vector.broadcast %cst : f32 to vector<28x168xf32>
    %3 = vector.extract_strided_slice %1 {offsets = [0, 0], sizes = [28, 84], strides = [1, 1]} : vector<32x96xf32> to vector<28x84xf32>
    %4 = arith.truncf %3 : vector<28x84xf32> to vector<28x84xbf16>
    %c0_2 = arith.constant 0 : index
    %c0_3 = arith.constant 0 : index
    %c0_4 = arith.constant 0 : index
    %5 = vector.load %arg2[%c0_2, %c0_3, %c0_4] : memref<25x84x168xbf16, #tpu.memory_space<vmem>>, vector<1x84x168xbf16>
    %6 = vector.shape_cast %5 : vector<1x84x168xbf16> to vector<84x168xbf16>
    %cst_5 = arith.constant dense<0.000000e+00> : vector<28x168xf32>
    %7 = tpu.matmul %4, %6, %cst_5 {dimension_numbers = #tpu.dot_dimension_numbers<[1], [0], [0], [1], [0, 0, 1, 1], [], []>} : vector<28x84xbf16>, vector<84x168xbf16>, vector<28x168xf32> -> vector<28x168xf32>
    %8 = arith.addf %2, %7 : vector<28x168xf32>
    %9 = vector.extract_strided_slice %1 {offsets = [0, 3], sizes = [28, 84], strides = [1, 1]} : vector<32x96xf32> to vector<28x84xf32>
    %10 = arith.truncf %9 : vector<28x84xf32> to vector<28x84xbf16>
    %c1 = arith.constant 1 : index
    %c0_6 = arith.constant 0 : index
    %c0_7 = arith.constant 0 : index
    %11 = vector.load %arg2[%c1, %c0_6, %c0_7] : memref<25x84x168xbf16, #tpu.memory_space<vmem>>, vector<1x84x168xbf16>
    %12 = vector.shape_cast %11 : vector<1x84x168xbf16> to vector<84x168xbf16>
    %cst_8 = arith.constant dense<0.000000e+00> : vector<28x168xf32>
    %13 = tpu.matmul %10, %12, %cst_8 {dimension_numbers = #tpu.dot_dimension_numbers<[1], [0], [0], [1], [0, 0, 1, 1], [], []>} : vector<28x84xbf16>, vector<84x168xbf16>, vector<28x168xf32> -> vector<28x168xf32>
    %14 = arith.addf %8, %13 : vector<28x168xf32>
    %15 = vector.extract_strided_slice %1 {offsets = [0, 6], sizes = [28, 84], strides = [1, 1]} : vector<32x96xf32> to vector<28x84xf32>
    %16 = arith.truncf %15 : vector<28x84xf32> to vector<28x84xbf16>
    %c2 = arith.constant 2 : index
    %c0_9 = arith.constant 0 : index
    %c0_10 = arith.constant 0 : index
    %17 = vector.load %arg2[%c2, %c0_9, %c0_10] : memref<25x84x168xbf16, #tpu.memory_space<vmem>>, vector<1x84x168xbf16>
    %18 = vector.shape_cast %17 : vector<1x84x168xbf16> to vector<84x168xbf16>
    %cst_11 = arith.constant dense<0.000000e+00> : vector<28x168xf32>
    %19 = tpu.matmul %16, %18, %cst_11 {dimension_numbers = #tpu.dot_dimension_numbers<[1], [0], [0], [1], [0, 0, 1, 1], [], []>} : vector<28x84xbf16>, vector<84x168xbf16>, vector<28x168xf32> -> vector<28x168xf32>
    %20 = arith.addf %14, %19 : vector<28x168xf32>
    %21 = vector.extract_strided_slice %1 {offsets = [0, 9], sizes = [28, 84], strides = [1, 1]} : vector<32x96xf32> to vector<28x84xf32>
    %22 = arith.truncf %21 : vector<28x84xf32> to vector<28x84xbf16>
    %c3 = arith.constant 3 : index
    %c0_12 = arith.constant 0 : index
    %c0_13 = arith.constant 0 : index
    %23 = vector.load %arg2[%c3, %c0_12, %c0_13] : memref<25x84x168xbf16, #tpu.memory_space<vmem>>, vector<1x84x168xbf16>
    %24 = vector.shape_cast %23 : vector<1x84x168xbf16> to vector<84x168xbf16>
    %cst_14 = arith.constant dense<0.000000e+00> : vector<28x168xf32>
    %25 = tpu.matmul %22, %24, %cst_14 {dimension_numbers = #tpu.dot_dimension_numbers<[1], [0], [0], [1], [0, 0, 1, 1], [], []>} : vector<28x84xbf16>, vector<84x168xbf16>, vector<28x168xf32> -> vector<28x168xf32>
    %26 = arith.addf %20, %25 : vector<28x168xf32>
    %27 = vector.extract_strided_slice %1 {offsets = [0, 12], sizes = [28, 84], strides = [1, 1]} : vector<32x96xf32> to vector<28x84xf32>
    %28 = arith.truncf %27 : vector<28x84xf32> to vector<28x84xbf16>
    %c4 = arith.constant 4 : index
    %c0_15 = arith.constant 0 : index
    %c0_16 = arith.constant 0 : index
    %29 = vector.load %arg2[%c4, %c0_15, %c0_16] : memref<25x84x168xbf16, #tpu.memory_space<vmem>>, vector<1x84x168xbf16>
    %30 = vector.shape_cast %29 : vector<1x84x168xbf16> to vector<84x168xbf16>
    %cst_17 = arith.constant dense<0.000000e+00> : vector<28x168xf32>
    %31 = tpu.matmul %28, %30, %cst_17 {dimension_numbers = #tpu.dot_dimension_numbers<[1], [0], [0], [1], [0, 0, 1, 1], [], []>} : vector<28x84xbf16>, vector<84x168xbf16>, vector<28x168xf32> -> vector<28x168xf32>
    %32 = arith.addf %26, %31 : vector<28x168xf32>
    %33 = vector.extract_strided_slice %1 {offsets = [1, 0], sizes = [28, 84], strides = [1, 1]} : vector<32x96xf32> to vector<28x84xf32>
    %34 = arith.truncf %33 : vector<28x84xf32> to vector<28x84xbf16>
    %c5 = arith.constant 5 : index
    %c0_18 = arith.constant 0 : index
    %c0_19 = arith.constant 0 : index
    %35 = vector.load %arg2[%c5, %c0_18, %c0_19] : memref<25x84x168xbf16, #tpu.memory_space<vmem>>, vector<1x84x168xbf16>
    %36 = vector.shape_cast %35 : vector<1x84x168xbf16> to vector<84x168xbf16>
    %cst_20 = arith.constant dense<0.000000e+00> : vector<28x168xf32>
    %37 = tpu.matmul %34, %36, %cst_20 {dimension_numbers = #tpu.dot_dimension_numbers<[1], [0], [0], [1], [0, 0, 1, 1], [], []>} : vector<28x84xbf16>, vector<84x168xbf16>, vector<28x168xf32> -> vector<28x168xf32>
    %38 = arith.addf %32, %37 : vector<28x168xf32>
    %39 = vector.extract_strided_slice %1 {offsets = [1, 3], sizes = [28, 84], strides = [1, 1]} : vector<32x96xf32> to vector<28x84xf32>
    %40 = arith.truncf %39 : vector<28x84xf32> to vector<28x84xbf16>
    %c6 = arith.constant 6 : index
    %c0_21 = arith.constant 0 : index
    %c0_22 = arith.constant 0 : index
    %41 = vector.load %arg2[%c6, %c0_21, %c0_22] : memref<25x84x168xbf16, #tpu.memory_space<vmem>>, vector<1x84x168xbf16>
    %42 = vector.shape_cast %41 : vector<1x84x168xbf16> to vector<84x168xbf16>
    %cst_23 = arith.constant dense<0.000000e+00> : vector<28x168xf32>
    %43 = tpu.matmul %40, %42, %cst_23 {dimension_numbers = #tpu.dot_dimension_numbers<[1], [0], [0], [1], [0, 0, 1, 1], [], []>} : vector<28x84xbf16>, vector<84x168xbf16>, vector<28x168xf32> -> vector<28x168xf32>
    %44 = arith.addf %38, %43 : vector<28x168xf32>
    %45 = vector.extract_strided_slice %1 {offsets = [1, 6], sizes = [28, 84], strides = [1, 1]} : vector<32x96xf32> to vector<28x84xf32>
    %46 = arith.truncf %45 : vector<28x84xf32> to vector<28x84xbf16>
    %c7 = arith.constant 7 : index
    %c0_24 = arith.constant 0 : index
    %c0_25 = arith.constant 0 : index
    %47 = vector.load %arg2[%c7, %c0_24, %c0_25] : memref<25x84x168xbf16, #tpu.memory_space<vmem>>, vector<1x84x168xbf16>
    %48 = vector.shape_cast %47 : vector<1x84x168xbf16> to vector<84x168xbf16>
    %cst_26 = arith.constant dense<0.000000e+00> : vector<28x168xf32>
    %49 = tpu.matmul %46, %48, %cst_26 {dimension_numbers = #tpu.dot_dimension_numbers<[1], [0], [0], [1], [0, 0, 1, 1], [], []>} : vector<28x84xbf16>, vector<84x168xbf16>, vector<28x168xf32> -> vector<28x168xf32>
    %50 = arith.addf %44, %49 : vector<28x168xf32>
    %51 = vector.extract_strided_slice %1 {offsets = [1, 9], sizes = [28, 84], strides = [1, 1]} : vector<32x96xf32> to vector<28x84xf32>
    %52 = arith.truncf %51 : vector<28x84xf32> to vector<28x84xbf16>
    %c8 = arith.constant 8 : index
    %c0_27 = arith.constant 0 : index
    %c0_28 = arith.constant 0 : index
    %53 = vector.load %arg2[%c8, %c0_27, %c0_28] : memref<25x84x168xbf16, #tpu.memory_space<vmem>>, vector<1x84x168xbf16>
    %54 = vector.shape_cast %53 : vector<1x84x168xbf16> to vector<84x168xbf16>
    %cst_29 = arith.constant dense<0.000000e+00> : vector<28x168xf32>
    %55 = tpu.matmul %52, %54, %cst_29 {dimension_numbers = #tpu.dot_dimension_numbers<[1], [0], [0], [1], [0, 0, 1, 1], [], []>} : vector<28x84xbf16>, vector<84x168xbf16>, vector<28x168xf32> -> vector<28x168xf32>
    %56 = arith.addf %50, %55 : vector<28x168xf32>
    %57 = vector.extract_strided_slice %1 {offsets = [1, 12], sizes = [28, 84], strides = [1, 1]} : vector<32x96xf32> to vector<28x84xf32>
    %58 = arith.truncf %57 : vector<28x84xf32> to vector<28x84xbf16>
    %c9 = arith.constant 9 : index
    %c0_30 = arith.constant 0 : index
    %c0_31 = arith.constant 0 : index
    %59 = vector.load %arg2[%c9, %c0_30, %c0_31] : memref<25x84x168xbf16, #tpu.memory_space<vmem>>, vector<1x84x168xbf16>
    %60 = vector.shape_cast %59 : vector<1x84x168xbf16> to vector<84x168xbf16>
    %cst_32 = arith.constant dense<0.000000e+00> : vector<28x168xf32>
    %61 = tpu.matmul %58, %60, %cst_32 {dimension_numbers = #tpu.dot_dimension_numbers<[1], [0], [0], [1], [0, 0, 1, 1], [], []>} : vector<28x84xbf16>, vector<84x168xbf16>, vector<28x168xf32> -> vector<28x168xf32>
    %62 = arith.addf %56, %61 : vector<28x168xf32>
    %63 = vector.extract_strided_slice %1 {offsets = [2, 0], sizes = [28, 84], strides = [1, 1]} : vector<32x96xf32> to vector<28x84xf32>
    %64 = arith.truncf %63 : vector<28x84xf32> to vector<28x84xbf16>
    %c10 = arith.constant 10 : index
    %c0_33 = arith.constant 0 : index
    %c0_34 = arith.constant 0 : index
    %65 = vector.load %arg2[%c10, %c0_33, %c0_34] : memref<25x84x168xbf16, #tpu.memory_space<vmem>>, vector<1x84x168xbf16>
    %66 = vector.shape_cast %65 : vector<1x84x168xbf16> to vector<84x168xbf16>
    %cst_35 = arith.constant dense<0.000000e+00> : vector<28x168xf32>
    %67 = tpu.matmul %64, %66, %cst_35 {dimension_numbers = #tpu.dot_dimension_numbers<[1], [0], [0], [1], [0, 0, 1, 1], [], []>} : vector<28x84xbf16>, vector<84x168xbf16>, vector<28x168xf32> -> vector<28x168xf32>
    %68 = arith.addf %62, %67 : vector<28x168xf32>
    %69 = vector.extract_strided_slice %1 {offsets = [2, 3], sizes = [28, 84], strides = [1, 1]} : vector<32x96xf32> to vector<28x84xf32>
    %70 = arith.truncf %69 : vector<28x84xf32> to vector<28x84xbf16>
    %c11 = arith.constant 11 : index
    %c0_36 = arith.constant 0 : index
    %c0_37 = arith.constant 0 : index
    %71 = vector.load %arg2[%c11, %c0_36, %c0_37] : memref<25x84x168xbf16, #tpu.memory_space<vmem>>, vector<1x84x168xbf16>
    %72 = vector.shape_cast %71 : vector<1x84x168xbf16> to vector<84x168xbf16>
    %cst_38 = arith.constant dense<0.000000e+00> : vector<28x168xf32>
    %73 = tpu.matmul %70, %72, %cst_38 {dimension_numbers = #tpu.dot_dimension_numbers<[1], [0], [0], [1], [0, 0, 1, 1], [], []>} : vector<28x84xbf16>, vector<84x168xbf16>, vector<28x168xf32> -> vector<28x168xf32>
    %74 = arith.addf %68, %73 : vector<28x168xf32>
    %75 = vector.extract_strided_slice %1 {offsets = [2, 6], sizes = [28, 84], strides = [1, 1]} : vector<32x96xf32> to vector<28x84xf32>
    %76 = arith.truncf %75 : vector<28x84xf32> to vector<28x84xbf16>
    %c12 = arith.constant 12 : index
    %c0_39 = arith.constant 0 : index
    %c0_40 = arith.constant 0 : index
    %77 = vector.load %arg2[%c12, %c0_39, %c0_40] : memref<25x84x168xbf16, #tpu.memory_space<vmem>>, vector<1x84x168xbf16>
    %78 = vector.shape_cast %77 : vector<1x84x168xbf16> to vector<84x168xbf16>
    %cst_41 = arith.constant dense<0.000000e+00> : vector<28x168xf32>
    %79 = tpu.matmul %76, %78, %cst_41 {dimension_numbers = #tpu.dot_dimension_numbers<[1], [0], [0], [1], [0, 0, 1, 1], [], []>} : vector<28x84xbf16>, vector<84x168xbf16>, vector<28x168xf32> -> vector<28x168xf32>
    %80 = arith.addf %74, %79 : vector<28x168xf32>
    %81 = vector.extract_strided_slice %1 {offsets = [2, 9], sizes = [28, 84], strides = [1, 1]} : vector<32x96xf32> to vector<28x84xf32>
    %82 = arith.truncf %81 : vector<28x84xf32> to vector<28x84xbf16>
    %c13 = arith.constant 13 : index
    %c0_42 = arith.constant 0 : index
    %c0_43 = arith.constant 0 : index
    %83 = vector.load %arg2[%c13, %c0_42, %c0_43] : memref<25x84x168xbf16, #tpu.memory_space<vmem>>, vector<1x84x168xbf16>
    %84 = vector.shape_cast %83 : vector<1x84x168xbf16> to vector<84x168xbf16>
    %cst_44 = arith.constant dense<0.000000e+00> : vector<28x168xf32>
    %85 = tpu.matmul %82, %84, %cst_44 {dimension_numbers = #tpu.dot_dimension_numbers<[1], [0], [0], [1], [0, 0, 1, 1], [], []>} : vector<28x84xbf16>, vector<84x168xbf16>, vector<28x168xf32> -> vector<28x168xf32>
    %86 = arith.addf %80, %85 : vector<28x168xf32>
    %87 = vector.extract_strided_slice %1 {offsets = [2, 12], sizes = [28, 84], strides = [1, 1]} : vector<32x96xf32> to vector<28x84xf32>
    %88 = arith.truncf %87 : vector<28x84xf32> to vector<28x84xbf16>
    %c14 = arith.constant 14 : index
    %c0_45 = arith.constant 0 : index
    %c0_46 = arith.constant 0 : index
    %89 = vector.load %arg2[%c14, %c0_45, %c0_46] : memref<25x84x168xbf16, #tpu.memory_space<vmem>>, vector<1x84x168xbf16>
    %90 = vector.shape_cast %89 : vector<1x84x168xbf16> to vector<84x168xbf16>
    %cst_47 = arith.constant dense<0.000000e+00> : vector<28x168xf32>
    %91 = tpu.matmul %88, %90, %cst_47 {dimension_numbers = #tpu.dot_dimension_numbers<[1], [0], [0], [1], [0, 0, 1, 1], [], []>} : vector<28x84xbf16>, vector<84x168xbf16>, vector<28x168xf32> -> vector<28x168xf32>
    %92 = arith.addf %86, %91 : vector<28x168xf32>
    %93 = vector.extract_strided_slice %1 {offsets = [3, 0], sizes = [28, 84], strides = [1, 1]} : vector<32x96xf32> to vector<28x84xf32>
    %94 = arith.truncf %93 : vector<28x84xf32> to vector<28x84xbf16>
    %c15 = arith.constant 15 : index
    %c0_48 = arith.constant 0 : index
    %c0_49 = arith.constant 0 : index
    %95 = vector.load %arg2[%c15, %c0_48, %c0_49] : memref<25x84x168xbf16, #tpu.memory_space<vmem>>, vector<1x84x168xbf16>
    %96 = vector.shape_cast %95 : vector<1x84x168xbf16> to vector<84x168xbf16>
    %cst_50 = arith.constant dense<0.000000e+00> : vector<28x168xf32>
    %97 = tpu.matmul %94, %96, %cst_50 {dimension_numbers = #tpu.dot_dimension_numbers<[1], [0], [0], [1], [0, 0, 1, 1], [], []>} : vector<28x84xbf16>, vector<84x168xbf16>, vector<28x168xf32> -> vector<28x168xf32>
    %98 = arith.addf %92, %97 : vector<28x168xf32>
    %99 = vector.extract_strided_slice %1 {offsets = [3, 3], sizes = [28, 84], strides = [1, 1]} : vector<32x96xf32> to vector<28x84xf32>
    %100 = arith.truncf %99 : vector<28x84xf32> to vector<28x84xbf16>
    %c16 = arith.constant 16 : index
    %c0_51 = arith.constant 0 : index
    %c0_52 = arith.constant 0 : index
    %101 = vector.load %arg2[%c16, %c0_51, %c0_52] : memref<25x84x168xbf16, #tpu.memory_space<vmem>>, vector<1x84x168xbf16>
    %102 = vector.shape_cast %101 : vector<1x84x168xbf16> to vector<84x168xbf16>
    %cst_53 = arith.constant dense<0.000000e+00> : vector<28x168xf32>
    %103 = tpu.matmul %100, %102, %cst_53 {dimension_numbers = #tpu.dot_dimension_numbers<[1], [0], [0], [1], [0, 0, 1, 1], [], []>} : vector<28x84xbf16>, vector<84x168xbf16>, vector<28x168xf32> -> vector<28x168xf32>
    %104 = arith.addf %98, %103 : vector<28x168xf32>
    %105 = vector.extract_strided_slice %1 {offsets = [3, 6], sizes = [28, 84], strides = [1, 1]} : vector<32x96xf32> to vector<28x84xf32>
    %106 = arith.truncf %105 : vector<28x84xf32> to vector<28x84xbf16>
    %c17 = arith.constant 17 : index
    %c0_54 = arith.constant 0 : index
    %c0_55 = arith.constant 0 : index
    %107 = vector.load %arg2[%c17, %c0_54, %c0_55] : memref<25x84x168xbf16, #tpu.memory_space<vmem>>, vector<1x84x168xbf16>
    %108 = vector.shape_cast %107 : vector<1x84x168xbf16> to vector<84x168xbf16>
    %cst_56 = arith.constant dense<0.000000e+00> : vector<28x168xf32>
    %109 = tpu.matmul %106, %108, %cst_56 {dimension_numbers = #tpu.dot_dimension_numbers<[1], [0], [0], [1], [0, 0, 1, 1], [], []>} : vector<28x84xbf16>, vector<84x168xbf16>, vector<28x168xf32> -> vector<28x168xf32>
    %110 = arith.addf %104, %109 : vector<28x168xf32>
    %111 = vector.extract_strided_slice %1 {offsets = [3, 9], sizes = [28, 84], strides = [1, 1]} : vector<32x96xf32> to vector<28x84xf32>
    %112 = arith.truncf %111 : vector<28x84xf32> to vector<28x84xbf16>
    %c18 = arith.constant 18 : index
    %c0_57 = arith.constant 0 : index
    %c0_58 = arith.constant 0 : index
    %113 = vector.load %arg2[%c18, %c0_57, %c0_58] : memref<25x84x168xbf16, #tpu.memory_space<vmem>>, vector<1x84x168xbf16>
    %114 = vector.shape_cast %113 : vector<1x84x168xbf16> to vector<84x168xbf16>
    %cst_59 = arith.constant dense<0.000000e+00> : vector<28x168xf32>
    %115 = tpu.matmul %112, %114, %cst_59 {dimension_numbers = #tpu.dot_dimension_numbers<[1], [0], [0], [1], [0, 0, 1, 1], [], []>} : vector<28x84xbf16>, vector<84x168xbf16>, vector<28x168xf32> -> vector<28x168xf32>
    %116 = arith.addf %110, %115 : vector<28x168xf32>
    %117 = vector.extract_strided_slice %1 {offsets = [3, 12], sizes = [28, 84], strides = [1, 1]} : vector<32x96xf32> to vector<28x84xf32>
    %118 = arith.truncf %117 : vector<28x84xf32> to vector<28x84xbf16>
    %c19 = arith.constant 19 : index
    %c0_60 = arith.constant 0 : index
    %c0_61 = arith.constant 0 : index
    %119 = vector.load %arg2[%c19, %c0_60, %c0_61] : memref<25x84x168xbf16, #tpu.memory_space<vmem>>, vector<1x84x168xbf16>
    %120 = vector.shape_cast %119 : vector<1x84x168xbf16> to vector<84x168xbf16>
    %cst_62 = arith.constant dense<0.000000e+00> : vector<28x168xf32>
    %121 = tpu.matmul %118, %120, %cst_62 {dimension_numbers = #tpu.dot_dimension_numbers<[1], [0], [0], [1], [0, 0, 1, 1], [], []>} : vector<28x84xbf16>, vector<84x168xbf16>, vector<28x168xf32> -> vector<28x168xf32>
    %122 = arith.addf %116, %121 : vector<28x168xf32>
    %123 = vector.extract_strided_slice %1 {offsets = [4, 0], sizes = [28, 84], strides = [1, 1]} : vector<32x96xf32> to vector<28x84xf32>
    %124 = arith.truncf %123 : vector<28x84xf32> to vector<28x84xbf16>
    %c20 = arith.constant 20 : index
    %c0_63 = arith.constant 0 : index
    %c0_64 = arith.constant 0 : index
    %125 = vector.load %arg2[%c20, %c0_63, %c0_64] : memref<25x84x168xbf16, #tpu.memory_space<vmem>>, vector<1x84x168xbf16>
    %126 = vector.shape_cast %125 : vector<1x84x168xbf16> to vector<84x168xbf16>
    %cst_65 = arith.constant dense<0.000000e+00> : vector<28x168xf32>
    %127 = tpu.matmul %124, %126, %cst_65 {dimension_numbers = #tpu.dot_dimension_numbers<[1], [0], [0], [1], [0, 0, 1, 1], [], []>} : vector<28x84xbf16>, vector<84x168xbf16>, vector<28x168xf32> -> vector<28x168xf32>
    %128 = arith.addf %122, %127 : vector<28x168xf32>
    %129 = vector.extract_strided_slice %1 {offsets = [4, 3], sizes = [28, 84], strides = [1, 1]} : vector<32x96xf32> to vector<28x84xf32>
    %130 = arith.truncf %129 : vector<28x84xf32> to vector<28x84xbf16>
    %c21 = arith.constant 21 : index
    %c0_66 = arith.constant 0 : index
    %c0_67 = arith.constant 0 : index
    %131 = vector.load %arg2[%c21, %c0_66, %c0_67] : memref<25x84x168xbf16, #tpu.memory_space<vmem>>, vector<1x84x168xbf16>
    %132 = vector.shape_cast %131 : vector<1x84x168xbf16> to vector<84x168xbf16>
    %cst_68 = arith.constant dense<0.000000e+00> : vector<28x168xf32>
    %133 = tpu.matmul %130, %132, %cst_68 {dimension_numbers = #tpu.dot_dimension_numbers<[1], [0], [0], [1], [0, 0, 1, 1], [], []>} : vector<28x84xbf16>, vector<84x168xbf16>, vector<28x168xf32> -> vector<28x168xf32>
    %134 = arith.addf %128, %133 : vector<28x168xf32>
    %135 = vector.extract_strided_slice %1 {offsets = [4, 6], sizes = [28, 84], strides = [1, 1]} : vector<32x96xf32> to vector<28x84xf32>
    %136 = arith.truncf %135 : vector<28x84xf32> to vector<28x84xbf16>
    %c22 = arith.constant 22 : index
    %c0_69 = arith.constant 0 : index
    %c0_70 = arith.constant 0 : index
    %137 = vector.load %arg2[%c22, %c0_69, %c0_70] : memref<25x84x168xbf16, #tpu.memory_space<vmem>>, vector<1x84x168xbf16>
    %138 = vector.shape_cast %137 : vector<1x84x168xbf16> to vector<84x168xbf16>
    %cst_71 = arith.constant dense<0.000000e+00> : vector<28x168xf32>
    %139 = tpu.matmul %136, %138, %cst_71 {dimension_numbers = #tpu.dot_dimension_numbers<[1], [0], [0], [1], [0, 0, 1, 1], [], []>} : vector<28x84xbf16>, vector<84x168xbf16>, vector<28x168xf32> -> vector<28x168xf32>
    %140 = arith.addf %134, %139 : vector<28x168xf32>
    %141 = vector.extract_strided_slice %1 {offsets = [4, 9], sizes = [28, 84], strides = [1, 1]} : vector<32x96xf32> to vector<28x84xf32>
    %142 = arith.truncf %141 : vector<28x84xf32> to vector<28x84xbf16>
    %c23 = arith.constant 23 : index
    %c0_72 = arith.constant 0 : index
    %c0_73 = arith.constant 0 : index
    %143 = vector.load %arg2[%c23, %c0_72, %c0_73] : memref<25x84x168xbf16, #tpu.memory_space<vmem>>, vector<1x84x168xbf16>
    %144 = vector.shape_cast %143 : vector<1x84x168xbf16> to vector<84x168xbf16>
    %cst_74 = arith.constant dense<0.000000e+00> : vector<28x168xf32>
    %145 = tpu.matmul %142, %144, %cst_74 {dimension_numbers = #tpu.dot_dimension_numbers<[1], [0], [0], [1], [0, 0, 1, 1], [], []>} : vector<28x84xbf16>, vector<84x168xbf16>, vector<28x168xf32> -> vector<28x168xf32>
    %146 = arith.addf %140, %145 : vector<28x168xf32>
    %147 = vector.extract_strided_slice %1 {offsets = [4, 12], sizes = [28, 84], strides = [1, 1]} : vector<32x96xf32> to vector<28x84xf32>
    %148 = arith.truncf %147 : vector<28x84xf32> to vector<28x84xbf16>
    %c24 = arith.constant 24 : index
    %c0_75 = arith.constant 0 : index
    %c0_76 = arith.constant 0 : index
    %149 = vector.load %arg2[%c24, %c0_75, %c0_76] : memref<25x84x168xbf16, #tpu.memory_space<vmem>>, vector<1x84x168xbf16>
    %150 = vector.shape_cast %149 : vector<1x84x168xbf16> to vector<84x168xbf16>
    %cst_77 = arith.constant dense<0.000000e+00> : vector<28x168xf32>
    %151 = tpu.matmul %148, %150, %cst_77 {dimension_numbers = #tpu.dot_dimension_numbers<[1], [0], [0], [1], [0, 0, 1, 1], [], []>} : vector<28x84xbf16>, vector<84x168xbf16>, vector<28x168xf32> -> vector<28x168xf32>
    %152 = arith.addf %146, %151 : vector<28x168xf32>
    %c0_78 = arith.constant 0 : index
    %c0_79 = arith.constant 0 : index
    %153 = vector.load %arg3[%c0_78, %c0_79] : memref<1x168xf32, #tpu.memory_space<vmem>>, vector<1x168xf32>
    %154 = vector.broadcast %153 : vector<1x168xf32> to vector<28x168xf32>
    %155 = arith.addf %152, %154 : vector<28x168xf32>
    %cst_80 = arith.constant 0.000000e+00 : f32
    %156 = vector.broadcast %cst_80 : f32 to vector<28x168xf32>
    %157 = arith.maximumf %155, %156 : vector<28x168xf32>
    %158 = vector.extract_strided_slice %157 {offsets = [0, 0], sizes = [1, 168], strides = [1, 1]} : vector<28x168xf32> to vector<1x168xf32>
    %159 = vector.extract_strided_slice %157 {offsets = [1, 0], sizes = [1, 168], strides = [1, 1]} : vector<28x168xf32> to vector<1x168xf32>
    %160 = arith.maximumf %158, %159 : vector<1x168xf32>
    %161 = vector.extract_strided_slice %160 {offsets = [0, 0], sizes = [1, 162], strides = [1, 1]} : vector<1x168xf32> to vector<1x162xf32>
    %162 = vector.extract_strided_slice %160 {offsets = [0, 6], sizes = [1, 162], strides = [1, 1]} : vector<1x168xf32> to vector<1x162xf32>
    %163 = arith.maximumf %161, %162 : vector<1x162xf32>
    %c0_81 = arith.constant 0 : index
    %c0_82 = arith.constant 0 : index
    %164 = vector.load %arg13[%c0_81, %c0_82] : memref<14x162xf32, #tpu.memory_space<vmem>>, vector<1x162xf32>
    tpu.vector_store %arg13[%c0_81, %c0_82], %163 {strides = array<i32>} : memref<14x162xf32, #tpu.memory_space<vmem>>, vector<1x162xf32>,
    %165 = vector.extract_strided_slice %157 {offsets = [2, 0], sizes = [1, 168], strides = [1, 1]} : vector<28x168xf32> to vector<1x168xf32>
    %166 = vector.extract_strided_slice %157 {offsets = [3, 0], sizes = [1, 168], strides = [1, 1]} : vector<28x168xf32> to vector<1x168xf32>
    %167 = arith.maximumf %165, %166 : vector<1x168xf32>
    %168 = vector.extract_strided_slice %167 {offsets = [0, 0], sizes = [1, 162], strides = [1, 1]} : vector<1x168xf32> to vector<1x162xf32>
    %169 = vector.extract_strided_slice %167 {offsets = [0, 6], sizes = [1, 162], strides = [1, 1]} : vector<1x168xf32> to vector<1x162xf32>
    %170 = arith.maximumf %168, %169 : vector<1x162xf32>
    %c1_83 = arith.constant 1 : index
    %c0_84 = arith.constant 0 : index
    %171 = vector.load %arg13[%c1_83, %c0_84] : memref<14x162xf32, #tpu.memory_space<vmem>>, vector<1x162xf32>
    tpu.vector_store %arg13[%c1_83, %c0_84], %170 {strides = array<i32>} : memref<14x162xf32, #tpu.memory_space<vmem>>, vector<1x162xf32>,
    %172 = vector.extract_strided_slice %157 {offsets = [4, 0], sizes = [1, 168], strides = [1, 1]} : vector<28x168xf32> to vector<1x168xf32>
    %173 = vector.extract_strided_slice %157 {offsets = [5, 0], sizes = [1, 168], strides = [1, 1]} : vector<28x168xf32> to vector<1x168xf32>
    %174 = arith.maximumf %172, %173 : vector<1x168xf32>
    %175 = vector.extract_strided_slice %174 {offsets = [0, 0], sizes = [1, 162], strides = [1, 1]} : vector<1x168xf32> to vector<1x162xf32>
    %176 = vector.extract_strided_slice %174 {offsets = [0, 6], sizes = [1, 162], strides = [1, 1]} : vector<1x168xf32> to vector<1x162xf32>
    %177 = arith.maximumf %175, %176 : vector<1x162xf32>
    %c2_85 = arith.constant 2 : index
    %c0_86 = arith.constant 0 : index
    %178 = vector.load %arg13[%c2_85, %c0_86] : memref<14x162xf32, #tpu.memory_space<vmem>>, vector<1x162xf32>
    tpu.vector_store %arg13[%c2_85, %c0_86], %177 {strides = array<i32>} : memref<14x162xf32, #tpu.memory_space<vmem>>, vector<1x162xf32>,
    %179 = vector.extract_strided_slice %157 {offsets = [6, 0], sizes = [1, 168], strides = [1, 1]} : vector<28x168xf32> to vector<1x168xf32>
    %180 = vector.extract_strided_slice %157 {offsets = [7, 0], sizes = [1, 168], strides = [1, 1]} : vector<28x168xf32> to vector<1x168xf32>
    %181 = arith.maximumf %179, %180 : vector<1x168xf32>
    %182 = vector.extract_strided_slice %181 {offsets = [0, 0], sizes = [1, 162], strides = [1, 1]} : vector<1x168xf32> to vector<1x162xf32>
    %183 = vector.extract_strided_slice %181 {offsets = [0, 6], sizes = [1, 162], strides = [1, 1]} : vector<1x168xf32> to vector<1x162xf32>
    %184 = arith.maximumf %182, %183 : vector<1x162xf32>
    %c3_87 = arith.constant 3 : index
    %c0_88 = arith.constant 0 : index
    %185 = vector.load %arg13[%c3_87, %c0_88] : memref<14x162xf32, #tpu.memory_space<vmem>>, vector<1x162xf32>
    tpu.vector_store %arg13[%c3_87, %c0_88], %184 {strides = array<i32>} : memref<14x162xf32, #tpu.memory_space<vmem>>, vector<1x162xf32>,
    %186 = vector.extract_strided_slice %157 {offsets = [8, 0], sizes = [1, 168], strides = [1, 1]} : vector<28x168xf32> to vector<1x168xf32>
    %187 = vector.extract_strided_slice %157 {offsets = [9, 0], sizes = [1, 168], strides = [1, 1]} : vector<28x168xf32> to vector<1x168xf32>
    %188 = arith.maximumf %186, %187 : vector<1x168xf32>
    %189 = vector.extract_strided_slice %188 {offsets = [0, 0], sizes = [1, 162], strides = [1, 1]} : vector<1x168xf32> to vector<1x162xf32>
    %190 = vector.extract_strided_slice %188 {offsets = [0, 6], sizes = [1, 162], strides = [1, 1]} : vector<1x168xf32> to vector<1x162xf32>
    %191 = arith.maximumf %189, %190 : vector<1x162xf32>
    %c4_89 = arith.constant 4 : index
    %c0_90 = arith.constant 0 : index
    %192 = vector.load %arg13[%c4_89, %c0_90] : memref<14x162xf32, #tpu.memory_space<vmem>>, vector<1x162xf32>
    tpu.vector_store %arg13[%c4_89, %c0_90], %191 {strides = array<i32>} : memref<14x162xf32, #tpu.memory_space<vmem>>, vector<1x162xf32>,
    %193 = vector.extract_strided_slice %157 {offsets = [10, 0], sizes = [1, 168], strides = [1, 1]} : vector<28x168xf32> to vector<1x168xf32>
    %194 = vector.extract_strided_slice %157 {offsets = [11, 0], sizes = [1, 168], strides = [1, 1]} : vector<28x168xf32> to vector<1x168xf32>
    %195 = arith.maximumf %193, %194 : vector<1x168xf32>
    %196 = vector.extract_strided_slice %195 {offsets = [0, 0], sizes = [1, 162], strides = [1, 1]} : vector<1x168xf32> to vector<1x162xf32>
    %197 = vector.extract_strided_slice %195 {offsets = [0, 6], sizes = [1, 162], strides = [1, 1]} : vector<1x168xf32> to vector<1x162xf32>
    %198 = arith.maximumf %196, %197 : vector<1x162xf32>
    %c5_91 = arith.constant 5 : index
    %c0_92 = arith.constant 0 : index
    %199 = vector.load %arg13[%c5_91, %c0_92] : memref<14x162xf32, #tpu.memory_space<vmem>>, vector<1x162xf32>
    tpu.vector_store %arg13[%c5_91, %c0_92], %198 {strides = array<i32>} : memref<14x162xf32, #tpu.memory_space<vmem>>, vector<1x162xf32>,
    %200 = vector.extract_strided_slice %157 {offsets = [12, 0], sizes = [1, 168], strides = [1, 1]} : vector<28x168xf32> to vector<1x168xf32>
    %201 = vector.extract_strided_slice %157 {offsets = [13, 0], sizes = [1, 168], strides = [1, 1]} : vector<28x168xf32> to vector<1x168xf32>
    %202 = arith.maximumf %200, %201 : vector<1x168xf32>
    %203 = vector.extract_strided_slice %202 {offsets = [0, 0], sizes = [1, 162], strides = [1, 1]} : vector<1x168xf32> to vector<1x162xf32>
    %204 = vector.extract_strided_slice %202 {offsets = [0, 6], sizes = [1, 162], strides = [1, 1]} : vector<1x168xf32> to vector<1x162xf32>
    %205 = arith.maximumf %203, %204 : vector<1x162xf32>
    %c6_93 = arith.constant 6 : index
    %c0_94 = arith.constant 0 : index
    %206 = vector.load %arg13[%c6_93, %c0_94] : memref<14x162xf32, #tpu.memory_space<vmem>>, vector<1x162xf32>
    tpu.vector_store %arg13[%c6_93, %c0_94], %205 {strides = array<i32>} : memref<14x162xf32, #tpu.memory_space<vmem>>, vector<1x162xf32>,
    %207 = vector.extract_strided_slice %157 {offsets = [14, 0], sizes = [1, 168], strides = [1, 1]} : vector<28x168xf32> to vector<1x168xf32>
    %208 = vector.extract_strided_slice %157 {offsets = [15, 0], sizes = [1, 168], strides = [1, 1]} : vector<28x168xf32> to vector<1x168xf32>
    %209 = arith.maximumf %207, %208 : vector<1x168xf32>
    %210 = vector.extract_strided_slice %209 {offsets = [0, 0], sizes = [1, 162], strides = [1, 1]} : vector<1x168xf32> to vector<1x162xf32>
    %211 = vector.extract_strided_slice %209 {offsets = [0, 6], sizes = [1, 162], strides = [1, 1]} : vector<1x168xf32> to vector<1x162xf32>
    %212 = arith.maximumf %210, %211 : vector<1x162xf32>
    %c7_95 = arith.constant 7 : index
    %c0_96 = arith.constant 0 : index
    %213 = vector.load %arg13[%c7_95, %c0_96] : memref<14x162xf32, #tpu.memory_space<vmem>>, vector<1x162xf32>
    tpu.vector_store %arg13[%c7_95, %c0_96], %212 {strides = array<i32>} : memref<14x162xf32, #tpu.memory_space<vmem>>, vector<1x162xf32>,
    %214 = vector.extract_strided_slice %157 {offsets = [16, 0], sizes = [1, 168], strides = [1, 1]} : vector<28x168xf32> to vector<1x168xf32>
    %215 = vector.extract_strided_slice %157 {offsets = [17, 0], sizes = [1, 168], strides = [1, 1]} : vector<28x168xf32> to vector<1x168xf32>
    %216 = arith.maximumf %214, %215 : vector<1x168xf32>
    %217 = vector.extract_strided_slice %216 {offsets = [0, 0], sizes = [1, 162], strides = [1, 1]} : vector<1x168xf32> to vector<1x162xf32>
    %218 = vector.extract_strided_slice %216 {offsets = [0, 6], sizes = [1, 162], strides = [1, 1]} : vector<1x168xf32> to vector<1x162xf32>
    %219 = arith.maximumf %217, %218 : vector<1x162xf32>
    %c8_97 = arith.constant 8 : index
    %c0_98 = arith.constant 0 : index
    %220 = vector.load %arg13[%c8_97, %c0_98] : memref<14x162xf32, #tpu.memory_space<vmem>>, vector<1x162xf32>
    tpu.vector_store %arg13[%c8_97, %c0_98], %219 {strides = array<i32>} : memref<14x162xf32, #tpu.memory_space<vmem>>, vector<1x162xf32>,
    %221 = vector.extract_strided_slice %157 {offsets = [18, 0], sizes = [1, 168], strides = [1, 1]} : vector<28x168xf32> to vector<1x168xf32>
    %222 = vector.extract_strided_slice %157 {offsets = [19, 0], sizes = [1, 168], strides = [1, 1]} : vector<28x168xf32> to vector<1x168xf32>
    %223 = arith.maximumf %221, %222 : vector<1x168xf32>
    %224 = vector.extract_strided_slice %223 {offsets = [0, 0], sizes = [1, 162], strides = [1, 1]} : vector<1x168xf32> to vector<1x162xf32>
    %225 = vector.extract_strided_slice %223 {offsets = [0, 6], sizes = [1, 162], strides = [1, 1]} : vector<1x168xf32> to vector<1x162xf32>
    %226 = arith.maximumf %224, %225 : vector<1x162xf32>
    %c9_99 = arith.constant 9 : index
    %c0_100 = arith.constant 0 : index
    %227 = vector.load %arg13[%c9_99, %c0_100] : memref<14x162xf32, #tpu.memory_space<vmem>>, vector<1x162xf32>
    tpu.vector_store %arg13[%c9_99, %c0_100], %226 {strides = array<i32>} : memref<14x162xf32, #tpu.memory_space<vmem>>, vector<1x162xf32>,
    %228 = vector.extract_strided_slice %157 {offsets = [20, 0], sizes = [1, 168], strides = [1, 1]} : vector<28x168xf32> to vector<1x168xf32>
    %229 = vector.extract_strided_slice %157 {offsets = [21, 0], sizes = [1, 168], strides = [1, 1]} : vector<28x168xf32> to vector<1x168xf32>
    %230 = arith.maximumf %228, %229 : vector<1x168xf32>
    %231 = vector.extract_strided_slice %230 {offsets = [0, 0], sizes = [1, 162], strides = [1, 1]} : vector<1x168xf32> to vector<1x162xf32>
    %232 = vector.extract_strided_slice %230 {offsets = [0, 6], sizes = [1, 162], strides = [1, 1]} : vector<1x168xf32> to vector<1x162xf32>
    %233 = arith.maximumf %231, %232 : vector<1x162xf32>
    %c10_101 = arith.constant 10 : index
    %c0_102 = arith.constant 0 : index
    %234 = vector.load %arg13[%c10_101, %c0_102] : memref<14x162xf32, #tpu.memory_space<vmem>>, vector<1x162xf32>
    tpu.vector_store %arg13[%c10_101, %c0_102], %233 {strides = array<i32>} : memref<14x162xf32, #tpu.memory_space<vmem>>, vector<1x162xf32>,
    %235 = vector.extract_strided_slice %157 {offsets = [22, 0], sizes = [1, 168], strides = [1, 1]} : vector<28x168xf32> to vector<1x168xf32>
    %236 = vector.extract_strided_slice %157 {offsets = [23, 0], sizes = [1, 168], strides = [1, 1]} : vector<28x168xf32> to vector<1x168xf32>
    %237 = arith.maximumf %235, %236 : vector<1x168xf32>
    %238 = vector.extract_strided_slice %237 {offsets = [0, 0], sizes = [1, 162], strides = [1, 1]} : vector<1x168xf32> to vector<1x162xf32>
    %239 = vector.extract_strided_slice %237 {offsets = [0, 6], sizes = [1, 162], strides = [1, 1]} : vector<1x168xf32> to vector<1x162xf32>
    %240 = arith.maximumf %238, %239 : vector<1x162xf32>
    %c11_103 = arith.constant 11 : index
    %c0_104 = arith.constant 0 : index
    %241 = vector.load %arg13[%c11_103, %c0_104] : memref<14x162xf32, #tpu.memory_space<vmem>>, vector<1x162xf32>
    tpu.vector_store %arg13[%c11_103, %c0_104], %240 {strides = array<i32>} : memref<14x162xf32, #tpu.memory_space<vmem>>, vector<1x162xf32>,
    %242 = vector.extract_strided_slice %157 {offsets = [24, 0], sizes = [1, 168], strides = [1, 1]} : vector<28x168xf32> to vector<1x168xf32>
    %243 = vector.extract_strided_slice %157 {offsets = [25, 0], sizes = [1, 168], strides = [1, 1]} : vector<28x168xf32> to vector<1x168xf32>
    %244 = arith.maximumf %242, %243 : vector<1x168xf32>
    %245 = vector.extract_strided_slice %244 {offsets = [0, 0], sizes = [1, 162], strides = [1, 1]} : vector<1x168xf32> to vector<1x162xf32>
    %246 = vector.extract_strided_slice %244 {offsets = [0, 6], sizes = [1, 162], strides = [1, 1]} : vector<1x168xf32> to vector<1x162xf32>
    %247 = arith.maximumf %245, %246 : vector<1x162xf32>
    %c12_105 = arith.constant 12 : index
    %c0_106 = arith.constant 0 : index
    %248 = vector.load %arg13[%c12_105, %c0_106] : memref<14x162xf32, #tpu.memory_space<vmem>>, vector<1x162xf32>
    tpu.vector_store %arg13[%c12_105, %c0_106], %247 {strides = array<i32>} : memref<14x162xf32, #tpu.memory_space<vmem>>, vector<1x162xf32>,
    %249 = vector.extract_strided_slice %157 {offsets = [26, 0], sizes = [1, 168], strides = [1, 1]} : vector<28x168xf32> to vector<1x168xf32>
    %250 = vector.extract_strided_slice %157 {offsets = [27, 0], sizes = [1, 168], strides = [1, 1]} : vector<28x168xf32> to vector<1x168xf32>
    %251 = arith.maximumf %249, %250 : vector<1x168xf32>
    %252 = vector.extract_strided_slice %251 {offsets = [0, 0], sizes = [1, 162], strides = [1, 1]} : vector<1x168xf32> to vector<1x162xf32>
    %253 = vector.extract_strided_slice %251 {offsets = [0, 6], sizes = [1, 162], strides = [1, 1]} : vector<1x168xf32> to vector<1x162xf32>
    %254 = arith.maximumf %252, %253 : vector<1x162xf32>
    %c13_107 = arith.constant 13 : index
    %c0_108 = arith.constant 0 : index
    %255 = vector.load %arg13[%c13_107, %c0_108] : memref<14x162xf32, #tpu.memory_space<vmem>>, vector<1x162xf32>
    tpu.vector_store %arg13[%c13_107, %c0_108], %254 {strides = array<i32>} : memref<14x162xf32, #tpu.memory_space<vmem>>, vector<1x162xf32>,
    %cst_109 = arith.constant 0.000000e+00 : f32
    %256 = vector.broadcast %cst_109 : f32 to vector<10x160xf32>
    %c0_110 = arith.constant 0 : index
    %c0_111 = arith.constant 0 : index
    %257 = vector.load %arg13[%c0_110, %c0_111] : memref<14x162xf32, #tpu.memory_space<vmem>>, vector<10x114xf32>
    %258 = arith.truncf %257 : vector<10x114xf32> to vector<10x114xbf16>
    %c0_112 = arith.constant 0 : index
    %c0_113 = arith.constant 0 : index
    %c0_114 = arith.constant 0 : index
    %259 = vector.load %arg4[%c0_112, %c0_113, %c0_114] : memref<25x114x160xbf16, #tpu.memory_space<vmem>>, vector<1x114x160xbf16>
    %260 = vector.shape_cast %259 : vector<1x114x160xbf16> to vector<114x160xbf16>
    %cst_115 = arith.constant dense<0.000000e+00> : vector<10x160xf32>
    %261 = tpu.matmul %258, %260, %cst_115 {dimension_numbers = #tpu.dot_dimension_numbers<[1], [0], [0], [1], [0, 0, 1, 1], [], []>} : vector<10x114xbf16>, vector<114x160xbf16>, vector<10x160xf32> -> vector<10x160xf32>
    %262 = arith.addf %256, %261 : vector<10x160xf32>
    %c0_116 = arith.constant 0 : index
    %c12_117 = arith.constant 12 : index
    %263 = vector.load %arg13[%c0_116, %c12_117] : memref<14x162xf32, #tpu.memory_space<vmem>>, vector<10x114xf32>
    %264 = arith.truncf %263 : vector<10x114xf32> to vector<10x114xbf16>
    %c1_118 = arith.constant 1 : index
    %c0_119 = arith.constant 0 : index
    %c0_120 = arith.constant 0 : index
    %265 = vector.load %arg4[%c1_118, %c0_119, %c0_120] : memref<25x114x160xbf16, #tpu.memory_space<vmem>>, vector<1x114x160xbf16>
    %266 = vector.shape_cast %265 : vector<1x114x160xbf16> to vector<114x160xbf16>
    %cst_121 = arith.constant dense<0.000000e+00> : vector<10x160xf32>
    %267 = tpu.matmul %264, %266, %cst_121 {dimension_numbers = #tpu.dot_dimension_numbers<[1], [0], [0], [1], [0, 0, 1, 1], [], []>} : vector<10x114xbf16>, vector<114x160xbf16>, vector<10x160xf32> -> vector<10x160xf32>
    %268 = arith.addf %262, %267 : vector<10x160xf32>
    %c0_122 = arith.constant 0 : index
    %c24_123 = arith.constant 24 : index
    %269 = vector.load %arg13[%c0_122, %c24_123] : memref<14x162xf32, #tpu.memory_space<vmem>>, vector<10x114xf32>
    %270 = arith.truncf %269 : vector<10x114xf32> to vector<10x114xbf16>
    %c2_124 = arith.constant 2 : index
    %c0_125 = arith.constant 0 : index
    %c0_126 = arith.constant 0 : index
    %271 = vector.load %arg4[%c2_124, %c0_125, %c0_126] : memref<25x114x160xbf16, #tpu.memory_space<vmem>>, vector<1x114x160xbf16>
    %272 = vector.shape_cast %271 : vector<1x114x160xbf16> to vector<114x160xbf16>
    %cst_127 = arith.constant dense<0.000000e+00> : vector<10x160xf32>
    %273 = tpu.matmul %270, %272, %cst_127 {dimension_numbers = #tpu.dot_dimension_numbers<[1], [0], [0], [1], [0, 0, 1, 1], [], []>} : vector<10x114xbf16>, vector<114x160xbf16>, vector<10x160xf32> -> vector<10x160xf32>
    %274 = arith.addf %268, %273 : vector<10x160xf32>
    %c0_128 = arith.constant 0 : index
    %c36 = arith.constant 36 : index
    %275 = vector.load %arg13[%c0_128, %c36] : memref<14x162xf32, #tpu.memory_space<vmem>>, vector<10x114xf32>
    %276 = arith.truncf %275 : vector<10x114xf32> to vector<10x114xbf16>
    %c3_129 = arith.constant 3 : index
    %c0_130 = arith.constant 0 : index
    %c0_131 = arith.constant 0 : index
    %277 = vector.load %arg4[%c3_129, %c0_130, %c0_131] : memref<25x114x160xbf16, #tpu.memory_space<vmem>>, vector<1x114x160xbf16>
    %278 = vector.shape_cast %277 : vector<1x114x160xbf16> to vector<114x160xbf16>
    %cst_132 = arith.constant dense<0.000000e+00> : vector<10x160xf32>
    %279 = tpu.matmul %276, %278, %cst_132 {dimension_numbers = #tpu.dot_dimension_numbers<[1], [0], [0], [1], [0, 0, 1, 1], [], []>} : vector<10x114xbf16>, vector<114x160xbf16>, vector<10x160xf32> -> vector<10x160xf32>
    %280 = arith.addf %274, %279 : vector<10x160xf32>
    %c0_133 = arith.constant 0 : index
    %c48 = arith.constant 48 : index
    %281 = vector.load %arg13[%c0_133, %c48] : memref<14x162xf32, #tpu.memory_space<vmem>>, vector<10x114xf32>
    %282 = arith.truncf %281 : vector<10x114xf32> to vector<10x114xbf16>
    %c4_134 = arith.constant 4 : index
    %c0_135 = arith.constant 0 : index
    %c0_136 = arith.constant 0 : index
    %283 = vector.load %arg4[%c4_134, %c0_135, %c0_136] : memref<25x114x160xbf16, #tpu.memory_space<vmem>>, vector<1x114x160xbf16>
    %284 = vector.shape_cast %283 : vector<1x114x160xbf16> to vector<114x160xbf16>
    %cst_137 = arith.constant dense<0.000000e+00> : vector<10x160xf32>
    %285 = tpu.matmul %282, %284, %cst_137 {dimension_numbers = #tpu.dot_dimension_numbers<[1], [0], [0], [1], [0, 0, 1, 1], [], []>} : vector<10x114xbf16>, vector<114x160xbf16>, vector<10x160xf32> -> vector<10x160xf32>
    %286 = arith.addf %280, %285 : vector<10x160xf32>
    %c1_138 = arith.constant 1 : index
    %c0_139 = arith.constant 0 : index
    %287 = vector.load %arg13[%c1_138, %c0_139] : memref<14x162xf32, #tpu.memory_space<vmem>>, vector<10x114xf32>
    %288 = arith.truncf %287 : vector<10x114xf32> to vector<10x114xbf16>
    %c5_140 = arith.constant 5 : index
    %c0_141 = arith.constant 0 : index
    %c0_142 = arith.constant 0 : index
    %289 = vector.load %arg4[%c5_140, %c0_141, %c0_142] : memref<25x114x160xbf16, #tpu.memory_space<vmem>>, vector<1x114x160xbf16>
    %290 = vector.shape_cast %289 : vector<1x114x160xbf16> to vector<114x160xbf16>
    %cst_143 = arith.constant dense<0.000000e+00> : vector<10x160xf32>
    %291 = tpu.matmul %288, %290, %cst_143 {dimension_numbers = #tpu.dot_dimension_numbers<[1], [0], [0], [1], [0, 0, 1, 1], [], []>} : vector<10x114xbf16>, vector<114x160xbf16>, vector<10x160xf32> -> vector<10x160xf32>
    %292 = arith.addf %286, %291 : vector<10x160xf32>
    %c1_144 = arith.constant 1 : index
    %c12_145 = arith.constant 12 : index
    %293 = vector.load %arg13[%c1_144, %c12_145] : memref<14x162xf32, #tpu.memory_space<vmem>>, vector<10x114xf32>
    %294 = arith.truncf %293 : vector<10x114xf32> to vector<10x114xbf16>
    %c6_146 = arith.constant 6 : index
    %c0_147 = arith.constant 0 : index
    %c0_148 = arith.constant 0 : index
    %295 = vector.load %arg4[%c6_146, %c0_147, %c0_148] : memref<25x114x160xbf16, #tpu.memory_space<vmem>>, vector<1x114x160xbf16>
    %296 = vector.shape_cast %295 : vector<1x114x160xbf16> to vector<114x160xbf16>
    %cst_149 = arith.constant dense<0.000000e+00> : vector<10x160xf32>
    %297 = tpu.matmul %294, %296, %cst_149 {dimension_numbers = #tpu.dot_dimension_numbers<[1], [0], [0], [1], [0, 0, 1, 1], [], []>} : vector<10x114xbf16>, vector<114x160xbf16>, vector<10x160xf32> -> vector<10x160xf32>
    %298 = arith.addf %292, %297 : vector<10x160xf32>
    %c1_150 = arith.constant 1 : index
    %c24_151 = arith.constant 24 : index
    %299 = vector.load %arg13[%c1_150, %c24_151] : memref<14x162xf32, #tpu.memory_space<vmem>>, vector<10x114xf32>
    %300 = arith.truncf %299 : vector<10x114xf32> to vector<10x114xbf16>
    %c7_152 = arith.constant 7 : index
    %c0_153 = arith.constant 0 : index
    %c0_154 = arith.constant 0 : index
    %301 = vector.load %arg4[%c7_152, %c0_153, %c0_154] : memref<25x114x160xbf16, #tpu.memory_space<vmem>>, vector<1x114x160xbf16>
    %302 = vector.shape_cast %301 : vector<1x114x160xbf16> to vector<114x160xbf16>
    %cst_155 = arith.constant dense<0.000000e+00> : vector<10x160xf32>
    %303 = tpu.matmul %300, %302, %cst_155 {dimension_numbers = #tpu.dot_dimension_numbers<[1], [0], [0], [1], [0, 0, 1, 1], [], []>} : vector<10x114xbf16>, vector<114x160xbf16>, vector<10x160xf32> -> vector<10x160xf32>
    %304 = arith.addf %298, %303 : vector<10x160xf32>
    %c1_156 = arith.constant 1 : index
    %c36_157 = arith.constant 36 : index
    %305 = vector.load %arg13[%c1_156, %c36_157] : memref<14x162xf32, #tpu.memory_space<vmem>>, vector<10x114xf32>
    %306 = arith.truncf %305 : vector<10x114xf32> to vector<10x114xbf16>
    %c8_158 = arith.constant 8 : index
    %c0_159 = arith.constant 0 : index
    %c0_160 = arith.constant 0 : index
    %307 = vector.load %arg4[%c8_158, %c0_159, %c0_160] : memref<25x114x160xbf16, #tpu.memory_space<vmem>>, vector<1x114x160xbf16>
    %308 = vector.shape_cast %307 : vector<1x114x160xbf16> to vector<114x160xbf16>
    %cst_161 = arith.constant dense<0.000000e+00> : vector<10x160xf32>
    %309 = tpu.matmul %306, %308, %cst_161 {dimension_numbers = #tpu.dot_dimension_numbers<[1], [0], [0], [1], [0, 0, 1, 1], [], []>} : vector<10x114xbf16>, vector<114x160xbf16>, vector<10x160xf32> -> vector<10x160xf32>
    %310 = arith.addf %304, %309 : vector<10x160xf32>
    %c1_162 = arith.constant 1 : index
    %c48_163 = arith.constant 48 : index
    %311 = vector.load %arg13[%c1_162, %c48_163] : memref<14x162xf32, #tpu.memory_space<vmem>>, vector<10x114xf32>
    %312 = arith.truncf %311 : vector<10x114xf32> to vector<10x114xbf16>
    %c9_164 = arith.constant 9 : index
    %c0_165 = arith.constant 0 : index
    %c0_166 = arith.constant 0 : index
    %313 = vector.load %arg4[%c9_164, %c0_165, %c0_166] : memref<25x114x160xbf16, #tpu.memory_space<vmem>>, vector<1x114x160xbf16>
    %314 = vector.shape_cast %313 : vector<1x114x160xbf16> to vector<114x160xbf16>
    %cst_167 = arith.constant dense<0.000000e+00> : vector<10x160xf32>
    %315 = tpu.matmul %312, %314, %cst_167 {dimension_numbers = #tpu.dot_dimension_numbers<[1], [0], [0], [1], [0, 0, 1, 1], [], []>} : vector<10x114xbf16>, vector<114x160xbf16>, vector<10x160xf32> -> vector<10x160xf32>
    %316 = arith.addf %310, %315 : vector<10x160xf32>
    %c2_168 = arith.constant 2 : index
    %c0_169 = arith.constant 0 : index
    %317 = vector.load %arg13[%c2_168, %c0_169] : memref<14x162xf32, #tpu.memory_space<vmem>>, vector<10x114xf32>
    %318 = arith.truncf %317 : vector<10x114xf32> to vector<10x114xbf16>
    %c10_170 = arith.constant 10 : index
    %c0_171 = arith.constant 0 : index
    %c0_172 = arith.constant 0 : index
    %319 = vector.load %arg4[%c10_170, %c0_171, %c0_172] : memref<25x114x160xbf16, #tpu.memory_space<vmem>>, vector<1x114x160xbf16>
    %320 = vector.shape_cast %319 : vector<1x114x160xbf16> to vector<114x160xbf16>
    %cst_173 = arith.constant dense<0.000000e+00> : vector<10x160xf32>
    %321 = tpu.matmul %318, %320, %cst_173 {dimension_numbers = #tpu.dot_dimension_numbers<[1], [0], [0], [1], [0, 0, 1, 1], [], []>} : vector<10x114xbf16>, vector<114x160xbf16>, vector<10x160xf32> -> vector<10x160xf32>
    %322 = arith.addf %316, %321 : vector<10x160xf32>
    %c2_174 = arith.constant 2 : index
    %c12_175 = arith.constant 12 : index
    %323 = vector.load %arg13[%c2_174, %c12_175] : memref<14x162xf32, #tpu.memory_space<vmem>>, vector<10x114xf32>
    %324 = arith.truncf %323 : vector<10x114xf32> to vector<10x114xbf16>
    %c11_176 = arith.constant 11 : index
    %c0_177 = arith.constant 0 : index
    %c0_178 = arith.constant 0 : index
    %325 = vector.load %arg4[%c11_176, %c0_177, %c0_178] : memref<25x114x160xbf16, #tpu.memory_space<vmem>>, vector<1x114x160xbf16>
    %326 = vector.shape_cast %325 : vector<1x114x160xbf16> to vector<114x160xbf16>
    %cst_179 = arith.constant dense<0.000000e+00> : vector<10x160xf32>
    %327 = tpu.matmul %324, %326, %cst_179 {dimension_numbers = #tpu.dot_dimension_numbers<[1], [0], [0], [1], [0, 0, 1, 1], [], []>} : vector<10x114xbf16>, vector<114x160xbf16>, vector<10x160xf32> -> vector<10x160xf32>
    %328 = arith.addf %322, %327 : vector<10x160xf32>
    %c2_180 = arith.constant 2 : index
    %c24_181 = arith.constant 24 : index
    %329 = vector.load %arg13[%c2_180, %c24_181] : memref<14x162xf32, #tpu.memory_space<vmem>>, vector<10x114xf32>
    %330 = arith.truncf %329 : vector<10x114xf32> to vector<10x114xbf16>
    %c12_182 = arith.constant 12 : index
    %c0_183 = arith.constant 0 : index
    %c0_184 = arith.constant 0 : index
    %331 = vector.load %arg4[%c12_182, %c0_183, %c0_184] : memref<25x114x160xbf16, #tpu.memory_space<vmem>>, vector<1x114x160xbf16>
    %332 = vector.shape_cast %331 : vector<1x114x160xbf16> to vector<114x160xbf16>
    %cst_185 = arith.constant dense<0.000000e+00> : vector<10x160xf32>
    %333 = tpu.matmul %330, %332, %cst_185 {dimension_numbers = #tpu.dot_dimension_numbers<[1], [0], [0], [1], [0, 0, 1, 1], [], []>} : vector<10x114xbf16>, vector<114x160xbf16>, vector<10x160xf32> -> vector<10x160xf32>
    %334 = arith.addf %328, %333 : vector<10x160xf32>
    %c2_186 = arith.constant 2 : index
    %c36_187 = arith.constant 36 : index
    %335 = vector.load %arg13[%c2_186, %c36_187] : memref<14x162xf32, #tpu.memory_space<vmem>>, vector<10x114xf32>
    %336 = arith.truncf %335 : vector<10x114xf32> to vector<10x114xbf16>
    %c13_188 = arith.constant 13 : index
    %c0_189 = arith.constant 0 : index
    %c0_190 = arith.constant 0 : index
    %337 = vector.load %arg4[%c13_188, %c0_189, %c0_190] : memref<25x114x160xbf16, #tpu.memory_space<vmem>>, vector<1x114x160xbf16>
    %338 = vector.shape_cast %337 : vector<1x114x160xbf16> to vector<114x160xbf16>
    %cst_191 = arith.constant dense<0.000000e+00> : vector<10x160xf32>
    %339 = tpu.matmul %336, %338, %cst_191 {dimension_numbers = #tpu.dot_dimension_numbers<[1], [0], [0], [1], [0, 0, 1, 1], [], []>} : vector<10x114xbf16>, vector<114x160xbf16>, vector<10x160xf32> -> vector<10x160xf32>
    %340 = arith.addf %334, %339 : vector<10x160xf32>
    %c2_192 = arith.constant 2 : index
    %c48_193 = arith.constant 48 : index
    %341 = vector.load %arg13[%c2_192, %c48_193] : memref<14x162xf32, #tpu.memory_space<vmem>>, vector<10x114xf32>
    %342 = arith.truncf %341 : vector<10x114xf32> to vector<10x114xbf16>
    %c14_194 = arith.constant 14 : index
    %c0_195 = arith.constant 0 : index
    %c0_196 = arith.constant 0 : index
    %343 = vector.load %arg4[%c14_194, %c0_195, %c0_196] : memref<25x114x160xbf16, #tpu.memory_space<vmem>>, vector<1x114x160xbf16>
    %344 = vector.shape_cast %343 : vector<1x114x160xbf16> to vector<114x160xbf16>
    %cst_197 = arith.constant dense<0.000000e+00> : vector<10x160xf32>
    %345 = tpu.matmul %342, %344, %cst_197 {dimension_numbers = #tpu.dot_dimension_numbers<[1], [0], [0], [1], [0, 0, 1, 1], [], []>} : vector<10x114xbf16>, vector<114x160xbf16>, vector<10x160xf32> -> vector<10x160xf32>
    %346 = arith.addf %340, %345 : vector<10x160xf32>
    %c3_198 = arith.constant 3 : index
    %c0_199 = arith.constant 0 : index
    %347 = vector.load %arg13[%c3_198, %c0_199] : memref<14x162xf32, #tpu.memory_space<vmem>>, vector<10x114xf32>
    %348 = arith.truncf %347 : vector<10x114xf32> to vector<10x114xbf16>
    %c15_200 = arith.constant 15 : index
    %c0_201 = arith.constant 0 : index
    %c0_202 = arith.constant 0 : index
    %349 = vector.load %arg4[%c15_200, %c0_201, %c0_202] : memref<25x114x160xbf16, #tpu.memory_space<vmem>>, vector<1x114x160xbf16>
    %350 = vector.shape_cast %349 : vector<1x114x160xbf16> to vector<114x160xbf16>
    %cst_203 = arith.constant dense<0.000000e+00> : vector<10x160xf32>
    %351 = tpu.matmul %348, %350, %cst_203 {dimension_numbers = #tpu.dot_dimension_numbers<[1], [0], [0], [1], [0, 0, 1, 1], [], []>} : vector<10x114xbf16>, vector<114x160xbf16>, vector<10x160xf32> -> vector<10x160xf32>
    %352 = arith.addf %346, %351 : vector<10x160xf32>
    %c3_204 = arith.constant 3 : index
    %c12_205 = arith.constant 12 : index
    %353 = vector.load %arg13[%c3_204, %c12_205] : memref<14x162xf32, #tpu.memory_space<vmem>>, vector<10x114xf32>
    %354 = arith.truncf %353 : vector<10x114xf32> to vector<10x114xbf16>
    %c16_206 = arith.constant 16 : index
    %c0_207 = arith.constant 0 : index
    %c0_208 = arith.constant 0 : index
    %355 = vector.load %arg4[%c16_206, %c0_207, %c0_208] : memref<25x114x160xbf16, #tpu.memory_space<vmem>>, vector<1x114x160xbf16>
    %356 = vector.shape_cast %355 : vector<1x114x160xbf16> to vector<114x160xbf16>
    %cst_209 = arith.constant dense<0.000000e+00> : vector<10x160xf32>
    %357 = tpu.matmul %354, %356, %cst_209 {dimension_numbers = #tpu.dot_dimension_numbers<[1], [0], [0], [1], [0, 0, 1, 1], [], []>} : vector<10x114xbf16>, vector<114x160xbf16>, vector<10x160xf32> -> vector<10x160xf32>
    %358 = arith.addf %352, %357 : vector<10x160xf32>
    %c3_210 = arith.constant 3 : index
    %c24_211 = arith.constant 24 : index
    %359 = vector.load %arg13[%c3_210, %c24_211] : memref<14x162xf32, #tpu.memory_space<vmem>>, vector<10x114xf32>
    %360 = arith.truncf %359 : vector<10x114xf32> to vector<10x114xbf16>
    %c17_212 = arith.constant 17 : index
    %c0_213 = arith.constant 0 : index
    %c0_214 = arith.constant 0 : index
    %361 = vector.load %arg4[%c17_212, %c0_213, %c0_214] : memref<25x114x160xbf16, #tpu.memory_space<vmem>>, vector<1x114x160xbf16>
    %362 = vector.shape_cast %361 : vector<1x114x160xbf16> to vector<114x160xbf16>
    %cst_215 = arith.constant dense<0.000000e+00> : vector<10x160xf32>
    %363 = tpu.matmul %360, %362, %cst_215 {dimension_numbers = #tpu.dot_dimension_numbers<[1], [0], [0], [1], [0, 0, 1, 1], [], []>} : vector<10x114xbf16>, vector<114x160xbf16>, vector<10x160xf32> -> vector<10x160xf32>
    %364 = arith.addf %358, %363 : vector<10x160xf32>
    %c3_216 = arith.constant 3 : index
    %c36_217 = arith.constant 36 : index
    %365 = vector.load %arg13[%c3_216, %c36_217] : memref<14x162xf32, #tpu.memory_space<vmem>>, vector<10x114xf32>
    %366 = arith.truncf %365 : vector<10x114xf32> to vector<10x114xbf16>
    %c18_218 = arith.constant 18 : index
    %c0_219 = arith.constant 0 : index
    %c0_220 = arith.constant 0 : index
    %367 = vector.load %arg4[%c18_218, %c0_219, %c0_220] : memref<25x114x160xbf16, #tpu.memory_space<vmem>>, vector<1x114x160xbf16>
    %368 = vector.shape_cast %367 : vector<1x114x160xbf16> to vector<114x160xbf16>
    %cst_221 = arith.constant dense<0.000000e+00> : vector<10x160xf32>
    %369 = tpu.matmul %366, %368, %cst_221 {dimension_numbers = #tpu.dot_dimension_numbers<[1], [0], [0], [1], [0, 0, 1, 1], [], []>} : vector<10x114xbf16>, vector<114x160xbf16>, vector<10x160xf32> -> vector<10x160xf32>
    %370 = arith.addf %364, %369 : vector<10x160xf32>
    %c3_222 = arith.constant 3 : index
    %c48_223 = arith.constant 48 : index
    %371 = vector.load %arg13[%c3_222, %c48_223] : memref<14x162xf32, #tpu.memory_space<vmem>>, vector<10x114xf32>
    %372 = arith.truncf %371 : vector<10x114xf32> to vector<10x114xbf16>
    %c19_224 = arith.constant 19 : index
    %c0_225 = arith.constant 0 : index
    %c0_226 = arith.constant 0 : index
    %373 = vector.load %arg4[%c19_224, %c0_225, %c0_226] : memref<25x114x160xbf16, #tpu.memory_space<vmem>>, vector<1x114x160xbf16>
    %374 = vector.shape_cast %373 : vector<1x114x160xbf16> to vector<114x160xbf16>
    %cst_227 = arith.constant dense<0.000000e+00> : vector<10x160xf32>
    %375 = tpu.matmul %372, %374, %cst_227 {dimension_numbers = #tpu.dot_dimension_numbers<[1], [0], [0], [1], [0, 0, 1, 1], [], []>} : vector<10x114xbf16>, vector<114x160xbf16>, vector<10x160xf32> -> vector<10x160xf32>
    %376 = arith.addf %370, %375 : vector<10x160xf32>
    %c4_228 = arith.constant 4 : index
    %c0_229 = arith.constant 0 : index
    %377 = vector.load %arg13[%c4_228, %c0_229] : memref<14x162xf32, #tpu.memory_space<vmem>>, vector<10x114xf32>
    %378 = arith.truncf %377 : vector<10x114xf32> to vector<10x114xbf16>
    %c20_230 = arith.constant 20 : index
    %c0_231 = arith.constant 0 : index
    %c0_232 = arith.constant 0 : index
    %379 = vector.load %arg4[%c20_230, %c0_231, %c0_232] : memref<25x114x160xbf16, #tpu.memory_space<vmem>>, vector<1x114x160xbf16>
    %380 = vector.shape_cast %379 : vector<1x114x160xbf16> to vector<114x160xbf16>
    %cst_233 = arith.constant dense<0.000000e+00> : vector<10x160xf32>
    %381 = tpu.matmul %378, %380, %cst_233 {dimension_numbers = #tpu.dot_dimension_numbers<[1], [0], [0], [1], [0, 0, 1, 1], [], []>} : vector<10x114xbf16>, vector<114x160xbf16>, vector<10x160xf32> -> vector<10x160xf32>
    %382 = arith.addf %376, %381 : vector<10x160xf32>
    %c4_234 = arith.constant 4 : index
    %c12_235 = arith.constant 12 : index
    %383 = vector.load %arg13[%c4_234, %c12_235] : memref<14x162xf32, #tpu.memory_space<vmem>>, vector<10x114xf32>
    %384 = arith.truncf %383 : vector<10x114xf32> to vector<10x114xbf16>
    %c21_236 = arith.constant 21 : index
    %c0_237 = arith.constant 0 : index
    %c0_238 = arith.constant 0 : index
    %385 = vector.load %arg4[%c21_236, %c0_237, %c0_238] : memref<25x114x160xbf16, #tpu.memory_space<vmem>>, vector<1x114x160xbf16>
    %386 = vector.shape_cast %385 : vector<1x114x160xbf16> to vector<114x160xbf16>
    %cst_239 = arith.constant dense<0.000000e+00> : vector<10x160xf32>
    %387 = tpu.matmul %384, %386, %cst_239 {dimension_numbers = #tpu.dot_dimension_numbers<[1], [0], [0], [1], [0, 0, 1, 1], [], []>} : vector<10x114xbf16>, vector<114x160xbf16>, vector<10x160xf32> -> vector<10x160xf32>
    %388 = arith.addf %382, %387 : vector<10x160xf32>
    %c4_240 = arith.constant 4 : index
    %c24_241 = arith.constant 24 : index
    %389 = vector.load %arg13[%c4_240, %c24_241] : memref<14x162xf32, #tpu.memory_space<vmem>>, vector<10x114xf32>
    %390 = arith.truncf %389 : vector<10x114xf32> to vector<10x114xbf16>
    %c22_242 = arith.constant 22 : index
    %c0_243 = arith.constant 0 : index
    %c0_244 = arith.constant 0 : index
    %391 = vector.load %arg4[%c22_242, %c0_243, %c0_244] : memref<25x114x160xbf16, #tpu.memory_space<vmem>>, vector<1x114x160xbf16>
    %392 = vector.shape_cast %391 : vector<1x114x160xbf16> to vector<114x160xbf16>
    %cst_245 = arith.constant dense<0.000000e+00> : vector<10x160xf32>
    %393 = tpu.matmul %390, %392, %cst_245 {dimension_numbers = #tpu.dot_dimension_numbers<[1], [0], [0], [1], [0, 0, 1, 1], [], []>} : vector<10x114xbf16>, vector<114x160xbf16>, vector<10x160xf32> -> vector<10x160xf32>
    %394 = arith.addf %388, %393 : vector<10x160xf32>
    %c4_246 = arith.constant 4 : index
    %c36_247 = arith.constant 36 : index
    %395 = vector.load %arg13[%c4_246, %c36_247] : memref<14x162xf32, #tpu.memory_space<vmem>>, vector<10x114xf32>
    %396 = arith.truncf %395 : vector<10x114xf32> to vector<10x114xbf16>
    %c23_248 = arith.constant 23 : index
    %c0_249 = arith.constant 0 : index
    %c0_250 = arith.constant 0 : index
    %397 = vector.load %arg4[%c23_248, %c0_249, %c0_250] : memref<25x114x160xbf16, #tpu.memory_space<vmem>>, vector<1x114x160xbf16>
    %398 = vector.shape_cast %397 : vector<1x114x160xbf16> to vector<114x160xbf16>
    %cst_251 = arith.constant dense<0.000000e+00> : vector<10x160xf32>
    %399 = tpu.matmul %396, %398, %cst_251 {dimension_numbers = #tpu.dot_dimension_numbers<[1], [0], [0], [1], [0, 0, 1, 1], [], []>} : vector<10x114xbf16>, vector<114x160xbf16>, vector<10x160xf32> -> vector<10x160xf32>
    %400 = arith.addf %394, %399 : vector<10x160xf32>
    %c4_252 = arith.constant 4 : index
    %c48_253 = arith.constant 48 : index
    %401 = vector.load %arg13[%c4_252, %c48_253] : memref<14x162xf32, #tpu.memory_space<vmem>>, vector<10x114xf32>
    %402 = arith.truncf %401 : vector<10x114xf32> to vector<10x114xbf16>
    %c24_254 = arith.constant 24 : index
    %c0_255 = arith.constant 0 : index
    %c0_256 = arith.constant 0 : index
    %403 = vector.load %arg4[%c24_254, %c0_255, %c0_256] : memref<25x114x160xbf16, #tpu.memory_space<vmem>>, vector<1x114x160xbf16>
    %404 = vector.shape_cast %403 : vector<1x114x160xbf16> to vector<114x160xbf16>
    %cst_257 = arith.constant dense<0.000000e+00> : vector<10x160xf32>
    %405 = tpu.matmul %402, %404, %cst_257 {dimension_numbers = #tpu.dot_dimension_numbers<[1], [0], [0], [1], [0, 0, 1, 1], [], []>} : vector<10x114xbf16>, vector<114x160xbf16>, vector<10x160xf32> -> vector<10x160xf32>
    %406 = arith.addf %400, %405 : vector<10x160xf32>
    %c0_258 = arith.constant 0 : index
    %c0_259 = arith.constant 0 : index
    %407 = vector.load %arg5[%c0_258, %c0_259] : memref<1x160xf32, #tpu.memory_space<vmem>>, vector<1x160xf32>
    %408 = vector.broadcast %407 : vector<1x160xf32> to vector<10x160xf32>
    %409 = arith.addf %406, %408 : vector<10x160xf32>
    %cst_260 = arith.constant 0.000000e+00 : f32
    %410 = vector.broadcast %cst_260 : f32 to vector<10x160xf32>
    %411 = arith.maximumf %409, %410 : vector<10x160xf32>
    %412 = vector.extract_strided_slice %411 {offsets = [0, 0], sizes = [1, 160], strides = [1, 1]} : vector<10x160xf32> to vector<1x160xf32>
    %413 = vector.extract_strided_slice %411 {offsets = [1, 0], sizes = [1, 160], strides = [1, 1]} : vector<10x160xf32> to vector<1x160xf32>
    %414 = arith.maximumf %412, %413 : vector<1x160xf32>
    %415 = vector.extract_strided_slice %414 {offsets = [0, 0], sizes = [1, 144], strides = [1, 1]} : vector<1x160xf32> to vector<1x144xf32>
    %416 = vector.extract_strided_slice %414 {offsets = [0, 16], sizes = [1, 144], strides = [1, 1]} : vector<1x160xf32> to vector<1x144xf32>
    %417 = arith.maximumf %415, %416 : vector<1x144xf32>
    %c0_261 = arith.constant 0 : index
    %c0_262 = arith.constant 0 : index
    %418 = vector.load %arg14[%c0_261, %c0_262] : memref<5x144xf32, #tpu.memory_space<vmem>>, vector<1x144xf32>
    tpu.vector_store %arg14[%c0_261, %c0_262], %417 {strides = array<i32>} : memref<5x144xf32, #tpu.memory_space<vmem>>, vector<1x144xf32>,
    %419 = vector.extract_strided_slice %411 {offsets = [2, 0], sizes = [1, 160], strides = [1, 1]} : vector<10x160xf32> to vector<1x160xf32>
    %420 = vector.extract_strided_slice %411 {offsets = [3, 0], sizes = [1, 160], strides = [1, 1]} : vector<10x160xf32> to vector<1x160xf32>
    %421 = arith.maximumf %419, %420 : vector<1x160xf32>
    %422 = vector.extract_strided_slice %421 {offsets = [0, 0], sizes = [1, 144], strides = [1, 1]} : vector<1x160xf32> to vector<1x144xf32>
    %423 = vector.extract_strided_slice %421 {offsets = [0, 16], sizes = [1, 144], strides = [1, 1]} : vector<1x160xf32> to vector<1x144xf32>
    %424 = arith.maximumf %422, %423 : vector<1x144xf32>
    %c1_263 = arith.constant 1 : index
    %c0_264 = arith.constant 0 : index
    %425 = vector.load %arg14[%c1_263, %c0_264] : memref<5x144xf32, #tpu.memory_space<vmem>>, vector<1x144xf32>
    tpu.vector_store %arg14[%c1_263, %c0_264], %424 {strides = array<i32>} : memref<5x144xf32, #tpu.memory_space<vmem>>, vector<1x144xf32>,
    %426 = vector.extract_strided_slice %411 {offsets = [4, 0], sizes = [1, 160], strides = [1, 1]} : vector<10x160xf32> to vector<1x160xf32>
    %427 = vector.extract_strided_slice %411 {offsets = [5, 0], sizes = [1, 160], strides = [1, 1]} : vector<10x160xf32> to vector<1x160xf32>
    %428 = arith.maximumf %426, %427 : vector<1x160xf32>
    %429 = vector.extract_strided_slice %428 {offsets = [0, 0], sizes = [1, 144], strides = [1, 1]} : vector<1x160xf32> to vector<1x144xf32>
    %430 = vector.extract_strided_slice %428 {offsets = [0, 16], sizes = [1, 144], strides = [1, 1]} : vector<1x160xf32> to vector<1x144xf32>
    %431 = arith.maximumf %429, %430 : vector<1x144xf32>
    %c2_265 = arith.constant 2 : index
    %c0_266 = arith.constant 0 : index
    %432 = vector.load %arg14[%c2_265, %c0_266] : memref<5x144xf32, #tpu.memory_space<vmem>>, vector<1x144xf32>
    tpu.vector_store %arg14[%c2_265, %c0_266], %431 {strides = array<i32>} : memref<5x144xf32, #tpu.memory_space<vmem>>, vector<1x144xf32>,
    %433 = vector.extract_strided_slice %411 {offsets = [6, 0], sizes = [1, 160], strides = [1, 1]} : vector<10x160xf32> to vector<1x160xf32>
    %434 = vector.extract_strided_slice %411 {offsets = [7, 0], sizes = [1, 160], strides = [1, 1]} : vector<10x160xf32> to vector<1x160xf32>
    %435 = arith.maximumf %433, %434 : vector<1x160xf32>
    %436 = vector.extract_strided_slice %435 {offsets = [0, 0], sizes = [1, 144], strides = [1, 1]} : vector<1x160xf32> to vector<1x144xf32>
    %437 = vector.extract_strided_slice %435 {offsets = [0, 16], sizes = [1, 144], strides = [1, 1]} : vector<1x160xf32> to vector<1x144xf32>
    %438 = arith.maximumf %436, %437 : vector<1x144xf32>
    %c3_267 = arith.constant 3 : index
    %c0_268 = arith.constant 0 : index
    %439 = vector.load %arg14[%c3_267, %c0_268] : memref<5x144xf32, #tpu.memory_space<vmem>>, vector<1x144xf32>
    tpu.vector_store %arg14[%c3_267, %c0_268], %438 {strides = array<i32>} : memref<5x144xf32, #tpu.memory_space<vmem>>, vector<1x144xf32>,
    %440 = vector.extract_strided_slice %411 {offsets = [8, 0], sizes = [1, 160], strides = [1, 1]} : vector<10x160xf32> to vector<1x160xf32>
    %441 = vector.extract_strided_slice %411 {offsets = [9, 0], sizes = [1, 160], strides = [1, 1]} : vector<10x160xf32> to vector<1x160xf32>
    %442 = arith.maximumf %440, %441 : vector<1x160xf32>
    %443 = vector.extract_strided_slice %442 {offsets = [0, 0], sizes = [1, 144], strides = [1, 1]} : vector<1x160xf32> to vector<1x144xf32>
    %444 = vector.extract_strided_slice %442 {offsets = [0, 16], sizes = [1, 144], strides = [1, 1]} : vector<1x160xf32> to vector<1x144xf32>
    %445 = arith.maximumf %443, %444 : vector<1x144xf32>
    %c4_269 = arith.constant 4 : index
    %c0_270 = arith.constant 0 : index
    %446 = vector.load %arg14[%c4_269, %c0_270] : memref<5x144xf32, #tpu.memory_space<vmem>>, vector<1x144xf32>
    tpu.vector_store %arg14[%c4_269, %c0_270], %445 {strides = array<i32>} : memref<5x144xf32, #tpu.memory_space<vmem>>, vector<1x144xf32>,
    %cst_271 = arith.constant 0.000000e+00 : f32
    %447 = vector.broadcast %cst_271 : f32 to vector<1x120xf32>
    %c0_272 = arith.constant 0 : index
    %c0_273 = arith.constant 0 : index
    %448 = vector.load %arg14[%c0_272, %c0_273] : memref<5x144xf32, #tpu.memory_space<vmem>>, vector<1x144xf32>
    %449 = arith.truncf %448 : vector<1x144xf32> to vector<1x144xbf16>
    %c0_274 = arith.constant 0 : index
    %c0_275 = arith.constant 0 : index
    %c0_276 = arith.constant 0 : index
    %450 = vector.load %arg6[%c0_274, %c0_275, %c0_276] : memref<5x144x120xbf16, #tpu.memory_space<vmem>>, vector<1x144x120xbf16>
    %451 = vector.shape_cast %450 : vector<1x144x120xbf16> to vector<144x120xbf16>
    %cst_277 = arith.constant dense<0.000000e+00> : vector<1x120xf32>
    %452 = tpu.matmul %449, %451, %cst_277 {dimension_numbers = #tpu.dot_dimension_numbers<[1], [0], [0], [1], [0, 0, 1, 1], [], []>} : vector<1x144xbf16>, vector<144x120xbf16>, vector<1x120xf32> -> vector<1x120xf32>
    %453 = arith.addf %447, %452 : vector<1x120xf32>
    %c1_278 = arith.constant 1 : index
    %c0_279 = arith.constant 0 : index
    %454 = vector.load %arg14[%c1_278, %c0_279] : memref<5x144xf32, #tpu.memory_space<vmem>>, vector<1x144xf32>
    %455 = arith.truncf %454 : vector<1x144xf32> to vector<1x144xbf16>
    %c1_280 = arith.constant 1 : index
    %c0_281 = arith.constant 0 : index
    %c0_282 = arith.constant 0 : index
    %456 = vector.load %arg6[%c1_280, %c0_281, %c0_282] : memref<5x144x120xbf16, #tpu.memory_space<vmem>>, vector<1x144x120xbf16>
    %457 = vector.shape_cast %456 : vector<1x144x120xbf16> to vector<144x120xbf16>
    %cst_283 = arith.constant dense<0.000000e+00> : vector<1x120xf32>
    %458 = tpu.matmul %455, %457, %cst_283 {dimension_numbers = #tpu.dot_dimension_numbers<[1], [0], [0], [1], [0, 0, 1, 1], [], []>} : vector<1x144xbf16>, vector<144x120xbf16>, vector<1x120xf32> -> vector<1x120xf32>
    %459 = arith.addf %453, %458 : vector<1x120xf32>
    %c2_284 = arith.constant 2 : index
    %c0_285 = arith.constant 0 : index
    %460 = vector.load %arg14[%c2_284, %c0_285] : memref<5x144xf32, #tpu.memory_space<vmem>>, vector<1x144xf32>
    %461 = arith.truncf %460 : vector<1x144xf32> to vector<1x144xbf16>
    %c2_286 = arith.constant 2 : index
    %c0_287 = arith.constant 0 : index
    %c0_288 = arith.constant 0 : index
    %462 = vector.load %arg6[%c2_286, %c0_287, %c0_288] : memref<5x144x120xbf16, #tpu.memory_space<vmem>>, vector<1x144x120xbf16>
    %463 = vector.shape_cast %462 : vector<1x144x120xbf16> to vector<144x120xbf16>
    %cst_289 = arith.constant dense<0.000000e+00> : vector<1x120xf32>
    %464 = tpu.matmul %461, %463, %cst_289 {dimension_numbers = #tpu.dot_dimension_numbers<[1], [0], [0], [1], [0, 0, 1, 1], [], []>} : vector<1x144xbf16>, vector<144x120xbf16>, vector<1x120xf32> -> vector<1x120xf32>
    %465 = arith.addf %459, %464 : vector<1x120xf32>
    %c3_290 = arith.constant 3 : index
    %c0_291 = arith.constant 0 : index
    %466 = vector.load %arg14[%c3_290, %c0_291] : memref<5x144xf32, #tpu.memory_space<vmem>>, vector<1x144xf32>
    %467 = arith.truncf %466 : vector<1x144xf32> to vector<1x144xbf16>
    %c3_292 = arith.constant 3 : index
    %c0_293 = arith.constant 0 : index
    %c0_294 = arith.constant 0 : index
    %468 = vector.load %arg6[%c3_292, %c0_293, %c0_294] : memref<5x144x120xbf16, #tpu.memory_space<vmem>>, vector<1x144x120xbf16>
    %469 = vector.shape_cast %468 : vector<1x144x120xbf16> to vector<144x120xbf16>
    %cst_295 = arith.constant dense<0.000000e+00> : vector<1x120xf32>
    %470 = tpu.matmul %467, %469, %cst_295 {dimension_numbers = #tpu.dot_dimension_numbers<[1], [0], [0], [1], [0, 0, 1, 1], [], []>} : vector<1x144xbf16>, vector<144x120xbf16>, vector<1x120xf32> -> vector<1x120xf32>
    %471 = arith.addf %465, %470 : vector<1x120xf32>
    %c4_296 = arith.constant 4 : index
    %c0_297 = arith.constant 0 : index
    %472 = vector.load %arg14[%c4_296, %c0_297] : memref<5x144xf32, #tpu.memory_space<vmem>>, vector<1x144xf32>
    %473 = arith.truncf %472 : vector<1x144xf32> to vector<1x144xbf16>
    %c4_298 = arith.constant 4 : index
    %c0_299 = arith.constant 0 : index
    %c0_300 = arith.constant 0 : index
    %474 = vector.load %arg6[%c4_298, %c0_299, %c0_300] : memref<5x144x120xbf16, #tpu.memory_space<vmem>>, vector<1x144x120xbf16>
    %475 = vector.shape_cast %474 : vector<1x144x120xbf16> to vector<144x120xbf16>
    %cst_301 = arith.constant dense<0.000000e+00> : vector<1x120xf32>
    %476 = tpu.matmul %473, %475, %cst_301 {dimension_numbers = #tpu.dot_dimension_numbers<[1], [0], [0], [1], [0, 0, 1, 1], [], []>} : vector<1x144xbf16>, vector<144x120xbf16>, vector<1x120xf32> -> vector<1x120xf32>
    %477 = arith.addf %471, %476 : vector<1x120xf32>
    %c0_302 = arith.constant 0 : index
    %c0_303 = arith.constant 0 : index
    %478 = vector.load %arg7[%c0_302, %c0_303] : memref<1x120xf32, #tpu.memory_space<vmem>>, vector<1x120xf32>
    %479 = arith.addf %477, %478 : vector<1x120xf32>
    %cst_304 = arith.constant 0.000000e+00 : f32
    %480 = vector.broadcast %cst_304 : f32 to vector<1x120xf32>
    %481 = arith.maximumf %479, %480 : vector<1x120xf32>
    %482 = arith.truncf %481 : vector<1x120xf32> to vector<1x120xbf16>
    %c0_305 = arith.constant 0 : index
    %c0_306 = arith.constant 0 : index
    %483 = vector.load %arg8[%c0_305, %c0_306] : memref<120x84xbf16, #tpu.memory_space<vmem>>, vector<120x84xbf16>
    %cst_307 = arith.constant dense<0.000000e+00> : vector<1x84xf32>
    %484 = tpu.matmul %482, %483, %cst_307 {dimension_numbers = #tpu.dot_dimension_numbers<[1], [0], [0], [1], [0, 0, 1, 1], [], []>} : vector<1x120xbf16>, vector<120x84xbf16>, vector<1x84xf32> -> vector<1x84xf32>
    %c0_308 = arith.constant 0 : index
    %c0_309 = arith.constant 0 : index
    %485 = vector.load %arg9[%c0_308, %c0_309] : memref<1x84xf32, #tpu.memory_space<vmem>>, vector<1x84xf32>
    %486 = arith.addf %484, %485 : vector<1x84xf32>
    %cst_310 = arith.constant 0.000000e+00 : f32
    %487 = vector.broadcast %cst_310 : f32 to vector<1x84xf32>
    %488 = arith.maximumf %486, %487 : vector<1x84xf32>
    %489 = arith.truncf %488 : vector<1x84xf32> to vector<1x84xbf16>
    %c0_311 = arith.constant 0 : index
    %c0_312 = arith.constant 0 : index
    %490 = vector.load %arg10[%c0_311, %c0_312] : memref<84x10xbf16, #tpu.memory_space<vmem>>, vector<84x10xbf16>
    %cst_313 = arith.constant dense<0.000000e+00> : vector<1x10xf32>
    %491 = tpu.matmul %489, %490, %cst_313 {dimension_numbers = #tpu.dot_dimension_numbers<[1], [0], [0], [1], [0, 0, 1, 1], [], []>} : vector<1x84xbf16>, vector<84x10xbf16>, vector<1x10xf32> -> vector<1x10xf32>
    %c0_314 = arith.constant 0 : index
    %c0_315 = arith.constant 0 : index
    %492 = vector.load %arg11[%c0_314, %c0_315] : memref<1x10xf32, #tpu.memory_space<vmem>>, vector<1x10xf32>
    %493 = arith.addf %491, %492 : vector<1x10xf32>
    %c0_316 = arith.constant 0 : index
    %c0_317 = arith.constant 0 : index
    %c0_318 = arith.constant 0 : index
    %494 = vector.load %arg12[%c0_316, %c0_317, %c0_318] : memref<1x1x10xf32, #tpu.memory_space<vmem>>, vector<1x1x10xf32>
    %495 = vector.shape_cast %494 : vector<1x1x10xf32> to vector<1x10xf32>
    %496 = vector.shape_cast %493 : vector<1x10xf32> to vector<1x1x10xf32>
    tpu.vector_store %arg12[%c0_316, %c0_317, %c0_318], %496 {strides = array<i32>} : memref<1x1x10xf32, #tpu.memory_space<vmem>>, vector<1x1x10xf32>,
    return
  }
  func.func @transform_0(%arg0: i32) -> (i32, i32, i32) {
    %c0_i32 = arith.constant 0 : i32
    %c0_i32_0 = arith.constant 0 : i32
    %c0_i32_1 = arith.constant 0 : i32
    return %arg0, %c0_i32, %c0_i32_0 : i32, i32, i32
  }
  func.func @transform_1(%arg0: i32) -> (i32, i32, i32) {
    %c0_i32 = arith.constant 0 : i32
    %c0_i32_0 = arith.constant 0 : i32
    %c0_i32_1 = arith.constant 0 : i32
    %c0_i32_2 = arith.constant 0 : i32
    return %c0_i32, %c0_i32_0, %c0_i32_1 : i32, i32, i32
  }
  func.func @transform_2(%arg0: i32) -> (i32, i32) {
    %c0_i32 = arith.constant 0 : i32
    %c0_i32_0 = arith.constant 0 : i32
    %c0_i32_1 = arith.constant 0 : i32
    return %c0_i32, %c0_i32_0 : i32, i32
  }
  func.func @transform_3(%arg0: i32) -> (i32, i32, i32) {
    %c0_i32 = arith.constant 0 : i32
    %c0_i32_0 = arith.constant 0 : i32
    %c0_i32_1 = arith.constant 0 : i32
    %c0_i32_2 = arith.constant 0 : i32
    return %c0_i32, %c0_i32_0, %c0_i32_1 : i32, i32, i32
  }
  func.func @transform_4(%arg0: i32) -> (i32, i32) {
    %c0_i32 = arith.constant 0 : i32
    %c0_i32_0 = arith.constant 0 : i32
    %c0_i32_1 = arith.constant 0 : i32
    return %c0_i32, %c0_i32_0 : i32, i32
  }
  func.func @transform_5(%arg0: i32) -> (i32, i32, i32) {
    %c0_i32 = arith.constant 0 : i32
    %c0_i32_0 = arith.constant 0 : i32
    %c0_i32_1 = arith.constant 0 : i32
    %c0_i32_2 = arith.constant 0 : i32
    return %c0_i32, %c0_i32_0, %c0_i32_1 : i32, i32, i32
  }
  func.func @transform_6(%arg0: i32) -> (i32, i32) {
    %c0_i32 = arith.constant 0 : i32
    %c0_i32_0 = arith.constant 0 : i32
    %c0_i32_1 = arith.constant 0 : i32
    return %c0_i32, %c0_i32_0 : i32, i32
  }
  func.func @transform_7(%arg0: i32) -> (i32, i32) {
    %c0_i32 = arith.constant 0 : i32
    %c0_i32_0 = arith.constant 0 : i32
    %c0_i32_1 = arith.constant 0 : i32
    return %c0_i32, %c0_i32_0 : i32, i32
  }
  func.func @transform_8(%arg0: i32) -> (i32, i32) {
    %c0_i32 = arith.constant 0 : i32
    %c0_i32_0 = arith.constant 0 : i32
    %c0_i32_1 = arith.constant 0 : i32
    return %c0_i32, %c0_i32_0 : i32, i32
  }
  func.func @transform_9(%arg0: i32) -> (i32, i32) {
    %c0_i32 = arith.constant 0 : i32
    %c0_i32_0 = arith.constant 0 : i32
    %c0_i32_1 = arith.constant 0 : i32
    return %c0_i32, %c0_i32_0 : i32, i32
  }
  func.func @transform_10(%arg0: i32) -> (i32, i32) {
    %c0_i32 = arith.constant 0 : i32
    %c0_i32_0 = arith.constant 0 : i32
    %c0_i32_1 = arith.constant 0 : i32
    return %c0_i32, %c0_i32_0 : i32, i32
  }
  func.func @transform_11(%arg0: i32) -> (i32, i32, i32) {
    %c0_i32 = arith.constant 0 : i32
    %c0_i32_0 = arith.constant 0 : i32
    %c0_i32_1 = arith.constant 0 : i32
    return %arg0, %c0_i32, %c0_i32_0 : i32, i32, i32
  }
}

</mosaic_0001>

<llo_original>
// kernel: lenet_forward.1
$region0: #{lenet_forward.1}
  #allocation0 [shape = 'u32[]', space=smem, size = 0x4, offset = 0x4, fixed_abs, tag = 'smem constant byte address 0x4 - core index']
  #allocation1 [shape = 'u32[144,128]{1,0:T(1,128)}', space=vmem, size = 0x12000, scoped, tag = 'internal scratch']
  #allocation2 [shape = 'f32[14,162]{1,0:T(8,128)}', space=vmem, size = 0x4000, scoped, tag = 'scratch operand']
  #allocation3 [shape = 'f32[5,144]{1,0:T(8,128)}', space=vmem, size = 0x2000, scoped, tag = 'scratch operand']
  %s0 = inlined_call_operand.vmem [shape: f32[2,32,96], index: 0, kind: input, shape index: {}]
  %s1 = inlined_call_operand.vmem [shape: bf16[25,84,168], index: 1, kind: input, shape index: {}]
  %s2 = inlined_call_operand.vmem [shape: f32[1,168], index: 2, kind: input, shape index: {}]
  %s3 = inlined_call_operand.vmem [shape: bf16[25,114,160], index: 3, kind: input, shape index: {}]
  %s4 = inlined_call_operand.vmem [shape: f32[1,160], index: 4, kind: input, shape index: {}]
  %s5 = inlined_call_operand.vmem [shape: bf16[5,144,120], index: 5, kind: input, shape index: {}]
  %s6 = inlined_call_operand.vmem [shape: f32[1,120], index: 6, kind: input, shape index: {}]
  %s7 = inlined_call_operand.vmem [shape: bf16[120,84], index: 7, kind: input, shape index: {}]
  %s8 = inlined_call_operand.vmem [shape: f32[1,84], index: 8, kind: input, shape index: {}]
  %s9 = inlined_call_operand.vmem [shape: bf16[84,10], index: 9, kind: input, shape index: {}]
  %s10 = inlined_call_operand.vmem [shape: f32[1,10], index: 10, kind: input, shape index: {}]
  %s11 = inlined_call_operand.hbm [shape: f32[2,1,10], index: 11, kind: output, shape index: {}]
  %s12 = sld [smem:[#allocation0]]
  $region77: #{lenet_forward.1} parent=0
    _
  %s14 = ssub.s32 1, %s12
  %s15 = scalar_select 0, %s14, %s12
  $region1: #{lenet_forward.1} parent=0
    #allocation4 [shape = 'u8[1024]{0}', space=vmem, size = 0x400, scoped, tag = 'output window, operand 0']
    #allocation5 [shape = 's32[2]{0}', space=sflag, size = 0x8, scoped, tag = 'scoped memory for lenet_forward.1']
    %16 = vsyncpa [#allocation5], 0
    %s17 = scalar_lea.sflag [#allocation5], 1
    %18 = vsyncpa %s17, 0
    loop: start=0, step=1, limit=4
    $region2: #{lenet_forward.1} parent=1 // loop_pre_header
      _
    $region3: #{lenet_forward.1} parent=1 // loop_header
      %s20 = sphi 0, %s24
      %p21 = scmp.ge.s32.totalorder %s20, 4
      %s30 = sphi 0, %s32
      %s33 = sphi 0, %s30
      %s34 = sphi 0, %s33
      %s50 = sphi 0, %s34
      %s54 = sphi 0, %s54
      %s56 = sphi 0, %s54
      %s57 = sphi 0, %s56
      %s71 = sphi 0, %s57
      %s75 = sphi 0, %s75
      %s77 = sphi 0, %s75
      %s78 = sphi 0, %s77
      %s92 = sphi 0, %s78
      %s96 = sphi 0, %s96
      %s98 = sphi 0, %s96
      %s99 = sphi 0, %s98
      %s113 = sphi 0, %s99
      %s117 = sphi 0, %s117
      %s119 = sphi 0, %s117
      %s120 = sphi 0, %s119
      %s134 = sphi 0, %s120
      %s138 = sphi 0, %s138
      %s140 = sphi 0, %s138
      %s141 = sphi 0, %s140
      %s155 = sphi 0, %s141
      %s159 = sphi 0, %s159
      %s161 = sphi 0, %s159
      %s162 = sphi 0, %s161
      %s176 = sphi 0, %s162
      %s180 = sphi 0, %s180
      %s182 = sphi 0, %s180
      %s183 = sphi 0, %s182
      %s197 = sphi 0, %s183
      %s201 = sphi 0, %s201
      %s203 = sphi 0, %s201
      %s204 = sphi 0, %s203
      %s218 = sphi 0, %s204
      %s222 = sphi 0, %s222
      %s224 = sphi 0, %s222
      %s225 = sphi 0, %s224
      %s239 = sphi 0, %s225
      %s243 = sphi 0, %s243
      %s245 = sphi 0, %s243
      %s246 = sphi 0, %s245
      %s260 = sphi 0, %s246
      %s266 = sphi 0, %s268
      %s269 = sphi 0, %s266
      %s270 = sphi 0, %s269
      %s286 = sphi 0, %s270
    $region4: #{lenet_forward.1} parent=1 // loop_header_branch
      %23 = sbr.rel (%p21) target = $region8
    $region5: #{lenet_forward.1} parent=1 // loop_body
      %s25 = ssub.s32 %s20, 1
      %s26 = ssub.s32 %s20, 2
      %s27 = sadd.s32 %s20, 1
      %s28 = ssub.s32 %s20, %s27
      %p29 = scmp.eq.s32.totalorder %s28, 0
      %s31 = sadd.s32 %s30, 1
      %s32 = scalar_select %p29, %s30, %s31
      %p35 = pneg %p29
      %p36 = scmp.eq.s32.totalorder %s20, 1
      %p37 = por %p35, %p36
      %p38 = scmp.ne.s32.totalorder %s30, %s33
      %p39 = scmp.eq.s32.totalorder %s20, 0
      %p40 = por %p38, %p39
      %p41 = scmp.ne.s32.totalorder %s30, %s33
      %p42 = scmp.eq.s32.totalorder %s25, 1
      %p43 = por %p41, %p42
      %p44 = scmp.ne.s32.totalorder %s33, %s34
      %p45 = scmp.eq.s32.totalorder %s25, 0
      %p46 = por %p44, %p45
      %p47 = scmp.ne.s32.totalorder %s33, %s34
      %p48 = scmp.eq.s32.totalorder %s26, 1
      %p49 = por %p47, %p48
      %p51 = scmp.ne.s32.totalorder %s34, %s50
      %p52 = scmp.eq.s32.totalorder %s26, 0
      %p53 = por %p51, %p52
      %s55 = sadd.s32 %s54, 1
      %p58 = scmp.eq.s32.totalorder %s20, 1
      %p59 = scmp.ne.s32.totalorder %s54, %s56
      %p60 = scmp.eq.s32.totalorder %s20, 0
      %p61 = por %p59, %p60
      %p62 = scmp.ne.s32.totalorder %s54, %s56
      %p63 = scmp.eq.s32.totalorder %s25, 1
      %p64 = por %p62, %p63
      %p65 = scmp.ne.s32.totalorder %s56, %s57
      %p66 = scmp.eq.s32.totalorder %s25, 0
      %p67 = por %p65, %p66
      %p68 = scmp.ne.s32.totalorder %s56, %s57
      %p69 = scmp.eq.s32.totalorder %s26, 1
      %p70 = por %p68, %p69
      %p72 = scmp.ne.s32.totalorder %s57, %s71
      %p73 = scmp.eq.s32.totalorder %s26, 0
      %p74 = por %p72, %p73
      %s76 = sadd.s32 %s75, 1
      %p79 = scmp.eq.s32.totalorder %s20, 1
      %p80 = scmp.ne.s32.totalorder %s75, %s77
      %p81 = scmp.eq.s32.totalorder %s20, 0
      %p82 = por %p80, %p81
      %p83 = scmp.ne.s32.totalorder %s75, %s77
      %p84 = scmp.eq.s32.totalorder %s25, 1
      %p85 = por %p83, %p84
      %p86 = scmp.ne.s32.totalorder %s77, %s78
      %p87 = scmp.eq.s32.totalorder %s25, 0
      %p88 = por %p86, %p87
      %p89 = scmp.ne.s32.totalorder %s77, %s78
      %p90 = scmp.eq.s32.totalorder %s26, 1
      %p91 = por %p89, %p90
      %p93 = scmp.ne.s32.totalorder %s78, %s92
      %p94 = scmp.eq.s32.totalorder %s26, 0
      %p95 = por %p93, %p94
      %s97 = sadd.s32 %s96, 1
      %p100 = scmp.eq.s32.totalorder %s20, 1
      %p101 = scmp.ne.s32.totalorder %s96, %s98
      %p102 = scmp.eq.s32.totalorder %s20, 0
      %p103 = por %p101, %p102
      %p104 = scmp.ne.s32.totalorder %s96, %s98
      %p105 = scmp.eq.s32.totalorder %s25, 1
      %p106 = por %p104, %p105
      %p107 = scmp.ne.s32.totalorder %s98, %s99
      %p108 = scmp.eq.s32.totalorder %s25, 0
      %p109 = por %p107, %p108
      %p110 = scmp.ne.s32.totalorder %s98, %s99
      %p111 = scmp.eq.s32.totalorder %s26, 1
      %p112 = por %p110, %p111
      %p114 = scmp.ne.s32.totalorder %s99, %s113
      %p115 = scmp.eq.s32.totalorder %s26, 0
      %p116 = por %p114, %p115
      %s118 = sadd.s32 %s117, 1
      %p121 = scmp.eq.s32.totalorder %s20, 1
      %p122 = scmp.ne.s32.totalorder %s117, %s119
      %p123 = scmp.eq.s32.totalorder %s20, 0
      %p124 = por %p122, %p123
      %p125 = scmp.ne.s32.totalorder %s117, %s119
      %p126 = scmp.eq.s32.totalorder %s25, 1
      %p127 = por %p125, %p126
      %p128 = scmp.ne.s32.totalorder %s119, %s120
      %p129 = scmp.eq.s32.totalorder %s25, 0
      %p130 = por %p128, %p129
      %p131 = scmp.ne.s32.totalorder %s119, %s120
      %p132 = scmp.eq.s32.totalorder %s26, 1
      %p133 = por %p131, %p132
      %p135 = scmp.ne.s32.totalorder %s120, %s134
      %p136 = scmp.eq.s32.totalorder %s26, 0
      %p137 = por %p135, %p136
      %s139 = sadd.s32 %s138, 1
      %p142 = scmp.eq.s32.totalorder %s20, 1
      %p143 = scmp.ne.s32.totalorder %s138, %s140
      %p144 = scmp.eq.s32.totalorder %s20, 0
      %p145 = por %p143, %p144
      %p146 = scmp.ne.s32.totalorder %s138, %s140
      %p147 = scmp.eq.s32.totalorder %s25, 1
      %p148 = por %p146, %p147
      %p149 = scmp.ne.s32.totalorder %s140, %s141
      %p150 = scmp.eq.s32.totalorder %s25, 0
      %p151 = por %p149, %p150
      %p152 = scmp.ne.s32.totalorder %s140, %s141
      %p153 = scmp.eq.s32.totalorder %s26, 1
      %p154 = por %p152, %p153
      %p156 = scmp.ne.s32.totalorder %s141, %s155
      %p157 = scmp.eq.s32.totalorder %s26, 0
      %p158 = por %p156, %p157
      %s160 = sadd.s32 %s159, 1
      %p163 = scmp.eq.s32.totalorder %s20, 1
      %p164 = scmp.ne.s32.totalorder %s159, %s161
      %p165 = scmp.eq.s32.totalorder %s20, 0
      %p166 = por %p164, %p165
      %p167 = scmp.ne.s32.totalorder %s159, %s161
      %p168 = scmp.eq.s32.totalorder %s25, 1
      %p169 = por %p167, %p168
      %p170 = scmp.ne.s32.totalorder %s161, %s162
      %p171 = scmp.eq.s32.totalorder %s25, 0
      %p172 = por %p170, %p171
      %p173 = scmp.ne.s32.totalorder %s161, %s162
      %p174 = scmp.eq.s32.totalorder %s26, 1
      %p175 = por %p173, %p174
      %p177 = scmp.ne.s32.totalorder %s162, %s176
      %p178 = scmp.eq.s32.totalorder %s26, 0
      %p179 = por %p177, %p178
      %s181 = sadd.s32 %s180, 1
      %p184 = scmp.eq.s32.totalorder %s20, 1
      %p185 = scmp.ne.s32.totalorder %s180, %s182
      %p186 = scmp.eq.s32.totalorder %s20, 0
      %p187 = por %p185, %p186
      %p188 = scmp.ne.s32.totalorder %s180, %s182
      %p189 = scmp.eq.s32.totalorder %s25, 1
      %p190 = por %p188, %p189
      %p191 = scmp.ne.s32.totalorder %s182, %s183
      %p192 = scmp.eq.s32.totalorder %s25, 0
      %p193 = por %p191, %p192
      %p194 = scmp.ne.s32.totalorder %s182, %s183
      %p195 = scmp.eq.s32.totalorder %s26, 1
      %p196 = por %p194, %p195
      %p198 = scmp.ne.s32.totalorder %s183, %s197
      %p199 = scmp.eq.s32.totalorder %s26, 0
      %p200 = por %p198, %p199
      %s202 = sadd.s32 %s201, 1
      %p205 = scmp.eq.s32.totalorder %s20, 1
      %p206 = scmp.ne.s32.totalorder %s201, %s203
      %p207 = scmp.eq.s32.totalorder %s20, 0
      %p208 = por %p206, %p207
      %p209 = scmp.ne.s32.totalorder %s201, %s203
      %p210 = scmp.eq.s32.totalorder %s25, 1
      %p211 = por %p209, %p210
      %p212 = scmp.ne.s32.totalorder %s203, %s204
      %p213 = scmp.eq.s32.totalorder %s25, 0
      %p214 = por %p212, %p213
      %p215 = scmp.ne.s32.totalorder %s203, %s204
      %p216 = scmp.eq.s32.totalorder %s26, 1
      %p217 = por %p215, %p216
      %p219 = scmp.ne.s32.totalorder %s204, %s218
      %p220 = scmp.eq.s32.totalorder %s26, 0
      %p221 = por %p219, %p220
      %s223 = sadd.s32 %s222, 1
      %p226 = scmp.eq.s32.totalorder %s20, 1
      %p227 = scmp.ne.s32.totalorder %s222, %s224
      %p228 = scmp.eq.s32.totalorder %s20, 0
      %p229 = por %p227, %p228
      %p230 = scmp.ne.s32.totalorder %s222, %s224
      %p231 = scmp.eq.s32.totalorder %s25, 1
      %p232 = por %p230, %p231
      %p233 = scmp.ne.s32.totalorder %s224, %s225
      %p234 = scmp.eq.s32.totalorder %s25, 0
      %p235 = por %p233, %p234
      %p236 = scmp.ne.s32.totalorder %s224, %s225
      %p237 = scmp.eq.s32.totalorder %s26, 1
      %p238 = por %p236, %p237
      %p240 = scmp.ne.s32.totalorder %s225, %s239
      %p241 = scmp.eq.s32.totalorder %s26, 0
      %p242 = por %p240, %p241
      %s244 = sadd.s32 %s243, 1
      %p247 = scmp.eq.s32.totalorder %s20, 1
      %p248 = scmp.ne.s32.totalorder %s243, %s245
      %p249 = scmp.eq.s32.totalorder %s20, 0
      %p250 = por %p248, %p249
      %p251 = scmp.ne.s32.totalorder %s243, %s245
      %p252 = scmp.eq.s32.totalorder %s25, 1
      %p253 = por %p251, %p252
      %p254 = scmp.ne.s32.totalorder %s245, %s246
      %p255 = scmp.eq.s32.totalorder %s25, 0
      %p256 = por %p254, %p255
      %p257 = scmp.ne.s32.totalorder %s245, %s246
      %p258 = scmp.eq.s32.totalorder %s26, 1
      %p259 = por %p257, %p258
      %p261 = scmp.ne.s32.totalorder %s246, %s260
      %p262 = scmp.eq.s32.totalorder %s26, 0
      %p263 = por %p261, %p262
      %s264 = ssub.s32 %s20, %s27
      %p265 = scmp.eq.s32.totalorder %s264, 0
      %s267 = sadd.s32 %s266, 1
      %s268 = scalar_select %p265, %s266, %s267
      %p271 = pneg %p265
      %p272 = scmp.eq.s32.totalorder %s20, 1
      %p273 = por %p271, %p272
      %p274 = scmp.ne.s32.totalorder %s266, %s269
      %p275 = scmp.eq.s32.totalorder %s20, 0
      %p276 = por %p274, %p275
      %p277 = scmp.ne.s32.totalorder %s266, %s269
      %p278 = scmp.eq.s32.totalorder %s25, 1
      %p279 = por %p277, %p278
      %p280 = scmp.ne.s32.totalorder %s269, %s270
      %p281 = scmp.eq.s32.totalorder %s25, 0
      %p282 = por %p280, %p281
      %p283 = scmp.ne.s32.totalorder %s269, %s270
      %p284 = scmp.eq.s32.totalorder %s26, 1
      %p285 = por %p283, %p284
      %p287 = scmp.ne.s32.totalorder %s270, %s286
      %p288 = scmp.eq.s32.totalorder %s26, 0
      %p289 = por %p287, %p288
      %p290 = scmp.le.s32.totalorder 1, %s20
      %p291 = scmp.lt.s32.totalorder %s20, 3
      %p292 = pnand %p290, %p291
      %p293 = pneg %p292
      // Predicated region
      $region9: #{lenet_forward.1} parent=5 // pred_check
        _
      $region10: #{lenet_forward.1} parent=5 // pred_check_branch
        %295 = sbr.rel (%p292) target = $region12
      $region11: #{lenet_forward.1} parent=5 // pred_region
        %s296 = ssub.s32 %s20, 1
        // Predicated region
        $region13: #{lenet_forward.1} parent=11 // pred_check
          %p297 = pneg %p67
        $region14: #{lenet_forward.1} parent=11 // pred_check_branch
          %299 = sbr.rel (%p297) target = $region16
        $region15: #{lenet_forward.1} parent=11 // pred_region
          _
        $region16: #{lenet_forward.1} parent=11 // pred_fallthru
          _
        // Predicated region
        $region17: #{lenet_forward.1} parent=11 // pred_check
          %p300 = pneg %p88
        $region18: #{lenet_forward.1} parent=11 // pred_check_branch
          %302 = sbr.rel (%p300) target = $region20
        $region19: #{lenet_forward.1} parent=11 // pred_region
          _
        $region20: #{lenet_forward.1} parent=11 // pred_fallthru
          _
        // Predicated region
        $region21: #{lenet_forward.1} parent=11 // pred_check
          %p303 = pneg %p109
        $region22: #{lenet_forward.1} parent=11 // pred_check_branch
          %305 = sbr.rel (%p303) target = $region24
        $region23: #{lenet_forward.1} parent=11 // pred_region
          _
        $region24: #{lenet_forward.1} parent=11 // pred_fallthru
          _
        // Predicated region
        $region25: #{lenet_forward.1} parent=11 // pred_check
          %p306 = pneg %p130
        $region26: #{lenet_forward.1} parent=11 // pred_check_branch
          %308 = sbr.rel (%p306) target = $region28
        $region27: #{lenet_forward.1} parent=11 // pred_region
          _
        $region28: #{lenet_forward.1} parent=11 // pred_fallthru
          _
        // Predicated region
        $region29: #{lenet_forward.1} parent=11 // pred_check
          %p309 = pneg %p151
        $region30: #{lenet_forward.1} parent=11 // pred_check_branch
          %311 = sbr.rel (%p309) target = $region32
        $region31: #{lenet_forward.1} parent=11 // pred_region
          _
        $region32: #{lenet_forward.1} parent=11 // pred_fallthru
          _
        // Predicated region
        $region33: #{lenet_forward.1} parent=11 // pred_check
          %p312 = pneg %p172
        $region34: #{lenet_forward.1} parent=11 // pred_check_branch
          %314 = sbr.rel (%p312) target = $region36
        $region35: #{lenet_forward.1} parent=11 // pred_region
          _
        $region36: #{lenet_forward.1} parent=11 // pred_fallthru
          _
        // Predicated region
        $region37: #{lenet_forward.1} parent=11 // pred_check
          %p315 = pneg %p193
        $region38: #{lenet_forward.1} parent=11 // pred_check_branch
          %317 = sbr.rel (%p315) target = $region40
        $region39: #{lenet_forward.1} parent=11 // pred_region
          _
        $region40: #{lenet_forward.1} parent=11 // pred_fallthru
          _
        // Predicated region
        $region41: #{lenet_forward.1} parent=11 // pred_check
          %p318 = pneg %p214
        $region42: #{lenet_forward.1} parent=11 // pred_check_branch
          %320 = sbr.rel (%p318) target = $region44
        $region43: #{lenet_forward.1} parent=11 // pred_region
          _
        $region44: #{lenet_forward.1} parent=11 // pred_fallthru
          _
        // Predicated region
        $region45: #{lenet_forward.1} parent=11 // pred_check
          %p321 = pneg %p235
        $region46: #{lenet_forward.1} parent=11 // pred_check_branch
          %323 = sbr.rel (%p321) target = $region48
        $region47: #{lenet_forward.1} parent=11 // pred_region
          _
        $region48: #{lenet_forward.1} parent=11 // pred_fallthru
          _
        // Predicated region
        $region49: #{lenet_forward.1} parent=11 // pred_check
          %p324 = pneg %p256
        $region50: #{lenet_forward.1} parent=11 // pred_check_branch
          %326 = sbr.rel (%p324) target = $region52
        $region51: #{lenet_forward.1} parent=11 // pred_region
          _
        $region52: #{lenet_forward.1} parent=11 // pred_fallthru
          _
      $region12: #{lenet_forward.1} parent=5 // pred_fallthru
        _
      %p327 = scmp.lt.s32.totalorder %s20, 2
      // Predicated region
      $region53: #{lenet_forward.1} parent=5 // pred_check
        %p328 = pneg %p327
      $region54: #{lenet_forward.1} parent=5 // pred_check_branch
        %330 = sbr.rel (%p328) target = $region56
      $region55: #{lenet_forward.1} parent=5 // pred_region
        // Predicated region
        $region57: #{lenet_forward.1} parent=55 // pred_check
          %p331 = pneg %p40
        $region58: #{lenet_forward.1} parent=55 // pred_check_branch
          %333 = sbr.rel (%p331) target = $region60
        $region59: #{lenet_forward.1} parent=55 // pred_region
          %p334 = scmp.lt.s32.totalorder %s20, 1
          %s335 = scalar_select %p334, %s20, 1
          %s336 = smul.addr %s335, 4
          %s337 = smul.addr %s336, 8
          %s338 = scalar_lea.vmem %s0, %s337
        $region60: #{lenet_forward.1} parent=55 // pred_fallthru
          _
      $region56: #{lenet_forward.1} parent=5 // pred_fallthru
        _
      %p339 = scmp.le.s32.totalorder 1, %s20
      %p340 = scmp.lt.s32.totalorder %s20, 3
      %p341 = pnand %p339, %p340
      %p342 = pneg %p341
      // Predicated region
      $region61: #{lenet_forward.1} parent=5 // pred_check
        _
      $region62: #{lenet_forward.1} parent=5 // pred_check_branch
        %344 = sbr.rel (%p341) target = $region64
      $region63: #{lenet_forward.1} parent=5 // pred_region
        %s345 = ssub.s32 %s20, 1
        %p346 = scmp.lt.s32.totalorder %s25, 1
        %s347 = scalar_select %p346, %s25, 1
        %s348 = smul.addr %s347, 4
        %s349 = smul.addr %s348, 8
        %s350 = scalar_lea.vmem %s0, %s349
        %p351 = pneg %p46
        %p352 = pneg %p43
        %p353 = pneg %p67
        %p354 = pneg %p64
        %p355 = pneg %p88
        %p356 = pneg %p85
        %p357 = pneg %p109
        %p358 = pneg %p106
        %p359 = pneg %p130
        %p360 = pneg %p127
        %p361 = pneg %p151
        %p362 = pneg %p148
        %p363 = pneg %p172
        %p364 = pneg %p169
        %p365 = pneg %p193
        %p366 = pneg %p190
        %p367 = pneg %p214
        %p368 = pneg %p211
        %p369 = pneg %p235
        %p370 = pneg %p232
        %p371 = pneg %p256
        %p372 = pneg %p253
        %p373 = pneg %p282
        %p374 = pneg %p279
        %s375 = sand.u32 %s269, 1
        %s376 = scalar_lea.sflag [#allocation5], %s375
        %s377 = sand.u32 %s269, 1
        %s378 = scalar_lea.vmem [#allocation4], %s377
        %p379 = scmp.lt.s32.totalorder %s25, 1
        %s380 = scalar_select %p379, %s25, 1
        %s381 = smul.addr %s380, 4
        %s382 = smul.addr %s381, 8
        %s383 = scalar_lea.vmem %s0, %s382
        %v385 = vld [vmem:[%s383] sm:$0xff]
        %v386 = vld [vmem:[%s383 + $0x8] sm:$0xff]
        %v387 = vld [vmem:[%s383 + $0x10] sm:$0xff]
        %v388 = vld [vmem:[%s383 + $0x18] sm:$0xff]
        %v389 = vpack.c.bf16 %v386, %v385
        %v390 = vpack.c.bf16 %v388, %v387
        %v391 = vld [vmem:[%s1] sm:$0xff]
        %v392 = vld [vmem:[%s1 + $0x8] sm:$0xff]
        %v393 = vld [vmem:[%s1 + $0x10] sm:$0xff]
        %v394 = vld [vmem:[%s1 + $0x18] sm:$0xff]
        %v395 = vld [vmem:[%s1 + $0x20] sm:$0xff]
        %v396 = vld [vmem:[%s1 + $0x28] sm:$0xff]
        %v397 = vld [vmem:[%s1 + $0x30] sm:$0xff]
        %v398 = vld [vmem:[%s1 + $0x38] sm:$0xff]
        %v399 = vld [vmem:[%s1 + $0x40] sm:$0xff]
        %v400 = vld [vmem:[%s1 + $0x48] sm:$0xff]
        %v401 = vld [vmem:[%s1 + $0x50] sm:$0x33]
        %s402 = scalar_lea.vmem %s1, 88
        %v403 = vld [vmem:[%s402] sm:$0xff]
        %v404 = vld [vmem:[%s402 + $0x8] sm:$0xff]
        %v405 = vld [vmem:[%s402 + $0x10] sm:$0xff]
        %v406 = vld [vmem:[%s402 + $0x18] sm:$0xff]
        %v407 = vld [vmem:[%s402 + $0x20] sm:$0xff]
        %v408 = vld [vmem:[%s402 + $0x28] sm:$0xff]
        %v409 = vld [vmem:[%s402 + $0x30] sm:$0xff]
        %v410 = vld [vmem:[%s402 + $0x38] sm:$0xff]
        %v411 = vld [vmem:[%s402 + $0x40] sm:$0xff]
        %v412 = vld [vmem:[%s402 + $0x48] sm:$0xff]
        %v413 = vld [vmem:[%s402 + $0x50] sm:$0x33]
        %416 = vrot.lane.b32.xlu0 %v389, 125
        %v417 = vpop.permute.xlu0 %416
        %418 = vrot.lane.b32.xlu0 %v390, 125
        %v419 = vpop.permute.xlu0 %418
        %v431 = vunpack.c.l.b16 %v403
        %v432 = vunpack.c.h.b16 %v403
        %v433 = vunpack.c.l.b16 %v404
        %v434 = vunpack.c.h.b16 %v404
        %v435 = vunpack.c.l.b16 %v405
        %v436 = vunpack.c.h.b16 %v405
        %v437 = vunpack.c.l.b16 %v406
        %v438 = vunpack.c.h.b16 %v406
        %v439 = vunpack.c.l.b16 %v407
        %v440 = vunpack.c.h.b16 %v407
        %v441 = vunpack.c.l.b16 %v408
        %v442 = vunpack.c.h.b16 %v408
        %v443 = vunpack.c.l.b16 %v409
        %v444 = vunpack.c.h.b16 %v409
        %v445 = vunpack.c.l.b16 %v410
        %v446 = vunpack.c.h.b16 %v410
        %v447 = vunpack.c.l.b16 %v411
        %v448 = vunpack.c.h.b16 %v411
        %v449 = vunpack.c.l.b16 %v412
        %v450 = vunpack.c.h.b16 %v412
        %v451 = vunpack.c.l.b16 %v413
        %v452 = vunpack.c.h.b16 %v413
        %v453 = vpack.c.b16 %v433, %v431
        %v454 = vpack.c.b16 %v434, %v432
        %v455 = vpack.c.b16 %v437, %v435
        %v456 = vpack.c.b16 %v438, %v436
        %v457 = vpack.c.b16 %v441, %v439
        %v458 = vpack.c.b16 %v442, %v440
        %v459 = vpack.c.b16 %v445, %v443
        %v460 = vpack.c.b16 %v446, %v444
        %v461 = vpack.c.b16 %v449, %v447
        %v462 = vpack.c.b16 %v450, %v448
        %v463 = vpack.c.b16 %v451, %v451
        %v464 = vpack.c.b16 %v452, %v452
        %vm475 = vcmask 687104
        %v477 = vsel %vm475, %v417, 0
        %v480 = vsel %vm475, %v419, 0
        %vm482 = vcmask 1041408
        %v484 = vsel %vm482, %v463, 0
        %v487 = vsel %vm482, %v464, 0
        %489 = vmatprep.subr.bf16.mxu0 %v454
        %490 = vmatpush1.bf16.msra.mxu0 %v453
        %491 = vmatprep.subr.bf16.mxu0 %v456
        %492 = vmatpush1.bf16.msra.mxu0 %v455
        %493 = vmatprep.subr.bf16.mxu0 %v458
        %494 = vmatpush1.bf16.msra.mxu0 %v457
        %495 = vmatprep.subr.bf16.mxu0 %v460
        %496 = vmatpush1.bf16.msra.mxu0 %v459
        %497 = vmatprep.subr.bf16.mxu0 %v462
        %498 = vmatpush1.bf16.msra.mxu0 %v461
        %499 = vmatprep.subr.bf16.mxu0 %v487
        %500 = vmatpush1.bf16.msra.mxu0 %v484
        %501 = vmatprep.subr.bf16.mxu0 0
        %502 = vmatpush1.bf16.msra.mxu0 0
        %503 = vmatprep.subr.bf16.mxu0 0
        %504 = vmatpush1.bf16.msra.mxu0 0
        %505 = vmatprep.subr.bf16.mxu0 0
        %506 = vmatpush1.bf16.msra.mxu0 0
        %507 = vmatprep.subr.bf16.mxu0 0
        %508 = vmatpush1.bf16.msra.mxu0 0
        %509 = vmatprep.subr.bf16.mxu0 0
        %510 = vmatpush1.bf16.msra.mxu0 0
        %511 = vmatprep.subr.bf16.mxu0 0
        %512 = vmatpush1.bf16.msra.mxu0 0
        %513 = vmatprep.subr.bf16.mxu0 0
        %514 = vmatpush1.bf16.msra.mxu0 0
        %515 = vmatprep.subr.bf16.mxu0 0
        %516 = vmatpush1.bf16.msra.mxu0 0
        %517 = vmatprep.subr.bf16.mxu0 0
        %518 = vmatpush1.bf16.msra.mxu0 0
        %519 = vmatprep.subr.bf16.mxu0 0
        %520 = vmatpush1.bf16.msra.mxu0 0
        %521 = vmatprep.mubr.bf16.mxu0 0
        %522 = vmatmul.mubr.bf16.gmra.mrb[0].mxu0 %v477
        %v523 = vpop.f32.mrb[0].mxu0
        %v524 = vadd.f32 0.0, %v523
        %v525 = vpop.f32.mrb[0].mxu0
        %v526 = vadd.f32 0.0, %v525
        %v527 = vpop.f32.mrb[0].mxu0
        %v528 = vadd.f32 0.0, %v527
        %v529 = vpop.f32.mrb[0].mxu0
        %v530 = vadd.f32 0.0, %v529
        %531 = vmatprep.mubr.bf16.mxu0 0
        %532 = vmatmul.mubr.bf16.gmra.mrb[0].mxu0 %v480
        %v533 = vpop.f32.mrb[0].mxu0
        %v534 = vadd.f32 0.0, %v533
        %v535 = vpop.f32.mrb[0].mxu0
        %v536 = vadd.f32 0.0, %v535
        %v537 = vpop.f32.mrb[0].mxu0
        %v538 = vadd.f32 0.0, %v537
        %v539 = vpop.f32.mrb[0].mxu0
        %v540 = vadd.f32 0.0, %v539
        %541 = vdwg.mxu0
        %v553 = vunpack.c.l.b16 %v391
        %v554 = vunpack.c.h.b16 %v391
        %v555 = vunpack.c.l.b16 %v392
        %v556 = vunpack.c.h.b16 %v392
        %v557 = vunpack.c.l.b16 %v393
        %v558 = vunpack.c.h.b16 %v393
        %v559 = vunpack.c.l.b16 %v394
        %v560 = vunpack.c.h.b16 %v394
        %v561 = vunpack.c.l.b16 %v395
        %v562 = vunpack.c.h.b16 %v395
        %v563 = vunpack.c.l.b16 %v396
        %v564 = vunpack.c.h.b16 %v396
        %v565 = vunpack.c.l.b16 %v397
        %v566 = vunpack.c.h.b16 %v397
        %v567 = vunpack.c.l.b16 %v398
        %v568 = vunpack.c.h.b16 %v398
        %v569 = vunpack.c.l.b16 %v399
        %v570 = vunpack.c.h.b16 %v399
        %v571 = vunpack.c.l.b16 %v400
        %v572 = vunpack.c.h.b16 %v400
        %v573 = vunpack.c.l.b16 %v401
        %v574 = vunpack.c.h.b16 %v401
        %v575 = vpack.c.b16 %v555, %v553
        %v576 = vpack.c.b16 %v556, %v554
        %v577 = vpack.c.b16 %v559, %v557
        %v578 = vpack.c.b16 %v560, %v558
        %v579 = vpack.c.b16 %v563, %v561
        %v580 = vpack.c.b16 %v564, %v562
        %v581 = vpack.c.b16 %v567, %v565
        %v582 = vpack.c.b16 %v568, %v566
        %v583 = vpack.c.b16 %v571, %v569
        %v584 = vpack.c.b16 %v572, %v570
        %v585 = vpack.c.b16 %v573, %v573
        %v586 = vpack.c.b16 %v574, %v574
        %v598 = vsel %vm475, %v389, 0
        %v601 = vsel %vm475, %v390, 0
        %v604 = vsel %vm482, %v585, 0
        %v607 = vsel %vm482, %v586, 0
        %609 = vmatprep.subr.bf16.mxu0 %v576
        %610 = vmatpush1.bf16.msra.mxu0 %v575
        %611 = vmatprep.subr.bf16.mxu0 %v578
        %612 = vmatpush1.bf16.msra.mxu0 %v577
        %613 = vmatprep.subr.bf16.mxu0 %v580
        %614 = vmatpush1.bf16.msra.mxu0 %v579
        %615 = vmatprep.subr.bf16.mxu0 %v582
        %616 = vmatpush1.bf16.msra.mxu0 %v581
        %617 = vmatprep.subr.bf16.mxu0 %v584
        %618 = vmatpush1.bf16.msra.mxu0 %v583
        %619 = vmatprep.subr.bf16.mxu0 %v607
        %620 = vmatpush1.bf16.msra.mxu0 %v604
        %621 = vmatprep.subr.bf16.mxu0 0
        %622 = vmatpush1.bf16.msra.mxu0 0
        %623 = vmatprep.subr.bf16.mxu0 0
        %624 = vmatpush1.bf16.msra.mxu0 0
        %625 = vmatprep.subr.bf16.mxu0 0
        %626 = vmatpush1.bf16.msra.mxu0 0
        %627 = vmatprep.subr.bf16.mxu0 0
        %628 = vmatpush1.bf16.msra.mxu0 0
        %629 = vmatprep.subr.bf16.mxu0 0
        %630 = vmatpush1.bf16.msra.mxu0 0
        %631 = vmatprep.subr.bf16.mxu0 0
        %632 = vmatpush1.bf16.msra.mxu0 0
        %633 = vmatprep.subr.bf16.mxu0 0
        %634 = vmatpush1.bf16.msra.mxu0 0
        %635 = vmatprep.subr.bf16.mxu0 0
        %636 = vmatpush1.bf16.msra.mxu0 0
        %637 = vmatprep.subr.bf16.mxu0 0
        %638 = vmatpush1.bf16.msra.mxu0 0
        %639 = vmatprep.subr.bf16.mxu0 0
        %640 = vmatpush1.bf16.msra.mxu0 0
        %641 = vmatprep.mubr.bf16.mxu0 0
        %642 = vmatmul.mubr.bf16.gmra.mrb[0].mxu0 %v598
        %v643 = vpop.f32.mrb[0].mxu0
        %v644 = vadd.f32 %v524, %v643
        %v645 = vpop.f32.mrb[0].mxu0
        %v646 = vadd.f32 %v526, %v645
        %v647 = vpop.f32.mrb[0].mxu0
        %v648 = vadd.f32 %v528, %v647
        %v649 = vpop.f32.mrb[0].mxu0
        %v650 = vadd.f32 %v530, %v649
        %651 = vmatprep.mubr.bf16.mxu0 0
        %652 = vmatmul.mubr.bf16.gmra.mrb[0].mxu0 %v601
        %v653 = vpop.f32.mrb[0].mxu0
        %v654 = vadd.f32 %v534, %v653
        %v655 = vpop.f32.mrb[0].mxu0
        %v656 = vadd.f32 %v536, %v655
        %v657 = vpop.f32.mrb[0].mxu0
        %v658 = vadd.f32 %v538, %v657
        %v659 = vpop.f32.mrb[0].mxu0
        %v660 = vadd.f32 %v540, %v659
        %661 = vdwg.mxu0
        %s662 = scalar_lea.vmem %s1, 176
        %v663 = vld [vmem:[%s662] sm:$0xff]
        %v664 = vld [vmem:[%s662 + $0x8] sm:$0xff]
        %v665 = vld [vmem:[%s662 + $0x10] sm:$0xff]
        %v666 = vld [vmem:[%s662 + $0x18] sm:$0xff]
        %v667 = vld [vmem:[%s662 + $0x20] sm:$0xff]
        %v668 = vld [vmem:[%s662 + $0x28] sm:$0xff]
        %v669 = vld [vmem:[%s662 + $0x30] sm:$0xff]
        %v670 = vld [vmem:[%s662 + $0x38] sm:$0xff]
        %v671 = vld [vmem:[%s662 + $0x40] sm:$0xff]
        %v672 = vld [vmem:[%s662 + $0x48] sm:$0xff]
        %v673 = vld [vmem:[%s662 + $0x50] sm:$0x33]
        %674 = vrot.lane.b32.xlu0 %v389, 122
        %v675 = vpop.permute.xlu0 %674
        %676 = vrot.lane.b32.xlu0 %v390, 122
        %v677 = vpop.permute.xlu0 %676
        %v689 = vunpack.c.l.b16 %v663
        %v690 = vunpack.c.h.b16 %v663
        %v691 = vunpack.c.l.b16 %v664
        %v692 = vunpack.c.h.b16 %v664
        %v693 = vunpack.c.l.b16 %v665
        %v694 = vunpack.c.h.b16 %v665
        %v695 = vunpack.c.l.b16 %v666
        %v696 = vunpack.c.h.b16 %v666
        %v697 = vunpack.c.l.b16 %v667
        %v698 = vunpack.c.h.b16 %v667
        %v699 = vunpack.c.l.b16 %v668
        %v700 = vunpack.c.h.b16 %v668
        %v701 = vunpack.c.l.b16 %v669
        %v702 = vunpack.c.h.b16 %v669
        %v703 = vunpack.c.l.b16 %v670
        %v704 = vunpack.c.h.b16 %v670
        %v705 = vunpack.c.l.b16 %v671
        %v706 = vunpack.c.h.b16 %v671
        %v707 = vunpack.c.l.b16 %v672
        %v708 = vunpack.c.h.b16 %v672
        %v709 = vunpack.c.l.b16 %v673
        %v710 = vunpack.c.h.b16 %v673
        %v711 = vpack.c.b16 %v691, %v689
        %v712 = vpack.c.b16 %v692, %v690
        %v713 = vpack.c.b16 %v695, %v693
        %v714 = vpack.c.b16 %v696, %v694
        %v715 = vpack.c.b16 %v699, %v697
        %v716 = vpack.c.b16 %v700, %v698
        %v717 = vpack.c.b16 %v703, %v701
        %v718 = vpack.c.b16 %v704, %v702
        %v719 = vpack.c.b16 %v707, %v705
        %v720 = vpack.c.b16 %v708, %v706
        %v721 = vpack.c.b16 %v709, %v709
        %v722 = vpack.c.b16 %v710, %v710
        %v734 = vsel %vm475, %v675, 0
        %v737 = vsel %vm475, %v677, 0
        %v740 = vsel %vm482, %v721, 0
        %v743 = vsel %vm482, %v722, 0
        %745 = vmatprep.subr.bf16.mxu0 %v712
        %746 = vmatpush1.bf16.msra.mxu0 %v711
        %747 = vmatprep.subr.bf16.mxu0 %v714
        %748 = vmatpush1.bf16.msra.mxu0 %v713
        %749 = vmatprep.subr.bf16.mxu0 %v716
        %750 = vmatpush1.bf16.msra.mxu0 %v715
        %751 = vmatprep.subr.bf16.mxu0 %v718
        %752 = vmatpush1.bf16.msra.mxu0 %v717
        %753 = vmatprep.subr.bf16.mxu0 %v720
        %754 = vmatpush1.bf16.msra.mxu0 %v719
        %755 = vmatprep.subr.bf16.mxu0 %v743
        %756 = vmatpush1.bf16.msra.mxu0 %v740
        %757 = vmatprep.subr.bf16.mxu0 0
        %758 = vmatpush1.bf16.msra.mxu0 0
        %759 = vmatprep.subr.bf16.mxu0 0
        %760 = vmatpush1.bf16.msra.mxu0 0
        %761 = vmatprep.subr.bf16.mxu0 0
        %762 = vmatpush1.bf16.msra.mxu0 0
        %763 = vmatprep.subr.bf16.mxu0 0
        %764 = vmatpush1.bf16.msra.mxu0 0
        %765 = vmatprep.subr.bf16.mxu0 0
        %766 = vmatpush1.bf16.msra.mxu0 0
        %767 = vmatprep.subr.bf16.mxu0 0
        %768 = vmatpush1.bf16.msra.mxu0 0
        %769 = vmatprep.subr.bf16.mxu0 0
        %770 = vmatpush1.bf16.msra.mxu0 0
        %771 = vmatprep.subr.bf16.mxu0 0
        %772 = vmatpush1.bf16.msra.mxu0 0
        %773 = vmatprep.subr.bf16.mxu0 0
        %774 = vmatpush1.bf16.msra.mxu0 0
        %775 = vmatprep.subr.bf16.mxu0 0
        %776 = vmatpush1.bf16.msra.mxu0 0
        %777 = vmatprep.mubr.bf16.mxu0 0
        %778 = vmatmul.mubr.bf16.gmra.mrb[0].mxu0 %v734
        %v779 = vpop.f32.mrb[0].mxu0
        %v780 = vadd.f32 0.0, %v779
        %v781 = vpop.f32.mrb[0].mxu0
        %v782 = vadd.f32 0.0, %v781
        %v783 = vpop.f32.mrb[0].mxu0
        %v784 = vadd.f32 0.0, %v783
        %v785 = vpop.f32.mrb[0].mxu0
        %v786 = vadd.f32 0.0, %v785
        %787 = vmatprep.mubr.bf16.mxu0 0
        %788 = vmatmul.mubr.bf16.gmra.mrb[0].mxu0 %v737
        %v789 = vpop.f32.mrb[0].mxu0
        %v790 = vadd.f32 0.0, %v789
        %v791 = vpop.f32.mrb[0].mxu0
        %v792 = vadd.f32 0.0, %v791
        %v793 = vpop.f32.mrb[0].mxu0
        %v794 = vadd.f32 0.0, %v793
        %v795 = vpop.f32.mrb[0].mxu0
        %v796 = vadd.f32 0.0, %v795
        %797 = vdwg.mxu0
        %v798 = vadd.f32 %v644, %v780
        %v799 = vadd.f32 %v646, %v782
        %v800 = vadd.f32 %v648, %v784
        %v801 = vadd.f32 %v650, %v786
        %v802 = vadd.f32 %v654, %v790
        %v803 = vadd.f32 %v656, %v792
        %v804 = vadd.f32 %v658, %v794
        %v805 = vadd.f32 %v660, %v796
        %s806 = scalar_lea.vmem %s1, 264
        %v807 = vld [vmem:[%s806] sm:$0xff]
        %v808 = vld [vmem:[%s806 + $0x8] sm:$0xff]
        %v809 = vld [vmem:[%s806 + $0x10] sm:$0xff]
        %v810 = vld [vmem:[%s806 + $0x18] sm:$0xff]
        %v811 = vld [vmem:[%s806 + $0x20] sm:$0xff]
        %v812 = vld [vmem:[%s806 + $0x28] sm:$0xff]
        %v813 = vld [vmem:[%s806 + $0x30] sm:$0xff]
        %v814 = vld [vmem:[%s806 + $0x38] sm:$0xff]
        %v815 = vld [vmem:[%s806 + $0x40] sm:$0xff]
        %v816 = vld [vmem:[%s806 + $0x48] sm:$0xff]
        %v817 = vld [vmem:[%s806 + $0x50] sm:$0x33]
        %818 = vrot.lane.b32.xlu0 %v389, 119
        %v819 = vpop.permute.xlu0 %818
        %820 = vrot.lane.b32.xlu0 %v390, 119
        %v821 = vpop.permute.xlu0 %820
        %v833 = vunpack.c.l.b16 %v807
        %v834 = vunpack.c.h.b16 %v807
        %v835 = vunpack.c.l.b16 %v808
        %v836 = vunpack.c.h.b16 %v808
        %v837 = vunpack.c.l.b16 %v809
        %v838 = vunpack.c.h.b16 %v809
        %v839 = vunpack.c.l.b16 %v810
        %v840 = vunpack.c.h.b16 %v810
        %v841 = vunpack.c.l.b16 %v811
        %v842 = vunpack.c.h.b16 %v811
        %v843 = vunpack.c.l.b16 %v812
        %v844 = vunpack.c.h.b16 %v812
        %v845 = vunpack.c.l.b16 %v813
        %v846 = vunpack.c.h.b16 %v813
        %v847 = vunpack.c.l.b16 %v814
        %v848 = vunpack.c.h.b16 %v814
        %v849 = vunpack.c.l.b16 %v815
        %v850 = vunpack.c.h.b16 %v815
        %v851 = vunpack.c.l.b16 %v816
        %v852 = vunpack.c.h.b16 %v816
        %v853 = vunpack.c.l.b16 %v817
        %v854 = vunpack.c.h.b16 %v817
        %v855 = vpack.c.b16 %v835, %v833
        %v856 = vpack.c.b16 %v836, %v834
        %v857 = vpack.c.b16 %v839, %v837
        %v858 = vpack.c.b16 %v840, %v838
        %v859 = vpack.c.b16 %v843, %v841
        %v860 = vpack.c.b16 %v844, %v842
        %v861 = vpack.c.b16 %v847, %v845
        %v862 = vpack.c.b16 %v848, %v846
        %v863 = vpack.c.b16 %v851, %v849
        %v864 = vpack.c.b16 %v852, %v850
        %v865 = vpack.c.b16 %v853, %v853
        %v866 = vpack.c.b16 %v854, %v854
        %v878 = vsel %vm475, %v819, 0
        %v881 = vsel %vm475, %v821, 0
        %v884 = vsel %vm482, %v865, 0
        %v887 = vsel %vm482, %v866, 0
        %889 = vmatprep.subr.bf16.mxu0 %v856
        %890 = vmatpush1.bf16.msra.mxu0 %v855
        %891 = vmatprep.subr.bf16.mxu0 %v858
        %892 = vmatpush1.bf16.msra.mxu0 %v857
        %893 = vmatprep.subr.bf16.mxu0 %v860
        %894 = vmatpush1.bf16.msra.mxu0 %v859
        %895 = vmatprep.subr.bf16.mxu0 %v862
        %896 = vmatpush1.bf16.msra.mxu0 %v861
        %897 = vmatprep.subr.bf16.mxu0 %v864
        %898 = vmatpush1.bf16.msra.mxu0 %v863
        %899 = vmatprep.subr.bf16.mxu0 %v887
        %900 = vmatpush1.bf16.msra.mxu0 %v884
        %901 = vmatprep.subr.bf16.mxu0 0
        %902 = vmatpush1.bf16.msra.mxu0 0
        %903 = vmatprep.subr.bf16.mxu0 0
        %904 = vmatpush1.bf16.msra.mxu0 0
        %905 = vmatprep.subr.bf16.mxu0 0
        %906 = vmatpush1.bf16.msra.mxu0 0
        %907 = vmatprep.subr.bf16.mxu0 0
        %908 = vmatpush1.bf16.msra.mxu0 0
        %909 = vmatprep.subr.bf16.mxu0 0
        %910 = vmatpush1.bf16.msra.mxu0 0
        %911 = vmatprep.subr.bf16.mxu0 0
        %912 = vmatpush1.bf16.msra.mxu0 0
        %913 = vmatprep.subr.bf16.mxu0 0
        %914 = vmatpush1.bf16.msra.mxu0 0
        %915 = vmatprep.subr.bf16.mxu0 0
        %916 = vmatpush1.bf16.msra.mxu0 0
        %917 = vmatprep.subr.bf16.mxu0 0
        %918 = vmatpush1.bf16.msra.mxu0 0
        %919 = vmatprep.subr.bf16.mxu0 0
        %920 = vmatpush1.bf16.msra.mxu0 0
        %921 = vmatprep.mubr.bf16.mxu0 0
        %922 = vmatmul.mubr.bf16.gmra.mrb[0].mxu0 %v878
        %v923 = vpop.f32.mrb[0].mxu0
        %v924 = vadd.f32 0.0, %v923
        %v925 = vpop.f32.mrb[0].mxu0
        %v926 = vadd.f32 0.0, %v925
        %v927 = vpop.f32.mrb[0].mxu0
        %v928 = vadd.f32 0.0, %v927
        %v929 = vpop.f32.mrb[0].mxu0
        %v930 = vadd.f32 0.0, %v929
        %931 = vmatprep.mubr.bf16.mxu0 0
        %932 = vmatmul.mubr.bf16.gmra.mrb[0].mxu0 %v881
        %v933 = vpop.f32.mrb[0].mxu0
        %v934 = vadd.f32 0.0, %v933
        %v935 = vpop.f32.mrb[0].mxu0
        %v936 = vadd.f32 0.0, %v935
        %v937 = vpop.f32.mrb[0].mxu0
        %v938 = vadd.f32 0.0, %v937
        %v939 = vpop.f32.mrb[0].mxu0
        %v940 = vadd.f32 0.0, %v939
        %941 = vdwg.mxu0
        %v942 = vadd.f32 %v798, %v924
        %v943 = vadd.f32 %v799, %v926
        %v944 = vadd.f32 %v800, %v928
        %v945 = vadd.f32 %v801, %v930
        %v946 = vadd.f32 %v802, %v934
        %v947 = vadd.f32 %v803, %v936
        %v948 = vadd.f32 %v804, %v938
        %v949 = vadd.f32 %v805, %v940
        %s950 = scalar_lea.vmem %s1, 352
        %v951 = vld [vmem:[%s950] sm:$0xff]
        %v952 = vld [vmem:[%s950 + $0x8] sm:$0xff]
        %v953 = vld [vmem:[%s950 + $0x10] sm:$0xff]
        %v954 = vld [vmem:[%s950 + $0x18] sm:$0xff]
        %v955 = vld [vmem:[%s950 + $0x20] sm:$0xff]
        %v956 = vld [vmem:[%s950 + $0x28] sm:$0xff]
        %v957 = vld [vmem:[%s950 + $0x30] sm:$0xff]
        %v958 = vld [vmem:[%s950 + $0x38] sm:$0xff]
        %v959 = vld [vmem:[%s950 + $0x40] sm:$0xff]
        %v960 = vld [vmem:[%s950 + $0x48] sm:$0xff]
        %v961 = vld [vmem:[%s950 + $0x50] sm:$0x33]
        %962 = vrot.lane.b32.xlu0 %v389, 116
        %v963 = vpop.permute.xlu0 %962
        %964 = vrot.lane.b32.xlu0 %v390, 116
        %v965 = vpop.permute.xlu0 %964
        %v977 = vunpack.c.l.b16 %v951
        %v978 = vunpack.c.h.b16 %v951
        %v979 = vunpack.c.l.b16 %v952
        %v980 = vunpack.c.h.b16 %v952
        %v981 = vunpack.c.l.b16 %v953
        %v982 = vunpack.c.h.b16 %v953
        %v983 = vunpack.c.l.b16 %v954
        %v984 = vunpack.c.h.b16 %v954
        %v985 = vunpack.c.l.b16 %v955
        %v986 = vunpack.c.h.b16 %v955
        %v987 = vunpack.c.l.b16 %v956
        %v988 = vunpack.c.h.b16 %v956
        %v989 = vunpack.c.l.b16 %v957
        %v990 = vunpack.c.h.b16 %v957
        %v991 = vunpack.c.l.b16 %v958
        %v992 = vunpack.c.h.b16 %v958
        %v993 = vunpack.c.l.b16 %v959
        %v994 = vunpack.c.h.b16 %v959
        %v995 = vunpack.c.l.b16 %v960
        %v996 = vunpack.c.h.b16 %v960
        %v997 = vunpack.c.l.b16 %v961
        %v998 = vunpack.c.h.b16 %v961
        %v999 = vpack.c.b16 %v979, %v977
        %v1000 = vpack.c.b16 %v980, %v978
        %v1001 = vpack.c.b16 %v983, %v981
        %v1002 = vpack.c.b16 %v984, %v982
        %v1003 = vpack.c.b16 %v987, %v985
        %v1004 = vpack.c.b16 %v988, %v986
        %v1005 = vpack.c.b16 %v991, %v989
        %v1006 = vpack.c.b16 %v992, %v990
        %v1007 = vpack.c.b16 %v995, %v993
        %v1008 = vpack.c.b16 %v996, %v994
        %v1009 = vpack.c.b16 %v997, %v997
        %v1010 = vpack.c.b16 %v998, %v998
        %v1022 = vsel %vm475, %v963, 0
        %v1025 = vsel %vm475, %v965, 0
        %v1028 = vsel %vm482, %v1009, 0
        %v1031 = vsel %vm482, %v1010, 0
        %1033 = vmatprep.subr.bf16.mxu0 %v1000
        %1034 = vmatpush1.bf16.msra.mxu0 %v999
        %1035 = vmatprep.subr.bf16.mxu0 %v1002
        %1036 = vmatpush1.bf16.msra.mxu0 %v1001
        %1037 = vmatprep.subr.bf16.mxu0 %v1004
        %1038 = vmatpush1.bf16.msra.mxu0 %v1003
        %1039 = vmatprep.subr.bf16.mxu0 %v1006
        %1040 = vmatpush1.bf16.msra.mxu0 %v1005
        %1041 = vmatprep.subr.bf16.mxu0 %v1008
        %1042 = vmatpush1.bf16.msra.mxu0 %v1007
        %1043 = vmatprep.subr.bf16.mxu0 %v1031
        %1044 = vmatpush1.bf16.msra.mxu0 %v1028
        %1045 = vmatprep.subr.bf16.mxu0 0
        %1046 = vmatpush1.bf16.msra.mxu0 0
        %1047 = vmatprep.subr.bf16.mxu0 0
        %1048 = vmatpush1.bf16.msra.mxu0 0
        %1049 = vmatprep.subr.bf16.mxu0 0
        %1050 = vmatpush1.bf16.msra.mxu0 0
        %1051 = vmatprep.subr.bf16.mxu0 0
        %1052 = vmatpush1.bf16.msra.mxu0 0
        %1053 = vmatprep.subr.bf16.mxu0 0
        %1054 = vmatpush1.bf16.msra.mxu0 0
        %1055 = vmatprep.subr.bf16.mxu0 0
        %1056 = vmatpush1.bf16.msra.mxu0 0
        %1057 = vmatprep.subr.bf16.mxu0 0
        %1058 = vmatpush1.bf16.msra.mxu0 0
        %1059 = vmatprep.subr.bf16.mxu0 0
        %1060 = vmatpush1.bf16.msra.mxu0 0
        %1061 = vmatprep.subr.bf16.mxu0 0
        %1062 = vmatpush1.bf16.msra.mxu0 0
        %1063 = vmatprep.subr.bf16.mxu0 0
        %1064 = vmatpush1.bf16.msra.mxu0 0
        %1065 = vmatprep.mubr.bf16.mxu0 0
        %1066 = vmatmul.mubr.bf16.gmra.mrb[0].mxu0 %v1022
        %v1067 = vpop.f32.mrb[0].mxu0
        %v1068 = vadd.f32 0.0, %v1067
        %v1069 = vpop.f32.mrb[0].mxu0
        %v1070 = vadd.f32 0.0, %v1069
        %v1071 = vpop.f32.mrb[0].mxu0
        %v1072 = vadd.f32 0.0, %v1071
        %v1073 = vpop.f32.mrb[0].mxu0
        %v1074 = vadd.f32 0.0, %v1073
        %1075 = vmatprep.mubr.bf16.mxu0 0
        %1076 = vmatmul.mubr.bf16.gmra.mrb[0].mxu0 %v1025
        %v1077 = vpop.f32.mrb[0].mxu0
        %v1078 = vadd.f32 0.0, %v1077
        %v1079 = vpop.f32.mrb[0].mxu0
        %v1080 = vadd.f32 0.0, %v1079
        %v1081 = vpop.f32.mrb[0].mxu0
        %v1082 = vadd.f32 0.0, %v1081
        %v1083 = vpop.f32.mrb[0].mxu0
        %v1084 = vadd.f32 0.0, %v1083
        %1085 = vdwg.mxu0
        %v1086 = vadd.f32 %v942, %v1068
        %v1087 = vadd.f32 %v943, %v1070
        %v1088 = vadd.f32 %v944, %v1072
        %v1089 = vadd.f32 %v945, %v1074
        %v1090 = vadd.f32 %v946, %v1078
        %v1091 = vadd.f32 %v947, %v1080
        %v1092 = vadd.f32 %v948, %v1082
        %v1093 = vadd.f32 %v949, %v1084
        %s1094 = scalar_lea.vmem %s1, 440
        %v1095 = vld [vmem:[%s1094] sm:$0xff]
        %v1096 = vld [vmem:[%s1094 + $0x8] sm:$0xff]
        %v1097 = vld [vmem:[%s1094 + $0x10] sm:$0xff]
        %v1098 = vld [vmem:[%s1094 + $0x18] sm:$0xff]
        %v1099 = vld [vmem:[%s1094 + $0x20] sm:$0xff]
        %v1100 = vld [vmem:[%s1094 + $0x28] sm:$0xff]
        %v1101 = vld [vmem:[%s1094 + $0x30] sm:$0xff]
        %v1102 = vld [vmem:[%s1094 + $0x38] sm:$0xff]
        %v1103 = vld [vmem:[%s1094 + $0x40] sm:$0xff]
        %v1104 = vld [vmem:[%s1094 + $0x48] sm:$0xff]
        %v1105 = vld [vmem:[%s1094 + $0x50] sm:$0x33]
        %vm1106 = vsmask.f32 7424
        %v1107 = vshrl.u32 %v389, 16
        %v1109 = vshll.u32 %v389, 16
        %v1111 = vrot.slane %v1109, 1
        %v1112 = vor.u32 %v1107, %v1111
        %v1113 = vshll.u32 %v390, 16
        %v1115 = vrot.slane %v1113, 1
        %v1116 = vsel %vm1106, %v1112, %v1115
        %v1117 = vshrl.u32 %v390, 16
        %v1119 = vor.u32 %v1117, %v1115
        %v1131 = vunpack.c.l.b16 %v1095
        %v1132 = vunpack.c.h.b16 %v1095
        %v1133 = vunpack.c.l.b16 %v1096
        %v1134 = vunpack.c.h.b16 %v1096
        %v1135 = vunpack.c.l.b16 %v1097
        %v1136 = vunpack.c.h.b16 %v1097
        %v1137 = vunpack.c.l.b16 %v1098
        %v1138 = vunpack.c.h.b16 %v1098
        %v1139 = vunpack.c.l.b16 %v1099
        %v1140 = vunpack.c.h.b16 %v1099
        %v1141 = vunpack.c.l.b16 %v1100
        %v1142 = vunpack.c.h.b16 %v1100
        %v1143 = vunpack.c.l.b16 %v1101
        %v1144 = vunpack.c.h.b16 %v1101
        %v1145 = vunpack.c.l.b16 %v1102
        %v1146 = vunpack.c.h.b16 %v1102
        %v1147 = vunpack.c.l.b16 %v1103
        %v1148 = vunpack.c.h.b16 %v1103
        %v1149 = vunpack.c.l.b16 %v1104
        %v1150 = vunpack.c.h.b16 %v1104
        %v1151 = vunpack.c.l.b16 %v1105
        %v1152 = vunpack.c.h.b16 %v1105
        %v1153 = vpack.c.b16 %v1133, %v1131
        %v1154 = vpack.c.b16 %v1134, %v1132
        %v1155 = vpack.c.b16 %v1137, %v1135
        %v1156 = vpack.c.b16 %v1138, %v1136
        %v1157 = vpack.c.b16 %v1141, %v1139
        %v1158 = vpack.c.b16 %v1142, %v1140
        %v1159 = vpack.c.b16 %v1145, %v1143
        %v1160 = vpack.c.b16 %v1146, %v1144
        %v1161 = vpack.c.b16 %v1149, %v1147
        %v1162 = vpack.c.b16 %v1150, %v1148
        %v1163 = vpack.c.b16 %v1151, %v1151
        %v1164 = vpack.c.b16 %v1152, %v1152
        %v1176 = vsel %vm475, %v1116, 0
        %v1179 = vsel %vm475, %v1119, 0
        %v1182 = vsel %vm482, %v1163, 0
        %v1185 = vsel %vm482, %v1164, 0
        %1187 = vmatprep.subr.bf16.mxu0 %v1154
        %1188 = vmatpush1.bf16.msra.mxu0 %v1153
        %1189 = vmatprep.subr.bf16.mxu0 %v1156
        %1190 = vmatpush1.bf16.msra.mxu0 %v1155
        %1191 = vmatprep.subr.bf16.mxu0 %v1158
        %1192 = vmatpush1.bf16.msra.mxu0 %v1157
        %1193 = vmatprep.subr.bf16.mxu0 %v1160
        %1194 = vmatpush1.bf16.msra.mxu0 %v1159
        %1195 = vmatprep.subr.bf16.mxu0 %v1162
        %1196 = vmatpush1.bf16.msra.mxu0 %v1161
        %1197 = vmatprep.subr.bf16.mxu0 %v1185
        %1198 = vmatpush1.bf16.msra.mxu0 %v1182
        %1199 = vmatprep.subr.bf16.mxu0 0
        %1200 = vmatpush1.bf16.msra.mxu0 0
        %1201 = vmatprep.subr.bf16.mxu0 0
        %1202 = vmatpush1.bf16.msra.mxu0 0
        %1203 = vmatprep.subr.bf16.mxu0 0
        %1204 = vmatpush1.bf16.msra.mxu0 0
        %1205 = vmatprep.subr.bf16.mxu0 0
        %1206 = vmatpush1.bf16.msra.mxu0 0
        %1207 = vmatprep.subr.bf16.mxu0 0
        %1208 = vmatpush1.bf16.msra.mxu0 0
        %1209 = vmatprep.subr.bf16.mxu0 0
        %1210 = vmatpush1.bf16.msra.mxu0 0
        %1211 = vmatprep.subr.bf16.mxu0 0
        %1212 = vmatpush1.bf16.msra.mxu0 0
        %1213 = vmatprep.subr.bf16.mxu0 0
        %1214 = vmatpush1.bf16.msra.mxu0 0
        %1215 = vmatprep.subr.bf16.mxu0 0
        %1216 = vmatpush1.bf16.msra.mxu0 0
        %1217 = vmatprep.subr.bf16.mxu0 0
        %1218 = vmatpush1.bf16.msra.mxu0 0
        %1219 = vmatprep.mubr.bf16.mxu0 0
        %1220 = vmatmul.mubr.bf16.gmra.mrb[0].mxu0 %v1176
        %v1221 = vpop.f32.mrb[0].mxu0
        %v1222 = vadd.f32 0.0, %v1221
        %v1223 = vpop.f32.mrb[0].mxu0
        %v1224 = vadd.f32 0.0, %v1223
        %v1225 = vpop.f32.mrb[0].mxu0
        %v1226 = vadd.f32 0.0, %v1225
        %v1227 = vpop.f32.mrb[0].mxu0
        %v1228 = vadd.f32 0.0, %v1227
        %1229 = vmatprep.mubr.bf16.mxu0 0
        %1230 = vmatmul.mubr.bf16.gmra.mrb[0].mxu0 %v1179
        %v1231 = vpop.f32.mrb[0].mxu0
        %v1232 = vadd.f32 0.0, %v1231
        %v1233 = vpop.f32.mrb[0].mxu0
        %v1234 = vadd.f32 0.0, %v1233
        %v1235 = vpop.f32.mrb[0].mxu0
        %v1236 = vadd.f32 0.0, %v1235
        %v1237 = vpop.f32.mrb[0].mxu0
        %v1238 = vadd.f32 0.0, %v1237
        %1239 = vdwg.mxu0
        %v1240 = vadd.f32 %v1086, %v1222
        %v1241 = vadd.f32 %v1087, %v1224
        %v1242 = vadd.f32 %v1088, %v1226
        %v1243 = vadd.f32 %v1089, %v1228
        %v1244 = vadd.f32 %v1090, %v1232
        %v1245 = vadd.f32 %v1091, %v1234
        %v1246 = vadd.f32 %v1092, %v1236
        %v1247 = vadd.f32 %v1093, %v1238
        %s1248 = scalar_lea.vmem %s1, 528
        %v1249 = vld [vmem:[%s1248] sm:$0xff]
        %v1250 = vld [vmem:[%s1248 + $0x8] sm:$0xff]
        %v1251 = vld [vmem:[%s1248 + $0x10] sm:$0xff]
        %v1252 = vld [vmem:[%s1248 + $0x18] sm:$0xff]
        %v1253 = vld [vmem:[%s1248 + $0x20] sm:$0xff]
        %v1254 = vld [vmem:[%s1248 + $0x28] sm:$0xff]
        %v1255 = vld [vmem:[%s1248 + $0x30] sm:$0xff]
        %v1256 = vld [vmem:[%s1248 + $0x38] sm:$0xff]
        %v1257 = vld [vmem:[%s1248 + $0x40] sm:$0xff]
        %v1258 = vld [vmem:[%s1248 + $0x48] sm:$0xff]
        %v1259 = vld [vmem:[%s1248 + $0x50] sm:$0x33]
        %1260 = vrot.lane.b32.xlu0 %v1116, 125
        %v1261 = vpop.permute.xlu0 %1260
        %1262 = vrot.lane.b32.xlu0 %v1119, 125
        %v1263 = vpop.permute.xlu0 %1262
        %v1275 = vunpack.c.l.b16 %v1249
        %v1276 = vunpack.c.h.b16 %v1249
        %v1277 = vunpack.c.l.b16 %v1250
        %v1278 = vunpack.c.h.b16 %v1250
        %v1279 = vunpack.c.l.b16 %v1251
        %v1280 = vunpack.c.h.b16 %v1251
        %v1281 = vunpack.c.l.b16 %v1252
        %v1282 = vunpack.c.h.b16 %v1252
        %v1283 = vunpack.c.l.b16 %v1253
        %v1284 = vunpack.c.h.b16 %v1253
        %v1285 = vunpack.c.l.b16 %v1254
        %v1286 = vunpack.c.h.b16 %v1254
        %v1287 = vunpack.c.l.b16 %v1255
        %v1288 = vunpack.c.h.b16 %v1255
        %v1289 = vunpack.c.l.b16 %v1256
        %v1290 = vunpack.c.h.b16 %v1256
        %v1291 = vunpack.c.l.b16 %v1257
        %v1292 = vunpack.c.h.b16 %v1257
        %v1293 = vunpack.c.l.b16 %v1258
        %v1294 = vunpack.c.h.b16 %v1258
        %v1295 = vunpack.c.l.b16 %v1259
        %v1296 = vunpack.c.h.b16 %v1259
        %v1297 = vpack.c.b16 %v1277, %v1275
        %v1298 = vpack.c.b16 %v1278, %v1276
        %v1299 = vpack.c.b16 %v1281, %v1279
        %v1300 = vpack.c.b16 %v1282, %v1280
        %v1301 = vpack.c.b16 %v1285, %v1283
        %v1302 = vpack.c.b16 %v1286, %v1284
        %v1303 = vpack.c.b16 %v1289, %v1287
        %v1304 = vpack.c.b16 %v1290, %v1288
        %v1305 = vpack.c.b16 %v1293, %v1291
        %v1306 = vpack.c.b16 %v1294, %v1292
        %v1307 = vpack.c.b16 %v1295, %v1295
        %v1308 = vpack.c.b16 %v1296, %v1296
        %v1320 = vsel %vm475, %v1261, 0
        %v1323 = vsel %vm475, %v1263, 0
        %v1326 = vsel %vm482, %v1307, 0
        %v1329 = vsel %vm482, %v1308, 0
        %1331 = vmatprep.subr.bf16.mxu0 %v1298
        %1332 = vmatpush1.bf16.msra.mxu0 %v1297
        %1333 = vmatprep.subr.bf16.mxu0 %v1300
        %1334 = vmatpush1.bf16.msra.mxu0 %v1299
        %1335 = vmatprep.subr.bf16.mxu0 %v1302
        %1336 = vmatpush1.bf16.msra.mxu0 %v1301
        %1337 = vmatprep.subr.bf16.mxu0 %v1304
        %1338 = vmatpush1.bf16.msra.mxu0 %v1303
        %1339 = vmatprep.subr.bf16.mxu0 %v1306
        %1340 = vmatpush1.bf16.msra.mxu0 %v1305
        %1341 = vmatprep.subr.bf16.mxu0 %v1329
        %1342 = vmatpush1.bf16.msra.mxu0 %v1326
        %1343 = vmatprep.subr.bf16.mxu0 0
        %1344 = vmatpush1.bf16.msra.mxu0 0
        %1345 = vmatprep.subr.bf16.mxu0 0
        %1346 = vmatpush1.bf16.msra.mxu0 0
        %1347 = vmatprep.subr.bf16.mxu0 0
        %1348 = vmatpush1.bf16.msra.mxu0 0
        %1349 = vmatprep.subr.bf16.mxu0 0
        %1350 = vmatpush1.bf16.msra.mxu0 0
        %1351 = vmatprep.subr.bf16.mxu0 0
        %1352 = vmatpush1.bf16.msra.mxu0 0
        %1353 = vmatprep.subr.bf16.mxu0 0
        %1354 = vmatpush1.bf16.msra.mxu0 0
        %1355 = vmatprep.subr.bf16.mxu0 0
        %1356 = vmatpush1.bf16.msra.mxu0 0
        %1357 = vmatprep.subr.bf16.mxu0 0
        %1358 = vmatpush1.bf16.msra.mxu0 0
        %1359 = vmatprep.subr.bf16.mxu0 0
        %1360 = vmatpush1.bf16.msra.mxu0 0
        %1361 = vmatprep.subr.bf16.mxu0 0
        %1362 = vmatpush1.bf16.msra.mxu0 0
        %1363 = vmatprep.mubr.bf16.mxu0 0
        %1364 = vmatmul.mubr.bf16.gmra.mrb[0].mxu0 %v1320
        %v1365 = vpop.f32.mrb[0].mxu0
        %v1366 = vadd.f32 0.0, %v1365
        %v1367 = vpop.f32.mrb[0].mxu0
        %v1368 = vadd.f32 0.0, %v1367
        %v1369 = vpop.f32.mrb[0].mxu0
        %v1370 = vadd.f32 0.0, %v1369
        %v1371 = vpop.f32.mrb[0].mxu0
        %v1372 = vadd.f32 0.0, %v1371
        %1373 = vmatprep.mubr.bf16.mxu0 0
        %1374 = vmatmul.mubr.bf16.gmra.mrb[0].mxu0 %v1323
        %v1375 = vpop.f32.mrb[0].mxu0
        %v1376 = vadd.f32 0.0, %v1375
        %v1377 = vpop.f32.mrb[0].mxu0
        %v1378 = vadd.f32 0.0, %v1377
        %v1379 = vpop.f32.mrb[0].mxu0
        %v1380 = vadd.f32 0.0, %v1379
        %v1381 = vpop.f32.mrb[0].mxu0
        %v1382 = vadd.f32 0.0, %v1381
        %1383 = vdwg.mxu0
        %v1384 = vadd.f32 %v1240, %v1366
        %v1385 = vadd.f32 %v1241, %v1368
        %v1386 = vadd.f32 %v1242, %v1370
        %v1387 = vadd.f32 %v1243, %v1372
        %v1388 = vadd.f32 %v1244, %v1376
        %v1389 = vadd.f32 %v1245, %v1378
        %v1390 = vadd.f32 %v1246, %v1380
        %v1391 = vadd.f32 %v1247, %v1382
        %s1392 = scalar_lea.vmem %s1, 616
        %v1393 = vld [vmem:[%s1392] sm:$0xff]
        %v1394 = vld [vmem:[%s1392 + $0x8] sm:$0xff]
        %v1395 = vld [vmem:[%s1392 + $0x10] sm:$0xff]
        %v1396 = vld [vmem:[%s1392 + $0x18] sm:$0xff]
        %v1397 = vld [vmem:[%s1392 + $0x20] sm:$0xff]
        %v1398 = vld [vmem:[%s1392 + $0x28] sm:$0xff]
        %v1399 = vld [vmem:[%s1392 + $0x30] sm:$0xff]
        %v1400 = vld [vmem:[%s1392 + $0x38] sm:$0xff]
        %v1401 = vld [vmem:[%s1392 + $0x40] sm:$0xff]
        %v1402 = vld [vmem:[%s1392 + $0x48] sm:$0xff]
        %v1403 = vld [vmem:[%s1392 + $0x50] sm:$0x33]
        %1404 = vrot.lane.b32.xlu0 %v1116, 122
        %v1405 = vpop.permute.xlu0 %1404
        %1406 = vrot.lane.b32.xlu0 %v1119, 122
        %v1407 = vpop.permute.xlu0 %1406
        %v1419 = vunpack.c.l.b16 %v1393
        %v1420 = vunpack.c.h.b16 %v1393
        %v1421 = vunpack.c.l.b16 %v1394
        %v1422 = vunpack.c.h.b16 %v1394
        %v1423 = vunpack.c.l.b16 %v1395
        %v1424 = vunpack.c.h.b16 %v1395
        %v1425 = vunpack.c.l.b16 %v1396
        %v1426 = vunpack.c.h.b16 %v1396
        %v1427 = vunpack.c.l.b16 %v1397
        %v1428 = vunpack.c.h.b16 %v1397
        %v1429 = vunpack.c.l.b16 %v1398
        %v1430 = vunpack.c.h.b16 %v1398
        %v1431 = vunpack.c.l.b16 %v1399
        %v1432 = vunpack.c.h.b16 %v1399
        %v1433 = vunpack.c.l.b16 %v1400
        %v1434 = vunpack.c.h.b16 %v1400
        %v1435 = vunpack.c.l.b16 %v1401
        %v1436 = vunpack.c.h.b16 %v1401
        %v1437 = vunpack.c.l.b16 %v1402
        %v1438 = vunpack.c.h.b16 %v1402
        %v1439 = vunpack.c.l.b16 %v1403
        %v1440 = vunpack.c.h.b16 %v1403
        %v1441 = vpack.c.b16 %v1421, %v1419
        %v1442 = vpack.c.b16 %v1422, %v1420
        %v1443 = vpack.c.b16 %v1425, %v1423
        %v1444 = vpack.c.b16 %v1426, %v1424
        %v1445 = vpack.c.b16 %v1429, %v1427
        %v1446 = vpack.c.b16 %v1430, %v1428
        %v1447 = vpack.c.b16 %v1433, %v1431
        %v1448 = vpack.c.b16 %v1434, %v1432
        %v1449 = vpack.c.b16 %v1437, %v1435
        %v1450 = vpack.c.b16 %v1438, %v1436
        %v1451 = vpack.c.b16 %v1439, %v1439
        %v1452 = vpack.c.b16 %v1440, %v1440
        %v1464 = vsel %vm475, %v1405, 0
        %v1467 = vsel %vm475, %v1407, 0
        %v1470 = vsel %vm482, %v1451, 0
        %v1473 = vsel %vm482, %v1452, 0
        %1475 = vmatprep.subr.bf16.mxu0 %v1442
        %1476 = vmatpush1.bf16.msra.mxu0 %v1441
        %1477 = vmatprep.subr.bf16.mxu0 %v1444
        %1478 = vmatpush1.bf16.msra.mxu0 %v1443
        %1479 = vmatprep.subr.bf16.mxu0 %v1446
        %1480 = vmatpush1.bf16.msra.mxu0 %v1445
        %1481 = vmatprep.subr.bf16.mxu0 %v1448
        %1482 = vmatpush1.bf16.msra.mxu0 %v1447
        %1483 = vmatprep.subr.bf16.mxu0 %v1450
        %1484 = vmatpush1.bf16.msra.mxu0 %v1449
        %1485 = vmatprep.subr.bf16.mxu0 %v1473
        %1486 = vmatpush1.bf16.msra.mxu0 %v1470
        %1487 = vmatprep.subr.bf16.mxu0 0
        %1488 = vmatpush1.bf16.msra.mxu0 0
        %1489 = vmatprep.subr.bf16.mxu0 0
        %1490 = vmatpush1.bf16.msra.mxu0 0
        %1491 = vmatprep.subr.bf16.mxu0 0
        %1492 = vmatpush1.bf16.msra.mxu0 0
        %1493 = vmatprep.subr.bf16.mxu0 0
        %1494 = vmatpush1.bf16.msra.mxu0 0
        %1495 = vmatprep.subr.bf16.mxu0 0
        %1496 = vmatpush1.bf16.msra.mxu0 0
        %1497 = vmatprep.subr.bf16.mxu0 0
        %1498 = vmatpush1.bf16.msra.mxu0 0
        %1499 = vmatprep.subr.bf16.mxu0 0
        %1500 = vmatpush1.bf16.msra.mxu0 0
        %1501 = vmatprep.subr.bf16.mxu0 0
        %1502 = vmatpush1.bf16.msra.mxu0 0
        %1503 = vmatprep.subr.bf16.mxu0 0
        %1504 = vmatpush1.bf16.msra.mxu0 0
        %1505 = vmatprep.subr.bf16.mxu0 0
        %1506 = vmatpush1.bf16.msra.mxu0 0
        %1507 = vmatprep.mubr.bf16.mxu0 0
        %1508 = vmatmul.mubr.bf16.gmra.mrb[0].mxu0 %v1464
        %v1509 = vpop.f32.mrb[0].mxu0
        %v1510 = vadd.f32 0.0, %v1509
        %v1511 = vpop.f32.mrb[0].mxu0
        %v1512 = vadd.f32 0.0, %v1511
        %v1513 = vpop.f32.mrb[0].mxu0
        %v1514 = vadd.f32 0.0, %v1513
        %v1515 = vpop.f32.mrb[0].mxu0
        %v1516 = vadd.f32 0.0, %v1515
        %1517 = vmatprep.mubr.bf16.mxu0 0
        %1518 = vmatmul.mubr.bf16.gmra.mrb[0].mxu0 %v1467
        %v1519 = vpop.f32.mrb[0].mxu0
        %v1520 = vadd.f32 0.0, %v1519
        %v1521 = vpop.f32.mrb[0].mxu0
        %v1522 = vadd.f32 0.0, %v1521
        %v1523 = vpop.f32.mrb[0].mxu0
        %v1524 = vadd.f32 0.0, %v1523
        %v1525 = vpop.f32.mrb[0].mxu0
        %v1526 = vadd.f32 0.0, %v1525
        %1527 = vdwg.mxu0
        %v1528 = vadd.f32 %v1384, %v1510
        %v1529 = vadd.f32 %v1385, %v1512
        %v1530 = vadd.f32 %v1386, %v1514
        %v1531 = vadd.f32 %v1387, %v1516
        %v1532 = vadd.f32 %v1388, %v1520
        %v1533 = vadd.f32 %v1389, %v1522
        %v1534 = vadd.f32 %v1390, %v1524
        %v1535 = vadd.f32 %v1391, %v1526
        %s1536 = scalar_lea.vmem %s1, 704
        %v1537 = vld [vmem:[%s1536] sm:$0xff]
        %v1538 = vld [vmem:[%s1536 + $0x8] sm:$0xff]
        %v1539 = vld [vmem:[%s1536 + $0x10] sm:$0xff]
        %v1540 = vld [vmem:[%s1536 + $0x18] sm:$0xff]
        %v1541 = vld [vmem:[%s1536 + $0x20] sm:$0xff]
        %v1542 = vld [vmem:[%s1536 + $0x28] sm:$0xff]
        %v1543 = vld [vmem:[%s1536 + $0x30] sm:$0xff]
        %v1544 = vld [vmem:[%s1536 + $0x38] sm:$0xff]
        %v1545 = vld [vmem:[%s1536 + $0x40] sm:$0xff]
        %v1546 = vld [vmem:[%s1536 + $0x48] sm:$0xff]
        %v1547 = vld [vmem:[%s1536 + $0x50] sm:$0x33]
        %1548 = vrot.lane.b32.xlu0 %v1116, 119
        %v1549 = vpop.permute.xlu0 %1548
        %1550 = vrot.lane.b32.xlu0 %v1119, 119
        %v1551 = vpop.permute.xlu0 %1550
        %v1563 = vunpack.c.l.b16 %v1537
        %v1564 = vunpack.c.h.b16 %v1537
        %v1565 = vunpack.c.l.b16 %v1538
        %v1566 = vunpack.c.h.b16 %v1538
        %v1567 = vunpack.c.l.b16 %v1539
        %v1568 = vunpack.c.h.b16 %v1539
        %v1569 = vunpack.c.l.b16 %v1540
        %v1570 = vunpack.c.h.b16 %v1540
        %v1571 = vunpack.c.l.b16 %v1541
        %v1572 = vunpack.c.h.b16 %v1541
        %v1573 = vunpack.c.l.b16 %v1542
        %v1574 = vunpack.c.h.b16 %v1542
        %v1575 = vunpack.c.l.b16 %v1543
        %v1576 = vunpack.c.h.b16 %v1543
        %v1577 = vunpack.c.l.b16 %v1544
        %v1578 = vunpack.c.h.b16 %v1544
        %v1579 = vunpack.c.l.b16 %v1545
        %v1580 = vunpack.c.h.b16 %v1545
        %v1581 = vunpack.c.l.b16 %v1546
        %v1582 = vunpack.c.h.b16 %v1546
        %v1583 = vunpack.c.l.b16 %v1547
        %v1584 = vunpack.c.h.b16 %v1547
        %v1585 = vpack.c.b16 %v1565, %v1563
        %v1586 = vpack.c.b16 %v1566, %v1564
        %v1587 = vpack.c.b16 %v1569, %v1567
        %v1588 = vpack.c.b16 %v1570, %v1568
        %v1589 = vpack.c.b16 %v1573, %v1571
        %v1590 = vpack.c.b16 %v1574, %v1572
        %v1591 = vpack.c.b16 %v1577, %v1575
        %v1592 = vpack.c.b16 %v1578, %v1576
        %v1593 = vpack.c.b16 %v1581, %v1579
        %v1594 = vpack.c.b16 %v1582, %v1580
        %v1595 = vpack.c.b16 %v1583, %v1583
        %v1596 = vpack.c.b16 %v1584, %v1584
        %v1608 = vsel %vm475, %v1549, 0
        %v1611 = vsel %vm475, %v1551, 0
        %v1614 = vsel %vm482, %v1595, 0
        %v1617 = vsel %vm482, %v1596, 0
        %1619 = vmatprep.subr.bf16.mxu0 %v1586
        %1620 = vmatpush1.bf16.msra.mxu0 %v1585
        %1621 = vmatprep.subr.bf16.mxu0 %v1588
        %1622 = vmatpush1.bf16.msra.mxu0 %v1587
        %1623 = vmatprep.subr.bf16.mxu0 %v1590
        %1624 = vmatpush1.bf16.msra.mxu0 %v1589
        %1625 = vmatprep.subr.bf16.mxu0 %v1592
        %1626 = vmatpush1.bf16.msra.mxu0 %v1591
        %1627 = vmatprep.subr.bf16.mxu0 %v1594
        %1628 = vmatpush1.bf16.msra.mxu0 %v1593
        %1629 = vmatprep.subr.bf16.mxu0 %v1617
        %1630 = vmatpush1.bf16.msra.mxu0 %v1614
        %1631 = vmatprep.subr.bf16.mxu0 0
        %1632 = vmatpush1.bf16.msra.mxu0 0
        %1633 = vmatprep.subr.bf16.mxu0 0
        %1634 = vmatpush1.bf16.msra.mxu0 0
        %1635 = vmatprep.subr.bf16.mxu0 0
        %1636 = vmatpush1.bf16.msra.mxu0 0
        %1637 = vmatprep.subr.bf16.mxu0 0
        %1638 = vmatpush1.bf16.msra.mxu0 0
        %1639 = vmatprep.subr.bf16.mxu0 0
        %1640 = vmatpush1.bf16.msra.mxu0 0
        %1641 = vmatprep.subr.bf16.mxu0 0
        %1642 = vmatpush1.bf16.msra.mxu0 0
        %1643 = vmatprep.subr.bf16.mxu0 0
        %1644 = vmatpush1.bf16.msra.mxu0 0
        %1645 = vmatprep.subr.bf16.mxu0 0
        %1646 = vmatpush1.bf16.msra.mxu0 0
        %1647 = vmatprep.subr.bf16.mxu0 0
        %1648 = vmatpush1.bf16.msra.mxu0 0
        %1649 = vmatprep.subr.bf16.mxu0 0
        %1650 = vmatpush1.bf16.msra.mxu0 0
        %1651 = vmatprep.mubr.bf16.mxu0 0
        %1652 = vmatmul.mubr.bf16.gmra.mrb[0].mxu0 %v1608
        %v1653 = vpop.f32.mrb[0].mxu0
        %v1654 = vadd.f32 0.0, %v1653
        %v1655 = vpop.f32.mrb[0].mxu0
        %v1656 = vadd.f32 0.0, %v1655
        %v1657 = vpop.f32.mrb[0].mxu0
        %v1658 = vadd.f32 0.0, %v1657
        %v1659 = vpop.f32.mrb[0].mxu0
        %v1660 = vadd.f32 0.0, %v1659
        %1661 = vmatprep.mubr.bf16.mxu0 0
        %1662 = vmatmul.mubr.bf16.gmra.mrb[0].mxu0 %v1611
        %v1663 = vpop.f32.mrb[0].mxu0
        %v1664 = vadd.f32 0.0, %v1663
        %v1665 = vpop.f32.mrb[0].mxu0
        %v1666 = vadd.f32 0.0, %v1665
        %v1667 = vpop.f32.mrb[0].mxu0
        %v1668 = vadd.f32 0.0, %v1667
        %v1669 = vpop.f32.mrb[0].mxu0
        %v1670 = vadd.f32 0.0, %v1669
        %1671 = vdwg.mxu0
        %v1672 = vadd.f32 %v1528, %v1654
        %v1673 = vadd.f32 %v1529, %v1656
        %v1674 = vadd.f32 %v1530, %v1658
        %v1675 = vadd.f32 %v1531, %v1660
        %v1676 = vadd.f32 %v1532, %v1664
        %v1677 = vadd.f32 %v1533, %v1666
        %v1678 = vadd.f32 %v1534, %v1668
        %v1679 = vadd.f32 %v1535, %v1670
        %s1680 = scalar_lea.vmem %s1, 792
        %v1681 = vld [vmem:[%s1680] sm:$0xff]
        %v1682 = vld [vmem:[%s1680 + $0x8] sm:$0xff]
        %v1683 = vld [vmem:[%s1680 + $0x10] sm:$0xff]
        %v1684 = vld [vmem:[%s1680 + $0x18] sm:$0xff]
        %v1685 = vld [vmem:[%s1680 + $0x20] sm:$0xff]
        %v1686 = vld [vmem:[%s1680 + $0x28] sm:$0xff]
        %v1687 = vld [vmem:[%s1680 + $0x30] sm:$0xff]
        %v1688 = vld [vmem:[%s1680 + $0x38] sm:$0xff]
        %v1689 = vld [vmem:[%s1680 + $0x40] sm:$0xff]
        %v1690 = vld [vmem:[%s1680 + $0x48] sm:$0xff]
        %v1691 = vld [vmem:[%s1680 + $0x50] sm:$0x33]
        %1692 = vrot.lane.b32.xlu0 %v1116, 116
        %v1693 = vpop.permute.xlu0 %1692
        %1694 = vrot.lane.b32.xlu0 %v1119, 116
        %v1695 = vpop.permute.xlu0 %1694
        %v1707 = vunpack.c.l.b16 %v1681
        %v1708 = vunpack.c.h.b16 %v1681
        %v1709 = vunpack.c.l.b16 %v1682
        %v1710 = vunpack.c.h.b16 %v1682
        %v1711 = vunpack.c.l.b16 %v1683
        %v1712 = vunpack.c.h.b16 %v1683
        %v1713 = vunpack.c.l.b16 %v1684
        %v1714 = vunpack.c.h.b16 %v1684
        %v1715 = vunpack.c.l.b16 %v1685
        %v1716 = vunpack.c.h.b16 %v1685
        %v1717 = vunpack.c.l.b16 %v1686
        %v1718 = vunpack.c.h.b16 %v1686
        %v1719 = vunpack.c.l.b16 %v1687
        %v1720 = vunpack.c.h.b16 %v1687
        %v1721 = vunpack.c.l.b16 %v1688
        %v1722 = vunpack.c.h.b16 %v1688
        %v1723 = vunpack.c.l.b16 %v1689
        %v1724 = vunpack.c.h.b16 %v1689
        %v1725 = vunpack.c.l.b16 %v1690
        %v1726 = vunpack.c.h.b16 %v1690
        %v1727 = vunpack.c.l.b16 %v1691
        %v1728 = vunpack.c.h.b16 %v1691
        %v1729 = vpack.c.b16 %v1709, %v1707
        %v1730 = vpack.c.b16 %v1710, %v1708
        %v1731 = vpack.c.b16 %v1713, %v1711
        %v1732 = vpack.c.b16 %v1714, %v1712
        %v1733 = vpack.c.b16 %v1717, %v1715
        %v1734 = vpack.c.b16 %v1718, %v1716
        %v1735 = vpack.c.b16 %v1721, %v1719
        %v1736 = vpack.c.b16 %v1722, %v1720
        %v1737 = vpack.c.b16 %v1725, %v1723
        %v1738 = vpack.c.b16 %v1726, %v1724
        %v1739 = vpack.c.b16 %v1727, %v1727
        %v1740 = vpack.c.b16 %v1728, %v1728
        %v1752 = vsel %vm475, %v1693, 0
        %v1755 = vsel %vm475, %v1695, 0
        %v1758 = vsel %vm482, %v1739, 0
        %v1761 = vsel %vm482, %v1740, 0
        %1763 = vmatprep.subr.bf16.mxu0 %v1730
        %1764 = vmatpush1.bf16.msra.mxu0 %v1729
        %1765 = vmatprep.subr.bf16.mxu0 %v1732
        %1766 = vmatpush1.bf16.msra.mxu0 %v1731
        %1767 = vmatprep.subr.bf16.mxu0 %v1734
        %1768 = vmatpush1.bf16.msra.mxu0 %v1733
        %1769 = vmatprep.subr.bf16.mxu0 %v1736
        %1770 = vmatpush1.bf16.msra.mxu0 %v1735
        %1771 = vmatprep.subr.bf16.mxu0 %v1738
        %1772 = vmatpush1.bf16.msra.mxu0 %v1737
        %1773 = vmatprep.subr.bf16.mxu0 %v1761
        %1774 = vmatpush1.bf16.msra.mxu0 %v1758
        %1775 = vmatprep.subr.bf16.mxu0 0
        %1776 = vmatpush1.bf16.msra.mxu0 0
        %1777 = vmatprep.subr.bf16.mxu0 0
        %1778 = vmatpush1.bf16.msra.mxu0 0
        %1779 = vmatprep.subr.bf16.mxu0 0
        %1780 = vmatpush1.bf16.msra.mxu0 0
        %1781 = vmatprep.subr.bf16.mxu0 0
        %1782 = vmatpush1.bf16.msra.mxu0 0
        %1783 = vmatprep.subr.bf16.mxu0 0
        %1784 = vmatpush1.bf16.msra.mxu0 0
        %1785 = vmatprep.subr.bf16.mxu0 0
        %1786 = vmatpush1.bf16.msra.mxu0 0
        %1787 = vmatprep.subr.bf16.mxu0 0
        %1788 = vmatpush1.bf16.msra.mxu0 0
        %1789 = vmatprep.subr.bf16.mxu0 0
        %1790 = vmatpush1.bf16.msra.mxu0 0
        %1791 = vmatprep.subr.bf16.mxu0 0
        %1792 = vmatpush1.bf16.msra.mxu0 0
        %1793 = vmatprep.subr.bf16.mxu0 0
        %1794 = vmatpush1.bf16.msra.mxu0 0
        %1795 = vmatprep.mubr.bf16.mxu0 0
        %1796 = vmatmul.mubr.bf16.gmra.mrb[0].mxu0 %v1752
        %v1797 = vpop.f32.mrb[0].mxu0
        %v1798 = vadd.f32 0.0, %v1797
        %v1799 = vpop.f32.mrb[0].mxu0
        %v1800 = vadd.f32 0.0, %v1799
        %v1801 = vpop.f32.mrb[0].mxu0
        %v1802 = vadd.f32 0.0, %v1801
        %v1803 = vpop.f32.mrb[0].mxu0
        %v1804 = vadd.f32 0.0, %v1803
        %1805 = vmatprep.mubr.bf16.mxu0 0
        %1806 = vmatmul.mubr.bf16.gmra.mrb[0].mxu0 %v1755
        %v1807 = vpop.f32.mrb[0].mxu0
        %v1808 = vadd.f32 0.0, %v1807
        %v1809 = vpop.f32.mrb[0].mxu0
        %v1810 = vadd.f32 0.0, %v1809
        %v1811 = vpop.f32.mrb[0].mxu0
        %v1812 = vadd.f32 0.0, %v1811
        %v1813 = vpop.f32.mrb[0].mxu0
        %v1814 = vadd.f32 0.0, %v1813
        %1815 = vdwg.mxu0
        %v1816 = vadd.f32 %v1672, %v1798
        %v1817 = vadd.f32 %v1673, %v1800
        %v1818 = vadd.f32 %v1674, %v1802
        %v1819 = vadd.f32 %v1675, %v1804
        %v1820 = vadd.f32 %v1676, %v1808
        %v1821 = vadd.f32 %v1677, %v1810
        %v1822 = vadd.f32 %v1678, %v1812
        %v1823 = vadd.f32 %v1679, %v1814
        %s1824 = scalar_lea.vmem %s1, 880
        %v1825 = vld [vmem:[%s1824] sm:$0xff]
        %v1826 = vld [vmem:[%s1824 + $0x8] sm:$0xff]
        %v1827 = vld [vmem:[%s1824 + $0x10] sm:$0xff]
        %v1828 = vld [vmem:[%s1824 + $0x18] sm:$0xff]
        %v1829 = vld [vmem:[%s1824 + $0x20] sm:$0xff]
        %v1830 = vld [vmem:[%s1824 + $0x28] sm:$0xff]
        %v1831 = vld [vmem:[%s1824 + $0x30] sm:$0xff]
        %v1832 = vld [vmem:[%s1824 + $0x38] sm:$0xff]
        %v1833 = vld [vmem:[%s1824 + $0x40] sm:$0xff]
        %v1834 = vld [vmem:[%s1824 + $0x48] sm:$0xff]
        %v1835 = vld [vmem:[%s1824 + $0x50] sm:$0x33]
        %vm1836 = vcmask 1046528
        %v1837 = vrot.slane %v389, 1
        %v1838 = vrot.slane %v390, 1
        %v1839 = vsel %vm1836, %v1837, %v1838
        %v1851 = vunpack.c.l.b16 %v1825
        %v1852 = vunpack.c.h.b16 %v1825
        %v1853 = vunpack.c.l.b16 %v1826
        %v1854 = vunpack.c.h.b16 %v1826
        %v1855 = vunpack.c.l.b16 %v1827
        %v1856 = vunpack.c.h.b16 %v1827
        %v1857 = vunpack.c.l.b16 %v1828
        %v1858 = vunpack.c.h.b16 %v1828
        %v1859 = vunpack.c.l.b16 %v1829
        %v1860 = vunpack.c.h.b16 %v1829
        %v1861 = vunpack.c.l.b16 %v1830
        %v1862 = vunpack.c.h.b16 %v1830
        %v1863 = vunpack.c.l.b16 %v1831
        %v1864 = vunpack.c.h.b16 %v1831
        %v1865 = vunpack.c.l.b16 %v1832
        %v1866 = vunpack.c.h.b16 %v1832
        %v1867 = vunpack.c.l.b16 %v1833
        %v1868 = vunpack.c.h.b16 %v1833
        %v1869 = vunpack.c.l.b16 %v1834
        %v1870 = vunpack.c.h.b16 %v1834
        %v1871 = vunpack.c.l.b16 %v1835
        %v1872 = vunpack.c.h.b16 %v1835
        %v1873 = vpack.c.b16 %v1853, %v1851
        %v1874 = vpack.c.b16 %v1854, %v1852
        %v1875 = vpack.c.b16 %v1857, %v1855
        %v1876 = vpack.c.b16 %v1858, %v1856
        %v1877 = vpack.c.b16 %v1861, %v1859
        %v1878 = vpack.c.b16 %v1862, %v1860
        %v1879 = vpack.c.b16 %v1865, %v1863
        %v1880 = vpack.c.b16 %v1866, %v1864
        %v1881 = vpack.c.b16 %v1869, %v1867
        %v1882 = vpack.c.b16 %v1870, %v1868
        %v1883 = vpack.c.b16 %v1871, %v1871
        %v1884 = vpack.c.b16 %v1872, %v1872
        %v1896 = vsel %vm475, %v1839, 0
        %v1899 = vsel %vm475, %v1838, 0
        %v1902 = vsel %vm482, %v1883, 0
        %v1905 = vsel %vm482, %v1884, 0
        %1907 = vmatprep.subr.bf16.mxu0 %v1874
        %1908 = vmatpush1.bf16.msra.mxu0 %v1873
        %1909 = vmatprep.subr.bf16.mxu0 %v1876
        %1910 = vmatpush1.bf16.msra.mxu0 %v1875
        %1911 = vmatprep.subr.bf16.mxu0 %v1878
        %1912 = vmatpush1.bf16.msra.mxu0 %v1877
        %1913 = vmatprep.subr.bf16.mxu0 %v1880
        %1914 = vmatpush1.bf16.msra.mxu0 %v1879
        %1915 = vmatprep.subr.bf16.mxu0 %v1882
        %1916 = vmatpush1.bf16.msra.mxu0 %v1881
        %1917 = vmatprep.subr.bf16.mxu0 %v1905
        %1918 = vmatpush1.bf16.msra.mxu0 %v1902
        %1919 = vmatprep.subr.bf16.mxu0 0
        %1920 = vmatpush1.bf16.msra.mxu0 0
        %1921 = vmatprep.subr.bf16.mxu0 0
        %1922 = vmatpush1.bf16.msra.mxu0 0
        %1923 = vmatprep.subr.bf16.mxu0 0
        %1924 = vmatpush1.bf16.msra.mxu0 0
        %1925 = vmatprep.subr.bf16.mxu0 0
        %1926 = vmatpush1.bf16.msra.mxu0 0
        %1927 = vmatprep.subr.bf16.mxu0 0
        %1928 = vmatpush1.bf16.msra.mxu0 0
        %1929 = vmatprep.subr.bf16.mxu0 0
        %1930 = vmatpush1.bf16.msra.mxu0 0
        %1931 = vmatprep.subr.bf16.mxu0 0
        %1932 = vmatpush1.bf16.msra.mxu0 0
        %1933 = vmatprep.subr.bf16.mxu0 0
        %1934 = vmatpush1.bf16.msra.mxu0 0
        %1935 = vmatprep.subr.bf16.mxu0 0
        %1936 = vmatpush1.bf16.msra.mxu0 0
        %1937 = vmatprep.subr.bf16.mxu0 0
        %1938 = vmatpush1.bf16.msra.mxu0 0
        %1939 = vmatprep.mubr.bf16.mxu0 0
        %1940 = vmatmul.mubr.bf16.gmra.mrb[0].mxu0 %v1896
        %v1941 = vpop.f32.mrb[0].mxu0
        %v1942 = vadd.f32 0.0, %v1941
        %v1943 = vpop.f32.mrb[0].mxu0
        %v1944 = vadd.f32 0.0, %v1943
        %v1945 = vpop.f32.mrb[0].mxu0
        %v1946 = vadd.f32 0.0, %v1945
        %v1947 = vpop.f32.mrb[0].mxu0
        %v1948 = vadd.f32 0.0, %v1947
        %1949 = vmatprep.mubr.bf16.mxu0 0
        %1950 = vmatmul.mubr.bf16.gmra.mrb[0].mxu0 %v1899
        %v1951 = vpop.f32.mrb[0].mxu0
        %v1952 = vadd.f32 0.0, %v1951
        %v1953 = vpop.f32.mrb[0].mxu0
        %v1954 = vadd.f32 0.0, %v1953
        %v1955 = vpop.f32.mrb[0].mxu0
        %v1956 = vadd.f32 0.0, %v1955
        %v1957 = vpop.f32.mrb[0].mxu0
        %v1958 = vadd.f32 0.0, %v1957
        %1959 = vdwg.mxu0
        %v1960 = vadd.f32 %v1816, %v1942
        %v1961 = vadd.f32 %v1817, %v1944
        %v1962 = vadd.f32 %v1818, %v1946
        %v1963 = vadd.f32 %v1819, %v1948
        %v1964 = vadd.f32 %v1820, %v1952
        %v1965 = vadd.f32 %v1821, %v1954
        %v1966 = vadd.f32 %v1822, %v1956
        %v1967 = vadd.f32 %v1823, %v1958
        %s1968 = scalar_lea.vmem %s1, 968
        %v1969 = vld [vmem:[%s1968] sm:$0xff]
        %v1970 = vld [vmem:[%s1968 + $0x8] sm:$0xff]
        %v1971 = vld [vmem:[%s1968 + $0x10] sm:$0xff]
        %v1972 = vld [vmem:[%s1968 + $0x18] sm:$0xff]
        %v1973 = vld [vmem:[%s1968 + $0x20] sm:$0xff]
        %v1974 = vld [vmem:[%s1968 + $0x28] sm:$0xff]
        %v1975 = vld [vmem:[%s1968 + $0x30] sm:$0xff]
        %v1976 = vld [vmem:[%s1968 + $0x38] sm:$0xff]
        %v1977 = vld [vmem:[%s1968 + $0x40] sm:$0xff]
        %v1978 = vld [vmem:[%s1968 + $0x48] sm:$0xff]
        %v1979 = vld [vmem:[%s1968 + $0x50] sm:$0x33]
        %1980 = vrot.lane.b32.xlu0 %v1839, 125
        %v1981 = vpop.permute.xlu0 %1980
        %1982 = vrot.lane.b32.xlu0 %v1838, 125
        %v1983 = vpop.permute.xlu0 %1982
        %v1995 = vunpack.c.l.b16 %v1969
        %v1996 = vunpack.c.h.b16 %v1969
        %v1997 = vunpack.c.l.b16 %v1970
        %v1998 = vunpack.c.h.b16 %v1970
        %v1999 = vunpack.c.l.b16 %v1971
        %v2000 = vunpack.c.h.b16 %v1971
        %v2001 = vunpack.c.l.b16 %v1972
        %v2002 = vunpack.c.h.b16 %v1972
        %v2003 = vunpack.c.l.b16 %v1973
        %v2004 = vunpack.c.h.b16 %v1973
        %v2005 = vunpack.c.l.b16 %v1974
        %v2006 = vunpack.c.h.b16 %v1974
        %v2007 = vunpack.c.l.b16 %v1975
        %v2008 = vunpack.c.h.b16 %v1975
        %v2009 = vunpack.c.l.b16 %v1976
        %v2010 = vunpack.c.h.b16 %v1976
        %v2011 = vunpack.c.l.b16 %v1977
        %v2012 = vunpack.c.h.b16 %v1977
        %v2013 = vunpack.c.l.b16 %v1978
        %v2014 = vunpack.c.h.b16 %v1978
        %v2015 = vunpack.c.l.b16 %v1979
        %v2016 = vunpack.c.h.b16 %v1979
        %v2017 = vpack.c.b16 %v1997, %v1995
        %v2018 = vpack.c.b16 %v1998, %v1996
        %v2019 = vpack.c.b16 %v2001, %v1999
        %v2020 = vpack.c.b16 %v2002, %v2000
        %v2021 = vpack.c.b16 %v2005, %v2003
        %v2022 = vpack.c.b16 %v2006, %v2004
        %v2023 = vpack.c.b16 %v2009, %v2007
        %v2024 = vpack.c.b16 %v2010, %v2008
        %v2025 = vpack.c.b16 %v2013, %v2011
        %v2026 = vpack.c.b16 %v2014, %v2012
        %v2027 = vpack.c.b16 %v2015, %v2015
        %v2028 = vpack.c.b16 %v2016, %v2016
        %v2040 = vsel %vm475, %v1981, 0
        %v2043 = vsel %vm475, %v1983, 0
        %v2046 = vsel %vm482, %v2027, 0
        %v2049 = vsel %vm482, %v2028, 0
        %2051 = vmatprep.subr.bf16.mxu0 %v2018
        %2052 = vmatpush1.bf16.msra.mxu0 %v2017
        %2053 = vmatprep.subr.bf16.mxu0 %v2020
        %2054 = vmatpush1.bf16.msra.mxu0 %v2019
        %2055 = vmatprep.subr.bf16.mxu0 %v2022
        %2056 = vmatpush1.bf16.msra.mxu0 %v2021
        %2057 = vmatprep.subr.bf16.mxu0 %v2024
        %2058 = vmatpush1.bf16.msra.mxu0 %v2023
        %2059 = vmatprep.subr.bf16.mxu0 %v2026
        %2060 = vmatpush1.bf16.msra.mxu0 %v2025
        %2061 = vmatprep.subr.bf16.mxu0 %v2049
        %2062 = vmatpush1.bf16.msra.mxu0 %v2046
        %2063 = vmatprep.subr.bf16.mxu0 0
        %2064 = vmatpush1.bf16.msra.mxu0 0
        %2065 = vmatprep.subr.bf16.mxu0 0
        %2066 = vmatpush1.bf16.msra.mxu0 0
        %2067 = vmatprep.subr.bf16.mxu0 0
        %2068 = vmatpush1.bf16.msra.mxu0 0
        %2069 = vmatprep.subr.bf16.mxu0 0
        %2070 = vmatpush1.bf16.msra.mxu0 0
        %2071 = vmatprep.subr.bf16.mxu0 0
        %2072 = vmatpush1.bf16.msra.mxu0 0
        %2073 = vmatprep.subr.bf16.mxu0 0
        %2074 = vmatpush1.bf16.msra.mxu0 0
        %2075 = vmatprep.subr.bf16.mxu0 0
        %2076 = vmatpush1.bf16.msra.mxu0 0
        %2077 = vmatprep.subr.bf16.mxu0 0
        %2078 = vmatpush1.bf16.msra.mxu0 0
        %2079 = vmatprep.subr.bf16.mxu0 0
        %2080 = vmatpush1.bf16.msra.mxu0 0
        %2081 = vmatprep.subr.bf16.mxu0 0
        %2082 = vmatpush1.bf16.msra.mxu0 0
        %2083 = vmatprep.mubr.bf16.mxu0 0
        %2084 = vmatmul.mubr.bf16.gmra.mrb[0].mxu0 %v2040
        %v2085 = vpop.f32.mrb[0].mxu0
        %v2086 = vadd.f32 0.0, %v2085
        %v2087 = vpop.f32.mrb[0].mxu0
        %v2088 = vadd.f32 0.0, %v2087
        %v2089 = vpop.f32.mrb[0].mxu0
        %v2090 = vadd.f32 0.0, %v2089
        %v2091 = vpop.f32.mrb[0].mxu0
        %v2092 = vadd.f32 0.0, %v2091
        %2093 = vmatprep.mubr.bf16.mxu0 0
        %2094 = vmatmul.mubr.bf16.gmra.mrb[0].mxu0 %v2043
        %v2095 = vpop.f32.mrb[0].mxu0
        %v2096 = vadd.f32 0.0, %v2095
        %v2097 = vpop.f32.mrb[0].mxu0
        %v2098 = vadd.f32 0.0, %v2097
        %v2099 = vpop.f32.mrb[0].mxu0
        %v2100 = vadd.f32 0.0, %v2099
        %v2101 = vpop.f32.mrb[0].mxu0
        %v2102 = vadd.f32 0.0, %v2101
        %2103 = vdwg.mxu0
        %v2104 = vadd.f32 %v1960, %v2086
        %v2105 = vadd.f32 %v1961, %v2088
        %v2106 = vadd.f32 %v1962, %v2090
        %v2107 = vadd.f32 %v1963, %v2092
        %v2108 = vadd.f32 %v1964, %v2096
        %v2109 = vadd.f32 %v1965, %v2098
        %v2110 = vadd.f32 %v1966, %v2100
        %v2111 = vadd.f32 %v1967, %v2102
        %s2112 = scalar_lea.vmem %s1, 1056
        %v2113 = vld [vmem:[%s2112] sm:$0xff]
        %v2114 = vld [vmem:[%s2112 + $0x8] sm:$0xff]
        %v2115 = vld [vmem:[%s2112 + $0x10] sm:$0xff]
        %v2116 = vld [vmem:[%s2112 + $0x18] sm:$0xff]
        %v2117 = vld [vmem:[%s2112 + $0x20] sm:$0xff]
        %v2118 = vld [vmem:[%s2112 + $0x28] sm:$0xff]
        %v2119 = vld [vmem:[%s2112 + $0x30] sm:$0xff]
        %v2120 = vld [vmem:[%s2112 + $0x38] sm:$0xff]
        %v2121 = vld [vmem:[%s2112 + $0x40] sm:$0xff]
        %v2122 = vld [vmem:[%s2112 + $0x48] sm:$0xff]
        %v2123 = vld [vmem:[%s2112 + $0x50] sm:$0x33]
        %2124 = vrot.lane.b32.xlu0 %v1839, 122
        %v2125 = vpop.permute.xlu0 %2124
        %2126 = vrot.lane.b32.xlu0 %v1838, 122
        %v2127 = vpop.permute.xlu0 %2126
        %v2139 = vunpack.c.l.b16 %v2113
        %v2140 = vunpack.c.h.b16 %v2113
        %v2141 = vunpack.c.l.b16 %v2114
        %v2142 = vunpack.c.h.b16 %v2114
        %v2143 = vunpack.c.l.b16 %v2115
        %v2144 = vunpack.c.h.b16 %v2115
        %v2145 = vunpack.c.l.b16 %v2116
        %v2146 = vunpack.c.h.b16 %v2116
        %v2147 = vunpack.c.l.b16 %v2117
        %v2148 = vunpack.c.h.b16 %v2117
        %v2149 = vunpack.c.l.b16 %v2118
        %v2150 = vunpack.c.h.b16 %v2118
        %v2151 = vunpack.c.l.b16 %v2119
        %v2152 = vunpack.c.h.b16 %v2119
        %v2153 = vunpack.c.l.b16 %v2120
        %v2154 = vunpack.c.h.b16 %v2120
        %v2155 = vunpack.c.l.b16 %v2121
        %v2156 = vunpack.c.h.b16 %v2121
        %v2157 = vunpack.c.l.b16 %v2122
        %v2158 = vunpack.c.h.b16 %v2122
        %v2159 = vunpack.c.l.b16 %v2123
        %v2160 = vunpack.c.h.b16 %v2123
        %v2161 = vpack.c.b16 %v2141, %v2139
        %v2162 = vpack.c.b16 %v2142, %v2140
        %v2163 = vpack.c.b16 %v2145, %v2143
        %v2164 = vpack.c.b16 %v2146, %v2144
        %v2165 = vpack.c.b16 %v2149, %v2147
        %v2166 = vpack.c.b16 %v2150, %v2148
        %v2167 = vpack.c.b16 %v2153, %v2151
        %v2168 = vpack.c.b16 %v2154, %v2152
        %v2169 = vpack.c.b16 %v2157, %v2155
        %v2170 = vpack.c.b16 %v2158, %v2156
        %v2171 = vpack.c.b16 %v2159, %v2159
        %v2172 = vpack.c.b16 %v2160, %v2160
        %v2184 = vsel %vm475, %v2125, 0
        %v2187 = vsel %vm475, %v2127, 0
        %v2190 = vsel %vm482, %v2171, 0
        %v2193 = vsel %vm482, %v2172, 0
        %2195 = vmatprep.subr.bf16.mxu0 %v2162
        %2196 = vmatpush1.bf16.msra.mxu0 %v2161
        %2197 = vmatprep.subr.bf16.mxu0 %v2164
        %2198 = vmatpush1.bf16.msra.mxu0 %v2163
        %2199 = vmatprep.subr.bf16.mxu0 %v2166
        %2200 = vmatpush1.bf16.msra.mxu0 %v2165
        %2201 = vmatprep.subr.bf16.mxu0 %v2168
        %2202 = vmatpush1.bf16.msra.mxu0 %v2167
        %2203 = vmatprep.subr.bf16.mxu0 %v2170
        %2204 = vmatpush1.bf16.msra.mxu0 %v2169
        %2205 = vmatprep.subr.bf16.mxu0 %v2193
        %2206 = vmatpush1.bf16.msra.mxu0 %v2190
        %2207 = vmatprep.subr.bf16.mxu0 0
        %2208 = vmatpush1.bf16.msra.mxu0 0
        %2209 = vmatprep.subr.bf16.mxu0 0
        %2210 = vmatpush1.bf16.msra.mxu0 0
        %2211 = vmatprep.subr.bf16.mxu0 0
        %2212 = vmatpush1.bf16.msra.mxu0 0
        %2213 = vmatprep.subr.bf16.mxu0 0
        %2214 = vmatpush1.bf16.msra.mxu0 0
        %2215 = vmatprep.subr.bf16.mxu0 0
        %2216 = vmatpush1.bf16.msra.mxu0 0
        %2217 = vmatprep.subr.bf16.mxu0 0
        %2218 = vmatpush1.bf16.msra.mxu0 0
        %2219 = vmatprep.subr.bf16.mxu0 0
        %2220 = vmatpush1.bf16.msra.mxu0 0
        %2221 = vmatprep.subr.bf16.mxu0 0
        %2222 = vmatpush1.bf16.msra.mxu0 0
        %2223 = vmatprep.subr.bf16.mxu0 0
        %2224 = vmatpush1.bf16.msra.mxu0 0
        %2225 = vmatprep.subr.bf16.mxu0 0
        %2226 = vmatpush1.bf16.msra.mxu0 0
        %2227 = vmatprep.mubr.bf16.mxu0 0
        %2228 = vmatmul.mubr.bf16.gmra.mrb[0].mxu0 %v2184
        %v2229 = vpop.f32.mrb[0].mxu0
        %v2230 = vadd.f32 0.0, %v2229
        %v2231 = vpop.f32.mrb[0].mxu0
        %v2232 = vadd.f32 0.0, %v2231
        %v2233 = vpop.f32.mrb[0].mxu0
        %v2234 = vadd.f32 0.0, %v2233
        %v2235 = vpop.f32.mrb[0].mxu0
        %v2236 = vadd.f32 0.0, %v2235
        %2237 = vmatprep.mubr.bf16.mxu0 0
        %2238 = vmatmul.mubr.bf16.gmra.mrb[0].mxu0 %v2187
        %v2239 = vpop.f32.mrb[0].mxu0
        %v2240 = vadd.f32 0.0, %v2239
        %v2241 = vpop.f32.mrb[0].mxu0
        %v2242 = vadd.f32 0.0, %v2241
        %v2243 = vpop.f32.mrb[0].mxu0
        %v2244 = vadd.f32 0.0, %v2243
        %v2245 = vpop.f32.mrb[0].mxu0
        %v2246 = vadd.f32 0.0, %v2245
        %2247 = vdwg.mxu0
        %v2248 = vadd.f32 %v2104, %v2230
        %v2249 = vadd.f32 %v2105, %v2232
        %v2250 = vadd.f32 %v2106, %v2234
        %v2251 = vadd.f32 %v2107, %v2236
        %v2252 = vadd.f32 %v2108, %v2240
        %v2253 = vadd.f32 %v2109, %v2242
        %v2254 = vadd.f32 %v2110, %v2244
        %v2255 = vadd.f32 %v2111, %v2246
        %s2256 = scalar_lea.vmem %s1, 1144
        %v2257 = vld [vmem:[%s2256] sm:$0xff]
        %v2258 = vld [vmem:[%s2256 + $0x8] sm:$0xff]
        %v2259 = vld [vmem:[%s2256 + $0x10] sm:$0xff]
        %v2260 = vld [vmem:[%s2256 + $0x18] sm:$0xff]
        %v2261 = vld [vmem:[%s2256 + $0x20] sm:$0xff]
        %v2262 = vld [vmem:[%s2256 + $0x28] sm:$0xff]
        %v2263 = vld [vmem:[%s2256 + $0x30] sm:$0xff]
        %v2264 = vld [vmem:[%s2256 + $0x38] sm:$0xff]
        %v2265 = vld [vmem:[%s2256 + $0x40] sm:$0xff]
        %v2266 = vld [vmem:[%s2256 + $0x48] sm:$0xff]
        %v2267 = vld [vmem:[%s2256 + $0x50] sm:$0x33]
        %2268 = vrot.lane.b32.xlu0 %v1839, 119
        %v2269 = vpop.permute.xlu0 %2268
        %2270 = vrot.lane.b32.xlu0 %v1838, 119
        %v2271 = vpop.permute.xlu0 %2270
        %v2283 = vunpack.c.l.b16 %v2257
        %v2284 = vunpack.c.h.b16 %v2257
        %v2285 = vunpack.c.l.b16 %v2258
        %v2286 = vunpack.c.h.b16 %v2258
        %v2287 = vunpack.c.l.b16 %v2259
        %v2288 = vunpack.c.h.b16 %v2259
        %v2289 = vunpack.c.l.b16 %v2260
        %v2290 = vunpack.c.h.b16 %v2260
        %v2291 = vunpack.c.l.b16 %v2261
        %v2292 = vunpack.c.h.b16 %v2261
        %v2293 = vunpack.c.l.b16 %v2262
        %v2294 = vunpack.c.h.b16 %v2262
        %v2295 = vunpack.c.l.b16 %v2263
        %v2296 = vunpack.c.h.b16 %v2263
        %v2297 = vunpack.c.l.b16 %v2264
        %v2298 = vunpack.c.h.b16 %v2264
        %v2299 = vunpack.c.l.b16 %v2265
        %v2300 = vunpack.c.h.b16 %v2265
        %v2301 = vunpack.c.l.b16 %v2266
        %v2302 = vunpack.c.h.b16 %v2266
        %v2303 = vunpack.c.l.b16 %v2267
        %v2304 = vunpack.c.h.b16 %v2267
        %v2305 = vpack.c.b16 %v2285, %v2283
        %v2306 = vpack.c.b16 %v2286, %v2284
        %v2307 = vpack.c.b16 %v2289, %v2287
        %v2308 = vpack.c.b16 %v2290, %v2288
        %v2309 = vpack.c.b16 %v2293, %v2291
        %v2310 = vpack.c.b16 %v2294, %v2292
        %v2311 = vpack.c.b16 %v2297, %v2295
        %v2312 = vpack.c.b16 %v2298, %v2296
        %v2313 = vpack.c.b16 %v2301, %v2299
        %v2314 = vpack.c.b16 %v2302, %v2300
        %v2315 = vpack.c.b16 %v2303, %v2303
        %v2316 = vpack.c.b16 %v2304, %v2304
        %v2328 = vsel %vm475, %v2269, 0
        %v2331 = vsel %vm475, %v2271, 0
        %v2334 = vsel %vm482, %v2315, 0
        %v2337 = vsel %vm482, %v2316, 0
        %2339 = vmatprep.subr.bf16.mxu0 %v2306
        %2340 = vmatpush1.bf16.msra.mxu0 %v2305
        %2341 = vmatprep.subr.bf16.mxu0 %v2308
        %2342 = vmatpush1.bf16.msra.mxu0 %v2307
        %2343 = vmatprep.subr.bf16.mxu0 %v2310
        %2344 = vmatpush1.bf16.msra.mxu0 %v2309
        %2345 = vmatprep.subr.bf16.mxu0 %v2312
        %2346 = vmatpush1.bf16.msra.mxu0 %v2311
        %2347 = vmatprep.subr.bf16.mxu0 %v2314
        %2348 = vmatpush1.bf16.msra.mxu0 %v2313
        %2349 = vmatprep.subr.bf16.mxu0 %v2337
        %2350 = vmatpush1.bf16.msra.mxu0 %v2334
        %2351 = vmatprep.subr.bf16.mxu0 0
        %2352 = vmatpush1.bf16.msra.mxu0 0
        %2353 = vmatprep.subr.bf16.mxu0 0
        %2354 = vmatpush1.bf16.msra.mxu0 0
        %2355 = vmatprep.subr.bf16.mxu0 0
        %2356 = vmatpush1.bf16.msra.mxu0 0
        %2357 = vmatprep.subr.bf16.mxu0 0
        %2358 = vmatpush1.bf16.msra.mxu0 0
        %2359 = vmatprep.subr.bf16.mxu0 0
        %2360 = vmatpush1.bf16.msra.mxu0 0
        %2361 = vmatprep.subr.bf16.mxu0 0
        %2362 = vmatpush1.bf16.msra.mxu0 0
        %2363 = vmatprep.subr.bf16.mxu0 0
        %2364 = vmatpush1.bf16.msra.mxu0 0
        %2365 = vmatprep.subr.bf16.mxu0 0
        %2366 = vmatpush1.bf16.msra.mxu0 0
        %2367 = vmatprep.subr.bf16.mxu0 0
        %2368 = vmatpush1.bf16.msra.mxu0 0
        %2369 = vmatprep.subr.bf16.mxu0 0
        %2370 = vmatpush1.bf16.msra.mxu0 0
        %2371 = vmatprep.mubr.bf16.mxu0 0
        %2372 = vmatmul.mubr.bf16.gmra.mrb[0].mxu0 %v2328
        %v2373 = vpop.f32.mrb[0].mxu0
        %v2374 = vadd.f32 0.0, %v2373
        %v2375 = vpop.f32.mrb[0].mxu0
        %v2376 = vadd.f32 0.0, %v2375
        %v2377 = vpop.f32.mrb[0].mxu0
        %v2378 = vadd.f32 0.0, %v2377
        %v2379 = vpop.f32.mrb[0].mxu0
        %v2380 = vadd.f32 0.0, %v2379
        %2381 = vmatprep.mubr.bf16.mxu0 0
        %2382 = vmatmul.mubr.bf16.gmra.mrb[0].mxu0 %v2331
        %v2383 = vpop.f32.mrb[0].mxu0
        %v2384 = vadd.f32 0.0, %v2383
        %v2385 = vpop.f32.mrb[0].mxu0
        %v2386 = vadd.f32 0.0, %v2385
        %v2387 = vpop.f32.mrb[0].mxu0
        %v2388 = vadd.f32 0.0, %v2387
        %v2389 = vpop.f32.mrb[0].mxu0
        %v2390 = vadd.f32 0.0, %v2389
        %2391 = vdwg.mxu0
        %v2392 = vadd.f32 %v2248, %v2374
        %v2393 = vadd.f32 %v2249, %v2376
        %v2394 = vadd.f32 %v2250, %v2378
        %v2395 = vadd.f32 %v2251, %v2380
        %v2396 = vadd.f32 %v2252, %v2384
        %v2397 = vadd.f32 %v2253, %v2386
        %v2398 = vadd.f32 %v2254, %v2388
        %v2399 = vadd.f32 %v2255, %v2390
        %s2400 = scalar_lea.vmem %s1, 1232
        %v2401 = vld [vmem:[%s2400] sm:$0xff]
        %v2402 = vld [vmem:[%s2400 + $0x8] sm:$0xff]
        %v2403 = vld [vmem:[%s2400 + $0x10] sm:$0xff]
        %v2404 = vld [vmem:[%s2400 + $0x18] sm:$0xff]
        %v2405 = vld [vmem:[%s2400 + $0x20] sm:$0xff]
        %v2406 = vld [vmem:[%s2400 + $0x28] sm:$0xff]
        %v2407 = vld [vmem:[%s2400 + $0x30] sm:$0xff]
        %v2408 = vld [vmem:[%s2400 + $0x38] sm:$0xff]
        %v2409 = vld [vmem:[%s2400 + $0x40] sm:$0xff]
        %v2410 = vld [vmem:[%s2400 + $0x48] sm:$0xff]
        %v2411 = vld [vmem:[%s2400 + $0x50] sm:$0x33]
        %2412 = vrot.lane.b32.xlu0 %v1839, 116
        %v2413 = vpop.permute.xlu0 %2412
        %2414 = vrot.lane.b32.xlu0 %v1838, 116
        %v2415 = vpop.permute.xlu0 %2414
        %v2427 = vunpack.c.l.b16 %v2401
        %v2428 = vunpack.c.h.b16 %v2401
        %v2429 = vunpack.c.l.b16 %v2402
        %v2430 = vunpack.c.h.b16 %v2402
        %v2431 = vunpack.c.l.b16 %v2403
        %v2432 = vunpack.c.h.b16 %v2403
        %v2433 = vunpack.c.l.b16 %v2404
        %v2434 = vunpack.c.h.b16 %v2404
        %v2435 = vunpack.c.l.b16 %v2405
        %v2436 = vunpack.c.h.b16 %v2405
        %v2437 = vunpack.c.l.b16 %v2406
        %v2438 = vunpack.c.h.b16 %v2406
        %v2439 = vunpack.c.l.b16 %v2407
        %v2440 = vunpack.c.h.b16 %v2407
        %v2441 = vunpack.c.l.b16 %v2408
        %v2442 = vunpack.c.h.b16 %v2408
        %v2443 = vunpack.c.l.b16 %v2409
        %v2444 = vunpack.c.h.b16 %v2409
        %v2445 = vunpack.c.l.b16 %v2410
        %v2446 = vunpack.c.h.b16 %v2410
        %v2447 = vunpack.c.l.b16 %v2411
        %v2448 = vunpack.c.h.b16 %v2411
        %v2449 = vpack.c.b16 %v2429, %v2427
        %v2450 = vpack.c.b16 %v2430, %v2428
        %v2451 = vpack.c.b16 %v2433, %v2431
        %v2452 = vpack.c.b16 %v2434, %v2432
        %v2453 = vpack.c.b16 %v2437, %v2435
        %v2454 = vpack.c.b16 %v2438, %v2436
        %v2455 = vpack.c.b16 %v2441, %v2439
        %v2456 = vpack.c.b16 %v2442, %v2440
        %v2457 = vpack.c.b16 %v2445, %v2443
        %v2458 = vpack.c.b16 %v2446, %v2444
        %v2459 = vpack.c.b16 %v2447, %v2447
        %v2460 = vpack.c.b16 %v2448, %v2448
        %v2472 = vsel %vm475, %v2413, 0
        %v2475 = vsel %vm475, %v2415, 0
        %v2478 = vsel %vm482, %v2459, 0
        %v2481 = vsel %vm482, %v2460, 0
        %2483 = vmatprep.subr.bf16.mxu0 %v2450
        %2484 = vmatpush1.bf16.msra.mxu0 %v2449
        %2485 = vmatprep.subr.bf16.mxu0 %v2452
        %2486 = vmatpush1.bf16.msra.mxu0 %v2451
        %2487 = vmatprep.subr.bf16.mxu0 %v2454
        %2488 = vmatpush1.bf16.msra.mxu0 %v2453
        %2489 = vmatprep.subr.bf16.mxu0 %v2456
        %2490 = vmatpush1.bf16.msra.mxu0 %v2455
        %2491 = vmatprep.subr.bf16.mxu0 %v2458
        %2492 = vmatpush1.bf16.msra.mxu0 %v2457
        %2493 = vmatprep.subr.bf16.mxu0 %v2481
        %2494 = vmatpush1.bf16.msra.mxu0 %v2478
        %2495 = vmatprep.subr.bf16.mxu0 0
        %2496 = vmatpush1.bf16.msra.mxu0 0
        %2497 = vmatprep.subr.bf16.mxu0 0
        %2498 = vmatpush1.bf16.msra.mxu0 0
        %2499 = vmatprep.subr.bf16.mxu0 0
        %2500 = vmatpush1.bf16.msra.mxu0 0
        %2501 = vmatprep.subr.bf16.mxu0 0
        %2502 = vmatpush1.bf16.msra.mxu0 0
        %2503 = vmatprep.subr.bf16.mxu0 0
        %2504 = vmatpush1.bf16.msra.mxu0 0
        %2505 = vmatprep.subr.bf16.mxu0 0
        %2506 = vmatpush1.bf16.msra.mxu0 0
        %2507 = vmatprep.subr.bf16.mxu0 0
        %2508 = vmatpush1.bf16.msra.mxu0 0
        %2509 = vmatprep.subr.bf16.mxu0 0
        %2510 = vmatpush1.bf16.msra.mxu0 0
        %2511 = vmatprep.subr.bf16.mxu0 0
        %2512 = vmatpush1.bf16.msra.mxu0 0
        %2513 = vmatprep.subr.bf16.mxu0 0
        %2514 = vmatpush1.bf16.msra.mxu0 0
        %2515 = vmatprep.mubr.bf16.mxu0 0
        %2516 = vmatmul.mubr.bf16.gmra.mrb[0].mxu0 %v2472
        %v2517 = vpop.f32.mrb[0].mxu0
        %v2518 = vadd.f32 0.0, %v2517
        %v2519 = vpop.f32.mrb[0].mxu0
        %v2520 = vadd.f32 0.0, %v2519
        %v2521 = vpop.f32.mrb[0].mxu0
        %v2522 = vadd.f32 0.0, %v2521
        %v2523 = vpop.f32.mrb[0].mxu0
        %v2524 = vadd.f32 0.0, %v2523
        %2525 = vmatprep.mubr.bf16.mxu0 0
        %2526 = vmatmul.mubr.bf16.gmra.mrb[0].mxu0 %v2475
        %v2527 = vpop.f32.mrb[0].mxu0
        %v2528 = vadd.f32 0.0, %v2527
        %v2529 = vpop.f32.mrb[0].mxu0
        %v2530 = vadd.f32 0.0, %v2529
        %v2531 = vpop.f32.mrb[0].mxu0
        %v2532 = vadd.f32 0.0, %v2531
        %v2533 = vpop.f32.mrb[0].mxu0
        %v2534 = vadd.f32 0.0, %v2533
        %2535 = vdwg.mxu0
        %v2536 = vadd.f32 %v2392, %v2518
        %v2537 = vadd.f32 %v2393, %v2520
        %v2538 = vadd.f32 %v2394, %v2522
        %v2539 = vadd.f32 %v2395, %v2524
        %v2540 = vadd.f32 %v2396, %v2528
        %v2541 = vadd.f32 %v2397, %v2530
        %v2542 = vadd.f32 %v2398, %v2532
        %v2543 = vadd.f32 %v2399, %v2534
        %s2544 = scalar_lea.vmem %s1, 1320
        %v2545 = vld [vmem:[%s2544] sm:$0xff]
        %v2546 = vld [vmem:[%s2544 + $0x8] sm:$0xff]
        %v2547 = vld [vmem:[%s2544 + $0x10] sm:$0xff]
        %v2548 = vld [vmem:[%s2544 + $0x18] sm:$0xff]
        %v2549 = vld [vmem:[%s2544 + $0x20] sm:$0xff]
        %v2550 = vld [vmem:[%s2544 + $0x28] sm:$0xff]
        %v2551 = vld [vmem:[%s2544 + $0x30] sm:$0xff]
        %v2552 = vld [vmem:[%s2544 + $0x38] sm:$0xff]
        %v2553 = vld [vmem:[%s2544 + $0x40] sm:$0xff]
        %v2554 = vld [vmem:[%s2544 + $0x48] sm:$0xff]
        %v2555 = vld [vmem:[%s2544 + $0x50] sm:$0x33]
        %vm2556 = vsmask.f32 6400
        %v2557 = vrot.slane %v1107, 1
        %v2558 = vrot.slane %v1109, 2
        %v2559 = vor.u32 %v2557, %v2558
        %v2560 = vrot.slane %v1117, 1
        %v2561 = vrot.slane %v1113, 2
        %v2562 = vor.u32 %v2560, %v2561
        %v2563 = vsel %vm2556, %v2559, %v2562
        %v2575 = vunpack.c.l.b16 %v2545
        %v2576 = vunpack.c.h.b16 %v2545
        %v2577 = vunpack.c.l.b16 %v2546
        %v2578 = vunpack.c.h.b16 %v2546
        %v2579 = vunpack.c.l.b16 %v2547
        %v2580 = vunpack.c.h.b16 %v2547
        %v2581 = vunpack.c.l.b16 %v2548
        %v2582 = vunpack.c.h.b16 %v2548
        %v2583 = vunpack.c.l.b16 %v2549
        %v2584 = vunpack.c.h.b16 %v2549
        %v2585 = vunpack.c.l.b16 %v2550
        %v2586 = vunpack.c.h.b16 %v2550
        %v2587 = vunpack.c.l.b16 %v2551
        %v2588 = vunpack.c.h.b16 %v2551
        %v2589 = vunpack.c.l.b16 %v2552
        %v2590 = vunpack.c.h.b16 %v2552
        %v2591 = vunpack.c.l.b16 %v2553
        %v2592 = vunpack.c.h.b16 %v2553
        %v2593 = vunpack.c.l.b16 %v2554
        %v2594 = vunpack.c.h.b16 %v2554
        %v2595 = vunpack.c.l.b16 %v2555
        %v2596 = vunpack.c.h.b16 %v2555
        %v2597 = vpack.c.b16 %v2577, %v2575
        %v2598 = vpack.c.b16 %v2578, %v2576
        %v2599 = vpack.c.b16 %v2581, %v2579
        %v2600 = vpack.c.b16 %v2582, %v2580
        %v2601 = vpack.c.b16 %v2585, %v2583
        %v2602 = vpack.c.b16 %v2586, %v2584
        %v2603 = vpack.c.b16 %v2589, %v2587
        %v2604 = vpack.c.b16 %v2590, %v2588
        %v2605 = vpack.c.b16 %v2593, %v2591
        %v2606 = vpack.c.b16 %v2594, %v2592
        %v2607 = vpack.c.b16 %v2595, %v2595
        %v2608 = vpack.c.b16 %v2596, %v2596
        %v2620 = vsel %vm475, %v2563, 0
        %v2623 = vsel %vm475, %v2562, 0
        %v2626 = vsel %vm482, %v2607, 0
        %v2629 = vsel %vm482, %v2608, 0
        %2631 = vmatprep.subr.bf16.mxu0 %v2598
        %2632 = vmatpush1.bf16.msra.mxu0 %v2597
        %2633 = vmatprep.subr.bf16.mxu0 %v2600
        %2634 = vmatpush1.bf16.msra.mxu0 %v2599
        %2635 = vmatprep.subr.bf16.mxu0 %v2602
        %2636 = vmatpush1.bf16.msra.mxu0 %v2601
        %2637 = vmatprep.subr.bf16.mxu0 %v2604
        %2638 = vmatpush1.bf16.msra.mxu0 %v2603
        %2639 = vmatprep.subr.bf16.mxu0 %v2606
        %2640 = vmatpush1.bf16.msra.mxu0 %v2605
        %2641 = vmatprep.subr.bf16.mxu0 %v2629
        %2642 = vmatpush1.bf16.msra.mxu0 %v2626
        %2643 = vmatprep.subr.bf16.mxu0 0
        %2644 = vmatpush1.bf16.msra.mxu0 0
        %2645 = vmatprep.subr.bf16.mxu0 0
        %2646 = vmatpush1.bf16.msra.mxu0 0
        %2647 = vmatprep.subr.bf16.mxu0 0
        %2648 = vmatpush1.bf16.msra.mxu0 0
        %2649 = vmatprep.subr.bf16.mxu0 0
        %2650 = vmatpush1.bf16.msra.mxu0 0
        %2651 = vmatprep.subr.bf16.mxu0 0
        %2652 = vmatpush1.bf16.msra.mxu0 0
        %2653 = vmatprep.subr.bf16.mxu0 0
        %2654 = vmatpush1.bf16.msra.mxu0 0
        %2655 = vmatprep.subr.bf16.mxu0 0
        %2656 = vmatpush1.bf16.msra.mxu0 0
        %2657 = vmatprep.subr.bf16.mxu0 0
        %2658 = vmatpush1.bf16.msra.mxu0 0
        %2659 = vmatprep.subr.bf16.mxu0 0
        %2660 = vmatpush1.bf16.msra.mxu0 0
        %2661 = vmatprep.subr.bf16.mxu0 0
        %2662 = vmatpush1.bf16.msra.mxu0 0
        %2663 = vmatprep.mubr.bf16.mxu0 0
        %2664 = vmatmul.mubr.bf16.gmra.mrb[0].mxu0 %v2620
        %v2665 = vpop.f32.mrb[0].mxu0
        %v2666 = vadd.f32 0.0, %v2665
        %v2667 = vpop.f32.mrb[0].mxu0
        %v2668 = vadd.f32 0.0, %v2667
        %v2669 = vpop.f32.mrb[0].mxu0
        %v2670 = vadd.f32 0.0, %v2669
        %v2671 = vpop.f32.mrb[0].mxu0
        %v2672 = vadd.f32 0.0, %v2671
        %2673 = vmatprep.mubr.bf16.mxu0 0
        %2674 = vmatmul.mubr.bf16.gmra.mrb[0].mxu0 %v2623
        %v2675 = vpop.f32.mrb[0].mxu0
        %v2676 = vadd.f32 0.0, %v2675
        %v2677 = vpop.f32.mrb[0].mxu0
        %v2678 = vadd.f32 0.0, %v2677
        %v2679 = vpop.f32.mrb[0].mxu0
        %v2680 = vadd.f32 0.0, %v2679
        %v2681 = vpop.f32.mrb[0].mxu0
        %v2682 = vadd.f32 0.0, %v2681
        %2683 = vdwg.mxu0
        %v2684 = vadd.f32 %v2536, %v2666
        %v2685 = vadd.f32 %v2537, %v2668
        %v2686 = vadd.f32 %v2538, %v2670
        %v2687 = vadd.f32 %v2539, %v2672
        %v2688 = vadd.f32 %v2540, %v2676
        %v2689 = vadd.f32 %v2541, %v2678
        %v2690 = vadd.f32 %v2542, %v2680
        %v2691 = vadd.f32 %v2543, %v2682
        %s2692 = scalar_lea.vmem %s1, 1408
        %v2693 = vld [vmem:[%s2692] sm:$0xff]
        %v2694 = vld [vmem:[%s2692 + $0x8] sm:$0xff]
        %v2695 = vld [vmem:[%s2692 + $0x10] sm:$0xff]
        %v2696 = vld [vmem:[%s2692 + $0x18] sm:$0xff]
        %v2697 = vld [vmem:[%s2692 + $0x20] sm:$0xff]
        %v2698 = vld [vmem:[%s2692 + $0x28] sm:$0xff]
        %v2699 = vld [vmem:[%s2692 + $0x30] sm:$0xff]
        %v2700 = vld [vmem:[%s2692 + $0x38] sm:$0xff]
        %v2701 = vld [vmem:[%s2692 + $0x40] sm:$0xff]
        %v2702 = vld [vmem:[%s2692 + $0x48] sm:$0xff]
        %v2703 = vld [vmem:[%s2692 + $0x50] sm:$0x33]
        %2704 = vrot.lane.b32.xlu0 %v2563, 125
        %v2705 = vpop.permute.xlu0 %2704
        %2706 = vrot.lane.b32.xlu0 %v2562, 125
        %v2707 = vpop.permute.xlu0 %2706
        %v2719 = vunpack.c.l.b16 %v2693
        %v2720 = vunpack.c.h.b16 %v2693
        %v2721 = vunpack.c.l.b16 %v2694
        %v2722 = vunpack.c.h.b16 %v2694
        %v2723 = vunpack.c.l.b16 %v2695
        %v2724 = vunpack.c.h.b16 %v2695
        %v2725 = vunpack.c.l.b16 %v2696
        %v2726 = vunpack.c.h.b16 %v2696
        %v2727 = vunpack.c.l.b16 %v2697
        %v2728 = vunpack.c.h.b16 %v2697
        %v2729 = vunpack.c.l.b16 %v2698
        %v2730 = vunpack.c.h.b16 %v2698
        %v2731 = vunpack.c.l.b16 %v2699
        %v2732 = vunpack.c.h.b16 %v2699
        %v2733 = vunpack.c.l.b16 %v2700
        %v2734 = vunpack.c.h.b16 %v2700
        %v2735 = vunpack.c.l.b16 %v2701
        %v2736 = vunpack.c.h.b16 %v2701
        %v2737 = vunpack.c.l.b16 %v2702
        %v2738 = vunpack.c.h.b16 %v2702
        %v2739 = vunpack.c.l.b16 %v2703
        %v2740 = vunpack.c.h.b16 %v2703
        %v2741 = vpack.c.b16 %v2721, %v2719
        %v2742 = vpack.c.b16 %v2722, %v2720
        %v2743 = vpack.c.b16 %v2725, %v2723
        %v2744 = vpack.c.b16 %v2726, %v2724
        %v2745 = vpack.c.b16 %v2729, %v2727
        %v2746 = vpack.c.b16 %v2730, %v2728
        %v2747 = vpack.c.b16 %v2733, %v2731
        %v2748 = vpack.c.b16 %v2734, %v2732
        %v2749 = vpack.c.b16 %v2737, %v2735
        %v2750 = vpack.c.b16 %v2738, %v2736
        %v2751 = vpack.c.b16 %v2739, %v2739
        %v2752 = vpack.c.b16 %v2740, %v2740
        %v2764 = vsel %vm475, %v2705, 0
        %v2767 = vsel %vm475, %v2707, 0
        %v2770 = vsel %vm482, %v2751, 0
        %v2773 = vsel %vm482, %v2752, 0
        %2775 = vmatprep.subr.bf16.mxu0 %v2742
        %2776 = vmatpush1.bf16.msra.mxu0 %v2741
        %2777 = vmatprep.subr.bf16.mxu0 %v2744
        %2778 = vmatpush1.bf16.msra.mxu0 %v2743
        %2779 = vmatprep.subr.bf16.mxu0 %v2746
        %2780 = vmatpush1.bf16.msra.mxu0 %v2745
        %2781 = vmatprep.subr.bf16.mxu0 %v2748
        %2782 = vmatpush1.bf16.msra.mxu0 %v2747
        %2783 = vmatprep.subr.bf16.mxu0 %v2750
        %2784 = vmatpush1.bf16.msra.mxu0 %v2749
        %2785 = vmatprep.subr.bf16.mxu0 %v2773
        %2786 = vmatpush1.bf16.msra.mxu0 %v2770
        %2787 = vmatprep.subr.bf16.mxu0 0
        %2788 = vmatpush1.bf16.msra.mxu0 0
        %2789 = vmatprep.subr.bf16.mxu0 0
        %2790 = vmatpush1.bf16.msra.mxu0 0
        %2791 = vmatprep.subr.bf16.mxu0 0
        %2792 = vmatpush1.bf16.msra.mxu0 0
        %2793 = vmatprep.subr.bf16.mxu0 0
        %2794 = vmatpush1.bf16.msra.mxu0 0
        %2795 = vmatprep.subr.bf16.mxu0 0
        %2796 = vmatpush1.bf16.msra.mxu0 0
        %2797 = vmatprep.subr.bf16.mxu0 0
        %2798 = vmatpush1.bf16.msra.mxu0 0
        %2799 = vmatprep.subr.bf16.mxu0 0
        %2800 = vmatpush1.bf16.msra.mxu0 0
        %2801 = vmatprep.subr.bf16.mxu0 0
        %2802 = vmatpush1.bf16.msra.mxu0 0
        %2803 = vmatprep.subr.bf16.mxu0 0
        %2804 = vmatpush1.bf16.msra.mxu0 0
        %2805 = vmatprep.subr.bf16.mxu0 0
        %2806 = vmatpush1.bf16.msra.mxu0 0
        %2807 = vmatprep.mubr.bf16.mxu0 0
        %2808 = vmatmul.mubr.bf16.gmra.mrb[0].mxu0 %v2764
        %v2809 = vpop.f32.mrb[0].mxu0
        %v2810 = vadd.f32 0.0, %v2809
        %v2811 = vpop.f32.mrb[0].mxu0
        %v2812 = vadd.f32 0.0, %v2811
        %v2813 = vpop.f32.mrb[0].mxu0
        %v2814 = vadd.f32 0.0, %v2813
        %v2815 = vpop.f32.mrb[0].mxu0
        %v2816 = vadd.f32 0.0, %v2815
        %2817 = vmatprep.mubr.bf16.mxu0 0
        %2818 = vmatmul.mubr.bf16.gmra.mrb[0].mxu0 %v2767
        %v2819 = vpop.f32.mrb[0].mxu0
        %v2820 = vadd.f32 0.0, %v2819
        %v2821 = vpop.f32.mrb[0].mxu0
        %v2822 = vadd.f32 0.0, %v2821
        %v2823 = vpop.f32.mrb[0].mxu0
        %v2824 = vadd.f32 0.0, %v2823
        %v2825 = vpop.f32.mrb[0].mxu0
        %v2826 = vadd.f32 0.0, %v2825
        %2827 = vdwg.mxu0
        %v2828 = vadd.f32 %v2684, %v2810
        %v2829 = vadd.f32 %v2685, %v2812
        %v2830 = vadd.f32 %v2686, %v2814
        %v2831 = vadd.f32 %v2687, %v2816
        %v2832 = vadd.f32 %v2688, %v2820
        %v2833 = vadd.f32 %v2689, %v2822
        %v2834 = vadd.f32 %v2690, %v2824
        %v2835 = vadd.f32 %v2691, %v2826
        %s2836 = scalar_lea.vmem %s1, 1496
        %v2837 = vld [vmem:[%s2836] sm:$0xff]
        %v2838 = vld [vmem:[%s2836 + $0x8] sm:$0xff]
        %v2839 = vld [vmem:[%s2836 + $0x10] sm:$0xff]
        %v2840 = vld [vmem:[%s2836 + $0x18] sm:$0xff]
        %v2841 = vld [vmem:[%s2836 + $0x20] sm:$0xff]
        %v2842 = vld [vmem:[%s2836 + $0x28] sm:$0xff]
        %v2843 = vld [vmem:[%s2836 + $0x30] sm:$0xff]
        %v2844 = vld [vmem:[%s2836 + $0x38] sm:$0xff]
        %v2845 = vld [vmem:[%s2836 + $0x40] sm:$0xff]
        %v2846 = vld [vmem:[%s2836 + $0x48] sm:$0xff]
        %v2847 = vld [vmem:[%s2836 + $0x50] sm:$0x33]
        %2848 = vrot.lane.b32.xlu0 %v2563, 122
        %v2849 = vpop.permute.xlu0 %2848
        %2850 = vrot.lane.b32.xlu0 %v2562, 122
        %v2851 = vpop.permute.xlu0 %2850
        %v2863 = vunpack.c.l.b16 %v2837
        %v2864 = vunpack.c.h.b16 %v2837
        %v2865 = vunpack.c.l.b16 %v2838
        %v2866 = vunpack.c.h.b16 %v2838
        %v2867 = vunpack.c.l.b16 %v2839
        %v2868 = vunpack.c.h.b16 %v2839
        %v2869 = vunpack.c.l.b16 %v2840
        %v2870 = vunpack.c.h.b16 %v2840
        %v2871 = vunpack.c.l.b16 %v2841
        %v2872 = vunpack.c.h.b16 %v2841
        %v2873 = vunpack.c.l.b16 %v2842
        %v2874 = vunpack.c.h.b16 %v2842
        %v2875 = vunpack.c.l.b16 %v2843
        %v2876 = vunpack.c.h.b16 %v2843
        %v2877 = vunpack.c.l.b16 %v2844
        %v2878 = vunpack.c.h.b16 %v2844
        %v2879 = vunpack.c.l.b16 %v2845
        %v2880 = vunpack.c.h.b16 %v2845
        %v2881 = vunpack.c.l.b16 %v2846
        %v2882 = vunpack.c.h.b16 %v2846
        %v2883 = vunpack.c.l.b16 %v2847
        %v2884 = vunpack.c.h.b16 %v2847
        %v2885 = vpack.c.b16 %v2865, %v2863
        %v2886 = vpack.c.b16 %v2866, %v2864
        %v2887 = vpack.c.b16 %v2869, %v2867
        %v2888 = vpack.c.b16 %v2870, %v2868
        %v2889 = vpack.c.b16 %v2873, %v2871
        %v2890 = vpack.c.b16 %v2874, %v2872
        %v2891 = vpack.c.b16 %v2877, %v2875
        %v2892 = vpack.c.b16 %v2878, %v2876
        %v2893 = vpack.c.b16 %v2881, %v2879
        %v2894 = vpack.c.b16 %v2882, %v2880
        %v2895 = vpack.c.b16 %v2883, %v2883
        %v2896 = vpack.c.b16 %v2884, %v2884
        %v2908 = vsel %vm475, %v2849, 0
        %v2911 = vsel %vm475, %v2851, 0
        %v2914 = vsel %vm482, %v2895, 0
        %v2917 = vsel %vm482, %v2896, 0
        %2919 = vmatprep.subr.bf16.mxu0 %v2886
        %2920 = vmatpush1.bf16.msra.mxu0 %v2885
        %2921 = vmatprep.subr.bf16.mxu0 %v2888
        %2922 = vmatpush1.bf16.msra.mxu0 %v2887
        %2923 = vmatprep.subr.bf16.mxu0 %v2890
        %2924 = vmatpush1.bf16.msra.mxu0 %v2889
        %2925 = vmatprep.subr.bf16.mxu0 %v2892
        %2926 = vmatpush1.bf16.msra.mxu0 %v2891
        %2927 = vmatprep.subr.bf16.mxu0 %v2894
        %2928 = vmatpush1.bf16.msra.mxu0 %v2893
        %2929 = vmatprep.subr.bf16.mxu0 %v2917
        %2930 = vmatpush1.bf16.msra.mxu0 %v2914
        %2931 = vmatprep.subr.bf16.mxu0 0
        %2932 = vmatpush1.bf16.msra.mxu0 0
        %2933 = vmatprep.subr.bf16.mxu0 0
        %2934 = vmatpush1.bf16.msra.mxu0 0
        %2935 = vmatprep.subr.bf16.mxu0 0
        %2936 = vmatpush1.bf16.msra.mxu0 0
        %2937 = vmatprep.subr.bf16.mxu0 0
        %2938 = vmatpush1.bf16.msra.mxu0 0
        %2939 = vmatprep.subr.bf16.mxu0 0
        %2940 = vmatpush1.bf16.msra.mxu0 0
        %2941 = vmatprep.subr.bf16.mxu0 0
        %2942 = vmatpush1.bf16.msra.mxu0 0
        %2943 = vmatprep.subr.bf16.mxu0 0
        %2944 = vmatpush1.bf16.msra.mxu0 0
        %2945 = vmatprep.subr.bf16.mxu0 0
        %2946 = vmatpush1.bf16.msra.mxu0 0
        %2947 = vmatprep.subr.bf16.mxu0 0
        %2948 = vmatpush1.bf16.msra.mxu0 0
        %2949 = vmatprep.subr.bf16.mxu0 0
        %2950 = vmatpush1.bf16.msra.mxu0 0
        %2951 = vmatprep.mubr.bf16.mxu0 0
        %2952 = vmatmul.mubr.bf16.gmra.mrb[0].mxu0 %v2908
        %v2953 = vpop.f32.mrb[0].mxu0
        %v2954 = vadd.f32 0.0, %v2953
        %v2955 = vpop.f32.mrb[0].mxu0
        %v2956 = vadd.f32 0.0, %v2955
        %v2957 = vpop.f32.mrb[0].mxu0
        %v2958 = vadd.f32 0.0, %v2957
        %v2959 = vpop.f32.mrb[0].mxu0
        %v2960 = vadd.f32 0.0, %v2959
        %2961 = vmatprep.mubr.bf16.mxu0 0
        %2962 = vmatmul.mubr.bf16.gmra.mrb[0].mxu0 %v2911
        %v2963 = vpop.f32.mrb[0].mxu0
        %v2964 = vadd.f32 0.0, %v2963
        %v2965 = vpop.f32.mrb[0].mxu0
        %v2966 = vadd.f32 0.0, %v2965
        %v2967 = vpop.f32.mrb[0].mxu0
        %v2968 = vadd.f32 0.0, %v2967
        %v2969 = vpop.f32.mrb[0].mxu0
        %v2970 = vadd.f32 0.0, %v2969
        %2971 = vdwg.mxu0
        %v2972 = vadd.f32 %v2828, %v2954
        %v2973 = vadd.f32 %v2829, %v2956
        %v2974 = vadd.f32 %v2830, %v2958
        %v2975 = vadd.f32 %v2831, %v2960
        %v2976 = vadd.f32 %v2832, %v2964
        %v2977 = vadd.f32 %v2833, %v2966
        %v2978 = vadd.f32 %v2834, %v2968
        %v2979 = vadd.f32 %v2835, %v2970
        %s2980 = scalar_lea.vmem %s1, 1584
        %v2981 = vld [vmem:[%s2980] sm:$0xff]
        %v2982 = vld [vmem:[%s2980 + $0x8] sm:$0xff]
        %v2983 = vld [vmem:[%s2980 + $0x10] sm:$0xff]
        %v2984 = vld [vmem:[%s2980 + $0x18] sm:$0xff]
        %v2985 = vld [vmem:[%s2980 + $0x20] sm:$0xff]
        %v2986 = vld [vmem:[%s2980 + $0x28] sm:$0xff]
        %v2987 = vld [vmem:[%s2980 + $0x30] sm:$0xff]
        %v2988 = vld [vmem:[%s2980 + $0x38] sm:$0xff]
        %v2989 = vld [vmem:[%s2980 + $0x40] sm:$0xff]
        %v2990 = vld [vmem:[%s2980 + $0x48] sm:$0xff]
        %v2991 = vld [vmem:[%s2980 + $0x50] sm:$0x33]
        %2992 = vrot.lane.b32.xlu0 %v2563, 119
        %v2993 = vpop.permute.xlu0 %2992
        %2994 = vrot.lane.b32.xlu0 %v2562, 119
        %v2995 = vpop.permute.xlu0 %2994
        %v3007 = vunpack.c.l.b16 %v2981
        %v3008 = vunpack.c.h.b16 %v2981
        %v3009 = vunpack.c.l.b16 %v2982
        %v3010 = vunpack.c.h.b16 %v2982
        %v3011 = vunpack.c.l.b16 %v2983
        %v3012 = vunpack.c.h.b16 %v2983
        %v3013 = vunpack.c.l.b16 %v2984
        %v3014 = vunpack.c.h.b16 %v2984
        %v3015 = vunpack.c.l.b16 %v2985
        %v3016 = vunpack.c.h.b16 %v2985
        %v3017 = vunpack.c.l.b16 %v2986
        %v3018 = vunpack.c.h.b16 %v2986
        %v3019 = vunpack.c.l.b16 %v2987
        %v3020 = vunpack.c.h.b16 %v2987
        %v3021 = vunpack.c.l.b16 %v2988
        %v3022 = vunpack.c.h.b16 %v2988
        %v3023 = vunpack.c.l.b16 %v2989
        %v3024 = vunpack.c.h.b16 %v2989
        %v3025 = vunpack.c.l.b16 %v2990
        %v3026 = vunpack.c.h.b16 %v2990
        %v3027 = vunpack.c.l.b16 %v2991
        %v3028 = vunpack.c.h.b16 %v2991
        %v3029 = vpack.c.b16 %v3009, %v3007
        %v3030 = vpack.c.b16 %v3010, %v3008
        %v3031 = vpack.c.b16 %v3013, %v3011
        %v3032 = vpack.c.b16 %v3014, %v3012
        %v3033 = vpack.c.b16 %v3017, %v3015
        %v3034 = vpack.c.b16 %v3018, %v3016
        %v3035 = vpack.c.b16 %v3021, %v3019
        %v3036 = vpack.c.b16 %v3022, %v3020
        %v3037 = vpack.c.b16 %v3025, %v3023
        %v3038 = vpack.c.b16 %v3026, %v3024
        %v3039 = vpack.c.b16 %v3027, %v3027
        %v3040 = vpack.c.b16 %v3028, %v3028
        %v3052 = vsel %vm475, %v2993, 0
        %v3055 = vsel %vm475, %v2995, 0
        %v3058 = vsel %vm482, %v3039, 0
        %v3061 = vsel %vm482, %v3040, 0
        %3063 = vmatprep.subr.bf16.mxu0 %v3030
        %3064 = vmatpush1.bf16.msra.mxu0 %v3029
        %3065 = vmatprep.subr.bf16.mxu0 %v3032
        %3066 = vmatpush1.bf16.msra.mxu0 %v3031
        %3067 = vmatprep.subr.bf16.mxu0 %v3034
        %3068 = vmatpush1.bf16.msra.mxu0 %v3033
        %3069 = vmatprep.subr.bf16.mxu0 %v3036
        %3070 = vmatpush1.bf16.msra.mxu0 %v3035
        %3071 = vmatprep.subr.bf16.mxu0 %v3038
        %3072 = vmatpush1.bf16.msra.mxu0 %v3037
        %3073 = vmatprep.subr.bf16.mxu0 %v3061
        %3074 = vmatpush1.bf16.msra.mxu0 %v3058
        %3075 = vmatprep.subr.bf16.mxu0 0
        %3076 = vmatpush1.bf16.msra.mxu0 0
        %3077 = vmatprep.subr.bf16.mxu0 0
        %3078 = vmatpush1.bf16.msra.mxu0 0
        %3079 = vmatprep.subr.bf16.mxu0 0
        %3080 = vmatpush1.bf16.msra.mxu0 0
        %3081 = vmatprep.subr.bf16.mxu0 0
        %3082 = vmatpush1.bf16.msra.mxu0 0
        %3083 = vmatprep.subr.bf16.mxu0 0
        %3084 = vmatpush1.bf16.msra.mxu0 0
        %3085 = vmatprep.subr.bf16.mxu0 0
        %3086 = vmatpush1.bf16.msra.mxu0 0
        %3087 = vmatprep.subr.bf16.mxu0 0
        %3088 = vmatpush1.bf16.msra.mxu0 0
        %3089 = vmatprep.subr.bf16.mxu0 0
        %3090 = vmatpush1.bf16.msra.mxu0 0
        %3091 = vmatprep.subr.bf16.mxu0 0
        %3092 = vmatpush1.bf16.msra.mxu0 0
        %3093 = vmatprep.subr.bf16.mxu0 0
        %3094 = vmatpush1.bf16.msra.mxu0 0
        %3095 = vmatprep.mubr.bf16.mxu0 0
        %3096 = vmatmul.mubr.bf16.gmra.mrb[0].mxu0 %v3052
        %v3097 = vpop.f32.mrb[0].mxu0
        %v3098 = vadd.f32 0.0, %v3097
        %v3099 = vpop.f32.mrb[0].mxu0
        %v3100 = vadd.f32 0.0, %v3099
        %v3101 = vpop.f32.mrb[0].mxu0
        %v3102 = vadd.f32 0.0, %v3101
        %v3103 = vpop.f32.mrb[0].mxu0
        %v3104 = vadd.f32 0.0, %v3103
        %3105 = vmatprep.mubr.bf16.mxu0 0
        %3106 = vmatmul.mubr.bf16.gmra.mrb[0].mxu0 %v3055
        %v3107 = vpop.f32.mrb[0].mxu0
        %v3108 = vadd.f32 0.0, %v3107
        %v3109 = vpop.f32.mrb[0].mxu0
        %v3110 = vadd.f32 0.0, %v3109
        %v3111 = vpop.f32.mrb[0].mxu0
        %v3112 = vadd.f32 0.0, %v3111
        %v3113 = vpop.f32.mrb[0].mxu0
        %v3114 = vadd.f32 0.0, %v3113
        %3115 = vdwg.mxu0
        %v3116 = vadd.f32 %v2972, %v3098
        %v3117 = vadd.f32 %v2973, %v3100
        %v3118 = vadd.f32 %v2974, %v3102
        %v3119 = vadd.f32 %v2975, %v3104
        %v3120 = vadd.f32 %v2976, %v3108
        %v3121 = vadd.f32 %v2977, %v3110
        %v3122 = vadd.f32 %v2978, %v3112
        %v3123 = vadd.f32 %v2979, %v3114
        %s3124 = scalar_lea.vmem %s1, 1672
        %v3125 = vld [vmem:[%s3124] sm:$0xff]
        %v3126 = vld [vmem:[%s3124 + $0x8] sm:$0xff]
        %v3127 = vld [vmem:[%s3124 + $0x10] sm:$0xff]
        %v3128 = vld [vmem:[%s3124 + $0x18] sm:$0xff]
        %v3129 = vld [vmem:[%s3124 + $0x20] sm:$0xff]
        %v3130 = vld [vmem:[%s3124 + $0x28] sm:$0xff]
        %v3131 = vld [vmem:[%s3124 + $0x30] sm:$0xff]
        %v3132 = vld [vmem:[%s3124 + $0x38] sm:$0xff]
        %v3133 = vld [vmem:[%s3124 + $0x40] sm:$0xff]
        %v3134 = vld [vmem:[%s3124 + $0x48] sm:$0xff]
        %v3135 = vld [vmem:[%s3124 + $0x50] sm:$0x33]
        %3136 = vrot.lane.b32.xlu0 %v2563, 116
        %v3137 = vpop.permute.xlu0 %3136
        %3138 = vrot.lane.b32.xlu0 %v2562, 116
        %v3139 = vpop.permute.xlu0 %3138
        %v3151 = vunpack.c.l.b16 %v3125
        %v3152 = vunpack.c.h.b16 %v3125
        %v3153 = vunpack.c.l.b16 %v3126
        %v3154 = vunpack.c.h.b16 %v3126
        %v3155 = vunpack.c.l.b16 %v3127
        %v3156 = vunpack.c.h.b16 %v3127
        %v3157 = vunpack.c.l.b16 %v3128
        %v3158 = vunpack.c.h.b16 %v3128
        %v3159 = vunpack.c.l.b16 %v3129
        %v3160 = vunpack.c.h.b16 %v3129
        %v3161 = vunpack.c.l.b16 %v3130
        %v3162 = vunpack.c.h.b16 %v3130
        %v3163 = vunpack.c.l.b16 %v3131
        %v3164 = vunpack.c.h.b16 %v3131
        %v3165 = vunpack.c.l.b16 %v3132
        %v3166 = vunpack.c.h.b16 %v3132
        %v3167 = vunpack.c.l.b16 %v3133
        %v3168 = vunpack.c.h.b16 %v3133
        %v3169 = vunpack.c.l.b16 %v3134
        %v3170 = vunpack.c.h.b16 %v3134
        %v3171 = vunpack.c.l.b16 %v3135
        %v3172 = vunpack.c.h.b16 %v3135
        %v3173 = vpack.c.b16 %v3153, %v3151
        %v3174 = vpack.c.b16 %v3154, %v3152
        %v3175 = vpack.c.b16 %v3157, %v3155
        %v3176 = vpack.c.b16 %v3158, %v3156
        %v3177 = vpack.c.b16 %v3161, %v3159
        %v3178 = vpack.c.b16 %v3162, %v3160
        %v3179 = vpack.c.b16 %v3165, %v3163
        %v3180 = vpack.c.b16 %v3166, %v3164
        %v3181 = vpack.c.b16 %v3169, %v3167
        %v3182 = vpack.c.b16 %v3170, %v3168
        %v3183 = vpack.c.b16 %v3171, %v3171
        %v3184 = vpack.c.b16 %v3172, %v3172
        %v3196 = vsel %vm475, %v3137, 0
        %v3199 = vsel %vm475, %v3139, 0
        %v3202 = vsel %vm482, %v3183, 0
        %v3205 = vsel %vm482, %v3184, 0
        %3207 = vmatprep.subr.bf16.mxu0 %v3174
        %3208 = vmatpush1.bf16.msra.mxu0 %v3173
        %3209 = vmatprep.subr.bf16.mxu0 %v3176
        %3210 = vmatpush1.bf16.msra.mxu0 %v3175
        %3211 = vmatprep.subr.bf16.mxu0 %v3178
        %3212 = vmatpush1.bf16.msra.mxu0 %v3177
        %3213 = vmatprep.subr.bf16.mxu0 %v3180
        %3214 = vmatpush1.bf16.msra.mxu0 %v3179
        %3215 = vmatprep.subr.bf16.mxu0 %v3182
        %3216 = vmatpush1.bf16.msra.mxu0 %v3181
        %3217 = vmatprep.subr.bf16.mxu0 %v3205
        %3218 = vmatpush1.bf16.msra.mxu0 %v3202
        %3219 = vmatprep.subr.bf16.mxu0 0
        %3220 = vmatpush1.bf16.msra.mxu0 0
        %3221 = vmatprep.subr.bf16.mxu0 0
        %3222 = vmatpush1.bf16.msra.mxu0 0
        %3223 = vmatprep.subr.bf16.mxu0 0
        %3224 = vmatpush1.bf16.msra.mxu0 0
        %3225 = vmatprep.subr.bf16.mxu0 0
        %3226 = vmatpush1.bf16.msra.mxu0 0
        %3227 = vmatprep.subr.bf16.mxu0 0
        %3228 = vmatpush1.bf16.msra.mxu0 0
        %3229 = vmatprep.subr.bf16.mxu0 0
        %3230 = vmatpush1.bf16.msra.mxu0 0
        %3231 = vmatprep.subr.bf16.mxu0 0
        %3232 = vmatpush1.bf16.msra.mxu0 0
        %3233 = vmatprep.subr.bf16.mxu0 0
        %3234 = vmatpush1.bf16.msra.mxu0 0
        %3235 = vmatprep.subr.bf16.mxu0 0
        %3236 = vmatpush1.bf16.msra.mxu0 0
        %3237 = vmatprep.subr.bf16.mxu0 0
        %3238 = vmatpush1.bf16.msra.mxu0 0
        %3239 = vmatprep.mubr.bf16.mxu0 0
        %3240 = vmatmul.mubr.bf16.gmra.mrb[0].mxu0 %v3196
        %v3241 = vpop.f32.mrb[0].mxu0
        %v3242 = vadd.f32 0.0, %v3241
        %v3243 = vpop.f32.mrb[0].mxu0
        %v3244 = vadd.f32 0.0, %v3243
        %v3245 = vpop.f32.mrb[0].mxu0
        %v3246 = vadd.f32 0.0, %v3245
        %v3247 = vpop.f32.mrb[0].mxu0
        %v3248 = vadd.f32 0.0, %v3247
        %3249 = vmatprep.mubr.bf16.mxu0 0
        %3250 = vmatmul.mubr.bf16.gmra.mrb[0].mxu0 %v3199
        %v3251 = vpop.f32.mrb[0].mxu0
        %v3252 = vadd.f32 0.0, %v3251
        %v3253 = vpop.f32.mrb[0].mxu0
        %v3254 = vadd.f32 0.0, %v3253
        %v3255 = vpop.f32.mrb[0].mxu0
        %v3256 = vadd.f32 0.0, %v3255
        %v3257 = vpop.f32.mrb[0].mxu0
        %v3258 = vadd.f32 0.0, %v3257
        %3259 = vdwg.mxu0
        %v3260 = vadd.f32 %v3116, %v3242
        %v3261 = vadd.f32 %v3117, %v3244
        %v3262 = vadd.f32 %v3118, %v3246
        %v3263 = vadd.f32 %v3119, %v3248
        %v3264 = vadd.f32 %v3120, %v3252
        %v3265 = vadd.f32 %v3121, %v3254
        %v3266 = vadd.f32 %v3122, %v3256
        %v3267 = vadd.f32 %v3123, %v3258
        %s3268 = scalar_lea.vmem %s1, 1760
        %v3269 = vld [vmem:[%s3268] sm:$0xff]
        %v3270 = vld [vmem:[%s3268 + $0x8] sm:$0xff]
        %v3271 = vld [vmem:[%s3268 + $0x10] sm:$0xff]
        %v3272 = vld [vmem:[%s3268 + $0x18] sm:$0xff]
        %v3273 = vld [vmem:[%s3268 + $0x20] sm:$0xff]
        %v3274 = vld [vmem:[%s3268 + $0x28] sm:$0xff]
        %v3275 = vld [vmem:[%s3268 + $0x30] sm:$0xff]
        %v3276 = vld [vmem:[%s3268 + $0x38] sm:$0xff]
        %v3277 = vld [vmem:[%s3268 + $0x40] sm:$0xff]
        %v3278 = vld [vmem:[%s3268 + $0x48] sm:$0xff]
        %v3279 = vld [vmem:[%s3268 + $0x50] sm:$0x33]
        %vm3280 = vcmask 1045504
        %v3281 = vrot.slane %v389, 2
        %v3282 = vrot.slane %v390, 2
        %v3283 = vsel %vm3280, %v3281, %v3282
        %v3295 = vunpack.c.l.b16 %v3269
        %v3296 = vunpack.c.h.b16 %v3269
        %v3297 = vunpack.c.l.b16 %v3270
        %v3298 = vunpack.c.h.b16 %v3270
        %v3299 = vunpack.c.l.b16 %v3271
        %v3300 = vunpack.c.h.b16 %v3271
        %v3301 = vunpack.c.l.b16 %v3272
        %v3302 = vunpack.c.h.b16 %v3272
        %v3303 = vunpack.c.l.b16 %v3273
        %v3304 = vunpack.c.h.b16 %v3273
        %v3305 = vunpack.c.l.b16 %v3274
        %v3306 = vunpack.c.h.b16 %v3274
        %v3307 = vunpack.c.l.b16 %v3275
        %v3308 = vunpack.c.h.b16 %v3275
        %v3309 = vunpack.c.l.b16 %v3276
        %v3310 = vunpack.c.h.b16 %v3276
        %v3311 = vunpack.c.l.b16 %v3277
        %v3312 = vunpack.c.h.b16 %v3277
        %v3313 = vunpack.c.l.b16 %v3278
        %v3314 = vunpack.c.h.b16 %v3278
        %v3315 = vunpack.c.l.b16 %v3279
        %v3316 = vunpack.c.h.b16 %v3279
        %v3317 = vpack.c.b16 %v3297, %v3295
        %v3318 = vpack.c.b16 %v3298, %v3296
        %v3319 = vpack.c.b16 %v3301, %v3299
        %v3320 = vpack.c.b16 %v3302, %v3300
        %v3321 = vpack.c.b16 %v3305, %v3303
        %v3322 = vpack.c.b16 %v3306, %v3304
        %v3323 = vpack.c.b16 %v3309, %v3307
        %v3324 = vpack.c.b16 %v3310, %v3308
        %v3325 = vpack.c.b16 %v3313, %v3311
        %v3326 = vpack.c.b16 %v3314, %v3312
        %v3327 = vpack.c.b16 %v3315, %v3315
        %v3328 = vpack.c.b16 %v3316, %v3316
        %v3340 = vsel %vm475, %v3283, 0
        %v3343 = vsel %vm475, %v3282, 0
        %v3346 = vsel %vm482, %v3327, 0
        %v3349 = vsel %vm482, %v3328, 0
        %3351 = vmatprep.subr.bf16.mxu0 %v3318
        %3352 = vmatpush1.bf16.msra.mxu0 %v3317
        %3353 = vmatprep.subr.bf16.mxu0 %v3320
        %3354 = vmatpush1.bf16.msra.mxu0 %v3319
        %3355 = vmatprep.subr.bf16.mxu0 %v3322
        %3356 = vmatpush1.bf16.msra.mxu0 %v3321
        %3357 = vmatprep.subr.bf16.mxu0 %v3324
        %3358 = vmatpush1.bf16.msra.mxu0 %v3323
        %3359 = vmatprep.subr.bf16.mxu0 %v3326
        %3360 = vmatpush1.bf16.msra.mxu0 %v3325
        %3361 = vmatprep.subr.bf16.mxu0 %v3349
        %3362 = vmatpush1.bf16.msra.mxu0 %v3346
        %3363 = vmatprep.subr.bf16.mxu0 0
        %3364 = vmatpush1.bf16.msra.mxu0 0
        %3365 = vmatprep.subr.bf16.mxu0 0
        %3366 = vmatpush1.bf16.msra.mxu0 0
        %3367 = vmatprep.subr.bf16.mxu0 0
        %3368 = vmatpush1.bf16.msra.mxu0 0
        %3369 = vmatprep.subr.bf16.mxu0 0
        %3370 = vmatpush1.bf16.msra.mxu0 0
        %3371 = vmatprep.subr.bf16.mxu0 0
        %3372 = vmatpush1.bf16.msra.mxu0 0
        %3373 = vmatprep.subr.bf16.mxu0 0
        %3374 = vmatpush1.bf16.msra.mxu0 0
        %3375 = vmatprep.subr.bf16.mxu0 0
        %3376 = vmatpush1.bf16.msra.mxu0 0
        %3377 = vmatprep.subr.bf16.mxu0 0
        %3378 = vmatpush1.bf16.msra.mxu0 0
        %3379 = vmatprep.subr.bf16.mxu0 0
        %3380 = vmatpush1.bf16.msra.mxu0 0
        %3381 = vmatprep.subr.bf16.mxu0 0
        %3382 = vmatpush1.bf16.msra.mxu0 0
        %3383 = vmatprep.mubr.bf16.mxu0 0
        %3384 = vmatmul.mubr.bf16.gmra.mrb[0].mxu0 %v3340
        %v3385 = vpop.f32.mrb[0].mxu0
        %v3386 = vadd.f32 0.0, %v3385
        %v3387 = vpop.f32.mrb[0].mxu0
        %v3388 = vadd.f32 0.0, %v3387
        %v3389 = vpop.f32.mrb[0].mxu0
        %v3390 = vadd.f32 0.0, %v3389
        %v3391 = vpop.f32.mrb[0].mxu0
        %v3392 = vadd.f32 0.0, %v3391
        %3393 = vmatprep.mubr.bf16.mxu0 0
        %3394 = vmatmul.mubr.bf16.gmra.mrb[0].mxu0 %v3343
        %v3395 = vpop.f32.mrb[0].mxu0
        %v3396 = vadd.f32 0.0, %v3395
        %v3397 = vpop.f32.mrb[0].mxu0
        %v3398 = vadd.f32 0.0, %v3397
        %v3399 = vpop.f32.mrb[0].mxu0
        %v3400 = vadd.f32 0.0, %v3399
        %v3401 = vpop.f32.mrb[0].mxu0
        %v3402 = vadd.f32 0.0, %v3401
        %3403 = vdwg.mxu0
        %v3404 = vadd.f32 %v3260, %v3386
        %v3405 = vadd.f32 %v3261, %v3388
        %v3406 = vadd.f32 %v3262, %v3390
        %v3407 = vadd.f32 %v3263, %v3392
        %v3408 = vadd.f32 %v3264, %v3396
        %v3409 = vadd.f32 %v3265, %v3398
        %v3410 = vadd.f32 %v3266, %v3400
        %v3411 = vadd.f32 %v3267, %v3402
        %s3412 = scalar_lea.vmem %s1, 1848
        %v3413 = vld [vmem:[%s3412] sm:$0xff]
        %v3414 = vld [vmem:[%s3412 + $0x8] sm:$0xff]
        %v3415 = vld [vmem:[%s3412 + $0x10] sm:$0xff]
        %v3416 = vld [vmem:[%s3412 + $0x18] sm:$0xff]
        %v3417 = vld [vmem:[%s3412 + $0x20] sm:$0xff]
        %v3418 = vld [vmem:[%s3412 + $0x28] sm:$0xff]
        %v3419 = vld [vmem:[%s3412 + $0x30] sm:$0xff]
        %v3420 = vld [vmem:[%s3412 + $0x38] sm:$0xff]
        %v3421 = vld [vmem:[%s3412 + $0x40] sm:$0xff]
        %v3422 = vld [vmem:[%s3412 + $0x48] sm:$0xff]
        %v3423 = vld [vmem:[%s3412 + $0x50] sm:$0x33]
        %3424 = vrot.lane.b32.xlu0 %v3283, 125
        %v3425 = vpop.permute.xlu0 %3424
        %3426 = vrot.lane.b32.xlu0 %v3282, 125
        %v3427 = vpop.permute.xlu0 %3426
        %v3439 = vunpack.c.l.b16 %v3413
        %v3440 = vunpack.c.h.b16 %v3413
        %v3441 = vunpack.c.l.b16 %v3414
        %v3442 = vunpack.c.h.b16 %v3414
        %v3443 = vunpack.c.l.b16 %v3415
        %v3444 = vunpack.c.h.b16 %v3415
        %v3445 = vunpack.c.l.b16 %v3416
        %v3446 = vunpack.c.h.b16 %v3416
        %v3447 = vunpack.c.l.b16 %v3417
        %v3448 = vunpack.c.h.b16 %v3417
        %v3449 = vunpack.c.l.b16 %v3418
        %v3450 = vunpack.c.h.b16 %v3418
        %v3451 = vunpack.c.l.b16 %v3419
        %v3452 = vunpack.c.h.b16 %v3419
        %v3453 = vunpack.c.l.b16 %v3420
        %v3454 = vunpack.c.h.b16 %v3420
        %v3455 = vunpack.c.l.b16 %v3421
        %v3456 = vunpack.c.h.b16 %v3421
        %v3457 = vunpack.c.l.b16 %v3422
        %v3458 = vunpack.c.h.b16 %v3422
        %v3459 = vunpack.c.l.b16 %v3423
        %v3460 = vunpack.c.h.b16 %v3423
        %v3461 = vpack.c.b16 %v3441, %v3439
        %v3462 = vpack.c.b16 %v3442, %v3440
        %v3463 = vpack.c.b16 %v3445, %v3443
        %v3464 = vpack.c.b16 %v3446, %v3444
        %v3465 = vpack.c.b16 %v3449, %v3447
        %v3466 = vpack.c.b16 %v3450, %v3448
        %v3467 = vpack.c.b16 %v3453, %v3451
        %v3468 = vpack.c.b16 %v3454, %v3452
        %v3469 = vpack.c.b16 %v3457, %v3455
        %v3470 = vpack.c.b16 %v3458, %v3456
        %v3471 = vpack.c.b16 %v3459, %v3459
        %v3472 = vpack.c.b16 %v3460, %v3460
        %v3484 = vsel %vm475, %v3425, 0
        %v3487 = vsel %vm475, %v3427, 0
        %v3490 = vsel %vm482, %v3471, 0
        %v3493 = vsel %vm482, %v3472, 0
        %3495 = vmatprep.subr.bf16.mxu0 %v3462
        %3496 = vmatpush1.bf16.msra.mxu0 %v3461
        %3497 = vmatprep.subr.bf16.mxu0 %v3464
        %3498 = vmatpush1.bf16.msra.mxu0 %v3463
        %3499 = vmatprep.subr.bf16.mxu0 %v3466
        %3500 = vmatpush1.bf16.msra.mxu0 %v3465
        %3501 = vmatprep.subr.bf16.mxu0 %v3468
        %3502 = vmatpush1.bf16.msra.mxu0 %v3467
        %3503 = vmatprep.subr.bf16.mxu0 %v3470
        %3504 = vmatpush1.bf16.msra.mxu0 %v3469
        %3505 = vmatprep.subr.bf16.mxu0 %v3493
        %3506 = vmatpush1.bf16.msra.mxu0 %v3490
        %3507 = vmatprep.subr.bf16.mxu0 0
        %3508 = vmatpush1.bf16.msra.mxu0 0
        %3509 = vmatprep.subr.bf16.mxu0 0
        %3510 = vmatpush1.bf16.msra.mxu0 0
        %3511 = vmatprep.subr.bf16.mxu0 0
        %3512 = vmatpush1.bf16.msra.mxu0 0
        %3513 = vmatprep.subr.bf16.mxu0 0
        %3514 = vmatpush1.bf16.msra.mxu0 0
        %3515 = vmatprep.subr.bf16.mxu0 0
        %3516 = vmatpush1.bf16.msra.mxu0 0
        %3517 = vmatprep.subr.bf16.mxu0 0
        %3518 = vmatpush1.bf16.msra.mxu0 0
        %3519 = vmatprep.subr.bf16.mxu0 0
        %3520 = vmatpush1.bf16.msra.mxu0 0
        %3521 = vmatprep.subr.bf16.mxu0 0
        %3522 = vmatpush1.bf16.msra.mxu0 0
        %3523 = vmatprep.subr.bf16.mxu0 0
        %3524 = vmatpush1.bf16.msra.mxu0 0
        %3525 = vmatprep.subr.bf16.mxu0 0
        %3526 = vmatpush1.bf16.msra.mxu0 0
        %3527 = vmatprep.mubr.bf16.mxu0 0
        %3528 = vmatmul.mubr.bf16.gmra.mrb[0].mxu0 %v3484
        %v3529 = vpop.f32.mrb[0].mxu0
        %v3530 = vadd.f32 0.0, %v3529
        %v3531 = vpop.f32.mrb[0].mxu0
        %v3532 = vadd.f32 0.0, %v3531
        %v3533 = vpop.f32.mrb[0].mxu0
        %v3534 = vadd.f32 0.0, %v3533
        %v3535 = vpop.f32.mrb[0].mxu0
        %v3536 = vadd.f32 0.0, %v3535
        %3537 = vmatprep.mubr.bf16.mxu0 0
        %3538 = vmatmul.mubr.bf16.gmra.mrb[0].mxu0 %v3487
        %v3539 = vpop.f32.mrb[0].mxu0
        %v3540 = vadd.f32 0.0, %v3539
        %v3541 = vpop.f32.mrb[0].mxu0
        %v3542 = vadd.f32 0.0, %v3541
        %v3543 = vpop.f32.mrb[0].mxu0
        %v3544 = vadd.f32 0.0, %v3543
        %v3545 = vpop.f32.mrb[0].mxu0
        %v3546 = vadd.f32 0.0, %v3545
        %3547 = vdwg.mxu0
        %v3548 = vadd.f32 %v3404, %v3530
        %v3549 = vadd.f32 %v3405, %v3532
        %v3550 = vadd.f32 %v3406, %v3534
        %v3551 = vadd.f32 %v3407, %v3536
        %v3552 = vadd.f32 %v3408, %v3540
        %v3553 = vadd.f32 %v3409, %v3542
        %v3554 = vadd.f32 %v3410, %v3544
        %v3555 = vadd.f32 %v3411, %v3546
        %s3556 = scalar_lea.vmem %s1, 1936
        %v3557 = vld [vmem:[%s3556] sm:$0xff]
        %v3558 = vld [vmem:[%s3556 + $0x8] sm:$0xff]
        %v3559 = vld [vmem:[%s3556 + $0x10] sm:$0xff]
        %v3560 = vld [vmem:[%s3556 + $0x18] sm:$0xff]
        %v3561 = vld [vmem:[%s3556 + $0x20] sm:$0xff]
        %v3562 = vld [vmem:[%s3556 + $0x28] sm:$0xff]
        %v3563 = vld [vmem:[%s3556 + $0x30] sm:$0xff]
        %v3564 = vld [vmem:[%s3556 + $0x38] sm:$0xff]
        %v3565 = vld [vmem:[%s3556 + $0x40] sm:$0xff]
        %v3566 = vld [vmem:[%s3556 + $0x48] sm:$0xff]
        %v3567 = vld [vmem:[%s3556 + $0x50] sm:$0x33]
        %3568 = vrot.lane.b32.xlu0 %v3283, 122
        %v3569 = vpop.permute.xlu0 %3568
        %3570 = vrot.lane.b32.xlu0 %v3282, 122
        %v3571 = vpop.permute.xlu0 %3570
        %v3583 = vunpack.c.l.b16 %v3557
        %v3584 = vunpack.c.h.b16 %v3557
        %v3585 = vunpack.c.l.b16 %v3558
        %v3586 = vunpack.c.h.b16 %v3558
        %v3587 = vunpack.c.l.b16 %v3559
        %v3588 = vunpack.c.h.b16 %v3559
        %v3589 = vunpack.c.l.b16 %v3560
        %v3590 = vunpack.c.h.b16 %v3560
        %v3591 = vunpack.c.l.b16 %v3561
        %v3592 = vunpack.c.h.b16 %v3561
        %v3593 = vunpack.c.l.b16 %v3562
        %v3594 = vunpack.c.h.b16 %v3562
        %v3595 = vunpack.c.l.b16 %v3563
        %v3596 = vunpack.c.h.b16 %v3563
        %v3597 = vunpack.c.l.b16 %v3564
        %v3598 = vunpack.c.h.b16 %v3564
        %v3599 = vunpack.c.l.b16 %v3565
        %v3600 = vunpack.c.h.b16 %v3565
        %v3601 = vunpack.c.l.b16 %v3566
        %v3602 = vunpack.c.h.b16 %v3566
        %v3603 = vunpack.c.l.b16 %v3567
        %v3604 = vunpack.c.h.b16 %v3567
        %v3605 = vpack.c.b16 %v3585, %v3583
        %v3606 = vpack.c.b16 %v3586, %v3584
        %v3607 = vpack.c.b16 %v3589, %v3587
        %v3608 = vpack.c.b16 %v3590, %v3588
        %v3609 = vpack.c.b16 %v3593, %v3591
        %v3610 = vpack.c.b16 %v3594, %v3592
        %v3611 = vpack.c.b16 %v3597, %v3595
        %v3612 = vpack.c.b16 %v3598, %v3596
        %v3613 = vpack.c.b16 %v3601, %v3599
        %v3614 = vpack.c.b16 %v3602, %v3600
        %v3615 = vpack.c.b16 %v3603, %v3603
        %v3616 = vpack.c.b16 %v3604, %v3604
        %v3628 = vsel %vm475, %v3569, 0
        %v3631 = vsel %vm475, %v3571, 0
        %v3634 = vsel %vm482, %v3615, 0
        %v3637 = vsel %vm482, %v3616, 0
        %3639 = vmatprep.subr.bf16.mxu0 %v3606
        %3640 = vmatpush1.bf16.msra.mxu0 %v3605
        %3641 = vmatprep.subr.bf16.mxu0 %v3608
        %3642 = vmatpush1.bf16.msra.mxu0 %v3607
        %3643 = vmatprep.subr.bf16.mxu0 %v3610
        %3644 = vmatpush1.bf16.msra.mxu0 %v3609
        %3645 = vmatprep.subr.bf16.mxu0 %v3612
        %3646 = vmatpush1.bf16.msra.mxu0 %v3611
        %3647 = vmatprep.subr.bf16.mxu0 %v3614
        %3648 = vmatpush1.bf16.msra.mxu0 %v3613
        %3649 = vmatprep.subr.bf16.mxu0 %v3637
        %3650 = vmatpush1.bf16.msra.mxu0 %v3634
        %3651 = vmatprep.subr.bf16.mxu0 0
        %3652 = vmatpush1.bf16.msra.mxu0 0
        %3653 = vmatprep.subr.bf16.mxu0 0
        %3654 = vmatpush1.bf16.msra.mxu0 0
        %3655 = vmatprep.subr.bf16.mxu0 0
        %3656 = vmatpush1.bf16.msra.mxu0 0
        %3657 = vmatprep.subr.bf16.mxu0 0
        %3658 = vmatpush1.bf16.msra.mxu0 0
        %3659 = vmatprep.subr.bf16.mxu0 0
        %3660 = vmatpush1.bf16.msra.mxu0 0
        %3661 = vmatprep.subr.bf16.mxu0 0
        %3662 = vmatpush1.bf16.msra.mxu0 0
        %3663 = vmatprep.subr.bf16.mxu0 0
        %3664 = vmatpush1.bf16.msra.mxu0 0
        %3665 = vmatprep.subr.bf16.mxu0 0
        %3666 = vmatpush1.bf16.msra.mxu0 0
        %3667 = vmatprep.subr.bf16.mxu0 0
        %3668 = vmatpush1.bf16.msra.mxu0 0
        %3669 = vmatprep.subr.bf16.mxu0 0
        %3670 = vmatpush1.bf16.msra.mxu0 0
        %3671 = vmatprep.mubr.bf16.mxu0 0
        %3672 = vmatmul.mubr.bf16.gmra.mrb[0].mxu0 %v3628
        %v3673 = vpop.f32.mrb[0].mxu0
        %v3674 = vadd.f32 0.0, %v3673
        %v3675 = vpop.f32.mrb[0].mxu0
        %v3676 = vadd.f32 0.0, %v3675
        %v3677 = vpop.f32.mrb[0].mxu0
        %v3678 = vadd.f32 0.0, %v3677
        %v3679 = vpop.f32.mrb[0].mxu0
        %v3680 = vadd.f32 0.0, %v3679
        %3681 = vmatprep.mubr.bf16.mxu0 0
        %3682 = vmatmul.mubr.bf16.gmra.mrb[0].mxu0 %v3631
        %v3683 = vpop.f32.mrb[0].mxu0
        %v3684 = vadd.f32 0.0, %v3683
        %v3685 = vpop.f32.mrb[0].mxu0
        %v3686 = vadd.f32 0.0, %v3685
        %v3687 = vpop.f32.mrb[0].mxu0
        %v3688 = vadd.f32 0.0, %v3687
        %v3689 = vpop.f32.mrb[0].mxu0
        %v3690 = vadd.f32 0.0, %v3689
        %3691 = vdwg.mxu0
        %v3692 = vadd.f32 %v3548, %v3674
        %v3693 = vadd.f32 %v3549, %v3676
        %v3694 = vadd.f32 %v3550, %v3678
        %v3695 = vadd.f32 %v3551, %v3680
        %v3696 = vadd.f32 %v3552, %v3684
        %v3697 = vadd.f32 %v3553, %v3686
        %v3698 = vadd.f32 %v3554, %v3688
        %v3699 = vadd.f32 %v3555, %v3690
        %s3700 = scalar_lea.vmem %s1, 2024
        %v3701 = vld [vmem:[%s3700] sm:$0xff]
        %v3702 = vld [vmem:[%s3700 + $0x8] sm:$0xff]
        %v3703 = vld [vmem:[%s3700 + $0x10] sm:$0xff]
        %v3704 = vld [vmem:[%s3700 + $0x18] sm:$0xff]
        %v3705 = vld [vmem:[%s3700 + $0x20] sm:$0xff]
        %v3706 = vld [vmem:[%s3700 + $0x28] sm:$0xff]
        %v3707 = vld [vmem:[%s3700 + $0x30] sm:$0xff]
        %v3708 = vld [vmem:[%s3700 + $0x38] sm:$0xff]
        %v3709 = vld [vmem:[%s3700 + $0x40] sm:$0xff]
        %v3710 = vld [vmem:[%s3700 + $0x48] sm:$0xff]
        %v3711 = vld [vmem:[%s3700 + $0x50] sm:$0x33]
        %3712 = vrot.lane.b32.xlu0 %v3283, 119
        %v3713 = vpop.permute.xlu0 %3712
        %3714 = vrot.lane.b32.xlu0 %v3282, 119
        %v3715 = vpop.permute.xlu0 %3714
        %v3727 = vunpack.c.l.b16 %v3701
        %v3728 = vunpack.c.h.b16 %v3701
        %v3729 = vunpack.c.l.b16 %v3702
        %v3730 = vunpack.c.h.b16 %v3702
        %v3731 = vunpack.c.l.b16 %v3703
        %v3732 = vunpack.c.h.b16 %v3703
        %v3733 = vunpack.c.l.b16 %v3704
        %v3734 = vunpack.c.h.b16 %v3704
        %v3735 = vunpack.c.l.b16 %v3705
        %v3736 = vunpack.c.h.b16 %v3705
        %v3737 = vunpack.c.l.b16 %v3706
        %v3738 = vunpack.c.h.b16 %v3706
        %v3739 = vunpack.c.l.b16 %v3707
        %v3740 = vunpack.c.h.b16 %v3707
        %v3741 = vunpack.c.l.b16 %v3708
        %v3742 = vunpack.c.h.b16 %v3708
        %v3743 = vunpack.c.l.b16 %v3709
        %v3744 = vunpack.c.h.b16 %v3709
        %v3745 = vunpack.c.l.b16 %v3710
        %v3746 = vunpack.c.h.b16 %v3710
        %v3747 = vunpack.c.l.b16 %v3711
        %v3748 = vunpack.c.h.b16 %v3711
        %v3749 = vpack.c.b16 %v3729, %v3727
        %v3750 = vpack.c.b16 %v3730, %v3728
        %v3751 = vpack.c.b16 %v3733, %v3731
        %v3752 = vpack.c.b16 %v3734, %v3732
        %v3753 = vpack.c.b16 %v3737, %v3735
        %v3754 = vpack.c.b16 %v3738, %v3736
        %v3755 = vpack.c.b16 %v3741, %v3739
        %v3756 = vpack.c.b16 %v3742, %v3740
        %v3757 = vpack.c.b16 %v3745, %v3743
        %v3758 = vpack.c.b16 %v3746, %v3744
        %v3759 = vpack.c.b16 %v3747, %v3747
        %v3760 = vpack.c.b16 %v3748, %v3748
        %v3772 = vsel %vm475, %v3713, 0
        %v3775 = vsel %vm475, %v3715, 0
        %v3778 = vsel %vm482, %v3759, 0
        %v3781 = vsel %vm482, %v3760, 0
        %3783 = vmatprep.subr.bf16.mxu0 %v3750
        %3784 = vmatpush1.bf16.msra.mxu0 %v3749
        %3785 = vmatprep.subr.bf16.mxu0 %v3752
        %3786 = vmatpush1.bf16.msra.mxu0 %v3751
        %3787 = vmatprep.subr.bf16.mxu0 %v3754
        %3788 = vmatpush1.bf16.msra.mxu0 %v3753
        %3789 = vmatprep.subr.bf16.mxu0 %v3756
        %3790 = vmatpush1.bf16.msra.mxu0 %v3755
        %3791 = vmatprep.subr.bf16.mxu0 %v3758
        %3792 = vmatpush1.bf16.msra.mxu0 %v3757
        %3793 = vmatprep.subr.bf16.mxu0 %v3781
        %3794 = vmatpush1.bf16.msra.mxu0 %v3778
        %3795 = vmatprep.subr.bf16.mxu0 0
        %3796 = vmatpush1.bf16.msra.mxu0 0
        %3797 = vmatprep.subr.bf16.mxu0 0
        %3798 = vmatpush1.bf16.msra.mxu0 0
        %3799 = vmatprep.subr.bf16.mxu0 0
        %3800 = vmatpush1.bf16.msra.mxu0 0
        %3801 = vmatprep.subr.bf16.mxu0 0
        %3802 = vmatpush1.bf16.msra.mxu0 0
        %3803 = vmatprep.subr.bf16.mxu0 0
        %3804 = vmatpush1.bf16.msra.mxu0 0
        %3805 = vmatprep.subr.bf16.mxu0 0
        %3806 = vmatpush1.bf16.msra.mxu0 0
        %3807 = vmatprep.subr.bf16.mxu0 0
        %3808 = vmatpush1.bf16.msra.mxu0 0
        %3809 = vmatprep.subr.bf16.mxu0 0
        %3810 = vmatpush1.bf16.msra.mxu0 0
        %3811 = vmatprep.subr.bf16.mxu0 0
        %3812 = vmatpush1.bf16.msra.mxu0 0
        %3813 = vmatprep.subr.bf16.mxu0 0
        %3814 = vmatpush1.bf16.msra.mxu0 0
        %3815 = vmatprep.mubr.bf16.mxu0 0
        %3816 = vmatmul.mubr.bf16.gmra.mrb[0].mxu0 %v3772
        %v3817 = vpop.f32.mrb[0].mxu0
        %v3818 = vadd.f32 0.0, %v3817
        %v3819 = vpop.f32.mrb[0].mxu0
        %v3820 = vadd.f32 0.0, %v3819
        %v3821 = vpop.f32.mrb[0].mxu0
        %v3822 = vadd.f32 0.0, %v3821
        %v3823 = vpop.f32.mrb[0].mxu0
        %v3824 = vadd.f32 0.0, %v3823
        %3825 = vmatprep.mubr.bf16.mxu0 0
        %3826 = vmatmul.mubr.bf16.gmra.mrb[0].mxu0 %v3775
        %v3827 = vpop.f32.mrb[0].mxu0
        %v3828 = vadd.f32 0.0, %v3827
        %v3829 = vpop.f32.mrb[0].mxu0
        %v3830 = vadd.f32 0.0, %v3829
        %v3831 = vpop.f32.mrb[0].mxu0
        %v3832 = vadd.f32 0.0, %v3831
        %v3833 = vpop.f32.mrb[0].mxu0
        %v3834 = vadd.f32 0.0, %v3833
        %3835 = vdwg.mxu0
        %v3836 = vadd.f32 %v3692, %v3818
        %v3837 = vadd.f32 %v3693, %v3820
        %v3838 = vadd.f32 %v3694, %v3822
        %v3839 = vadd.f32 %v3695, %v3824
        %v3840 = vadd.f32 %v3696, %v3828
        %v3841 = vadd.f32 %v3697, %v3830
        %v3842 = vadd.f32 %v3698, %v3832
        %v3843 = vadd.f32 %v3699, %v3834
        %s3844 = scalar_lea.vmem %s1, 2112
        %v3845 = vld [vmem:[%s3844] sm:$0xff]
        %v3846 = vld [vmem:[%s3844 + $0x8] sm:$0xff]
        %v3847 = vld [vmem:[%s3844 + $0x10] sm:$0xff]
        %v3848 = vld [vmem:[%s3844 + $0x18] sm:$0xff]
        %v3849 = vld [vmem:[%s3844 + $0x20] sm:$0xff]
        %v3850 = vld [vmem:[%s3844 + $0x28] sm:$0xff]
        %v3851 = vld [vmem:[%s3844 + $0x30] sm:$0xff]
        %v3852 = vld [vmem:[%s3844 + $0x38] sm:$0xff]
        %v3853 = vld [vmem:[%s3844 + $0x40] sm:$0xff]
        %v3854 = vld [vmem:[%s3844 + $0x48] sm:$0xff]
        %v3855 = vld [vmem:[%s3844 + $0x50] sm:$0x33]
        %3856 = vrot.lane.b32.xlu0 %v3283, 116
        %v3857 = vpop.permute.xlu0 %3856
        %3858 = vrot.lane.b32.xlu0 %v3282, 116
        %v3859 = vpop.permute.xlu0 %3858
        %v3871 = vunpack.c.l.b16 %v3845
        %v3872 = vunpack.c.h.b16 %v3845
        %v3873 = vunpack.c.l.b16 %v3846
        %v3874 = vunpack.c.h.b16 %v3846
        %v3875 = vunpack.c.l.b16 %v3847
        %v3876 = vunpack.c.h.b16 %v3847
        %v3877 = vunpack.c.l.b16 %v3848
        %v3878 = vunpack.c.h.b16 %v3848
        %v3879 = vunpack.c.l.b16 %v3849
        %v3880 = vunpack.c.h.b16 %v3849
        %v3881 = vunpack.c.l.b16 %v3850
        %v3882 = vunpack.c.h.b16 %v3850
        %v3883 = vunpack.c.l.b16 %v3851
        %v3884 = vunpack.c.h.b16 %v3851
        %v3885 = vunpack.c.l.b16 %v3852
        %v3886 = vunpack.c.h.b16 %v3852
        %v3887 = vunpack.c.l.b16 %v3853
        %v3888 = vunpack.c.h.b16 %v3853
        %v3889 = vunpack.c.l.b16 %v3854
        %v3890 = vunpack.c.h.b16 %v3854
        %v3891 = vunpack.c.l.b16 %v3855
        %v3892 = vunpack.c.h.b16 %v3855
        %v3893 = vpack.c.b16 %v3873, %v3871
        %v3894 = vpack.c.b16 %v3874, %v3872
        %v3895 = vpack.c.b16 %v3877, %v3875
        %v3896 = vpack.c.b16 %v3878, %v3876
        %v3897 = vpack.c.b16 %v3881, %v3879
        %v3898 = vpack.c.b16 %v3882, %v3880
        %v3899 = vpack.c.b16 %v3885, %v3883
        %v3900 = vpack.c.b16 %v3886, %v3884
        %v3901 = vpack.c.b16 %v3889, %v3887
        %v3902 = vpack.c.b16 %v3890, %v3888
        %v3903 = vpack.c.b16 %v3891, %v3891
        %v3904 = vpack.c.b16 %v3892, %v3892
        %v3916 = vsel %vm475, %v3857, 0
        %v3919 = vsel %vm475, %v3859, 0
        %v3922 = vsel %vm482, %v3903, 0
        %v3925 = vsel %vm482, %v3904, 0
        %3927 = vmatprep.subr.bf16.mxu0 %v3894
        %3928 = vmatpush1.bf16.msra.mxu0 %v3893
        %3929 = vmatprep.subr.bf16.mxu0 %v3896
        %3930 = vmatpush1.bf16.msra.mxu0 %v3895
        %3931 = vmatprep.subr.bf16.mxu0 %v3898
        %3932 = vmatpush1.bf16.msra.mxu0 %v3897
        %3933 = vmatprep.subr.bf16.mxu0 %v3900
        %3934 = vmatpush1.bf16.msra.mxu0 %v3899
        %3935 = vmatprep.subr.bf16.mxu0 %v3902
        %3936 = vmatpush1.bf16.msra.mxu0 %v3901
        %3937 = vmatprep.subr.bf16.mxu0 %v3925
        %3938 = vmatpush1.bf16.msra.mxu0 %v3922
        %3939 = vmatprep.subr.bf16.mxu0 0
        %3940 = vmatpush1.bf16.msra.mxu0 0
        %3941 = vmatprep.subr.bf16.mxu0 0
        %3942 = vmatpush1.bf16.msra.mxu0 0
        %3943 = vmatprep.subr.bf16.mxu0 0
        %3944 = vmatpush1.bf16.msra.mxu0 0
        %3945 = vmatprep.subr.bf16.mxu0 0
        %3946 = vmatpush1.bf16.msra.mxu0 0
        %3947 = vmatprep.subr.bf16.mxu0 0
        %3948 = vmatpush1.bf16.msra.mxu0 0
        %3949 = vmatprep.subr.bf16.mxu0 0
        %3950 = vmatpush1.bf16.msra.mxu0 0
        %3951 = vmatprep.subr.bf16.mxu0 0
        %3952 = vmatpush1.bf16.msra.mxu0 0
        %3953 = vmatprep.subr.bf16.mxu0 0
        %3954 = vmatpush1.bf16.msra.mxu0 0
        %3955 = vmatprep.subr.bf16.mxu0 0
        %3956 = vmatpush1.bf16.msra.mxu0 0
        %3957 = vmatprep.subr.bf16.mxu0 0
        %3958 = vmatpush1.bf16.msra.mxu0 0
        %3959 = vmatprep.mubr.bf16.mxu0 0
        %3960 = vmatmul.mubr.bf16.gmra.mrb[0].mxu0 %v3916
        %v3961 = vpop.f32.mrb[0].mxu0
        %v3962 = vadd.f32 0.0, %v3961
        %v3963 = vpop.f32.mrb[0].mxu0
        %v3964 = vadd.f32 0.0, %v3963
        %v3965 = vpop.f32.mrb[0].mxu0
        %v3966 = vadd.f32 0.0, %v3965
        %v3967 = vpop.f32.mrb[0].mxu0
        %v3968 = vadd.f32 0.0, %v3967
        %3969 = vmatprep.mubr.bf16.mxu0 0
        %3970 = vmatmul.mubr.bf16.gmra.mrb[0].mxu0 %v3919
        %v3971 = vpop.f32.mrb[0].mxu0
        %v3972 = vadd.f32 0.0, %v3971
        %v3973 = vpop.f32.mrb[0].mxu0
        %v3974 = vadd.f32 0.0, %v3973
        %v3975 = vpop.f32.mrb[0].mxu0
        %v3976 = vadd.f32 0.0, %v3975
        %v3977 = vpop.f32.mrb[0].mxu0
        %v3978 = vadd.f32 0.0, %v3977
        %3979 = vdwg.mxu0
        %v3980 = vadd.f32 %v3836, %v3962
        %v3981 = vadd.f32 %v3837, %v3964
        %v3982 = vadd.f32 %v3838, %v3966
        %v3983 = vadd.f32 %v3839, %v3968
        %v3984 = vadd.f32 %v3840, %v3972
        %v3985 = vadd.f32 %v3841, %v3974
        %v3986 = vadd.f32 %v3842, %v3976
        %v3987 = vadd.f32 %v3843, %v3978
        %v3988 = vld [vmem:[%s2] sm:$0x3]
        %v3990 = vlaneseq
        %v3991 = vshrl.u32 %v3990, 7
        %v3992 = vsub.s32 0, %v3991
        %v3993 = vrot.slane %v3988, %v3992
        %v3994 = vlaneseq
        %v3995 = vshrl.u32 %v3994, 7
        %v3996 = vsub.s32 1, %v3995
        %v3997 = vrot.slane %v3988, %v3996
        %v4000 = vadd.f32 %v3980, %v3993
        %v4001 = vadd.f32 %v3981, %v3997
        %v4002 = vadd.f32 %v3982, %v3993
        %v4003 = vadd.f32 %v3983, %v3997
        %v4004 = vadd.f32 %v3984, %v3993
        %v4005 = vadd.f32 %v3985, %v3997
        %v4006 = vadd.f32 %v3986, %v3993
        %v4007 = vadd.f32 %v3987, %v3997
        %v4008 = vmax.f32 %v4000, 0.0
        %v4009 = vmax.f32 %v4001, 0.0
        %v4010 = vmax.f32 %v4002, 0.0
        %v4011 = vmax.f32 %v4003, 0.0
        %v4012 = vmax.f32 %v4004, 0.0
        %v4013 = vmax.f32 %v4005, 0.0
        %v4014 = vmax.f32 %v4006, 0.0
        %v4015 = vmax.f32 %v4007, 0.0
        %v4018 = vrot.slane %v4008, 1
        %v4019 = vrot.slane %v4009, 1
        %v4022 = vmax.f32 %v4008, %v4018
        %v4023 = vmax.f32 %v4009, %v4019
        %4026 = vrot.lane.b32.xlu0 %v4022, 122
        %v4027 = vpop.permute.xlu0 %4026
        %4028 = vrot.lane.b32.xlu0 %v4023, 122
        %v4029 = vpop.permute.xlu0 %4028
        %vm4030 = vcmask 998400
        %v4031 = vsel %vm4030, %v4027, %v4029
        %v4034 = vmax.f32 %v4022, %v4031
        %v4035 = vmax.f32 %v4023, %v4029
        %v4038 = vcombine.low %v4034, %v4035
        %v4040 = vunpack.c.l.s4 1966171168
        %v4041 = vunpack.c.0.s8 %v4040
        %v4042 = vlaneseq
        %v4043 = vshrl.u32 %v4042, 7
        %v4044 = vsub.s32 %v4041, %v4043
        %v4045 = vrot.slane %v4038, %v4044
        %v4047 = vunpack.c.l.s4 1966171168
        %v4048 = vunpack.c.0.s8 %v4047
        %v4049 = vlaneseq
        %v4050 = vshrl.u32 %v4049, 7
        %v4051 = vsub.s32 %v4048, %v4050
        %v4052 = vrot.slane %v4045, %v4051
        %v4054 = vlaneseq
        %vm4055 = vcmp.ge.s32.totalorder %v4054, 0
        %vm4056 = vcmp.lt.s32.totalorder %v4054, 162
        %vm4057 = vmand %vm4055, %vm4056
        %4058 = vst.msk [vmem:[#allocation2] ss:$8 sm:$0x3] %vm4057, %v4052
        %4059 = vst.msk [vmem:[#allocation2] ss:$8 sm:$0x0] %vm4057, %v4052
        %v4060 = vcombine.high %v4052, %v4052
        %s4062 = scalar_lea.vmem [#allocation2], 1
        %4063 = vst.msk [vmem:[%s4062] ss:$8 sm:$0x3] %vm4057, %v4060
        %4064 = vst.msk [vmem:[%s4062] ss:$8 sm:$0x0] %vm4057, %v4060
        %v4065 = vcombine.high %v4034, %v4035
        %v4067 = vunpack.c.l.s4 1966171168
        %v4068 = vunpack.c.0.s8 %v4067
        %v4069 = vlaneseq
        %v4070 = vshrl.u32 %v4069, 7
        %v4071 = vsub.s32 %v4068, %v4070
        %v4072 = vrot.slane %v4065, %v4071
        %v4074 = vunpack.c.l.s4 1966171168
        %v4075 = vunpack.c.0.s8 %v4074
        %v4076 = vlaneseq
        %v4077 = vshrl.u32 %v4076, 7
        %v4078 = vsub.s32 %v4075, %v4077
        %v4079 = vrot.slane %v4072, %v4078
        %s4081 = scalar_lea.vmem [#allocation2], 2
        %4082 = vst.msk [vmem:[%s4081] ss:$8 sm:$0x3] %vm4057, %v4079
        %4083 = vst.msk [vmem:[%s4081] ss:$8 sm:$0x0] %vm4057, %v4079
        %v4084 = vcombine.high %v4079, %v4079
        %s4086 = scalar_lea.vmem [#allocation2], 3
        %4087 = vst.msk [vmem:[%s4086] ss:$8 sm:$0x3] %vm4057, %v4084
        %4088 = vst.msk [vmem:[%s4086] ss:$8 sm:$0x0] %vm4057, %v4084
        %v4091 = vrot.slane %v4010, 1
        %v4092 = vrot.slane %v4011, 1
        %v4095 = vmax.f32 %v4010, %v4091
        %v4096 = vmax.f32 %v4011, %v4092
        %4099 = vrot.lane.b32.xlu0 %v4095, 122
        %v4100 = vpop.permute.xlu0 %4099
        %4101 = vrot.lane.b32.xlu0 %v4096, 122
        %v4102 = vpop.permute.xlu0 %4101
        %v4103 = vsel %vm4030, %v4100, %v4102
        %v4106 = vmax.f32 %v4095, %v4103
        %v4107 = vmax.f32 %v4096, %v4102
        %v4110 = vcombine.low %v4106, %v4107
        %v4112 = vunpack.c.l.s4 1966171168
        %v4113 = vunpack.c.0.s8 %v4112
        %v4114 = vlaneseq
        %v4115 = vshrl.u32 %v4114, 7
        %v4116 = vsub.s32 %v4113, %v4115
        %v4117 = vrot.slane %v4110, %v4116
        %v4119 = vunpack.c.l.s4 1966171168
        %v4120 = vunpack.c.0.s8 %v4119
        %v4121 = vlaneseq
        %v4122 = vshrl.u32 %v4121, 7
        %v4123 = vsub.s32 %v4120, %v4122
        %v4124 = vrot.slane %v4117, %v4123
        %s4126 = scalar_lea.vmem [#allocation2], 4
        %4127 = vst.msk [vmem:[%s4126] ss:$8 sm:$0x3] %vm4057, %v4124
        %4128 = vst.msk [vmem:[%s4126] ss:$8 sm:$0x0] %vm4057, %v4124
        %v4129 = vcombine.high %v4124, %v4124
        %s4131 = scalar_lea.vmem [#allocation2], 5
        %4132 = vst.msk [vmem:[%s4131] ss:$8 sm:$0x3] %vm4057, %v4129
        %4133 = vst.msk [vmem:[%s4131] ss:$8 sm:$0x0] %vm4057, %v4129
        %v4134 = vcombine.high %v4106, %v4107
        %v4136 = vunpack.c.l.s4 1966171168
        %v4137 = vunpack.c.0.s8 %v4136
        %v4138 = vlaneseq
        %v4139 = vshrl.u32 %v4138, 7
        %v4140 = vsub.s32 %v4137, %v4139
        %v4141 = vrot.slane %v4134, %v4140
        %v4143 = vunpack.c.l.s4 1966171168
        %v4144 = vunpack.c.0.s8 %v4143
        %v4145 = vlaneseq
        %v4146 = vshrl.u32 %v4145, 7
        %v4147 = vsub.s32 %v4144, %v4146
        %v4148 = vrot.slane %v4141, %v4147
        %s4150 = scalar_lea.vmem [#allocation2], 6
        %4151 = vst.msk [vmem:[%s4150] ss:$8 sm:$0x3] %vm4057, %v4148
        %4152 = vst.msk [vmem:[%s4150] ss:$8 sm:$0x0] %vm4057, %v4148
        %v4153 = vcombine.high %v4148, %v4148
        %s4155 = scalar_lea.vmem [#allocation2], 7
        %4156 = vst.msk [vmem:[%s4155] ss:$8 sm:$0x3] %vm4057, %v4153
        %4157 = vst.msk [vmem:[%s4155] ss:$8 sm:$0x0] %vm4057, %v4153
        %v4160 = vrot.slane %v4012, 1
        %v4161 = vrot.slane %v4013, 1
        %v4164 = vmax.f32 %v4012, %v4160
        %v4165 = vmax.f32 %v4013, %v4161
        %4168 = vrot.lane.b32.xlu0 %v4164, 122
        %v4169 = vpop.permute.xlu0 %4168
        %4170 = vrot.lane.b32.xlu0 %v4165, 122
        %v4171 = vpop.permute.xlu0 %4170
        %v4172 = vsel %vm4030, %v4169, %v4171
        %v4175 = vmax.f32 %v4164, %v4172
        %v4176 = vmax.f32 %v4165, %v4171
        %v4179 = vcombine.low %v4175, %v4176
        %v4181 = vunpack.c.l.s4 1966171168
        %v4182 = vunpack.c.0.s8 %v4181
        %v4183 = vlaneseq
        %v4184 = vshrl.u32 %v4183, 7
        %v4185 = vsub.s32 %v4182, %v4184
        %v4186 = vrot.slane %v4179, %v4185
        %v4188 = vunpack.c.l.s4 1966171168
        %v4189 = vunpack.c.0.s8 %v4188
        %v4190 = vlaneseq
        %v4191 = vshrl.u32 %v4190, 7
        %v4192 = vsub.s32 %v4189, %v4191
        %v4193 = vrot.slane %v4186, %v4192
        %s4195 = scalar_lea.vmem [#allocation2], 16
        %4196 = vst.msk [vmem:[%s4195] ss:$8 sm:$0x3] %vm4057, %v4193
        %4197 = vst.msk [vmem:[%s4195] ss:$8 sm:$0x0] %vm4057, %v4193
        %v4198 = vcombine.high %v4193, %v4193
        %s4200 = scalar_lea.vmem [#allocation2], 17
        %4201 = vst.msk [vmem:[%s4200] ss:$8 sm:$0x3] %vm4057, %v4198
        %4202 = vst.msk [vmem:[%s4200] ss:$8 sm:$0x0] %vm4057, %v4198
        %v4203 = vcombine.high %v4175, %v4176
        %v4205 = vunpack.c.l.s4 1966171168
        %v4206 = vunpack.c.0.s8 %v4205
        %v4207 = vlaneseq
        %v4208 = vshrl.u32 %v4207, 7
        %v4209 = vsub.s32 %v4206, %v4208
        %v4210 = vrot.slane %v4203, %v4209
        %v4212 = vunpack.c.l.s4 1966171168
        %v4213 = vunpack.c.0.s8 %v4212
        %v4214 = vlaneseq
        %v4215 = vshrl.u32 %v4214, 7
        %v4216 = vsub.s32 %v4213, %v4215
        %v4217 = vrot.slane %v4210, %v4216
        %s4219 = scalar_lea.vmem [#allocation2], 18
        %4220 = vst.msk [vmem:[%s4219] ss:$8 sm:$0x3] %vm4057, %v4217
        %4221 = vst.msk [vmem:[%s4219] ss:$8 sm:$0x0] %vm4057, %v4217
        %v4222 = vcombine.high %v4217, %v4217
        %s4224 = scalar_lea.vmem [#allocation2], 19
        %4225 = vst.msk [vmem:[%s4224] ss:$8 sm:$0x3] %vm4057, %v4222
        %4226 = vst.msk [vmem:[%s4224] ss:$8 sm:$0x0] %vm4057, %v4222
        %v4229 = vrot.slane %v4014, 1
        %v4230 = vrot.slane %v4015, 1
        %v4233 = vmax.f32 %v4014, %v4229
        %v4234 = vmax.f32 %v4015, %v4230
        %4237 = vrot.lane.b32.xlu0 %v4233, 122
        %v4238 = vpop.permute.xlu0 %4237
        %4239 = vrot.lane.b32.xlu0 %v4234, 122
        %v4240 = vpop.permute.xlu0 %4239
        %v4241 = vsel %vm4030, %v4238, %v4240
        %v4244 = vmax.f32 %v4233, %v4241
        %v4245 = vmax.f32 %v4234, %v4240
        %v4248 = vcombine.low %v4244, %v4245
        %v4250 = vunpack.c.l.s4 1966171168
        %v4251 = vunpack.c.0.s8 %v4250
        %v4252 = vlaneseq
        %v4253 = vshrl.u32 %v4252, 7
        %v4254 = vsub.s32 %v4251, %v4253
        %v4255 = vrot.slane %v4248, %v4254
        %v4257 = vunpack.c.l.s4 1966171168
        %v4258 = vunpack.c.0.s8 %v4257
        %v4259 = vlaneseq
        %v4260 = vshrl.u32 %v4259, 7
        %v4261 = vsub.s32 %v4258, %v4260
        %v4262 = vrot.slane %v4255, %v4261
        %s4264 = scalar_lea.vmem [#allocation2], 20
        %4265 = vst.msk [vmem:[%s4264] ss:$8 sm:$0x3] %vm4057, %v4262
        %4266 = vst.msk [vmem:[%s4264] ss:$8 sm:$0x0] %vm4057, %v4262
        %v4267 = vcombine.high %v4262, %v4262
        %s4269 = scalar_lea.vmem [#allocation2], 21
        %4270 = vst.msk [vmem:[%s4269] ss:$8 sm:$0x3] %vm4057, %v4267
        %4271 = vst.msk [vmem:[%s4269] ss:$8 sm:$0x0] %vm4057, %v4267
        %v4272 = vld [vmem:[#allocation2] sm:$0xff]
        %v4273 = vld [vmem:[#allocation2 + $0x10] sm:$0x3]
        %v4274 = vpack.c.bf16 %v4273, %v4272
        %v4275 = vld [vmem:[%s3] sm:$0xff]
        %v4276 = vld [vmem:[%s3 + $0x8] sm:$0xff]
        %v4277 = vld [vmem:[%s3 + $0x10] sm:$0xff]
        %v4278 = vld [vmem:[%s3 + $0x18] sm:$0xff]
        %v4279 = vld [vmem:[%s3 + $0x20] sm:$0xff]
        %v4280 = vld [vmem:[%s3 + $0x28] sm:$0xff]
        %v4281 = vld [vmem:[%s3 + $0x30] sm:$0xff]
        %v4282 = vld [vmem:[%s3 + $0x38] sm:$0xff]
        %v4283 = vld [vmem:[%s3 + $0x40] sm:$0xff]
        %v4284 = vld [vmem:[%s3 + $0x48] sm:$0xff]
        %v4285 = vld [vmem:[%s3 + $0x50] sm:$0xff]
        %v4286 = vld [vmem:[%s3 + $0x58] sm:$0xff]
        %v4287 = vld [vmem:[%s3 + $0x60] sm:$0xff]
        %v4288 = vld [vmem:[%s3 + $0x68] sm:$0xff]
        %v4289 = vld [vmem:[%s3 + $0x70] sm:$0x11]
        %s4290 = scalar_lea.vmem %s3, 120
        %v4291 = vld [vmem:[%s4290] sm:$0xff]
        %v4292 = vld [vmem:[%s4290 + $0x8] sm:$0xff]
        %v4293 = vld [vmem:[%s4290 + $0x10] sm:$0xff]
        %v4294 = vld [vmem:[%s4290 + $0x18] sm:$0xff]
        %v4295 = vld [vmem:[%s4290 + $0x20] sm:$0xff]
        %v4296 = vld [vmem:[%s4290 + $0x28] sm:$0xff]
        %v4297 = vld [vmem:[%s4290 + $0x30] sm:$0xff]
        %v4298 = vld [vmem:[%s4290 + $0x38] sm:$0xff]
        %v4299 = vld [vmem:[%s4290 + $0x40] sm:$0xff]
        %v4300 = vld [vmem:[%s4290 + $0x48] sm:$0xff]
        %v4301 = vld [vmem:[%s4290 + $0x50] sm:$0xff]
        %v4302 = vld [vmem:[%s4290 + $0x58] sm:$0xff]
        %v4303 = vld [vmem:[%s4290 + $0x60] sm:$0xff]
        %v4304 = vld [vmem:[%s4290 + $0x68] sm:$0xff]
        %v4305 = vld [vmem:[%s4290 + $0x70] sm:$0x11]
        %4307 = vrot.lane.b32.xlu0 %v4274, 116
        %v4308 = vpop.permute.xlu0 %4307
        %v4324 = vunpack.c.l.b16 %v4291
        %v4325 = vunpack.c.h.b16 %v4291
        %v4326 = vunpack.c.l.b16 %v4292
        %v4327 = vunpack.c.h.b16 %v4292
        %v4328 = vunpack.c.l.b16 %v4293
        %v4329 = vunpack.c.h.b16 %v4293
        %v4330 = vunpack.c.l.b16 %v4294
        %v4331 = vunpack.c.h.b16 %v4294
        %v4332 = vunpack.c.l.b16 %v4295
        %v4333 = vunpack.c.h.b16 %v4295
        %v4334 = vunpack.c.l.b16 %v4296
        %v4335 = vunpack.c.h.b16 %v4296
        %v4336 = vunpack.c.l.b16 %v4297
        %v4337 = vunpack.c.h.b16 %v4297
        %v4338 = vunpack.c.l.b16 %v4298
        %v4339 = vunpack.c.h.b16 %v4298
        %v4340 = vunpack.c.l.b16 %v4299
        %v4341 = vunpack.c.h.b16 %v4299
        %v4342 = vunpack.c.l.b16 %v4300
        %v4343 = vunpack.c.h.b16 %v4300
        %v4344 = vunpack.c.l.b16 %v4301
        %v4345 = vunpack.c.h.b16 %v4301
        %v4346 = vunpack.c.l.b16 %v4302
        %v4347 = vunpack.c.h.b16 %v4302
        %v4348 = vunpack.c.l.b16 %v4303
        %v4349 = vunpack.c.h.b16 %v4303
        %v4350 = vunpack.c.l.b16 %v4304
        %v4351 = vunpack.c.h.b16 %v4304
        %v4352 = vunpack.c.l.b16 %v4305
        %v4353 = vunpack.c.h.b16 %v4305
        %v4354 = vpack.c.b16 %v4326, %v4324
        %v4355 = vpack.c.b16 %v4327, %v4325
        %v4356 = vpack.c.b16 %v4330, %v4328
        %v4357 = vpack.c.b16 %v4331, %v4329
        %v4358 = vpack.c.b16 %v4334, %v4332
        %v4359 = vpack.c.b16 %v4335, %v4333
        %v4360 = vpack.c.b16 %v4338, %v4336
        %v4361 = vpack.c.b16 %v4339, %v4337
        %v4362 = vpack.c.b16 %v4342, %v4340
        %v4363 = vpack.c.b16 %v4343, %v4341
        %v4364 = vpack.c.b16 %v4346, %v4344
        %v4365 = vpack.c.b16 %v4347, %v4345
        %v4366 = vpack.c.b16 %v4350, %v4348
        %v4367 = vpack.c.b16 %v4351, %v4349
        %v4368 = vpack.c.b16 %v4352, %v4352
        %v4369 = vpack.c.b16 %v4353, %v4353
        %vm4384 = vcmask 932864
        %v4386 = vsel %vm4384, %v4308, 0
        %vm4388 = vcmask 1040384
        %v4390 = vsel %vm4388, %v4368, 0
        %v4393 = vsel %vm4388, %v4369, 0
        %4395 = vmatprep.subr.bf16.mxu0 %v4355
        %4396 = vmatpush1.bf16.msra.mxu0 %v4354
        %4397 = vmatprep.subr.bf16.mxu0 %v4357
        %4398 = vmatpush1.bf16.msra.mxu0 %v4356
        %4399 = vmatprep.subr.bf16.mxu0 %v4359
        %4400 = vmatpush1.bf16.msra.mxu0 %v4358
        %4401 = vmatprep.subr.bf16.mxu0 %v4361
        %4402 = vmatpush1.bf16.msra.mxu0 %v4360
        %4403 = vmatprep.subr.bf16.mxu0 %v4363
        %4404 = vmatpush1.bf16.msra.mxu0 %v4362
        %4405 = vmatprep.subr.bf16.mxu0 %v4365
        %4406 = vmatpush1.bf16.msra.mxu0 %v4364
        %4407 = vmatprep.subr.bf16.mxu0 %v4367
        %4408 = vmatpush1.bf16.msra.mxu0 %v4366
        %4409 = vmatprep.subr.bf16.mxu0 %v4393
        %4410 = vmatpush1.bf16.msra.mxu0 %v4390
        %4411 = vmatprep.subr.bf16.mxu0 0
        %4412 = vmatpush1.bf16.msra.mxu0 0
        %4413 = vmatprep.subr.bf16.mxu0 0
        %4414 = vmatpush1.bf16.msra.mxu0 0
        %4415 = vmatprep.subr.bf16.mxu0 0
        %4416 = vmatpush1.bf16.msra.mxu0 0
        %4417 = vmatprep.subr.bf16.mxu0 0
        %4418 = vmatpush1.bf16.msra.mxu0 0
        %4419 = vmatprep.subr.bf16.mxu0 0
        %4420 = vmatpush1.bf16.msra.mxu0 0
        %4421 = vmatprep.subr.bf16.mxu0 0
        %4422 = vmatpush1.bf16.msra.mxu0 0
        %4423 = vmatprep.subr.bf16.mxu0 0
        %4424 = vmatpush1.bf16.msra.mxu0 0
        %4425 = vmatprep.subr.bf16.mxu0 0
        %4426 = vmatpush1.bf16.msra.mxu0 0
        %4427 = vmatprep.mubr.bf16.mxu0 0
        %4428 = vmatmul.mubr.bf16.gmra.mrb[0].mxu0 %v4386
        %v4429 = vpop.f32.mrb[0].mxu0
        %v4430 = vadd.f32 0.0, %v4429
        %v4431 = vpop.f32.mrb[0].mxu0
        %v4432 = vadd.f32 0.0, %v4431
        %v4433 = vpop.f32.mrb[0].mxu0
        %v4434 = vadd.f32 0.0, %v4433
        %v4435 = vpop.f32.mrb[0].mxu0
        %v4436 = vadd.f32 0.0, %v4435
        %4437 = vdwg.mxu0
        %v4453 = vunpack.c.l.b16 %v4275
        %v4454 = vunpack.c.h.b16 %v4275
        %v4455 = vunpack.c.l.b16 %v4276
        %v4456 = vunpack.c.h.b16 %v4276
        %v4457 = vunpack.c.l.b16 %v4277
        %v4458 = vunpack.c.h.b16 %v4277
        %v4459 = vunpack.c.l.b16 %v4278
        %v4460 = vunpack.c.h.b16 %v4278
        %v4461 = vunpack.c.l.b16 %v4279
        %v4462 = vunpack.c.h.b16 %v4279
        %v4463 = vunpack.c.l.b16 %v4280
        %v4464 = vunpack.c.h.b16 %v4280
        %v4465 = vunpack.c.l.b16 %v4281
        %v4466 = vunpack.c.h.b16 %v4281
        %v4467 = vunpack.c.l.b16 %v4282
        %v4468 = vunpack.c.h.b16 %v4282
        %v4469 = vunpack.c.l.b16 %v4283
        %v4470 = vunpack.c.h.b16 %v4283
        %v4471 = vunpack.c.l.b16 %v4284
        %v4472 = vunpack.c.h.b16 %v4284
        %v4473 = vunpack.c.l.b16 %v4285
        %v4474 = vunpack.c.h.b16 %v4285
        %v4475 = vunpack.c.l.b16 %v4286
        %v4476 = vunpack.c.h.b16 %v4286
        %v4477 = vunpack.c.l.b16 %v4287
        %v4478 = vunpack.c.h.b16 %v4287
        %v4479 = vunpack.c.l.b16 %v4288
        %v4480 = vunpack.c.h.b16 %v4288
        %v4481 = vunpack.c.l.b16 %v4289
        %v4482 = vunpack.c.h.b16 %v4289
        %v4483 = vpack.c.b16 %v4455, %v4453
        %v4484 = vpack.c.b16 %v4456, %v4454
        %v4485 = vpack.c.b16 %v4459, %v4457
        %v4486 = vpack.c.b16 %v4460, %v4458
        %v4487 = vpack.c.b16 %v4463, %v4461
        %v4488 = vpack.c.b16 %v4464, %v4462
        %v4489 = vpack.c.b16 %v4467, %v4465
        %v4490 = vpack.c.b16 %v4468, %v4466
        %v4491 = vpack.c.b16 %v4471, %v4469
        %v4492 = vpack.c.b16 %v4472, %v4470
        %v4493 = vpack.c.b16 %v4475, %v4473
        %v4494 = vpack.c.b16 %v4476, %v4474
        %v4495 = vpack.c.b16 %v4479, %v4477
        %v4496 = vpack.c.b16 %v4480, %v4478
        %v4497 = vpack.c.b16 %v4481, %v4481
        %v4498 = vpack.c.b16 %v4482, %v4482
        %v4514 = vsel %vm4384, %v4274, 0
        %v4517 = vsel %vm4388, %v4497, 0
        %v4520 = vsel %vm4388, %v4498, 0
        %4522 = vmatprep.subr.bf16.mxu0 %v4484
        %4523 = vmatpush1.bf16.msra.mxu0 %v4483
        %4524 = vmatprep.subr.bf16.mxu0 %v4486
        %4525 = vmatpush1.bf16.msra.mxu0 %v4485
        %4526 = vmatprep.subr.bf16.mxu0 %v4488
        %4527 = vmatpush1.bf16.msra.mxu0 %v4487
        %4528 = vmatprep.subr.bf16.mxu0 %v4490
        %4529 = vmatpush1.bf16.msra.mxu0 %v4489
        %4530 = vmatprep.subr.bf16.mxu0 %v4492
        %4531 = vmatpush1.bf16.msra.mxu0 %v4491
        %4532 = vmatprep.subr.bf16.mxu0 %v4494
        %4533 = vmatpush1.bf16.msra.mxu0 %v4493
        %4534 = vmatprep.subr.bf16.mxu0 %v4496
        %4535 = vmatpush1.bf16.msra.mxu0 %v4495
        %4536 = vmatprep.subr.bf16.mxu0 %v4520
        %4537 = vmatpush1.bf16.msra.mxu0 %v4517
        %4538 = vmatprep.subr.bf16.mxu0 0
        %4539 = vmatpush1.bf16.msra.mxu0 0
        %4540 = vmatprep.subr.bf16.mxu0 0
        %4541 = vmatpush1.bf16.msra.mxu0 0
        %4542 = vmatprep.subr.bf16.mxu0 0
        %4543 = vmatpush1.bf16.msra.mxu0 0
        %4544 = vmatprep.subr.bf16.mxu0 0
        %4545 = vmatpush1.bf16.msra.mxu0 0
        %4546 = vmatprep.subr.bf16.mxu0 0
        %4547 = vmatpush1.bf16.msra.mxu0 0
        %4548 = vmatprep.subr.bf16.mxu0 0
        %4549 = vmatpush1.bf16.msra.mxu0 0
        %4550 = vmatprep.subr.bf16.mxu0 0
        %4551 = vmatpush1.bf16.msra.mxu0 0
        %4552 = vmatprep.subr.bf16.mxu0 0
        %4553 = vmatpush1.bf16.msra.mxu0 0
        %4554 = vmatprep.mubr.bf16.mxu0 0
        %4555 = vmatmul.mubr.bf16.gmra.mrb[0].mxu0 %v4514
        %v4556 = vpop.f32.mrb[0].mxu0
        %v4557 = vadd.f32 %v4430, %v4556
        %v4558 = vpop.f32.mrb[0].mxu0
        %v4559 = vadd.f32 %v4432, %v4558
        %v4560 = vpop.f32.mrb[0].mxu0
        %v4561 = vadd.f32 %v4434, %v4560
        %v4562 = vpop.f32.mrb[0].mxu0
        %v4563 = vadd.f32 %v4436, %v4562
        %4564 = vdwg.mxu0
        %v4565 = vld [vmem:[#allocation2] sm:$0xff]
        %v4566 = vld [vmem:[#allocation2 + $0x8] sm:$0xff]
        %v4567 = vld [vmem:[#allocation2 + $0x10] sm:$0x3]
        %v4568 = vld [vmem:[#allocation2 + $0x18] sm:$0x3]
        %v4569 = vpack.c.bf16 %v4567, %v4565
        %v4570 = vpack.c.bf16 %v4568, %v4566
        %s4571 = scalar_lea.vmem %s3, 240
        %v4572 = vld [vmem:[%s4571] sm:$0xff]
        %v4573 = vld [vmem:[%s4571 + $0x8] sm:$0xff]
        %v4574 = vld [vmem:[%s4571 + $0x10] sm:$0xff]
        %v4575 = vld [vmem:[%s4571 + $0x18] sm:$0xff]
        %v4576 = vld [vmem:[%s4571 + $0x20] sm:$0xff]
        %v4577 = vld [vmem:[%s4571 + $0x28] sm:$0xff]
        %v4578 = vld [vmem:[%s4571 + $0x30] sm:$0xff]
        %v4579 = vld [vmem:[%s4571 + $0x38] sm:$0xff]
        %v4580 = vld [vmem:[%s4571 + $0x40] sm:$0xff]
        %v4581 = vld [vmem:[%s4571 + $0x48] sm:$0xff]
        %v4582 = vld [vmem:[%s4571 + $0x50] sm:$0xff]
        %v4583 = vld [vmem:[%s4571 + $0x58] sm:$0xff]
        %v4584 = vld [vmem:[%s4571 + $0x60] sm:$0xff]
        %v4585 = vld [vmem:[%s4571 + $0x68] sm:$0xff]
        %v4586 = vld [vmem:[%s4571 + $0x70] sm:$0x11]
        %4589 = vrot.lane.b32.xlu0 %v4569, 104
        %v4590 = vpop.permute.xlu0 %4589
        %4591 = vrot.lane.b32.xlu0 %v4570, 104
        %v4592 = vpop.permute.xlu0 %4591
        %vm4593 = vcmask 850944
        %v4594 = vsel %vm4593, %v4590, %v4592
        %v4610 = vunpack.c.l.b16 %v4572
        %v4611 = vunpack.c.h.b16 %v4572
        %v4612 = vunpack.c.l.b16 %v4573
        %v4613 = vunpack.c.h.b16 %v4573
        %v4614 = vunpack.c.l.b16 %v4574
        %v4615 = vunpack.c.h.b16 %v4574
        %v4616 = vunpack.c.l.b16 %v4575
        %v4617 = vunpack.c.h.b16 %v4575
        %v4618 = vunpack.c.l.b16 %v4576
        %v4619 = vunpack.c.h.b16 %v4576
        %v4620 = vunpack.c.l.b16 %v4577
        %v4621 = vunpack.c.h.b16 %v4577
        %v4622 = vunpack.c.l.b16 %v4578
        %v4623 = vunpack.c.h.b16 %v4578
        %v4624 = vunpack.c.l.b16 %v4579
        %v4625 = vunpack.c.h.b16 %v4579
        %v4626 = vunpack.c.l.b16 %v4580
        %v4627 = vunpack.c.h.b16 %v4580
        %v4628 = vunpack.c.l.b16 %v4581
        %v4629 = vunpack.c.h.b16 %v4581
        %v4630 = vunpack.c.l.b16 %v4582
        %v4631 = vunpack.c.h.b16 %v4582
        %v4632 = vunpack.c.l.b16 %v4583
        %v4633 = vunpack.c.h.b16 %v4583
        %v4634 = vunpack.c.l.b16 %v4584
        %v4635 = vunpack.c.h.b16 %v4584
        %v4636 = vunpack.c.l.b16 %v4585
        %v4637 = vunpack.c.h.b16 %v4585
        %v4638 = vunpack.c.l.b16 %v4586
        %v4639 = vunpack.c.h.b16 %v4586
        %v4640 = vpack.c.b16 %v4612, %v4610
        %v4641 = vpack.c.b16 %v4613, %v4611
        %v4642 = vpack.c.b16 %v4616, %v4614
        %v4643 = vpack.c.b16 %v4617, %v4615
        %v4644 = vpack.c.b16 %v4620, %v4618
        %v4645 = vpack.c.b16 %v4621, %v4619
        %v4646 = vpack.c.b16 %v4624, %v4622
        %v4647 = vpack.c.b16 %v4625, %v4623
        %v4648 = vpack.c.b16 %v4628, %v4626
        %v4649 = vpack.c.b16 %v4629, %v4627
        %v4650 = vpack.c.b16 %v4632, %v4630
        %v4651 = vpack.c.b16 %v4633, %v4631
        %v4652 = vpack.c.b16 %v4636, %v4634
        %v4653 = vpack.c.b16 %v4637, %v4635
        %v4654 = vpack.c.b16 %v4638, %v4638
        %v4655 = vpack.c.b16 %v4639, %v4639
        %v4671 = vsel %vm4384, %v4594, 0
        %v4674 = vsel %vm4388, %v4654, 0
        %v4677 = vsel %vm4388, %v4655, 0
        %4679 = vmatprep.subr.bf16.mxu0 %v4641
        %4680 = vmatpush1.bf16.msra.mxu0 %v4640
        %4681 = vmatprep.subr.bf16.mxu0 %v4643
        %4682 = vmatpush1.bf16.msra.mxu0 %v4642
        %4683 = vmatprep.subr.bf16.mxu0 %v4645
        %4684 = vmatpush1.bf16.msra.mxu0 %v4644
        %4685 = vmatprep.subr.bf16.mxu0 %v4647
        %4686 = vmatpush1.bf16.msra.mxu0 %v4646
        %4687 = vmatprep.subr.bf16.mxu0 %v4649
        %4688 = vmatpush1.bf16.msra.mxu0 %v4648
        %4689 = vmatprep.subr.bf16.mxu0 %v4651
        %4690 = vmatpush1.bf16.msra.mxu0 %v4650
        %4691 = vmatprep.subr.bf16.mxu0 %v4653
        %4692 = vmatpush1.bf16.msra.mxu0 %v4652
        %4693 = vmatprep.subr.bf16.mxu0 %v4677
        %4694 = vmatpush1.bf16.msra.mxu0 %v4674
        %4695 = vmatprep.subr.bf16.mxu0 0
        %4696 = vmatpush1.bf16.msra.mxu0 0
        %4697 = vmatprep.subr.bf16.mxu0 0
        %4698 = vmatpush1.bf16.msra.mxu0 0
        %4699 = vmatprep.subr.bf16.mxu0 0
        %4700 = vmatpush1.bf16.msra.mxu0 0
        %4701 = vmatprep.subr.bf16.mxu0 0
        %4702 = vmatpush1.bf16.msra.mxu0 0
        %4703 = vmatprep.subr.bf16.mxu0 0
        %4704 = vmatpush1.bf16.msra.mxu0 0
        %4705 = vmatprep.subr.bf16.mxu0 0
        %4706 = vmatpush1.bf16.msra.mxu0 0
        %4707 = vmatprep.subr.bf16.mxu0 0
        %4708 = vmatpush1.bf16.msra.mxu0 0
        %4709 = vmatprep.subr.bf16.mxu0 0
        %4710 = vmatpush1.bf16.msra.mxu0 0
        %4711 = vmatprep.mubr.bf16.mxu0 0
        %4712 = vmatmul.mubr.bf16.gmra.mrb[0].mxu0 %v4671
        %v4713 = vpop.f32.mrb[0].mxu0
        %v4714 = vadd.f32 0.0, %v4713
        %v4715 = vpop.f32.mrb[0].mxu0
        %v4716 = vadd.f32 0.0, %v4715
        %v4717 = vpop.f32.mrb[0].mxu0
        %v4718 = vadd.f32 0.0, %v4717
        %v4719 = vpop.f32.mrb[0].mxu0
        %v4720 = vadd.f32 0.0, %v4719
        %4721 = vdwg.mxu0
        %v4722 = vadd.f32 %v4557, %v4714
        %v4723 = vadd.f32 %v4559, %v4716
        %v4724 = vadd.f32 %v4561, %v4718
        %v4725 = vadd.f32 %v4563, %v4720
        %s4726 = scalar_lea.vmem %s3, 360
        %v4727 = vld [vmem:[%s4726] sm:$0xff]
        %v4728 = vld [vmem:[%s4726 + $0x8] sm:$0xff]
        %v4729 = vld [vmem:[%s4726 + $0x10] sm:$0xff]
        %v4730 = vld [vmem:[%s4726 + $0x18] sm:$0xff]
        %v4731 = vld [vmem:[%s4726 + $0x20] sm:$0xff]
        %v4732 = vld [vmem:[%s4726 + $0x28] sm:$0xff]
        %v4733 = vld [vmem:[%s4726 + $0x30] sm:$0xff]
        %v4734 = vld [vmem:[%s4726 + $0x38] sm:$0xff]
        %v4735 = vld [vmem:[%s4726 + $0x40] sm:$0xff]
        %v4736 = vld [vmem:[%s4726 + $0x48] sm:$0xff]
        %v4737 = vld [vmem:[%s4726 + $0x50] sm:$0xff]
        %v4738 = vld [vmem:[%s4726 + $0x58] sm:$0xff]
        %v4739 = vld [vmem:[%s4726 + $0x60] sm:$0xff]
        %v4740 = vld [vmem:[%s4726 + $0x68] sm:$0xff]
        %v4741 = vld [vmem:[%s4726 + $0x70] sm:$0x11]
        %4742 = vrot.lane.b32.xlu0 %v4569, 92
        %v4743 = vpop.permute.xlu0 %4742
        %4744 = vrot.lane.b32.xlu0 %v4570, 92
        %v4745 = vpop.permute.xlu0 %4744
        %vm4746 = vcmask 752640
        %v4747 = vsel %vm4746, %v4743, %v4745
        %v4763 = vunpack.c.l.b16 %v4727
        %v4764 = vunpack.c.h.b16 %v4727
        %v4765 = vunpack.c.l.b16 %v4728
        %v4766 = vunpack.c.h.b16 %v4728
        %v4767 = vunpack.c.l.b16 %v4729
        %v4768 = vunpack.c.h.b16 %v4729
        %v4769 = vunpack.c.l.b16 %v4730
        %v4770 = vunpack.c.h.b16 %v4730
        %v4771 = vunpack.c.l.b16 %v4731
        %v4772 = vunpack.c.h.b16 %v4731
        %v4773 = vunpack.c.l.b16 %v4732
        %v4774 = vunpack.c.h.b16 %v4732
        %v4775 = vunpack.c.l.b16 %v4733
        %v4776 = vunpack.c.h.b16 %v4733
        %v4777 = vunpack.c.l.b16 %v4734
        %v4778 = vunpack.c.h.b16 %v4734
        %v4779 = vunpack.c.l.b16 %v4735
        %v4780 = vunpack.c.h.b16 %v4735
        %v4781 = vunpack.c.l.b16 %v4736
        %v4782 = vunpack.c.h.b16 %v4736
        %v4783 = vunpack.c.l.b16 %v4737
        %v4784 = vunpack.c.h.b16 %v4737
        %v4785 = vunpack.c.l.b16 %v4738
        %v4786 = vunpack.c.h.b16 %v4738
        %v4787 = vunpack.c.l.b16 %v4739
        %v4788 = vunpack.c.h.b16 %v4739
        %v4789 = vunpack.c.l.b16 %v4740
        %v4790 = vunpack.c.h.b16 %v4740
        %v4791 = vunpack.c.l.b16 %v4741
        %v4792 = vunpack.c.h.b16 %v4741
        %v4793 = vpack.c.b16 %v4765, %v4763
        %v4794 = vpack.c.b16 %v4766, %v4764
        %v4795 = vpack.c.b16 %v4769, %v4767
        %v4796 = vpack.c.b16 %v4770, %v4768
        %v4797 = vpack.c.b16 %v4773, %v4771
        %v4798 = vpack.c.b16 %v4774, %v4772
        %v4799 = vpack.c.b16 %v4777, %v4775
        %v4800 = vpack.c.b16 %v4778, %v4776
        %v4801 = vpack.c.b16 %v4781, %v4779
        %v4802 = vpack.c.b16 %v4782, %v4780
        %v4803 = vpack.c.b16 %v4785, %v4783
        %v4804 = vpack.c.b16 %v4786, %v4784
        %v4805 = vpack.c.b16 %v4789, %v4787
        %v4806 = vpack.c.b16 %v4790, %v4788
        %v4807 = vpack.c.b16 %v4791, %v4791
        %v4808 = vpack.c.b16 %v4792, %v4792
        %v4824 = vsel %vm4384, %v4747, 0
        %v4827 = vsel %vm4388, %v4807, 0
        %v4830 = vsel %vm4388, %v4808, 0
        %4832 = vmatprep.subr.bf16.mxu0 %v4794
        %4833 = vmatpush1.bf16.msra.mxu0 %v4793
        %4834 = vmatprep.subr.bf16.mxu0 %v4796
        %4835 = vmatpush1.bf16.msra.mxu0 %v4795
        %4836 = vmatprep.subr.bf16.mxu0 %v4798
        %4837 = vmatpush1.bf16.msra.mxu0 %v4797
        %4838 = vmatprep.subr.bf16.mxu0 %v4800
        %4839 = vmatpush1.bf16.msra.mxu0 %v4799
        %4840 = vmatprep.subr.bf16.mxu0 %v4802
        %4841 = vmatpush1.bf16.msra.mxu0 %v4801
        %4842 = vmatprep.subr.bf16.mxu0 %v4804
        %4843 = vmatpush1.bf16.msra.mxu0 %v4803
        %4844 = vmatprep.subr.bf16.mxu0 %v4806
        %4845 = vmatpush1.bf16.msra.mxu0 %v4805
        %4846 = vmatprep.subr.bf16.mxu0 %v4830
        %4847 = vmatpush1.bf16.msra.mxu0 %v4827
        %4848 = vmatprep.subr.bf16.mxu0 0
        %4849 = vmatpush1.bf16.msra.mxu0 0
        %4850 = vmatprep.subr.bf16.mxu0 0
        %4851 = vmatpush1.bf16.msra.mxu0 0
        %4852 = vmatprep.subr.bf16.mxu0 0
        %4853 = vmatpush1.bf16.msra.mxu0 0
        %4854 = vmatprep.subr.bf16.mxu0 0
        %4855 = vmatpush1.bf16.msra.mxu0 0
        %4856 = vmatprep.subr.bf16.mxu0 0
        %4857 = vmatpush1.bf16.msra.mxu0 0
        %4858 = vmatprep.subr.bf16.mxu0 0
        %4859 = vmatpush1.bf16.msra.mxu0 0
        %4860 = vmatprep.subr.bf16.mxu0 0
        %4861 = vmatpush1.bf16.msra.mxu0 0
        %4862 = vmatprep.subr.bf16.mxu0 0
        %4863 = vmatpush1.bf16.msra.mxu0 0
        %4864 = vmatprep.mubr.bf16.mxu0 0
        %4865 = vmatmul.mubr.bf16.gmra.mrb[0].mxu0 %v4824
        %v4866 = vpop.f32.mrb[0].mxu0
        %v4867 = vadd.f32 0.0, %v4866
        %v4868 = vpop.f32.mrb[0].mxu0
        %v4869 = vadd.f32 0.0, %v4868
        %v4870 = vpop.f32.mrb[0].mxu0
        %v4871 = vadd.f32 0.0, %v4870
        %v4872 = vpop.f32.mrb[0].mxu0
        %v4873 = vadd.f32 0.0, %v4872
        %4874 = vdwg.mxu0
        %v4875 = vadd.f32 %v4722, %v4867
        %v4876 = vadd.f32 %v4723, %v4869
        %v4877 = vadd.f32 %v4724, %v4871
        %v4878 = vadd.f32 %v4725, %v4873
        %s4879 = scalar_lea.vmem %s3, 480
        %v4880 = vld [vmem:[%s4879] sm:$0xff]
        %v4881 = vld [vmem:[%s4879 + $0x8] sm:$0xff]
        %v4882 = vld [vmem:[%s4879 + $0x10] sm:$0xff]
        %v4883 = vld [vmem:[%s4879 + $0x18] sm:$0xff]
        %v4884 = vld [vmem:[%s4879 + $0x20] sm:$0xff]
        %v4885 = vld [vmem:[%s4879 + $0x28] sm:$0xff]
        %v4886 = vld [vmem:[%s4879 + $0x30] sm:$0xff]
        %v4887 = vld [vmem:[%s4879 + $0x38] sm:$0xff]
        %v4888 = vld [vmem:[%s4879 + $0x40] sm:$0xff]
        %v4889 = vld [vmem:[%s4879 + $0x48] sm:$0xff]
        %v4890 = vld [vmem:[%s4879 + $0x50] sm:$0xff]
        %v4891 = vld [vmem:[%s4879 + $0x58] sm:$0xff]
        %v4892 = vld [vmem:[%s4879 + $0x60] sm:$0xff]
        %v4893 = vld [vmem:[%s4879 + $0x68] sm:$0xff]
        %v4894 = vld [vmem:[%s4879 + $0x70] sm:$0x11]
        %4895 = vrot.lane.b32.xlu0 %v4569, 80
        %v4896 = vpop.permute.xlu0 %4895
        %4897 = vrot.lane.b32.xlu0 %v4570, 80
        %v4898 = vpop.permute.xlu0 %4897
        %vm4899 = vcmask 654336
        %v4900 = vsel %vm4899, %v4896, %v4898
        %v4916 = vunpack.c.l.b16 %v4880
        %v4917 = vunpack.c.h.b16 %v4880
        %v4918 = vunpack.c.l.b16 %v4881
        %v4919 = vunpack.c.h.b16 %v4881
        %v4920 = vunpack.c.l.b16 %v4882
        %v4921 = vunpack.c.h.b16 %v4882
        %v4922 = vunpack.c.l.b16 %v4883
        %v4923 = vunpack.c.h.b16 %v4883
        %v4924 = vunpack.c.l.b16 %v4884
        %v4925 = vunpack.c.h.b16 %v4884
        %v4926 = vunpack.c.l.b16 %v4885
        %v4927 = vunpack.c.h.b16 %v4885
        %v4928 = vunpack.c.l.b16 %v4886
        %v4929 = vunpack.c.h.b16 %v4886
        %v4930 = vunpack.c.l.b16 %v4887
        %v4931 = vunpack.c.h.b16 %v4887
        %v4932 = vunpack.c.l.b16 %v4888
        %v4933 = vunpack.c.h.b16 %v4888
        %v4934 = vunpack.c.l.b16 %v4889
        %v4935 = vunpack.c.h.b16 %v4889
        %v4936 = vunpack.c.l.b16 %v4890
        %v4937 = vunpack.c.h.b16 %v4890
        %v4938 = vunpack.c.l.b16 %v4891
        %v4939 = vunpack.c.h.b16 %v4891
        %v4940 = vunpack.c.l.b16 %v4892
        %v4941 = vunpack.c.h.b16 %v4892
        %v4942 = vunpack.c.l.b16 %v4893
        %v4943 = vunpack.c.h.b16 %v4893
        %v4944 = vunpack.c.l.b16 %v4894
        %v4945 = vunpack.c.h.b16 %v4894
        %v4946 = vpack.c.b16 %v4918, %v4916
        %v4947 = vpack.c.b16 %v4919, %v4917
        %v4948 = vpack.c.b16 %v4922, %v4920
        %v4949 = vpack.c.b16 %v4923, %v4921
        %v4950 = vpack.c.b16 %v4926, %v4924
        %v4951 = vpack.c.b16 %v4927, %v4925
        %v4952 = vpack.c.b16 %v4930, %v4928
        %v4953 = vpack.c.b16 %v4931, %v4929
        %v4954 = vpack.c.b16 %v4934, %v4932
        %v4955 = vpack.c.b16 %v4935, %v4933
        %v4956 = vpack.c.b16 %v4938, %v4936
        %v4957 = vpack.c.b16 %v4939, %v4937
        %v4958 = vpack.c.b16 %v4942, %v4940
        %v4959 = vpack.c.b16 %v4943, %v4941
        %v4960 = vpack.c.b16 %v4944, %v4944
        %v4961 = vpack.c.b16 %v4945, %v4945
        %v4977 = vsel %vm4384, %v4900, 0
        %v4980 = vsel %vm4388, %v4960, 0
        %v4983 = vsel %vm4388, %v4961, 0
        %4985 = vmatprep.subr.bf16.mxu0 %v4947
        %4986 = vmatpush1.bf16.msra.mxu0 %v4946
        %4987 = vmatprep.subr.bf16.mxu0 %v4949
        %4988 = vmatpush1.bf16.msra.mxu0 %v4948
        %4989 = vmatprep.subr.bf16.mxu0 %v4951
        %4990 = vmatpush1.bf16.msra.mxu0 %v4950
        %4991 = vmatprep.subr.bf16.mxu0 %v4953
        %4992 = vmatpush1.bf16.msra.mxu0 %v4952
        %4993 = vmatprep.subr.bf16.mxu0 %v4955
        %4994 = vmatpush1.bf16.msra.mxu0 %v4954
        %4995 = vmatprep.subr.bf16.mxu0 %v4957
        %4996 = vmatpush1.bf16.msra.mxu0 %v4956
        %4997 = vmatprep.subr.bf16.mxu0 %v4959
        %4998 = vmatpush1.bf16.msra.mxu0 %v4958
        %4999 = vmatprep.subr.bf16.mxu0 %v4983
        %5000 = vmatpush1.bf16.msra.mxu0 %v4980
        %5001 = vmatprep.subr.bf16.mxu0 0
        %5002 = vmatpush1.bf16.msra.mxu0 0
        %5003 = vmatprep.subr.bf16.mxu0 0
        %5004 = vmatpush1.bf16.msra.mxu0 0
        %5005 = vmatprep.subr.bf16.mxu0 0
        %5006 = vmatpush1.bf16.msra.mxu0 0
        %5007 = vmatprep.subr.bf16.mxu0 0
        %5008 = vmatpush1.bf16.msra.mxu0 0
        %5009 = vmatprep.subr.bf16.mxu0 0
        %5010 = vmatpush1.bf16.msra.mxu0 0
        %5011 = vmatprep.subr.bf16.mxu0 0
        %5012 = vmatpush1.bf16.msra.mxu0 0
        %5013 = vmatprep.subr.bf16.mxu0 0
        %5014 = vmatpush1.bf16.msra.mxu0 0
        %5015 = vmatprep.subr.bf16.mxu0 0
        %5016 = vmatpush1.bf16.msra.mxu0 0
        %5017 = vmatprep.mubr.bf16.mxu0 0
        %5018 = vmatmul.mubr.bf16.gmra.mrb[0].mxu0 %v4977
        %v5019 = vpop.f32.mrb[0].mxu0
        %v5020 = vadd.f32 0.0, %v5019
        %v5021 = vpop.f32.mrb[0].mxu0
        %v5022 = vadd.f32 0.0, %v5021
        %v5023 = vpop.f32.mrb[0].mxu0
        %v5024 = vadd.f32 0.0, %v5023
        %v5025 = vpop.f32.mrb[0].mxu0
        %v5026 = vadd.f32 0.0, %v5025
        %5027 = vdwg.mxu0
        %v5028 = vadd.f32 %v4875, %v5020
        %v5029 = vadd.f32 %v4876, %v5022
        %v5030 = vadd.f32 %v4877, %v5024
        %v5031 = vadd.f32 %v4878, %v5026
        %v5032 = vld [vmem:[#allocation2] sm:$0xfe]
        %v5033 = vld [vmem:[#allocation2 + $0x10] sm:$0x7]
        %v5034 = vpack.c.bf16 %v5033, %v5032
        %s5035 = scalar_lea.vmem %s3, 600
        %v5036 = vld [vmem:[%s5035] sm:$0xff]
        %v5037 = vld [vmem:[%s5035 + $0x8] sm:$0xff]
        %v5038 = vld [vmem:[%s5035 + $0x10] sm:$0xff]
        %v5039 = vld [vmem:[%s5035 + $0x18] sm:$0xff]
        %v5040 = vld [vmem:[%s5035 + $0x20] sm:$0xff]
        %v5041 = vld [vmem:[%s5035 + $0x28] sm:$0xff]
        %v5042 = vld [vmem:[%s5035 + $0x30] sm:$0xff]
        %v5043 = vld [vmem:[%s5035 + $0x38] sm:$0xff]
        %v5044 = vld [vmem:[%s5035 + $0x40] sm:$0xff]
        %v5045 = vld [vmem:[%s5035 + $0x48] sm:$0xff]
        %v5046 = vld [vmem:[%s5035 + $0x50] sm:$0xff]
        %v5047 = vld [vmem:[%s5035 + $0x58] sm:$0xff]
        %v5048 = vld [vmem:[%s5035 + $0x60] sm:$0xff]
        %v5049 = vld [vmem:[%s5035 + $0x68] sm:$0xff]
        %v5050 = vld [vmem:[%s5035 + $0x70] sm:$0x11]
        %v5052 = vshrl.u32 %v5034, 16
        %v5054 = vshll.u32 %v5034, 16
        %v5056 = vrot.slane %v5054, 1
        %v5057 = vor.u32 %v5052, %v5056
        %v5073 = vunpack.c.l.b16 %v5036
        %v5074 = vunpack.c.h.b16 %v5036
        %v5075 = vunpack.c.l.b16 %v5037
        %v5076 = vunpack.c.h.b16 %v5037
        %v5077 = vunpack.c.l.b16 %v5038
        %v5078 = vunpack.c.h.b16 %v5038
        %v5079 = vunpack.c.l.b16 %v5039
        %v5080 = vunpack.c.h.b16 %v5039
        %v5081 = vunpack.c.l.b16 %v5040
        %v5082 = vunpack.c.h.b16 %v5040
        %v5083 = vunpack.c.l.b16 %v5041
        %v5084 = vunpack.c.h.b16 %v5041
        %v5085 = vunpack.c.l.b16 %v5042
        %v5086 = vunpack.c.h.b16 %v5042
        %v5087 = vunpack.c.l.b16 %v5043
        %v5088 = vunpack.c.h.b16 %v5043
        %v5089 = vunpack.c.l.b16 %v5044
        %v5090 = vunpack.c.h.b16 %v5044
        %v5091 = vunpack.c.l.b16 %v5045
        %v5092 = vunpack.c.h.b16 %v5045
        %v5093 = vunpack.c.l.b16 %v5046
        %v5094 = vunpack.c.h.b16 %v5046
        %v5095 = vunpack.c.l.b16 %v5047
        %v5096 = vunpack.c.h.b16 %v5047
        %v5097 = vunpack.c.l.b16 %v5048
        %v5098 = vunpack.c.h.b16 %v5048
        %v5099 = vunpack.c.l.b16 %v5049
        %v5100 = vunpack.c.h.b16 %v5049
        %v5101 = vunpack.c.l.b16 %v5050
        %v5102 = vunpack.c.h.b16 %v5050
        %v5103 = vpack.c.b16 %v5075, %v5073
        %v5104 = vpack.c.b16 %v5076, %v5074
        %v5105 = vpack.c.b16 %v5079, %v5077
        %v5106 = vpack.c.b16 %v5080, %v5078
        %v5107 = vpack.c.b16 %v5083, %v5081
        %v5108 = vpack.c.b16 %v5084, %v5082
        %v5109 = vpack.c.b16 %v5087, %v5085
        %v5110 = vpack.c.b16 %v5088, %v5086
        %v5111 = vpack.c.b16 %v5091, %v5089
        %v5112 = vpack.c.b16 %v5092, %v5090
        %v5113 = vpack.c.b16 %v5095, %v5093
        %v5114 = vpack.c.b16 %v5096, %v5094
        %v5115 = vpack.c.b16 %v5099, %v5097
        %v5116 = vpack.c.b16 %v5100, %v5098
        %v5117 = vpack.c.b16 %v5101, %v5101
        %v5118 = vpack.c.b16 %v5102, %v5102
        %v5134 = vsel %vm4384, %v5057, 0
        %v5137 = vsel %vm4388, %v5117, 0
        %v5140 = vsel %vm4388, %v5118, 0
        %5142 = vmatprep.subr.bf16.mxu0 %v5104
        %5143 = vmatpush1.bf16.msra.mxu0 %v5103
        %5144 = vmatprep.subr.bf16.mxu0 %v5106
        %5145 = vmatpush1.bf16.msra.mxu0 %v5105
        %5146 = vmatprep.subr.bf16.mxu0 %v5108
        %5147 = vmatpush1.bf16.msra.mxu0 %v5107
        %5148 = vmatprep.subr.bf16.mxu0 %v5110
        %5149 = vmatpush1.bf16.msra.mxu0 %v5109
        %5150 = vmatprep.subr.bf16.mxu0 %v5112
        %5151 = vmatpush1.bf16.msra.mxu0 %v5111
        %5152 = vmatprep.subr.bf16.mxu0 %v5114
        %5153 = vmatpush1.bf16.msra.mxu0 %v5113
        %5154 = vmatprep.subr.bf16.mxu0 %v5116
        %5155 = vmatpush1.bf16.msra.mxu0 %v5115
        %5156 = vmatprep.subr.bf16.mxu0 %v5140
        %5157 = vmatpush1.bf16.msra.mxu0 %v5137
        %5158 = vmatprep.subr.bf16.mxu0 0
        %5159 = vmatpush1.bf16.msra.mxu0 0
        %5160 = vmatprep.subr.bf16.mxu0 0
        %5161 = vmatpush1.bf16.msra.mxu0 0
        %5162 = vmatprep.subr.bf16.mxu0 0
        %5163 = vmatpush1.bf16.msra.mxu0 0
        %5164 = vmatprep.subr.bf16.mxu0 0
        %5165 = vmatpush1.bf16.msra.mxu0 0
        %5166 = vmatprep.subr.bf16.mxu0 0
        %5167 = vmatpush1.bf16.msra.mxu0 0
        %5168 = vmatprep.subr.bf16.mxu0 0
        %5169 = vmatpush1.bf16.msra.mxu0 0
        %5170 = vmatprep.subr.bf16.mxu0 0
        %5171 = vmatpush1.bf16.msra.mxu0 0
        %5172 = vmatprep.subr.bf16.mxu0 0
        %5173 = vmatpush1.bf16.msra.mxu0 0
        %5174 = vmatprep.mubr.bf16.mxu0 0
        %5175 = vmatmul.mubr.bf16.gmra.mrb[0].mxu0 %v5134
        %v5176 = vpop.f32.mrb[0].mxu0
        %v5177 = vadd.f32 0.0, %v5176
        %v5178 = vpop.f32.mrb[0].mxu0
        %v5179 = vadd.f32 0.0, %v5178
        %v5180 = vpop.f32.mrb[0].mxu0
        %v5181 = vadd.f32 0.0, %v5180
        %v5182 = vpop.f32.mrb[0].mxu0
        %v5183 = vadd.f32 0.0, %v5182
        %5184 = vdwg.mxu0
        %v5185 = vadd.f32 %v5028, %v5177
        %v5186 = vadd.f32 %v5029, %v5179
        %v5187 = vadd.f32 %v5030, %v5181
        %v5188 = vadd.f32 %v5031, %v5183
        %s5189 = scalar_lea.vmem %s3, 720
        %v5190 = vld [vmem:[%s5189] sm:$0xff]
        %v5191 = vld [vmem:[%s5189 + $0x8] sm:$0xff]
        %v5192 = vld [vmem:[%s5189 + $0x10] sm:$0xff]
        %v5193 = vld [vmem:[%s5189 + $0x18] sm:$0xff]
        %v5194 = vld [vmem:[%s5189 + $0x20] sm:$0xff]
        %v5195 = vld [vmem:[%s5189 + $0x28] sm:$0xff]
        %v5196 = vld [vmem:[%s5189 + $0x30] sm:$0xff]
        %v5197 = vld [vmem:[%s5189 + $0x38] sm:$0xff]
        %v5198 = vld [vmem:[%s5189 + $0x40] sm:$0xff]
        %v5199 = vld [vmem:[%s5189 + $0x48] sm:$0xff]
        %v5200 = vld [vmem:[%s5189 + $0x50] sm:$0xff]
        %v5201 = vld [vmem:[%s5189 + $0x58] sm:$0xff]
        %v5202 = vld [vmem:[%s5189 + $0x60] sm:$0xff]
        %v5203 = vld [vmem:[%s5189 + $0x68] sm:$0xff]
        %v5204 = vld [vmem:[%s5189 + $0x70] sm:$0x11]
        %5205 = vrot.lane.b32.xlu0 %v5057, 116
        %v5206 = vpop.permute.xlu0 %5205
        %v5222 = vunpack.c.l.b16 %v5190
        %v5223 = vunpack.c.h.b16 %v5190
        %v5224 = vunpack.c.l.b16 %v5191
        %v5225 = vunpack.c.h.b16 %v5191
        %v5226 = vunpack.c.l.b16 %v5192
        %v5227 = vunpack.c.h.b16 %v5192
        %v5228 = vunpack.c.l.b16 %v5193
        %v5229 = vunpack.c.h.b16 %v5193
        %v5230 = vunpack.c.l.b16 %v5194
        %v5231 = vunpack.c.h.b16 %v5194
        %v5232 = vunpack.c.l.b16 %v5195
        %v5233 = vunpack.c.h.b16 %v5195
        %v5234 = vunpack.c.l.b16 %v5196
        %v5235 = vunpack.c.h.b16 %v5196
        %v5236 = vunpack.c.l.b16 %v5197
        %v5237 = vunpack.c.h.b16 %v5197
        %v5238 = vunpack.c.l.b16 %v5198
        %v5239 = vunpack.c.h.b16 %v5198
        %v5240 = vunpack.c.l.b16 %v5199
        %v5241 = vunpack.c.h.b16 %v5199
        %v5242 = vunpack.c.l.b16 %v5200
        %v5243 = vunpack.c.h.b16 %v5200
        %v5244 = vunpack.c.l.b16 %v5201
        %v5245 = vunpack.c.h.b16 %v5201
        %v5246 = vunpack.c.l.b16 %v5202
        %v5247 = vunpack.c.h.b16 %v5202
        %v5248 = vunpack.c.l.b16 %v5203
        %v5249 = vunpack.c.h.b16 %v5203
        %v5250 = vunpack.c.l.b16 %v5204
        %v5251 = vunpack.c.h.b16 %v5204
        %v5252 = vpack.c.b16 %v5224, %v5222
        %v5253 = vpack.c.b16 %v5225, %v5223
        %v5254 = vpack.c.b16 %v5228, %v5226
        %v5255 = vpack.c.b16 %v5229, %v5227
        %v5256 = vpack.c.b16 %v5232, %v5230
        %v5257 = vpack.c.b16 %v5233, %v5231
        %v5258 = vpack.c.b16 %v5236, %v5234
        %v5259 = vpack.c.b16 %v5237, %v5235
        %v5260 = vpack.c.b16 %v5240, %v5238
        %v5261 = vpack.c.b16 %v5241, %v5239
        %v5262 = vpack.c.b16 %v5244, %v5242
        %v5263 = vpack.c.b16 %v5245, %v5243
        %v5264 = vpack.c.b16 %v5248, %v5246
        %v5265 = vpack.c.b16 %v5249, %v5247
        %v5266 = vpack.c.b16 %v5250, %v5250
        %v5267 = vpack.c.b16 %v5251, %v5251
        %v5283 = vsel %vm4384, %v5206, 0
        %v5286 = vsel %vm4388, %v5266, 0
        %v5289 = vsel %vm4388, %v5267, 0
        %5291 = vmatprep.subr.bf16.mxu0 %v5253
        %5292 = vmatpush1.bf16.msra.mxu0 %v5252
        %5293 = vmatprep.subr.bf16.mxu0 %v5255
        %5294 = vmatpush1.bf16.msra.mxu0 %v5254
        %5295 = vmatprep.subr.bf16.mxu0 %v5257
        %5296 = vmatpush1.bf16.msra.mxu0 %v5256
        %5297 = vmatprep.subr.bf16.mxu0 %v5259
        %5298 = vmatpush1.bf16.msra.mxu0 %v5258
        %5299 = vmatprep.subr.bf16.mxu0 %v5261
        %5300 = vmatpush1.bf16.msra.mxu0 %v5260
        %5301 = vmatprep.subr.bf16.mxu0 %v5263
        %5302 = vmatpush1.bf16.msra.mxu0 %v5262
        %5303 = vmatprep.subr.bf16.mxu0 %v5265
        %5304 = vmatpush1.bf16.msra.mxu0 %v5264
        %5305 = vmatprep.subr.bf16.mxu0 %v5289
        %5306 = vmatpush1.bf16.msra.mxu0 %v5286
        %5307 = vmatprep.subr.bf16.mxu0 0
        %5308 = vmatpush1.bf16.msra.mxu0 0
        %5309 = vmatprep.subr.bf16.mxu0 0
        %5310 = vmatpush1.bf16.msra.mxu0 0
        %5311 = vmatprep.subr.bf16.mxu0 0
        %5312 = vmatpush1.bf16.msra.mxu0 0
        %5313 = vmatprep.subr.bf16.mxu0 0
        %5314 = vmatpush1.bf16.msra.mxu0 0
        %5315 = vmatprep.subr.bf16.mxu0 0
        %5316 = vmatpush1.bf16.msra.mxu0 0
        %5317 = vmatprep.subr.bf16.mxu0 0
        %5318 = vmatpush1.bf16.msra.mxu0 0
        %5319 = vmatprep.subr.bf16.mxu0 0
        %5320 = vmatpush1.bf16.msra.mxu0 0
        %5321 = vmatprep.subr.bf16.mxu0 0
        %5322 = vmatpush1.bf16.msra.mxu0 0
        %5323 = vmatprep.mubr.bf16.mxu0 0
        %5324 = vmatmul.mubr.bf16.gmra.mrb[0].mxu0 %v5283
        %v5325 = vpop.f32.mrb[0].mxu0
        %v5326 = vadd.f32 0.0, %v5325
        %v5327 = vpop.f32.mrb[0].mxu0
        %v5328 = vadd.f32 0.0, %v5327
        %v5329 = vpop.f32.mrb[0].mxu0
        %v5330 = vadd.f32 0.0, %v5329
        %v5331 = vpop.f32.mrb[0].mxu0
        %v5332 = vadd.f32 0.0, %v5331
        %5333 = vdwg.mxu0
        %v5334 = vadd.f32 %v5185, %v5326
        %v5335 = vadd.f32 %v5186, %v5328
        %v5336 = vadd.f32 %v5187, %v5330
        %v5337 = vadd.f32 %v5188, %v5332
        %v5338 = vld [vmem:[#allocation2] sm:$0xfe]
        %v5339 = vld [vmem:[#allocation2 + $0x8] sm:$0xfe]
        %v5340 = vld [vmem:[#allocation2 + $0x10] sm:$0x7]
        %v5341 = vld [vmem:[#allocation2 + $0x18] sm:$0x7]
        %v5342 = vpack.c.bf16 %v5340, %v5338
        %v5343 = vpack.c.bf16 %v5341, %v5339
        %s5344 = scalar_lea.vmem %s3, 840
        %v5345 = vld [vmem:[%s5344] sm:$0xff]
        %v5346 = vld [vmem:[%s5344 + $0x8] sm:$0xff]
        %v5347 = vld [vmem:[%s5344 + $0x10] sm:$0xff]
        %v5348 = vld [vmem:[%s5344 + $0x18] sm:$0xff]
        %v5349 = vld [vmem:[%s5344 + $0x20] sm:$0xff]
        %v5350 = vld [vmem:[%s5344 + $0x28] sm:$0xff]
        %v5351 = vld [vmem:[%s5344 + $0x30] sm:$0xff]
        %v5352 = vld [vmem:[%s5344 + $0x38] sm:$0xff]
        %v5353 = vld [vmem:[%s5344 + $0x40] sm:$0xff]
        %v5354 = vld [vmem:[%s5344 + $0x48] sm:$0xff]
        %v5355 = vld [vmem:[%s5344 + $0x50] sm:$0xff]
        %v5356 = vld [vmem:[%s5344 + $0x58] sm:$0xff]
        %v5357 = vld [vmem:[%s5344 + $0x60] sm:$0xff]
        %v5358 = vld [vmem:[%s5344 + $0x68] sm:$0xff]
        %v5359 = vld [vmem:[%s5344 + $0x70] sm:$0x11]
        %v5361 = vshrl.u32 %v5342, 16
        %v5363 = vshll.u32 %v5342, 16
        %v5365 = vrot.slane %v5363, 1
        %v5366 = vor.u32 %v5361, %v5365
        %v5368 = vshrl.u32 %v5343, 16
        %v5370 = vshll.u32 %v5343, 16
        %v5372 = vrot.slane %v5370, 1
        %v5373 = vor.u32 %v5368, %v5372
        %5374 = vrot.lane.b32.xlu0 %v5366, 104
        %v5375 = vpop.permute.xlu0 %5374
        %5376 = vrot.lane.b32.xlu0 %v5373, 104
        %v5377 = vpop.permute.xlu0 %5376
        %v5378 = vsel %vm4593, %v5375, %v5377
        %v5394 = vunpack.c.l.b16 %v5345
        %v5395 = vunpack.c.h.b16 %v5345
        %v5396 = vunpack.c.l.b16 %v5346
        %v5397 = vunpack.c.h.b16 %v5346
        %v5398 = vunpack.c.l.b16 %v5347
        %v5399 = vunpack.c.h.b16 %v5347
        %v5400 = vunpack.c.l.b16 %v5348
        %v5401 = vunpack.c.h.b16 %v5348
        %v5402 = vunpack.c.l.b16 %v5349
        %v5403 = vunpack.c.h.b16 %v5349
        %v5404 = vunpack.c.l.b16 %v5350
        %v5405 = vunpack.c.h.b16 %v5350
        %v5406 = vunpack.c.l.b16 %v5351
        %v5407 = vunpack.c.h.b16 %v5351
        %v5408 = vunpack.c.l.b16 %v5352
        %v5409 = vunpack.c.h.b16 %v5352
        %v5410 = vunpack.c.l.b16 %v5353
        %v5411 = vunpack.c.h.b16 %v5353
        %v5412 = vunpack.c.l.b16 %v5354
        %v5413 = vunpack.c.h.b16 %v5354
        %v5414 = vunpack.c.l.b16 %v5355
        %v5415 = vunpack.c.h.b16 %v5355
        %v5416 = vunpack.c.l.b16 %v5356
        %v5417 = vunpack.c.h.b16 %v5356
        %v5418 = vunpack.c.l.b16 %v5357
        %v5419 = vunpack.c.h.b16 %v5357
        %v5420 = vunpack.c.l.b16 %v5358
        %v5421 = vunpack.c.h.b16 %v5358
        %v5422 = vunpack.c.l.b16 %v5359
        %v5423 = vunpack.c.h.b16 %v5359
        %v5424 = vpack.c.b16 %v5396, %v5394
        %v5425 = vpack.c.b16 %v5397, %v5395
        %v5426 = vpack.c.b16 %v5400, %v5398
        %v5427 = vpack.c.b16 %v5401, %v5399
        %v5428 = vpack.c.b16 %v5404, %v5402
        %v5429 = vpack.c.b16 %v5405, %v5403
        %v5430 = vpack.c.b16 %v5408, %v5406
        %v5431 = vpack.c.b16 %v5409, %v5407
        %v5432 = vpack.c.b16 %v5412, %v5410
        %v5433 = vpack.c.b16 %v5413, %v5411
        %v5434 = vpack.c.b16 %v5416, %v5414
        %v5435 = vpack.c.b16 %v5417, %v5415
        %v5436 = vpack.c.b16 %v5420, %v5418
        %v5437 = vpack.c.b16 %v5421, %v5419
        %v5438 = vpack.c.b16 %v5422, %v5422
        %v5439 = vpack.c.b16 %v5423, %v5423
        %v5455 = vsel %vm4384, %v5378, 0
        %v5458 = vsel %vm4388, %v5438, 0
        %v5461 = vsel %vm4388, %v5439, 0
        %5463 = vmatprep.subr.bf16.mxu0 %v5425
        %5464 = vmatpush1.bf16.msra.mxu0 %v5424
        %5465 = vmatprep.subr.bf16.mxu0 %v5427
        %5466 = vmatpush1.bf16.msra.mxu0 %v5426
        %5467 = vmatprep.subr.bf16.mxu0 %v5429
        %5468 = vmatpush1.bf16.msra.mxu0 %v5428
        %5469 = vmatprep.subr.bf16.mxu0 %v5431
        %5470 = vmatpush1.bf16.msra.mxu0 %v5430
        %5471 = vmatprep.subr.bf16.mxu0 %v5433
        %5472 = vmatpush1.bf16.msra.mxu0 %v5432
        %5473 = vmatprep.subr.bf16.mxu0 %v5435
        %5474 = vmatpush1.bf16.msra.mxu0 %v5434
        %5475 = vmatprep.subr.bf16.mxu0 %v5437
        %5476 = vmatpush1.bf16.msra.mxu0 %v5436
        %5477 = vmatprep.subr.bf16.mxu0 %v5461
        %5478 = vmatpush1.bf16.msra.mxu0 %v5458
        %5479 = vmatprep.subr.bf16.mxu0 0
        %5480 = vmatpush1.bf16.msra.mxu0 0
        %5481 = vmatprep.subr.bf16.mxu0 0
        %5482 = vmatpush1.bf16.msra.mxu0 0
        %5483 = vmatprep.subr.bf16.mxu0 0
        %5484 = vmatpush1.bf16.msra.mxu0 0
        %5485 = vmatprep.subr.bf16.mxu0 0
        %5486 = vmatpush1.bf16.msra.mxu0 0
        %5487 = vmatprep.subr.bf16.mxu0 0
        %5488 = vmatpush1.bf16.msra.mxu0 0
        %5489 = vmatprep.subr.bf16.mxu0 0
        %5490 = vmatpush1.bf16.msra.mxu0 0
        %5491 = vmatprep.subr.bf16.mxu0 0
        %5492 = vmatpush1.bf16.msra.mxu0 0
        %5493 = vmatprep.subr.bf16.mxu0 0
        %5494 = vmatpush1.bf16.msra.mxu0 0
        %5495 = vmatprep.mubr.bf16.mxu0 0
        %5496 = vmatmul.mubr.bf16.gmra.mrb[0].mxu0 %v5455
        %v5497 = vpop.f32.mrb[0].mxu0
        %v5498 = vadd.f32 0.0, %v5497
        %v5499 = vpop.f32.mrb[0].mxu0
        %v5500 = vadd.f32 0.0, %v5499
        %v5501 = vpop.f32.mrb[0].mxu0
        %v5502 = vadd.f32 0.0, %v5501
        %v5503 = vpop.f32.mrb[0].mxu0
        %v5504 = vadd.f32 0.0, %v5503
        %5505 = vdwg.mxu0
        %v5506 = vadd.f32 %v5334, %v5498
        %v5507 = vadd.f32 %v5335, %v5500
        %v5508 = vadd.f32 %v5336, %v5502
        %v5509 = vadd.f32 %v5337, %v5504
        %s5510 = scalar_lea.vmem %s3, 960
        %v5511 = vld [vmem:[%s5510] sm:$0xff]
        %v5512 = vld [vmem:[%s5510 + $0x8] sm:$0xff]
        %v5513 = vld [vmem:[%s5510 + $0x10] sm:$0xff]
        %v5514 = vld [vmem:[%s5510 + $0x18] sm:$0xff]
        %v5515 = vld [vmem:[%s5510 + $0x20] sm:$0xff]
        %v5516 = vld [vmem:[%s5510 + $0x28] sm:$0xff]
        %v5517 = vld [vmem:[%s5510 + $0x30] sm:$0xff]
        %v5518 = vld [vmem:[%s5510 + $0x38] sm:$0xff]
        %v5519 = vld [vmem:[%s5510 + $0x40] sm:$0xff]
        %v5520 = vld [vmem:[%s5510 + $0x48] sm:$0xff]
        %v5521 = vld [vmem:[%s5510 + $0x50] sm:$0xff]
        %v5522 = vld [vmem:[%s5510 + $0x58] sm:$0xff]
        %v5523 = vld [vmem:[%s5510 + $0x60] sm:$0xff]
        %v5524 = vld [vmem:[%s5510 + $0x68] sm:$0xff]
        %v5525 = vld [vmem:[%s5510 + $0x70] sm:$0x11]
        %5526 = vrot.lane.b32.xlu0 %v5366, 92
        %v5527 = vpop.permute.xlu0 %5526
        %5528 = vrot.lane.b32.xlu0 %v5373, 92
        %v5529 = vpop.permute.xlu0 %5528
        %v5530 = vsel %vm4746, %v5527, %v5529
        %v5546 = vunpack.c.l.b16 %v5511
        %v5547 = vunpack.c.h.b16 %v5511
        %v5548 = vunpack.c.l.b16 %v5512
        %v5549 = vunpack.c.h.b16 %v5512
        %v5550 = vunpack.c.l.b16 %v5513
        %v5551 = vunpack.c.h.b16 %v5513
        %v5552 = vunpack.c.l.b16 %v5514
        %v5553 = vunpack.c.h.b16 %v5514
        %v5554 = vunpack.c.l.b16 %v5515
        %v5555 = vunpack.c.h.b16 %v5515
        %v5556 = vunpack.c.l.b16 %v5516
        %v5557 = vunpack.c.h.b16 %v5516
        %v5558 = vunpack.c.l.b16 %v5517
        %v5559 = vunpack.c.h.b16 %v5517
        %v5560 = vunpack.c.l.b16 %v5518
        %v5561 = vunpack.c.h.b16 %v5518
        %v5562 = vunpack.c.l.b16 %v5519
        %v5563 = vunpack.c.h.b16 %v5519
        %v5564 = vunpack.c.l.b16 %v5520
        %v5565 = vunpack.c.h.b16 %v5520
        %v5566 = vunpack.c.l.b16 %v5521
        %v5567 = vunpack.c.h.b16 %v5521
        %v5568 = vunpack.c.l.b16 %v5522
        %v5569 = vunpack.c.h.b16 %v5522
        %v5570 = vunpack.c.l.b16 %v5523
        %v5571 = vunpack.c.h.b16 %v5523
        %v5572 = vunpack.c.l.b16 %v5524
        %v5573 = vunpack.c.h.b16 %v5524
        %v5574 = vunpack.c.l.b16 %v5525
        %v5575 = vunpack.c.h.b16 %v5525
        %v5576 = vpack.c.b16 %v5548, %v5546
        %v5577 = vpack.c.b16 %v5549, %v5547
        %v5578 = vpack.c.b16 %v5552, %v5550
        %v5579 = vpack.c.b16 %v5553, %v5551
        %v5580 = vpack.c.b16 %v5556, %v5554
        %v5581 = vpack.c.b16 %v5557, %v5555
        %v5582 = vpack.c.b16 %v5560, %v5558
        %v5583 = vpack.c.b16 %v5561, %v5559
        %v5584 = vpack.c.b16 %v5564, %v5562
        %v5585 = vpack.c.b16 %v5565, %v5563
        %v5586 = vpack.c.b16 %v5568, %v5566
        %v5587 = vpack.c.b16 %v5569, %v5567
        %v5588 = vpack.c.b16 %v5572, %v5570
        %v5589 = vpack.c.b16 %v5573, %v5571
        %v5590 = vpack.c.b16 %v5574, %v5574
        %v5591 = vpack.c.b16 %v5575, %v5575
        %v5607 = vsel %vm4384, %v5530, 0
        %v5610 = vsel %vm4388, %v5590, 0
        %v5613 = vsel %vm4388, %v5591, 0
        %5615 = vmatprep.subr.bf16.mxu0 %v5577
        %5616 = vmatpush1.bf16.msra.mxu0 %v5576
        %5617 = vmatprep.subr.bf16.mxu0 %v5579
        %5618 = vmatpush1.bf16.msra.mxu0 %v5578
        %5619 = vmatprep.subr.bf16.mxu0 %v5581
        %5620 = vmatpush1.bf16.msra.mxu0 %v5580
        %5621 = vmatprep.subr.bf16.mxu0 %v5583
        %5622 = vmatpush1.bf16.msra.mxu0 %v5582
        %5623 = vmatprep.subr.bf16.mxu0 %v5585
        %5624 = vmatpush1.bf16.msra.mxu0 %v5584
        %5625 = vmatprep.subr.bf16.mxu0 %v5587
        %5626 = vmatpush1.bf16.msra.mxu0 %v5586
        %5627 = vmatprep.subr.bf16.mxu0 %v5589
        %5628 = vmatpush1.bf16.msra.mxu0 %v5588
        %5629 = vmatprep.subr.bf16.mxu0 %v5613
        %5630 = vmatpush1.bf16.msra.mxu0 %v5610
        %5631 = vmatprep.subr.bf16.mxu0 0
        %5632 = vmatpush1.bf16.msra.mxu0 0
        %5633 = vmatprep.subr.bf16.mxu0 0
        %5634 = vmatpush1.bf16.msra.mxu0 0
        %5635 = vmatprep.subr.bf16.mxu0 0
        %5636 = vmatpush1.bf16.msra.mxu0 0
        %5637 = vmatprep.subr.bf16.mxu0 0
        %5638 = vmatpush1.bf16.msra.mxu0 0
        %5639 = vmatprep.subr.bf16.mxu0 0
        %5640 = vmatpush1.bf16.msra.mxu0 0
        %5641 = vmatprep.subr.bf16.mxu0 0
        %5642 = vmatpush1.bf16.msra.mxu0 0
        %5643 = vmatprep.subr.bf16.mxu0 0
        %5644 = vmatpush1.bf16.msra.mxu0 0
        %5645 = vmatprep.subr.bf16.mxu0 0
        %5646 = vmatpush1.bf16.msra.mxu0 0
        %5647 = vmatprep.mubr.bf16.mxu0 0
        %5648 = vmatmul.mubr.bf16.gmra.mrb[0].mxu0 %v5607
        %v5649 = vpop.f32.mrb[0].mxu0
        %v5650 = vadd.f32 0.0, %v5649
        %v5651 = vpop.f32.mrb[0].mxu0
        %v5652 = vadd.f32 0.0, %v5651
        %v5653 = vpop.f32.mrb[0].mxu0
        %v5654 = vadd.f32 0.0, %v5653
        %v5655 = vpop.f32.mrb[0].mxu0
        %v5656 = vadd.f32 0.0, %v5655
        %5657 = vdwg.mxu0
        %v5658 = vadd.f32 %v5506, %v5650
        %v5659 = vadd.f32 %v5507, %v5652
        %v5660 = vadd.f32 %v5508, %v5654
        %v5661 = vadd.f32 %v5509, %v5656
        %s5662 = scalar_lea.vmem %s3, 1080
        %v5663 = vld [vmem:[%s5662] sm:$0xff]
        %v5664 = vld [vmem:[%s5662 + $0x8] sm:$0xff]
        %v5665 = vld [vmem:[%s5662 + $0x10] sm:$0xff]
        %v5666 = vld [vmem:[%s5662 + $0x18] sm:$0xff]
        %v5667 = vld [vmem:[%s5662 + $0x20] sm:$0xff]
        %v5668 = vld [vmem:[%s5662 + $0x28] sm:$0xff]
        %v5669 = vld [vmem:[%s5662 + $0x30] sm:$0xff]
        %v5670 = vld [vmem:[%s5662 + $0x38] sm:$0xff]
        %v5671 = vld [vmem:[%s5662 + $0x40] sm:$0xff]
        %v5672 = vld [vmem:[%s5662 + $0x48] sm:$0xff]
        %v5673 = vld [vmem:[%s5662 + $0x50] sm:$0xff]
        %v5674 = vld [vmem:[%s5662 + $0x58] sm:$0xff]
        %v5675 = vld [vmem:[%s5662 + $0x60] sm:$0xff]
        %v5676 = vld [vmem:[%s5662 + $0x68] sm:$0xff]
        %v5677 = vld [vmem:[%s5662 + $0x70] sm:$0x11]
        %5678 = vrot.lane.b32.xlu0 %v5366, 80
        %v5679 = vpop.permute.xlu0 %5678
        %5680 = vrot.lane.b32.xlu0 %v5373, 80
        %v5681 = vpop.permute.xlu0 %5680
        %v5682 = vsel %vm4899, %v5679, %v5681
        %v5698 = vunpack.c.l.b16 %v5663
        %v5699 = vunpack.c.h.b16 %v5663
        %v5700 = vunpack.c.l.b16 %v5664
        %v5701 = vunpack.c.h.b16 %v5664
        %v5702 = vunpack.c.l.b16 %v5665
        %v5703 = vunpack.c.h.b16 %v5665
        %v5704 = vunpack.c.l.b16 %v5666
        %v5705 = vunpack.c.h.b16 %v5666
        %v5706 = vunpack.c.l.b16 %v5667
        %v5707 = vunpack.c.h.b16 %v5667
        %v5708 = vunpack.c.l.b16 %v5668
        %v5709 = vunpack.c.h.b16 %v5668
        %v5710 = vunpack.c.l.b16 %v5669
        %v5711 = vunpack.c.h.b16 %v5669
        %v5712 = vunpack.c.l.b16 %v5670
        %v5713 = vunpack.c.h.b16 %v5670
        %v5714 = vunpack.c.l.b16 %v5671
        %v5715 = vunpack.c.h.b16 %v5671
        %v5716 = vunpack.c.l.b16 %v5672
        %v5717 = vunpack.c.h.b16 %v5672
        %v5718 = vunpack.c.l.b16 %v5673
        %v5719 = vunpack.c.h.b16 %v5673
        %v5720 = vunpack.c.l.b16 %v5674
        %v5721 = vunpack.c.h.b16 %v5674
        %v5722 = vunpack.c.l.b16 %v5675
        %v5723 = vunpack.c.h.b16 %v5675
        %v5724 = vunpack.c.l.b16 %v5676
        %v5725 = vunpack.c.h.b16 %v5676
        %v5726 = vunpack.c.l.b16 %v5677
        %v5727 = vunpack.c.h.b16 %v5677
        %v5728 = vpack.c.b16 %v5700, %v5698
        %v5729 = vpack.c.b16 %v5701, %v5699
        %v5730 = vpack.c.b16 %v5704, %v5702
        %v5731 = vpack.c.b16 %v5705, %v5703
        %v5732 = vpack.c.b16 %v5708, %v5706
        %v5733 = vpack.c.b16 %v5709, %v5707
        %v5734 = vpack.c.b16 %v5712, %v5710
        %v5735 = vpack.c.b16 %v5713, %v5711
        %v5736 = vpack.c.b16 %v5716, %v5714
        %v5737 = vpack.c.b16 %v5717, %v5715
        %v5738 = vpack.c.b16 %v5720, %v5718
        %v5739 = vpack.c.b16 %v5721, %v5719
        %v5740 = vpack.c.b16 %v5724, %v5722
        %v5741 = vpack.c.b16 %v5725, %v5723
        %v5742 = vpack.c.b16 %v5726, %v5726
        %v5743 = vpack.c.b16 %v5727, %v5727
        %v5759 = vsel %vm4384, %v5682, 0
        %v5762 = vsel %vm4388, %v5742, 0
        %v5765 = vsel %vm4388, %v5743, 0
        %5767 = vmatprep.subr.bf16.mxu0 %v5729
        %5768 = vmatpush1.bf16.msra.mxu0 %v5728
        %5769 = vmatprep.subr.bf16.mxu0 %v5731
        %5770 = vmatpush1.bf16.msra.mxu0 %v5730
        %5771 = vmatprep.subr.bf16.mxu0 %v5733
        %5772 = vmatpush1.bf16.msra.mxu0 %v5732
        %5773 = vmatprep.subr.bf16.mxu0 %v5735
        %5774 = vmatpush1.bf16.msra.mxu0 %v5734
        %5775 = vmatprep.subr.bf16.mxu0 %v5737
        %5776 = vmatpush1.bf16.msra.mxu0 %v5736
        %5777 = vmatprep.subr.bf16.mxu0 %v5739
        %5778 = vmatpush1.bf16.msra.mxu0 %v5738
        %5779 = vmatprep.subr.bf16.mxu0 %v5741
        %5780 = vmatpush1.bf16.msra.mxu0 %v5740
        %5781 = vmatprep.subr.bf16.mxu0 %v5765
        %5782 = vmatpush1.bf16.msra.mxu0 %v5762
        %5783 = vmatprep.subr.bf16.mxu0 0
        %5784 = vmatpush1.bf16.msra.mxu0 0
        %5785 = vmatprep.subr.bf16.mxu0 0
        %5786 = vmatpush1.bf16.msra.mxu0 0
        %5787 = vmatprep.subr.bf16.mxu0 0
        %5788 = vmatpush1.bf16.msra.mxu0 0
        %5789 = vmatprep.subr.bf16.mxu0 0
        %5790 = vmatpush1.bf16.msra.mxu0 0
        %5791 = vmatprep.subr.bf16.mxu0 0
        %5792 = vmatpush1.bf16.msra.mxu0 0
        %5793 = vmatprep.subr.bf16.mxu0 0
        %5794 = vmatpush1.bf16.msra.mxu0 0
        %5795 = vmatprep.subr.bf16.mxu0 0
        %5796 = vmatpush1.bf16.msra.mxu0 0
        %5797 = vmatprep.subr.bf16.mxu0 0
        %5798 = vmatpush1.bf16.msra.mxu0 0
        %5799 = vmatprep.mubr.bf16.mxu0 0
        %5800 = vmatmul.mubr.bf16.gmra.mrb[0].mxu0 %v5759
        %v5801 = vpop.f32.mrb[0].mxu0
        %v5802 = vadd.f32 0.0, %v5801
        %v5803 = vpop.f32.mrb[0].mxu0
        %v5804 = vadd.f32 0.0, %v5803
        %v5805 = vpop.f32.mrb[0].mxu0
        %v5806 = vadd.f32 0.0, %v5805
        %v5807 = vpop.f32.mrb[0].mxu0
        %v5808 = vadd.f32 0.0, %v5807
        %5809 = vdwg.mxu0
        %v5810 = vadd.f32 %v5658, %v5802
        %v5811 = vadd.f32 %v5659, %v5804
        %v5812 = vadd.f32 %v5660, %v5806
        %v5813 = vadd.f32 %v5661, %v5808
        %v5814 = vld [vmem:[#allocation2] sm:$0xfc]
        %v5815 = vld [vmem:[#allocation2 + $0x10] sm:$0xf]
        %v5816 = vpack.c.bf16 %v5815, %v5814
        %s5817 = scalar_lea.vmem %s3, 1200
        %v5818 = vld [vmem:[%s5817] sm:$0xff]
        %v5819 = vld [vmem:[%s5817 + $0x8] sm:$0xff]
        %v5820 = vld [vmem:[%s5817 + $0x10] sm:$0xff]
        %v5821 = vld [vmem:[%s5817 + $0x18] sm:$0xff]
        %v5822 = vld [vmem:[%s5817 + $0x20] sm:$0xff]
        %v5823 = vld [vmem:[%s5817 + $0x28] sm:$0xff]
        %v5824 = vld [vmem:[%s5817 + $0x30] sm:$0xff]
        %v5825 = vld [vmem:[%s5817 + $0x38] sm:$0xff]
        %v5826 = vld [vmem:[%s5817 + $0x40] sm:$0xff]
        %v5827 = vld [vmem:[%s5817 + $0x48] sm:$0xff]
        %v5828 = vld [vmem:[%s5817 + $0x50] sm:$0xff]
        %v5829 = vld [vmem:[%s5817 + $0x58] sm:$0xff]
        %v5830 = vld [vmem:[%s5817 + $0x60] sm:$0xff]
        %v5831 = vld [vmem:[%s5817 + $0x68] sm:$0xff]
        %v5832 = vld [vmem:[%s5817 + $0x70] sm:$0x11]
        %v5834 = vrot.slane %v5816, 1
        %v5850 = vunpack.c.l.b16 %v5818
        %v5851 = vunpack.c.h.b16 %v5818
        %v5852 = vunpack.c.l.b16 %v5819
        %v5853 = vunpack.c.h.b16 %v5819
        %v5854 = vunpack.c.l.b16 %v5820
        %v5855 = vunpack.c.h.b16 %v5820
        %v5856 = vunpack.c.l.b16 %v5821
        %v5857 = vunpack.c.h.b16 %v5821
        %v5858 = vunpack.c.l.b16 %v5822
        %v5859 = vunpack.c.h.b16 %v5822
        %v5860 = vunpack.c.l.b16 %v5823
        %v5861 = vunpack.c.h.b16 %v5823
        %v5862 = vunpack.c.l.b16 %v5824
        %v5863 = vunpack.c.h.b16 %v5824
        %v5864 = vunpack.c.l.b16 %v5825
        %v5865 = vunpack.c.h.b16 %v5825
        %v5866 = vunpack.c.l.b16 %v5826
        %v5867 = vunpack.c.h.b16 %v5826
        %v5868 = vunpack.c.l.b16 %v5827
        %v5869 = vunpack.c.h.b16 %v5827
        %v5870 = vunpack.c.l.b16 %v5828
        %v5871 = vunpack.c.h.b16 %v5828
        %v5872 = vunpack.c.l.b16 %v5829
        %v5873 = vunpack.c.h.b16 %v5829
        %v5874 = vunpack.c.l.b16 %v5830
        %v5875 = vunpack.c.h.b16 %v5830
        %v5876 = vunpack.c.l.b16 %v5831
        %v5877 = vunpack.c.h.b16 %v5831
        %v5878 = vunpack.c.l.b16 %v5832
        %v5879 = vunpack.c.h.b16 %v5832
        %v5880 = vpack.c.b16 %v5852, %v5850
        %v5881 = vpack.c.b16 %v5853, %v5851
        %v5882 = vpack.c.b16 %v5856, %v5854
        %v5883 = vpack.c.b16 %v5857, %v5855
        %v5884 = vpack.c.b16 %v5860, %v5858
        %v5885 = vpack.c.b16 %v5861, %v5859
        %v5886 = vpack.c.b16 %v5864, %v5862
        %v5887 = vpack.c.b16 %v5865, %v5863
        %v5888 = vpack.c.b16 %v5868, %v5866
        %v5889 = vpack.c.b16 %v5869, %v5867
        %v5890 = vpack.c.b16 %v5872, %v5870
        %v5891 = vpack.c.b16 %v5873, %v5871
        %v5892 = vpack.c.b16 %v5876, %v5874
        %v5893 = vpack.c.b16 %v5877, %v5875
        %v5894 = vpack.c.b16 %v5878, %v5878
        %v5895 = vpack.c.b16 %v5879, %v5879
        %v5911 = vsel %vm4384, %v5834, 0
        %v5914 = vsel %vm4388, %v5894, 0
        %v5917 = vsel %vm4388, %v5895, 0
        %5919 = vmatprep.subr.bf16.mxu0 %v5881
        %5920 = vmatpush1.bf16.msra.mxu0 %v5880
        %5921 = vmatprep.subr.bf16.mxu0 %v5883
        %5922 = vmatpush1.bf16.msra.mxu0 %v5882
        %5923 = vmatprep.subr.bf16.mxu0 %v5885
        %5924 = vmatpush1.bf16.msra.mxu0 %v5884
        %5925 = vmatprep.subr.bf16.mxu0 %v5887
        %5926 = vmatpush1.bf16.msra.mxu0 %v5886
        %5927 = vmatprep.subr.bf16.mxu0 %v5889
        %5928 = vmatpush1.bf16.msra.mxu0 %v5888
        %5929 = vmatprep.subr.bf16.mxu0 %v5891
        %5930 = vmatpush1.bf16.msra.mxu0 %v5890
        %5931 = vmatprep.subr.bf16.mxu0 %v5893
        %5932 = vmatpush1.bf16.msra.mxu0 %v5892
        %5933 = vmatprep.subr.bf16.mxu0 %v5917
        %5934 = vmatpush1.bf16.msra.mxu0 %v5914
        %5935 = vmatprep.subr.bf16.mxu0 0
        %5936 = vmatpush1.bf16.msra.mxu0 0
        %5937 = vmatprep.subr.bf16.mxu0 0
        %5938 = vmatpush1.bf16.msra.mxu0 0
        %5939 = vmatprep.subr.bf16.mxu0 0
        %5940 = vmatpush1.bf16.msra.mxu0 0
        %5941 = vmatprep.subr.bf16.mxu0 0
        %5942 = vmatpush1.bf16.msra.mxu0 0
        %5943 = vmatprep.subr.bf16.mxu0 0
        %5944 = vmatpush1.bf16.msra.mxu0 0
        %5945 = vmatprep.subr.bf16.mxu0 0
        %5946 = vmatpush1.bf16.msra.mxu0 0
        %5947 = vmatprep.subr.bf16.mxu0 0
        %5948 = vmatpush1.bf16.msra.mxu0 0
        %5949 = vmatprep.subr.bf16.mxu0 0
        %5950 = vmatpush1.bf16.msra.mxu0 0
        %5951 = vmatprep.mubr.bf16.mxu0 0
        %5952 = vmatmul.mubr.bf16.gmra.mrb[0].mxu0 %v5911
        %v5953 = vpop.f32.mrb[0].mxu0
        %v5954 = vadd.f32 0.0, %v5953
        %v5955 = vpop.f32.mrb[0].mxu0
        %v5956 = vadd.f32 0.0, %v5955
        %v5957 = vpop.f32.mrb[0].mxu0
        %v5958 = vadd.f32 0.0, %v5957
        %v5959 = vpop.f32.mrb[0].mxu0
        %v5960 = vadd.f32 0.0, %v5959
        %5961 = vdwg.mxu0
        %v5962 = vadd.f32 %v5810, %v5954
        %v5963 = vadd.f32 %v5811, %v5956
        %v5964 = vadd.f32 %v5812, %v5958
        %v5965 = vadd.f32 %v5813, %v5960
        %s5966 = scalar_lea.vmem %s3, 1320
        %v5967 = vld [vmem:[%s5966] sm:$0xff]
        %v5968 = vld [vmem:[%s5966 + $0x8] sm:$0xff]
        %v5969 = vld [vmem:[%s5966 + $0x10] sm:$0xff]
        %v5970 = vld [vmem:[%s5966 + $0x18] sm:$0xff]
        %v5971 = vld [vmem:[%s5966 + $0x20] sm:$0xff]
        %v5972 = vld [vmem:[%s5966 + $0x28] sm:$0xff]
        %v5973 = vld [vmem:[%s5966 + $0x30] sm:$0xff]
        %v5974 = vld [vmem:[%s5966 + $0x38] sm:$0xff]
        %v5975 = vld [vmem:[%s5966 + $0x40] sm:$0xff]
        %v5976 = vld [vmem:[%s5966 + $0x48] sm:$0xff]
        %v5977 = vld [vmem:[%s5966 + $0x50] sm:$0xff]
        %v5978 = vld [vmem:[%s5966 + $0x58] sm:$0xff]
        %v5979 = vld [vmem:[%s5966 + $0x60] sm:$0xff]
        %v5980 = vld [vmem:[%s5966 + $0x68] sm:$0xff]
        %v5981 = vld [vmem:[%s5966 + $0x70] sm:$0x11]
        %5982 = vrot.lane.b32.xlu0 %v5834, 116
        %v5983 = vpop.permute.xlu0 %5982
        %v5999 = vunpack.c.l.b16 %v5967
        %v6000 = vunpack.c.h.b16 %v5967
        %v6001 = vunpack.c.l.b16 %v5968
        %v6002 = vunpack.c.h.b16 %v5968
        %v6003 = vunpack.c.l.b16 %v5969
        %v6004 = vunpack.c.h.b16 %v5969
        %v6005 = vunpack.c.l.b16 %v5970
        %v6006 = vunpack.c.h.b16 %v5970
        %v6007 = vunpack.c.l.b16 %v5971
        %v6008 = vunpack.c.h.b16 %v5971
        %v6009 = vunpack.c.l.b16 %v5972
        %v6010 = vunpack.c.h.b16 %v5972
        %v6011 = vunpack.c.l.b16 %v5973
        %v6012 = vunpack.c.h.b16 %v5973
        %v6013 = vunpack.c.l.b16 %v5974
        %v6014 = vunpack.c.h.b16 %v5974
        %v6015 = vunpack.c.l.b16 %v5975
        %v6016 = vunpack.c.h.b16 %v5975
        %v6017 = vunpack.c.l.b16 %v5976
        %v6018 = vunpack.c.h.b16 %v5976
        %v6019 = vunpack.c.l.b16 %v5977
        %v6020 = vunpack.c.h.b16 %v5977
        %v6021 = vunpack.c.l.b16 %v5978
        %v6022 = vunpack.c.h.b16 %v5978
        %v6023 = vunpack.c.l.b16 %v5979
        %v6024 = vunpack.c.h.b16 %v5979
        %v6025 = vunpack.c.l.b16 %v5980
        %v6026 = vunpack.c.h.b16 %v5980
        %v6027 = vunpack.c.l.b16 %v5981
        %v6028 = vunpack.c.h.b16 %v5981
        %v6029 = vpack.c.b16 %v6001, %v5999
        %v6030 = vpack.c.b16 %v6002, %v6000
        %v6031 = vpack.c.b16 %v6005, %v6003
        %v6032 = vpack.c.b16 %v6006, %v6004
        %v6033 = vpack.c.b16 %v6009, %v6007
        %v6034 = vpack.c.b16 %v6010, %v6008
        %v6035 = vpack.c.b16 %v6013, %v6011
        %v6036 = vpack.c.b16 %v6014, %v6012
        %v6037 = vpack.c.b16 %v6017, %v6015
        %v6038 = vpack.c.b16 %v6018, %v6016
        %v6039 = vpack.c.b16 %v6021, %v6019
        %v6040 = vpack.c.b16 %v6022, %v6020
        %v6041 = vpack.c.b16 %v6025, %v6023
        %v6042 = vpack.c.b16 %v6026, %v6024
        %v6043 = vpack.c.b16 %v6027, %v6027
        %v6044 = vpack.c.b16 %v6028, %v6028
        %v6060 = vsel %vm4384, %v5983, 0
        %v6063 = vsel %vm4388, %v6043, 0
        %v6066 = vsel %vm4388, %v6044, 0
        %6068 = vmatprep.subr.bf16.mxu0 %v6030
        %6069 = vmatpush1.bf16.msra.mxu0 %v6029
        %6070 = vmatprep.subr.bf16.mxu0 %v6032
        %6071 = vmatpush1.bf16.msra.mxu0 %v6031
        %6072 = vmatprep.subr.bf16.mxu0 %v6034
        %6073 = vmatpush1.bf16.msra.mxu0 %v6033
        %6074 = vmatprep.subr.bf16.mxu0 %v6036
        %6075 = vmatpush1.bf16.msra.mxu0 %v6035
        %6076 = vmatprep.subr.bf16.mxu0 %v6038
        %6077 = vmatpush1.bf16.msra.mxu0 %v6037
        %6078 = vmatprep.subr.bf16.mxu0 %v6040
        %6079 = vmatpush1.bf16.msra.mxu0 %v6039
        %6080 = vmatprep.subr.bf16.mxu0 %v6042
        %6081 = vmatpush1.bf16.msra.mxu0 %v6041
        %6082 = vmatprep.subr.bf16.mxu0 %v6066
        %6083 = vmatpush1.bf16.msra.mxu0 %v6063
        %6084 = vmatprep.subr.bf16.mxu0 0
        %6085 = vmatpush1.bf16.msra.mxu0 0
        %6086 = vmatprep.subr.bf16.mxu0 0
        %6087 = vmatpush1.bf16.msra.mxu0 0
        %6088 = vmatprep.subr.bf16.mxu0 0
        %6089 = vmatpush1.bf16.msra.mxu0 0
        %6090 = vmatprep.subr.bf16.mxu0 0
        %6091 = vmatpush1.bf16.msra.mxu0 0
        %6092 = vmatprep.subr.bf16.mxu0 0
        %6093 = vmatpush1.bf16.msra.mxu0 0
        %6094 = vmatprep.subr.bf16.mxu0 0
        %6095 = vmatpush1.bf16.msra.mxu0 0
        %6096 = vmatprep.subr.bf16.mxu0 0
        %6097 = vmatpush1.bf16.msra.mxu0 0
        %6098 = vmatprep.subr.bf16.mxu0 0
        %6099 = vmatpush1.bf16.msra.mxu0 0
        %6100 = vmatprep.mubr.bf16.mxu0 0
        %6101 = vmatmul.mubr.bf16.gmra.mrb[0].mxu0 %v6060
        %v6102 = vpop.f32.mrb[0].mxu0
        %v6103 = vadd.f32 0.0, %v6102
        %v6104 = vpop.f32.mrb[0].mxu0
        %v6105 = vadd.f32 0.0, %v6104
        %v6106 = vpop.f32.mrb[0].mxu0
        %v6107 = vadd.f32 0.0, %v6106
        %v6108 = vpop.f32.mrb[0].mxu0
        %v6109 = vadd.f32 0.0, %v6108
        %6110 = vdwg.mxu0
        %v6111 = vadd.f32 %v5962, %v6103
        %v6112 = vadd.f32 %v5963, %v6105
        %v6113 = vadd.f32 %v5964, %v6107
        %v6114 = vadd.f32 %v5965, %v6109
        %v6115 = vld [vmem:[#allocation2] sm:$0xfc]
        %v6116 = vld [vmem:[#allocation2 + $0x8] sm:$0xfc]
        %v6117 = vld [vmem:[#allocation2 + $0x10] sm:$0xf]
        %v6118 = vld [vmem:[#allocation2 + $0x18] sm:$0xf]
        %v6119 = vpack.c.bf16 %v6117, %v6115
        %v6120 = vpack.c.bf16 %v6118, %v6116
        %s6121 = scalar_lea.vmem %s3, 1440
        %v6122 = vld [vmem:[%s6121] sm:$0xff]
        %v6123 = vld [vmem:[%s6121 + $0x8] sm:$0xff]
        %v6124 = vld [vmem:[%s6121 + $0x10] sm:$0xff]
        %v6125 = vld [vmem:[%s6121 + $0x18] sm:$0xff]
        %v6126 = vld [vmem:[%s6121 + $0x20] sm:$0xff]
        %v6127 = vld [vmem:[%s6121 + $0x28] sm:$0xff]
        %v6128 = vld [vmem:[%s6121 + $0x30] sm:$0xff]
        %v6129 = vld [vmem:[%s6121 + $0x38] sm:$0xff]
        %v6130 = vld [vmem:[%s6121 + $0x40] sm:$0xff]
        %v6131 = vld [vmem:[%s6121 + $0x48] sm:$0xff]
        %v6132 = vld [vmem:[%s6121 + $0x50] sm:$0xff]
        %v6133 = vld [vmem:[%s6121 + $0x58] sm:$0xff]
        %v6134 = vld [vmem:[%s6121 + $0x60] sm:$0xff]
        %v6135 = vld [vmem:[%s6121 + $0x68] sm:$0xff]
        %v6136 = vld [vmem:[%s6121 + $0x70] sm:$0x11]
        %v6139 = vrot.slane %v6119, 1
        %v6140 = vrot.slane %v6120, 1
        %6141 = vrot.lane.b32.xlu0 %v6139, 104
        %v6142 = vpop.permute.xlu0 %6141
        %6143 = vrot.lane.b32.xlu0 %v6140, 104
        %v6144 = vpop.permute.xlu0 %6143
        %v6145 = vsel %vm4593, %v6142, %v6144
        %v6161 = vunpack.c.l.b16 %v6122
        %v6162 = vunpack.c.h.b16 %v6122
        %v6163 = vunpack.c.l.b16 %v6123
        %v6164 = vunpack.c.h.b16 %v6123
        %v6165 = vunpack.c.l.b16 %v6124
        %v6166 = vunpack.c.h.b16 %v6124
        %v6167 = vunpack.c.l.b16 %v6125
        %v6168 = vunpack.c.h.b16 %v6125
        %v6169 = vunpack.c.l.b16 %v6126
        %v6170 = vunpack.c.h.b16 %v6126
        %v6171 = vunpack.c.l.b16 %v6127
        %v6172 = vunpack.c.h.b16 %v6127
        %v6173 = vunpack.c.l.b16 %v6128
        %v6174 = vunpack.c.h.b16 %v6128
        %v6175 = vunpack.c.l.b16 %v6129
        %v6176 = vunpack.c.h.b16 %v6129
        %v6177 = vunpack.c.l.b16 %v6130
        %v6178 = vunpack.c.h.b16 %v6130
        %v6179 = vunpack.c.l.b16 %v6131
        %v6180 = vunpack.c.h.b16 %v6131
        %v6181 = vunpack.c.l.b16 %v6132
        %v6182 = vunpack.c.h.b16 %v6132
        %v6183 = vunpack.c.l.b16 %v6133
        %v6184 = vunpack.c.h.b16 %v6133
        %v6185 = vunpack.c.l.b16 %v6134
        %v6186 = vunpack.c.h.b16 %v6134
        %v6187 = vunpack.c.l.b16 %v6135
        %v6188 = vunpack.c.h.b16 %v6135
        %v6189 = vunpack.c.l.b16 %v6136
        %v6190 = vunpack.c.h.b16 %v6136
        %v6191 = vpack.c.b16 %v6163, %v6161
        %v6192 = vpack.c.b16 %v6164, %v6162
        %v6193 = vpack.c.b16 %v6167, %v6165
        %v6194 = vpack.c.b16 %v6168, %v6166
        %v6195 = vpack.c.b16 %v6171, %v6169
        %v6196 = vpack.c.b16 %v6172, %v6170
        %v6197 = vpack.c.b16 %v6175, %v6173
        %v6198 = vpack.c.b16 %v6176, %v6174
        %v6199 = vpack.c.b16 %v6179, %v6177
        %v6200 = vpack.c.b16 %v6180, %v6178
        %v6201 = vpack.c.b16 %v6183, %v6181
        %v6202 = vpack.c.b16 %v6184, %v6182
        %v6203 = vpack.c.b16 %v6187, %v6185
        %v6204 = vpack.c.b16 %v6188, %v6186
        %v6205 = vpack.c.b16 %v6189, %v6189
        %v6206 = vpack.c.b16 %v6190, %v6190
        %v6222 = vsel %vm4384, %v6145, 0
        %v6225 = vsel %vm4388, %v6205, 0
        %v6228 = vsel %vm4388, %v6206, 0
        %6230 = vmatprep.subr.bf16.mxu0 %v6192
        %6231 = vmatpush1.bf16.msra.mxu0 %v6191
        %6232 = vmatprep.subr.bf16.mxu0 %v6194
        %6233 = vmatpush1.bf16.msra.mxu0 %v6193
        %6234 = vmatprep.subr.bf16.mxu0 %v6196
        %6235 = vmatpush1.bf16.msra.mxu0 %v6195
        %6236 = vmatprep.subr.bf16.mxu0 %v6198
        %6237 = vmatpush1.bf16.msra.mxu0 %v6197
        %6238 = vmatprep.subr.bf16.mxu0 %v6200
        %6239 = vmatpush1.bf16.msra.mxu0 %v6199
        %6240 = vmatprep.subr.bf16.mxu0 %v6202
        %6241 = vmatpush1.bf16.msra.mxu0 %v6201
        %6242 = vmatprep.subr.bf16.mxu0 %v6204
        %6243 = vmatpush1.bf16.msra.mxu0 %v6203
        %6244 = vmatprep.subr.bf16.mxu0 %v6228
        %6245 = vmatpush1.bf16.msra.mxu0 %v6225
        %6246 = vmatprep.subr.bf16.mxu0 0
        %6247 = vmatpush1.bf16.msra.mxu0 0
        %6248 = vmatprep.subr.bf16.mxu0 0
        %6249 = vmatpush1.bf16.msra.mxu0 0
        %6250 = vmatprep.subr.bf16.mxu0 0
        %6251 = vmatpush1.bf16.msra.mxu0 0
        %6252 = vmatprep.subr.bf16.mxu0 0
        %6253 = vmatpush1.bf16.msra.mxu0 0
        %6254 = vmatprep.subr.bf16.mxu0 0
        %6255 = vmatpush1.bf16.msra.mxu0 0
        %6256 = vmatprep.subr.bf16.mxu0 0
        %6257 = vmatpush1.bf16.msra.mxu0 0
        %6258 = vmatprep.subr.bf16.mxu0 0
        %6259 = vmatpush1.bf16.msra.mxu0 0
        %6260 = vmatprep.subr.bf16.mxu0 0
        %6261 = vmatpush1.bf16.msra.mxu0 0
        %6262 = vmatprep.mubr.bf16.mxu0 0
        %6263 = vmatmul.mubr.bf16.gmra.mrb[0].mxu0 %v6222
        %v6264 = vpop.f32.mrb[0].mxu0
        %v6265 = vadd.f32 0.0, %v6264
        %v6266 = vpop.f32.mrb[0].mxu0
        %v6267 = vadd.f32 0.0, %v6266
        %v6268 = vpop.f32.mrb[0].mxu0
        %v6269 = vadd.f32 0.0, %v6268
        %v6270 = vpop.f32.mrb[0].mxu0
        %v6271 = vadd.f32 0.0, %v6270
        %6272 = vdwg.mxu0
        %v6273 = vadd.f32 %v6111, %v6265
        %v6274 = vadd.f32 %v6112, %v6267
        %v6275 = vadd.f32 %v6113, %v6269
        %v6276 = vadd.f32 %v6114, %v6271
        %s6277 = scalar_lea.vmem %s3, 1560
        %v6278 = vld [vmem:[%s6277] sm:$0xff]
        %v6279 = vld [vmem:[%s6277 + $0x8] sm:$0xff]
        %v6280 = vld [vmem:[%s6277 + $0x10] sm:$0xff]
        %v6281 = vld [vmem:[%s6277 + $0x18] sm:$0xff]
        %v6282 = vld [vmem:[%s6277 + $0x20] sm:$0xff]
        %v6283 = vld [vmem:[%s6277 + $0x28] sm:$0xff]
        %v6284 = vld [vmem:[%s6277 + $0x30] sm:$0xff]
        %v6285 = vld [vmem:[%s6277 + $0x38] sm:$0xff]
        %v6286 = vld [vmem:[%s6277 + $0x40] sm:$0xff]
        %v6287 = vld [vmem:[%s6277 + $0x48] sm:$0xff]
        %v6288 = vld [vmem:[%s6277 + $0x50] sm:$0xff]
        %v6289 = vld [vmem:[%s6277 + $0x58] sm:$0xff]
        %v6290 = vld [vmem:[%s6277 + $0x60] sm:$0xff]
        %v6291 = vld [vmem:[%s6277 + $0x68] sm:$0xff]
        %v6292 = vld [vmem:[%s6277 + $0x70] sm:$0x11]
        %6293 = vrot.lane.b32.xlu0 %v6139, 92
        %v6294 = vpop.permute.xlu0 %6293
        %6295 = vrot.lane.b32.xlu0 %v6140, 92
        %v6296 = vpop.permute.xlu0 %6295
        %v6297 = vsel %vm4746, %v6294, %v6296
        %v6313 = vunpack.c.l.b16 %v6278
        %v6314 = vunpack.c.h.b16 %v6278
        %v6315 = vunpack.c.l.b16 %v6279
        %v6316 = vunpack.c.h.b16 %v6279
        %v6317 = vunpack.c.l.b16 %v6280
        %v6318 = vunpack.c.h.b16 %v6280
        %v6319 = vunpack.c.l.b16 %v6281
        %v6320 = vunpack.c.h.b16 %v6281
        %v6321 = vunpack.c.l.b16 %v6282
        %v6322 = vunpack.c.h.b16 %v6282
        %v6323 = vunpack.c.l.b16 %v6283
        %v6324 = vunpack.c.h.b16 %v6283
        %v6325 = vunpack.c.l.b16 %v6284
        %v6326 = vunpack.c.h.b16 %v6284
        %v6327 = vunpack.c.l.b16 %v6285
        %v6328 = vunpack.c.h.b16 %v6285
        %v6329 = vunpack.c.l.b16 %v6286
        %v6330 = vunpack.c.h.b16 %v6286
        %v6331 = vunpack.c.l.b16 %v6287
        %v6332 = vunpack.c.h.b16 %v6287
        %v6333 = vunpack.c.l.b16 %v6288
        %v6334 = vunpack.c.h.b16 %v6288
        %v6335 = vunpack.c.l.b16 %v6289
        %v6336 = vunpack.c.h.b16 %v6289
        %v6337 = vunpack.c.l.b16 %v6290
        %v6338 = vunpack.c.h.b16 %v6290
        %v6339 = vunpack.c.l.b16 %v6291
        %v6340 = vunpack.c.h.b16 %v6291
        %v6341 = vunpack.c.l.b16 %v6292
        %v6342 = vunpack.c.h.b16 %v6292
        %v6343 = vpack.c.b16 %v6315, %v6313
        %v6344 = vpack.c.b16 %v6316, %v6314
        %v6345 = vpack.c.b16 %v6319, %v6317
        %v6346 = vpack.c.b16 %v6320, %v6318
        %v6347 = vpack.c.b16 %v6323, %v6321
        %v6348 = vpack.c.b16 %v6324, %v6322
        %v6349 = vpack.c.b16 %v6327, %v6325
        %v6350 = vpack.c.b16 %v6328, %v6326
        %v6351 = vpack.c.b16 %v6331, %v6329
        %v6352 = vpack.c.b16 %v6332, %v6330
        %v6353 = vpack.c.b16 %v6335, %v6333
        %v6354 = vpack.c.b16 %v6336, %v6334
        %v6355 = vpack.c.b16 %v6339, %v6337
        %v6356 = vpack.c.b16 %v6340, %v6338
        %v6357 = vpack.c.b16 %v6341, %v6341
        %v6358 = vpack.c.b16 %v6342, %v6342
        %v6374 = vsel %vm4384, %v6297, 0
        %v6377 = vsel %vm4388, %v6357, 0
        %v6380 = vsel %vm4388, %v6358, 0
        %6382 = vmatprep.subr.bf16.mxu0 %v6344
        %6383 = vmatpush1.bf16.msra.mxu0 %v6343
        %6384 = vmatprep.subr.bf16.mxu0 %v6346
        %6385 = vmatpush1.bf16.msra.mxu0 %v6345
        %6386 = vmatprep.subr.bf16.mxu0 %v6348
        %6387 = vmatpush1.bf16.msra.mxu0 %v6347
        %6388 = vmatprep.subr.bf16.mxu0 %v6350
        %6389 = vmatpush1.bf16.msra.mxu0 %v6349
        %6390 = vmatprep.subr.bf16.mxu0 %v6352
        %6391 = vmatpush1.bf16.msra.mxu0 %v6351
        %6392 = vmatprep.subr.bf16.mxu0 %v6354
        %6393 = vmatpush1.bf16.msra.mxu0 %v6353
        %6394 = vmatprep.subr.bf16.mxu0 %v6356
        %6395 = vmatpush1.bf16.msra.mxu0 %v6355
        %6396 = vmatprep.subr.bf16.mxu0 %v6380
        %6397 = vmatpush1.bf16.msra.mxu0 %v6377
        %6398 = vmatprep.subr.bf16.mxu0 0
        %6399 = vmatpush1.bf16.msra.mxu0 0
        %6400 = vmatprep.subr.bf16.mxu0 0
        %6401 = vmatpush1.bf16.msra.mxu0 0
        %6402 = vmatprep.subr.bf16.mxu0 0
        %6403 = vmatpush1.bf16.msra.mxu0 0
        %6404 = vmatprep.subr.bf16.mxu0 0
        %6405 = vmatpush1.bf16.msra.mxu0 0
        %6406 = vmatprep.subr.bf16.mxu0 0
        %6407 = vmatpush1.bf16.msra.mxu0 0
        %6408 = vmatprep.subr.bf16.mxu0 0
        %6409 = vmatpush1.bf16.msra.mxu0 0
        %6410 = vmatprep.subr.bf16.mxu0 0
        %6411 = vmatpush1.bf16.msra.mxu0 0
        %6412 = vmatprep.subr.bf16.mxu0 0
        %6413 = vmatpush1.bf16.msra.mxu0 0
        %6414 = vmatprep.mubr.bf16.mxu0 0
        %6415 = vmatmul.mubr.bf16.gmra.mrb[0].mxu0 %v6374
        %v6416 = vpop.f32.mrb[0].mxu0
        %v6417 = vadd.f32 0.0, %v6416
        %v6418 = vpop.f32.mrb[0].mxu0
        %v6419 = vadd.f32 0.0, %v6418
        %v6420 = vpop.f32.mrb[0].mxu0
        %v6421 = vadd.f32 0.0, %v6420
        %v6422 = vpop.f32.mrb[0].mxu0
        %v6423 = vadd.f32 0.0, %v6422
        %6424 = vdwg.mxu0
        %v6425 = vadd.f32 %v6273, %v6417
        %v6426 = vadd.f32 %v6274, %v6419
        %v6427 = vadd.f32 %v6275, %v6421
        %v6428 = vadd.f32 %v6276, %v6423
        %s6429 = scalar_lea.vmem %s3, 1680
        %v6430 = vld [vmem:[%s6429] sm:$0xff]
        %v6431 = vld [vmem:[%s6429 + $0x8] sm:$0xff]
        %v6432 = vld [vmem:[%s6429 + $0x10] sm:$0xff]
        %v6433 = vld [vmem:[%s6429 + $0x18] sm:$0xff]
        %v6434 = vld [vmem:[%s6429 + $0x20] sm:$0xff]
        %v6435 = vld [vmem:[%s6429 + $0x28] sm:$0xff]
        %v6436 = vld [vmem:[%s6429 + $0x30] sm:$0xff]
        %v6437 = vld [vmem:[%s6429 + $0x38] sm:$0xff]
        %v6438 = vld [vmem:[%s6429 + $0x40] sm:$0xff]
        %v6439 = vld [vmem:[%s6429 + $0x48] sm:$0xff]
        %v6440 = vld [vmem:[%s6429 + $0x50] sm:$0xff]
        %v6441 = vld [vmem:[%s6429 + $0x58] sm:$0xff]
        %v6442 = vld [vmem:[%s6429 + $0x60] sm:$0xff]
        %v6443 = vld [vmem:[%s6429 + $0x68] sm:$0xff]
        %v6444 = vld [vmem:[%s6429 + $0x70] sm:$0x11]
        %6445 = vrot.lane.b32.xlu0 %v6139, 80
        %v6446 = vpop.permute.xlu0 %6445
        %6447 = vrot.lane.b32.xlu0 %v6140, 80
        %v6448 = vpop.permute.xlu0 %6447
        %v6449 = vsel %vm4899, %v6446, %v6448
        %v6465 = vunpack.c.l.b16 %v6430
        %v6466 = vunpack.c.h.b16 %v6430
        %v6467 = vunpack.c.l.b16 %v6431
        %v6468 = vunpack.c.h.b16 %v6431
        %v6469 = vunpack.c.l.b16 %v6432
        %v6470 = vunpack.c.h.b16 %v6432
        %v6471 = vunpack.c.l.b16 %v6433
        %v6472 = vunpack.c.h.b16 %v6433
        %v6473 = vunpack.c.l.b16 %v6434
        %v6474 = vunpack.c.h.b16 %v6434
        %v6475 = vunpack.c.l.b16 %v6435
        %v6476 = vunpack.c.h.b16 %v6435
        %v6477 = vunpack.c.l.b16 %v6436
        %v6478 = vunpack.c.h.b16 %v6436
        %v6479 = vunpack.c.l.b16 %v6437
        %v6480 = vunpack.c.h.b16 %v6437
        %v6481 = vunpack.c.l.b16 %v6438
        %v6482 = vunpack.c.h.b16 %v6438
        %v6483 = vunpack.c.l.b16 %v6439
        %v6484 = vunpack.c.h.b16 %v6439
        %v6485 = vunpack.c.l.b16 %v6440
        %v6486 = vunpack.c.h.b16 %v6440
        %v6487 = vunpack.c.l.b16 %v6441
        %v6488 = vunpack.c.h.b16 %v6441
        %v6489 = vunpack.c.l.b16 %v6442
        %v6490 = vunpack.c.h.b16 %v6442
        %v6491 = vunpack.c.l.b16 %v6443
        %v6492 = vunpack.c.h.b16 %v6443
        %v6493 = vunpack.c.l.b16 %v6444
        %v6494 = vunpack.c.h.b16 %v6444
        %v6495 = vpack.c.b16 %v6467, %v6465
        %v6496 = vpack.c.b16 %v6468, %v6466
        %v6497 = vpack.c.b16 %v6471, %v6469
        %v6498 = vpack.c.b16 %v6472, %v6470
        %v6499 = vpack.c.b16 %v6475, %v6473
        %v6500 = vpack.c.b16 %v6476, %v6474
        %v6501 = vpack.c.b16 %v6479, %v6477
        %v6502 = vpack.c.b16 %v6480, %v6478
        %v6503 = vpack.c.b16 %v6483, %v6481
        %v6504 = vpack.c.b16 %v6484, %v6482
        %v6505 = vpack.c.b16 %v6487, %v6485
        %v6506 = vpack.c.b16 %v6488, %v6486
        %v6507 = vpack.c.b16 %v6491, %v6489
        %v6508 = vpack.c.b16 %v6492, %v6490
        %v6509 = vpack.c.b16 %v6493, %v6493
        %v6510 = vpack.c.b16 %v6494, %v6494
        %v6526 = vsel %vm4384, %v6449, 0
        %v6529 = vsel %vm4388, %v6509, 0
        %v6532 = vsel %vm4388, %v6510, 0
        %6534 = vmatprep.subr.bf16.mxu0 %v6496
        %6535 = vmatpush1.bf16.msra.mxu0 %v6495
        %6536 = vmatprep.subr.bf16.mxu0 %v6498
        %6537 = vmatpush1.bf16.msra.mxu0 %v6497
        %6538 = vmatprep.subr.bf16.mxu0 %v6500
        %6539 = vmatpush1.bf16.msra.mxu0 %v6499
        %6540 = vmatprep.subr.bf16.mxu0 %v6502
        %6541 = vmatpush1.bf16.msra.mxu0 %v6501
        %6542 = vmatprep.subr.bf16.mxu0 %v6504
        %6543 = vmatpush1.bf16.msra.mxu0 %v6503
        %6544 = vmatprep.subr.bf16.mxu0 %v6506
        %6545 = vmatpush1.bf16.msra.mxu0 %v6505
        %6546 = vmatprep.subr.bf16.mxu0 %v6508
        %6547 = vmatpush1.bf16.msra.mxu0 %v6507
        %6548 = vmatprep.subr.bf16.mxu0 %v6532
        %6549 = vmatpush1.bf16.msra.mxu0 %v6529
        %6550 = vmatprep.subr.bf16.mxu0 0
        %6551 = vmatpush1.bf16.msra.mxu0 0
        %6552 = vmatprep.subr.bf16.mxu0 0
        %6553 = vmatpush1.bf16.msra.mxu0 0
        %6554 = vmatprep.subr.bf16.mxu0 0
        %6555 = vmatpush1.bf16.msra.mxu0 0
        %6556 = vmatprep.subr.bf16.mxu0 0
        %6557 = vmatpush1.bf16.msra.mxu0 0
        %6558 = vmatprep.subr.bf16.mxu0 0
        %6559 = vmatpush1.bf16.msra.mxu0 0
        %6560 = vmatprep.subr.bf16.mxu0 0
        %6561 = vmatpush1.bf16.msra.mxu0 0
        %6562 = vmatprep.subr.bf16.mxu0 0
        %6563 = vmatpush1.bf16.msra.mxu0 0
        %6564 = vmatprep.subr.bf16.mxu0 0
        %6565 = vmatpush1.bf16.msra.mxu0 0
        %6566 = vmatprep.mubr.bf16.mxu0 0
        %6567 = vmatmul.mubr.bf16.gmra.mrb[0].mxu0 %v6526
        %v6568 = vpop.f32.mrb[0].mxu0
        %v6569 = vadd.f32 0.0, %v6568
        %v6570 = vpop.f32.mrb[0].mxu0
        %v6571 = vadd.f32 0.0, %v6570
        %v6572 = vpop.f32.mrb[0].mxu0
        %v6573 = vadd.f32 0.0, %v6572
        %v6574 = vpop.f32.mrb[0].mxu0
        %v6575 = vadd.f32 0.0, %v6574
        %6576 = vdwg.mxu0
        %v6577 = vadd.f32 %v6425, %v6569
        %v6578 = vadd.f32 %v6426, %v6571
        %v6579 = vadd.f32 %v6427, %v6573
        %v6580 = vadd.f32 %v6428, %v6575
        %v6581 = vld [vmem:[#allocation2] sm:$0xf8]
        %v6582 = vld [vmem:[#allocation2 + $0x10] sm:$0x1f]
        %v6583 = vpack.c.bf16 %v6582, %v6581
        %s6584 = scalar_lea.vmem %s3, 1800
        %v6585 = vld [vmem:[%s6584] sm:$0xff]
        %v6586 = vld [vmem:[%s6584 + $0x8] sm:$0xff]
        %v6587 = vld [vmem:[%s6584 + $0x10] sm:$0xff]
        %v6588 = vld [vmem:[%s6584 + $0x18] sm:$0xff]
        %v6589 = vld [vmem:[%s6584 + $0x20] sm:$0xff]
        %v6590 = vld [vmem:[%s6584 + $0x28] sm:$0xff]
        %v6591 = vld [vmem:[%s6584 + $0x30] sm:$0xff]
        %v6592 = vld [vmem:[%s6584 + $0x38] sm:$0xff]
        %v6593 = vld [vmem:[%s6584 + $0x40] sm:$0xff]
        %v6594 = vld [vmem:[%s6584 + $0x48] sm:$0xff]
        %v6595 = vld [vmem:[%s6584 + $0x50] sm:$0xff]
        %v6596 = vld [vmem:[%s6584 + $0x58] sm:$0xff]
        %v6597 = vld [vmem:[%s6584 + $0x60] sm:$0xff]
        %v6598 = vld [vmem:[%s6584 + $0x68] sm:$0xff]
        %v6599 = vld [vmem:[%s6584 + $0x70] sm:$0x11]
        %v6601 = vshrl.u32 %v6583, 16
        %v6603 = vrot.slane %v6601, 1
        %v6604 = vshll.u32 %v6583, 16
        %v6606 = vrot.slane %v6604, 2
        %v6607 = vor.u32 %v6603, %v6606
        %v6623 = vunpack.c.l.b16 %v6585
        %v6624 = vunpack.c.h.b16 %v6585
        %v6625 = vunpack.c.l.b16 %v6586
        %v6626 = vunpack.c.h.b16 %v6586
        %v6627 = vunpack.c.l.b16 %v6587
        %v6628 = vunpack.c.h.b16 %v6587
        %v6629 = vunpack.c.l.b16 %v6588
        %v6630 = vunpack.c.h.b16 %v6588
        %v6631 = vunpack.c.l.b16 %v6589
        %v6632 = vunpack.c.h.b16 %v6589
        %v6633 = vunpack.c.l.b16 %v6590
        %v6634 = vunpack.c.h.b16 %v6590
        %v6635 = vunpack.c.l.b16 %v6591
        %v6636 = vunpack.c.h.b16 %v6591
        %v6637 = vunpack.c.l.b16 %v6592
        %v6638 = vunpack.c.h.b16 %v6592
        %v6639 = vunpack.c.l.b16 %v6593
        %v6640 = vunpack.c.h.b16 %v6593
        %v6641 = vunpack.c.l.b16 %v6594
        %v6642 = vunpack.c.h.b16 %v6594
        %v6643 = vunpack.c.l.b16 %v6595
        %v6644 = vunpack.c.h.b16 %v6595
        %v6645 = vunpack.c.l.b16 %v6596
        %v6646 = vunpack.c.h.b16 %v6596
        %v6647 = vunpack.c.l.b16 %v6597
        %v6648 = vunpack.c.h.b16 %v6597
        %v6649 = vunpack.c.l.b16 %v6598
        %v6650 = vunpack.c.h.b16 %v6598
        %v6651 = vunpack.c.l.b16 %v6599
        %v6652 = vunpack.c.h.b16 %v6599
        %v6653 = vpack.c.b16 %v6625, %v6623
        %v6654 = vpack.c.b16 %v6626, %v6624
        %v6655 = vpack.c.b16 %v6629, %v6627
        %v6656 = vpack.c.b16 %v6630, %v6628
        %v6657 = vpack.c.b16 %v6633, %v6631
        %v6658 = vpack.c.b16 %v6634, %v6632
        %v6659 = vpack.c.b16 %v6637, %v6635
        %v6660 = vpack.c.b16 %v6638, %v6636
        %v6661 = vpack.c.b16 %v6641, %v6639
        %v6662 = vpack.c.b16 %v6642, %v6640
        %v6663 = vpack.c.b16 %v6645, %v6643
        %v6664 = vpack.c.b16 %v6646, %v6644
        %v6665 = vpack.c.b16 %v6649, %v6647
        %v6666 = vpack.c.b16 %v6650, %v6648
        %v6667 = vpack.c.b16 %v6651, %v6651
        %v6668 = vpack.c.b16 %v6652, %v6652
        %v6684 = vsel %vm4384, %v6607, 0
        %v6687 = vsel %vm4388, %v6667, 0
        %v6690 = vsel %vm4388, %v6668, 0
        %6692 = vmatprep.subr.bf16.mxu0 %v6654
        %6693 = vmatpush1.bf16.msra.mxu0 %v6653
        %6694 = vmatprep.subr.bf16.mxu0 %v6656
        %6695 = vmatpush1.bf16.msra.mxu0 %v6655
        %6696 = vmatprep.subr.bf16.mxu0 %v6658
        %6697 = vmatpush1.bf16.msra.mxu0 %v6657
        %6698 = vmatprep.subr.bf16.mxu0 %v6660
        %6699 = vmatpush1.bf16.msra.mxu0 %v6659
        %6700 = vmatprep.subr.bf16.mxu0 %v6662
        %6701 = vmatpush1.bf16.msra.mxu0 %v6661
        %6702 = vmatprep.subr.bf16.mxu0 %v6664
        %6703 = vmatpush1.bf16.msra.mxu0 %v6663
        %6704 = vmatprep.subr.bf16.mxu0 %v6666
        %6705 = vmatpush1.bf16.msra.mxu0 %v6665
        %6706 = vmatprep.subr.bf16.mxu0 %v6690
        %6707 = vmatpush1.bf16.msra.mxu0 %v6687
        %6708 = vmatprep.subr.bf16.mxu0 0
        %6709 = vmatpush1.bf16.msra.mxu0 0
        %6710 = vmatprep.subr.bf16.mxu0 0
        %6711 = vmatpush1.bf16.msra.mxu0 0
        %6712 = vmatprep.subr.bf16.mxu0 0
        %6713 = vmatpush1.bf16.msra.mxu0 0
        %6714 = vmatprep.subr.bf16.mxu0 0
        %6715 = vmatpush1.bf16.msra.mxu0 0
        %6716 = vmatprep.subr.bf16.mxu0 0
        %6717 = vmatpush1.bf16.msra.mxu0 0
        %6718 = vmatprep.subr.bf16.mxu0 0
        %6719 = vmatpush1.bf16.msra.mxu0 0
        %6720 = vmatprep.subr.bf16.mxu0 0
        %6721 = vmatpush1.bf16.msra.mxu0 0
        %6722 = vmatprep.subr.bf16.mxu0 0
        %6723 = vmatpush1.bf16.msra.mxu0 0
        %6724 = vmatprep.mubr.bf16.mxu0 0
        %6725 = vmatmul.mubr.bf16.gmra.mrb[0].mxu0 %v6684
        %v6726 = vpop.f32.mrb[0].mxu0
        %v6727 = vadd.f32 0.0, %v6726
        %v6728 = vpop.f32.mrb[0].mxu0
        %v6729 = vadd.f32 0.0, %v6728
        %v6730 = vpop.f32.mrb[0].mxu0
        %v6731 = vadd.f32 0.0, %v6730
        %v6732 = vpop.f32.mrb[0].mxu0
        %v6733 = vadd.f32 0.0, %v6732
        %6734 = vdwg.mxu0
        %v6735 = vadd.f32 %v6577, %v6727
        %v6736 = vadd.f32 %v6578, %v6729
        %v6737 = vadd.f32 %v6579, %v6731
        %v6738 = vadd.f32 %v6580, %v6733
        %s6739 = scalar_lea.vmem %s3, 1920
        %v6740 = vld [vmem:[%s6739] sm:$0xff]
        %v6741 = vld [vmem:[%s6739 + $0x8] sm:$0xff]
        %v6742 = vld [vmem:[%s6739 + $0x10] sm:$0xff]
        %v6743 = vld [vmem:[%s6739 + $0x18] sm:$0xff]
        %v6744 = vld [vmem:[%s6739 + $0x20] sm:$0xff]
        %v6745 = vld [vmem:[%s6739 + $0x28] sm:$0xff]
        %v6746 = vld [vmem:[%s6739 + $0x30] sm:$0xff]
        %v6747 = vld [vmem:[%s6739 + $0x38] sm:$0xff]
        %v6748 = vld [vmem:[%s6739 + $0x40] sm:$0xff]
        %v6749 = vld [vmem:[%s6739 + $0x48] sm:$0xff]
        %v6750 = vld [vmem:[%s6739 + $0x50] sm:$0xff]
        %v6751 = vld [vmem:[%s6739 + $0x58] sm:$0xff]
        %v6752 = vld [vmem:[%s6739 + $0x60] sm:$0xff]
        %v6753 = vld [vmem:[%s6739 + $0x68] sm:$0xff]
        %v6754 = vld [vmem:[%s6739 + $0x70] sm:$0x11]
        %6755 = vrot.lane.b32.xlu0 %v6607, 116
        %v6756 = vpop.permute.xlu0 %6755
        %v6772 = vunpack.c.l.b16 %v6740
        %v6773 = vunpack.c.h.b16 %v6740
        %v6774 = vunpack.c.l.b16 %v6741
        %v6775 = vunpack.c.h.b16 %v6741
        %v6776 = vunpack.c.l.b16 %v6742
        %v6777 = vunpack.c.h.b16 %v6742
        %v6778 = vunpack.c.l.b16 %v6743
        %v6779 = vunpack.c.h.b16 %v6743
        %v6780 = vunpack.c.l.b16 %v6744
        %v6781 = vunpack.c.h.b16 %v6744
        %v6782 = vunpack.c.l.b16 %v6745
        %v6783 = vunpack.c.h.b16 %v6745
        %v6784 = vunpack.c.l.b16 %v6746
        %v6785 = vunpack.c.h.b16 %v6746
        %v6786 = vunpack.c.l.b16 %v6747
        %v6787 = vunpack.c.h.b16 %v6747
        %v6788 = vunpack.c.l.b16 %v6748
        %v6789 = vunpack.c.h.b16 %v6748
        %v6790 = vunpack.c.l.b16 %v6749
        %v6791 = vunpack.c.h.b16 %v6749
        %v6792 = vunpack.c.l.b16 %v6750
        %v6793 = vunpack.c.h.b16 %v6750
        %v6794 = vunpack.c.l.b16 %v6751
        %v6795 = vunpack.c.h.b16 %v6751
        %v6796 = vunpack.c.l.b16 %v6752
        %v6797 = vunpack.c.h.b16 %v6752
        %v6798 = vunpack.c.l.b16 %v6753
        %v6799 = vunpack.c.h.b16 %v6753
        %v6800 = vunpack.c.l.b16 %v6754
        %v6801 = vunpack.c.h.b16 %v6754
        %v6802 = vpack.c.b16 %v6774, %v6772
        %v6803 = vpack.c.b16 %v6775, %v6773
        %v6804 = vpack.c.b16 %v6778, %v6776
        %v6805 = vpack.c.b16 %v6779, %v6777
        %v6806 = vpack.c.b16 %v6782, %v6780
        %v6807 = vpack.c.b16 %v6783, %v6781
        %v6808 = vpack.c.b16 %v6786, %v6784
        %v6809 = vpack.c.b16 %v6787, %v6785
        %v6810 = vpack.c.b16 %v6790, %v6788
        %v6811 = vpack.c.b16 %v6791, %v6789
        %v6812 = vpack.c.b16 %v6794, %v6792
        %v6813 = vpack.c.b16 %v6795, %v6793
        %v6814 = vpack.c.b16 %v6798, %v6796
        %v6815 = vpack.c.b16 %v6799, %v6797
        %v6816 = vpack.c.b16 %v6800, %v6800
        %v6817 = vpack.c.b16 %v6801, %v6801
        %v6833 = vsel %vm4384, %v6756, 0
        %v6836 = vsel %vm4388, %v6816, 0
        %v6839 = vsel %vm4388, %v6817, 0
        %6841 = vmatprep.subr.bf16.mxu0 %v6803
        %6842 = vmatpush1.bf16.msra.mxu0 %v6802
        %6843 = vmatprep.subr.bf16.mxu0 %v6805
        %6844 = vmatpush1.bf16.msra.mxu0 %v6804
        %6845 = vmatprep.subr.bf16.mxu0 %v6807
        %6846 = vmatpush1.bf16.msra.mxu0 %v6806
        %6847 = vmatprep.subr.bf16.mxu0 %v6809
        %6848 = vmatpush1.bf16.msra.mxu0 %v6808
        %6849 = vmatprep.subr.bf16.mxu0 %v6811
        %6850 = vmatpush1.bf16.msra.mxu0 %v6810
        %6851 = vmatprep.subr.bf16.mxu0 %v6813
        %6852 = vmatpush1.bf16.msra.mxu0 %v6812
        %6853 = vmatprep.subr.bf16.mxu0 %v6815
        %6854 = vmatpush1.bf16.msra.mxu0 %v6814
        %6855 = vmatprep.subr.bf16.mxu0 %v6839
        %6856 = vmatpush1.bf16.msra.mxu0 %v6836
        %6857 = vmatprep.subr.bf16.mxu0 0
        %6858 = vmatpush1.bf16.msra.mxu0 0
        %6859 = vmatprep.subr.bf16.mxu0 0
        %6860 = vmatpush1.bf16.msra.mxu0 0
        %6861 = vmatprep.subr.bf16.mxu0 0
        %6862 = vmatpush1.bf16.msra.mxu0 0
        %6863 = vmatprep.subr.bf16.mxu0 0
        %6864 = vmatpush1.bf16.msra.mxu0 0
        %6865 = vmatprep.subr.bf16.mxu0 0
        %6866 = vmatpush1.bf16.msra.mxu0 0
        %6867 = vmatprep.subr.bf16.mxu0 0
        %6868 = vmatpush1.bf16.msra.mxu0 0
        %6869 = vmatprep.subr.bf16.mxu0 0
        %6870 = vmatpush1.bf16.msra.mxu0 0
        %6871 = vmatprep.subr.bf16.mxu0 0
        %6872 = vmatpush1.bf16.msra.mxu0 0
        %6873 = vmatprep.mubr.bf16.mxu0 0
        %6874 = vmatmul.mubr.bf16.gmra.mrb[0].mxu0 %v6833
        %v6875 = vpop.f32.mrb[0].mxu0
        %v6876 = vadd.f32 0.0, %v6875
        %v6877 = vpop.f32.mrb[0].mxu0
        %v6878 = vadd.f32 0.0, %v6877
        %v6879 = vpop.f32.mrb[0].mxu0
        %v6880 = vadd.f32 0.0, %v6879
        %v6881 = vpop.f32.mrb[0].mxu0
        %v6882 = vadd.f32 0.0, %v6881
        %6883 = vdwg.mxu0
        %v6884 = vadd.f32 %v6735, %v6876
        %v6885 = vadd.f32 %v6736, %v6878
        %v6886 = vadd.f32 %v6737, %v6880
        %v6887 = vadd.f32 %v6738, %v6882
        %v6888 = vld [vmem:[#allocation2] sm:$0xf8]
        %v6889 = vld [vmem:[#allocation2 + $0x8] sm:$0xf8]
        %v6890 = vld [vmem:[#allocation2 + $0x10] sm:$0x1f]
        %v6891 = vld [vmem:[#allocation2 + $0x18] sm:$0x1f]
        %v6892 = vpack.c.bf16 %v6890, %v6888
        %v6893 = vpack.c.bf16 %v6891, %v6889
        %s6894 = scalar_lea.vmem %s3, 2040
        %v6895 = vld [vmem:[%s6894] sm:$0xff]
        %v6896 = vld [vmem:[%s6894 + $0x8] sm:$0xff]
        %v6897 = vld [vmem:[%s6894 + $0x10] sm:$0xff]
        %v6898 = vld [vmem:[%s6894 + $0x18] sm:$0xff]
        %v6899 = vld [vmem:[%s6894 + $0x20] sm:$0xff]
        %v6900 = vld [vmem:[%s6894 + $0x28] sm:$0xff]
        %v6901 = vld [vmem:[%s6894 + $0x30] sm:$0xff]
        %v6902 = vld [vmem:[%s6894 + $0x38] sm:$0xff]
        %v6903 = vld [vmem:[%s6894 + $0x40] sm:$0xff]
        %v6904 = vld [vmem:[%s6894 + $0x48] sm:$0xff]
        %v6905 = vld [vmem:[%s6894 + $0x50] sm:$0xff]
        %v6906 = vld [vmem:[%s6894 + $0x58] sm:$0xff]
        %v6907 = vld [vmem:[%s6894 + $0x60] sm:$0xff]
        %v6908 = vld [vmem:[%s6894 + $0x68] sm:$0xff]
        %v6909 = vld [vmem:[%s6894 + $0x70] sm:$0x11]
        %v6911 = vshrl.u32 %v6892, 16
        %v6913 = vrot.slane %v6911, 1
        %v6914 = vshll.u32 %v6892, 16
        %v6916 = vrot.slane %v6914, 2
        %v6917 = vor.u32 %v6913, %v6916
        %v6919 = vshrl.u32 %v6893, 16
        %v6921 = vrot.slane %v6919, 1
        %v6922 = vshll.u32 %v6893, 16
        %v6924 = vrot.slane %v6922, 2
        %v6925 = vor.u32 %v6921, %v6924
        %6926 = vrot.lane.b32.xlu0 %v6917, 104
        %v6927 = vpop.permute.xlu0 %6926
        %6928 = vrot.lane.b32.xlu0 %v6925, 104
        %v6929 = vpop.permute.xlu0 %6928
        %v6930 = vsel %vm4593, %v6927, %v6929
        %v6946 = vunpack.c.l.b16 %v6895
        %v6947 = vunpack.c.h.b16 %v6895
        %v6948 = vunpack.c.l.b16 %v6896
        %v6949 = vunpack.c.h.b16 %v6896
        %v6950 = vunpack.c.l.b16 %v6897
        %v6951 = vunpack.c.h.b16 %v6897
        %v6952 = vunpack.c.l.b16 %v6898
        %v6953 = vunpack.c.h.b16 %v6898
        %v6954 = vunpack.c.l.b16 %v6899
        %v6955 = vunpack.c.h.b16 %v6899
        %v6956 = vunpack.c.l.b16 %v6900
        %v6957 = vunpack.c.h.b16 %v6900
        %v6958 = vunpack.c.l.b16 %v6901
        %v6959 = vunpack.c.h.b16 %v6901
        %v6960 = vunpack.c.l.b16 %v6902
        %v6961 = vunpack.c.h.b16 %v6902
        %v6962 = vunpack.c.l.b16 %v6903
        %v6963 = vunpack.c.h.b16 %v6903
        %v6964 = vunpack.c.l.b16 %v6904
        %v6965 = vunpack.c.h.b16 %v6904
        %v6966 = vunpack.c.l.b16 %v6905
        %v6967 = vunpack.c.h.b16 %v6905
        %v6968 = vunpack.c.l.b16 %v6906
        %v6969 = vunpack.c.h.b16 %v6906
        %v6970 = vunpack.c.l.b16 %v6907
        %v6971 = vunpack.c.h.b16 %v6907
        %v6972 = vunpack.c.l.b16 %v6908
        %v6973 = vunpack.c.h.b16 %v6908
        %v6974 = vunpack.c.l.b16 %v6909
        %v6975 = vunpack.c.h.b16 %v6909
        %v6976 = vpack.c.b16 %v6948, %v6946
        %v6977 = vpack.c.b16 %v6949, %v6947
        %v6978 = vpack.c.b16 %v6952, %v6950
        %v6979 = vpack.c.b16 %v6953, %v6951
        %v6980 = vpack.c.b16 %v6956, %v6954
        %v6981 = vpack.c.b16 %v6957, %v6955
        %v6982 = vpack.c.b16 %v6960, %v6958
        %v6983 = vpack.c.b16 %v6961, %v6959
        %v6984 = vpack.c.b16 %v6964, %v6962
        %v6985 = vpack.c.b16 %v6965, %v6963
        %v6986 = vpack.c.b16 %v6968, %v6966
        %v6987 = vpack.c.b16 %v6969, %v6967
        %v6988 = vpack.c.b16 %v6972, %v6970
        %v6989 = vpack.c.b16 %v6973, %v6971
        %v6990 = vpack.c.b16 %v6974, %v6974
        %v6991 = vpack.c.b16 %v6975, %v6975
        %v7007 = vsel %vm4384, %v6930, 0
        %v7010 = vsel %vm4388, %v6990, 0
        %v7013 = vsel %vm4388, %v6991, 0
        %7015 = vmatprep.subr.bf16.mxu0 %v6977
        %7016 = vmatpush1.bf16.msra.mxu0 %v6976
        %7017 = vmatprep.subr.bf16.mxu0 %v6979
        %7018 = vmatpush1.bf16.msra.mxu0 %v6978
        %7019 = vmatprep.subr.bf16.mxu0 %v6981
        %7020 = vmatpush1.bf16.msra.mxu0 %v6980
        %7021 = vmatprep.subr.bf16.mxu0 %v6983
        %7022 = vmatpush1.bf16.msra.mxu0 %v6982
        %7023 = vmatprep.subr.bf16.mxu0 %v6985
        %7024 = vmatpush1.bf16.msra.mxu0 %v6984
        %7025 = vmatprep.subr.bf16.mxu0 %v6987
        %7026 = vmatpush1.bf16.msra.mxu0 %v6986
        %7027 = vmatprep.subr.bf16.mxu0 %v6989
        %7028 = vmatpush1.bf16.msra.mxu0 %v6988
        %7029 = vmatprep.subr.bf16.mxu0 %v7013
        %7030 = vmatpush1.bf16.msra.mxu0 %v7010
        %7031 = vmatprep.subr.bf16.mxu0 0
        %7032 = vmatpush1.bf16.msra.mxu0 0
        %7033 = vmatprep.subr.bf16.mxu0 0
        %7034 = vmatpush1.bf16.msra.mxu0 0
        %7035 = vmatprep.subr.bf16.mxu0 0
        %7036 = vmatpush1.bf16.msra.mxu0 0
        %7037 = vmatprep.subr.bf16.mxu0 0
        %7038 = vmatpush1.bf16.msra.mxu0 0
        %7039 = vmatprep.subr.bf16.mxu0 0
        %7040 = vmatpush1.bf16.msra.mxu0 0
        %7041 = vmatprep.subr.bf16.mxu0 0
        %7042 = vmatpush1.bf16.msra.mxu0 0
        %7043 = vmatprep.subr.bf16.mxu0 0
        %7044 = vmatpush1.bf16.msra.mxu0 0
        %7045 = vmatprep.subr.bf16.mxu0 0
        %7046 = vmatpush1.bf16.msra.mxu0 0
        %7047 = vmatprep.mubr.bf16.mxu0 0
        %7048 = vmatmul.mubr.bf16.gmra.mrb[0].mxu0 %v7007
        %v7049 = vpop.f32.mrb[0].mxu0
        %v7050 = vadd.f32 0.0, %v7049
        %v7051 = vpop.f32.mrb[0].mxu0
        %v7052 = vadd.f32 0.0, %v7051
        %v7053 = vpop.f32.mrb[0].mxu0
        %v7054 = vadd.f32 0.0, %v7053
        %v7055 = vpop.f32.mrb[0].mxu0
        %v7056 = vadd.f32 0.0, %v7055
        %7057 = vdwg.mxu0
        %v7058 = vadd.f32 %v6884, %v7050
        %v7059 = vadd.f32 %v6885, %v7052
        %v7060 = vadd.f32 %v6886, %v7054
        %v7061 = vadd.f32 %v6887, %v7056
        %s7062 = scalar_lea.vmem %s3, 2160
        %v7063 = vld [vmem:[%s7062] sm:$0xff]
        %v7064 = vld [vmem:[%s7062 + $0x8] sm:$0xff]
        %v7065 = vld [vmem:[%s7062 + $0x10] sm:$0xff]
        %v7066 = vld [vmem:[%s7062 + $0x18] sm:$0xff]
        %v7067 = vld [vmem:[%s7062 + $0x20] sm:$0xff]
        %v7068 = vld [vmem:[%s7062 + $0x28] sm:$0xff]
        %v7069 = vld [vmem:[%s7062 + $0x30] sm:$0xff]
        %v7070 = vld [vmem:[%s7062 + $0x38] sm:$0xff]
        %v7071 = vld [vmem:[%s7062 + $0x40] sm:$0xff]
        %v7072 = vld [vmem:[%s7062 + $0x48] sm:$0xff]
        %v7073 = vld [vmem:[%s7062 + $0x50] sm:$0xff]
        %v7074 = vld [vmem:[%s7062 + $0x58] sm:$0xff]
        %v7075 = vld [vmem:[%s7062 + $0x60] sm:$0xff]
        %v7076 = vld [vmem:[%s7062 + $0x68] sm:$0xff]
        %v7077 = vld [vmem:[%s7062 + $0x70] sm:$0x11]
        %7078 = vrot.lane.b32.xlu0 %v6917, 92
        %v7079 = vpop.permute.xlu0 %7078
        %7080 = vrot.lane.b32.xlu0 %v6925, 92
        %v7081 = vpop.permute.xlu0 %7080
        %v7082 = vsel %vm4746, %v7079, %v7081
        %v7098 = vunpack.c.l.b16 %v7063
        %v7099 = vunpack.c.h.b16 %v7063
        %v7100 = vunpack.c.l.b16 %v7064
        %v7101 = vunpack.c.h.b16 %v7064
        %v7102 = vunpack.c.l.b16 %v7065
        %v7103 = vunpack.c.h.b16 %v7065
        %v7104 = vunpack.c.l.b16 %v7066
        %v7105 = vunpack.c.h.b16 %v7066
        %v7106 = vunpack.c.l.b16 %v7067
        %v7107 = vunpack.c.h.b16 %v7067
        %v7108 = vunpack.c.l.b16 %v7068
        %v7109 = vunpack.c.h.b16 %v7068
        %v7110 = vunpack.c.l.b16 %v7069
        %v7111 = vunpack.c.h.b16 %v7069
        %v7112 = vunpack.c.l.b16 %v7070
        %v7113 = vunpack.c.h.b16 %v7070
        %v7114 = vunpack.c.l.b16 %v7071
        %v7115 = vunpack.c.h.b16 %v7071
        %v7116 = vunpack.c.l.b16 %v7072
        %v7117 = vunpack.c.h.b16 %v7072
        %v7118 = vunpack.c.l.b16 %v7073
        %v7119 = vunpack.c.h.b16 %v7073
        %v7120 = vunpack.c.l.b16 %v7074
        %v7121 = vunpack.c.h.b16 %v7074
        %v7122 = vunpack.c.l.b16 %v7075
        %v7123 = vunpack.c.h.b16 %v7075
        %v7124 = vunpack.c.l.b16 %v7076
        %v7125 = vunpack.c.h.b16 %v7076
        %v7126 = vunpack.c.l.b16 %v7077
        %v7127 = vunpack.c.h.b16 %v7077
        %v7128 = vpack.c.b16 %v7100, %v7098
        %v7129 = vpack.c.b16 %v7101, %v7099
        %v7130 = vpack.c.b16 %v7104, %v7102
        %v7131 = vpack.c.b16 %v7105, %v7103
        %v7132 = vpack.c.b16 %v7108, %v7106
        %v7133 = vpack.c.b16 %v7109, %v7107
        %v7134 = vpack.c.b16 %v7112, %v7110
        %v7135 = vpack.c.b16 %v7113, %v7111
        %v7136 = vpack.c.b16 %v7116, %v7114
        %v7137 = vpack.c.b16 %v7117, %v7115
        %v7138 = vpack.c.b16 %v7120, %v7118
        %v7139 = vpack.c.b16 %v7121, %v7119
        %v7140 = vpack.c.b16 %v7124, %v7122
        %v7141 = vpack.c.b16 %v7125, %v7123
        %v7142 = vpack.c.b16 %v7126, %v7126
        %v7143 = vpack.c.b16 %v7127, %v7127
        %v7159 = vsel %vm4384, %v7082, 0
        %v7162 = vsel %vm4388, %v7142, 0
        %v7165 = vsel %vm4388, %v7143, 0
        %7167 = vmatprep.subr.bf16.mxu0 %v7129
        %7168 = vmatpush1.bf16.msra.mxu0 %v7128
        %7169 = vmatprep.subr.bf16.mxu0 %v7131
        %7170 = vmatpush1.bf16.msra.mxu0 %v7130
        %7171 = vmatprep.subr.bf16.mxu0 %v7133
        %7172 = vmatpush1.bf16.msra.mxu0 %v7132
        %7173 = vmatprep.subr.bf16.mxu0 %v7135
        %7174 = vmatpush1.bf16.msra.mxu0 %v7134
        %7175 = vmatprep.subr.bf16.mxu0 %v7137
        %7176 = vmatpush1.bf16.msra.mxu0 %v7136
        %7177 = vmatprep.subr.bf16.mxu0 %v7139
        %7178 = vmatpush1.bf16.msra.mxu0 %v7138
        %7179 = vmatprep.subr.bf16.mxu0 %v7141
        %7180 = vmatpush1.bf16.msra.mxu0 %v7140
        %7181 = vmatprep.subr.bf16.mxu0 %v7165
        %7182 = vmatpush1.bf16.msra.mxu0 %v7162
        %7183 = vmatprep.subr.bf16.mxu0 0
        %7184 = vmatpush1.bf16.msra.mxu0 0
        %7185 = vmatprep.subr.bf16.mxu0 0
        %7186 = vmatpush1.bf16.msra.mxu0 0
        %7187 = vmatprep.subr.bf16.mxu0 0
        %7188 = vmatpush1.bf16.msra.mxu0 0
        %7189 = vmatprep.subr.bf16.mxu0 0
        %7190 = vmatpush1.bf16.msra.mxu0 0
        %7191 = vmatprep.subr.bf16.mxu0 0
        %7192 = vmatpush1.bf16.msra.mxu0 0
        %7193 = vmatprep.subr.bf16.mxu0 0
        %7194 = vmatpush1.bf16.msra.mxu0 0
        %7195 = vmatprep.subr.bf16.mxu0 0
        %7196 = vmatpush1.bf16.msra.mxu0 0
        %7197 = vmatprep.subr.bf16.mxu0 0
        %7198 = vmatpush1.bf16.msra.mxu0 0
        %7199 = vmatprep.mubr.bf16.mxu0 0
        %7200 = vmatmul.mubr.bf16.gmra.mrb[0].mxu0 %v7159
        %v7201 = vpop.f32.mrb[0].mxu0
        %v7202 = vadd.f32 0.0, %v7201
        %v7203 = vpop.f32.mrb[0].mxu0
        %v7204 = vadd.f32 0.0, %v7203
        %v7205 = vpop.f32.mrb[0].mxu0
        %v7206 = vadd.f32 0.0, %v7205
        %v7207 = vpop.f32.mrb[0].mxu0
        %v7208 = vadd.f32 0.0, %v7207
        %7209 = vdwg.mxu0
        %v7210 = vadd.f32 %v7058, %v7202
        %v7211 = vadd.f32 %v7059, %v7204
        %v7212 = vadd.f32 %v7060, %v7206
        %v7213 = vadd.f32 %v7061, %v7208
        %s7214 = scalar_lea.vmem %s3, 2280
        %v7215 = vld [vmem:[%s7214] sm:$0xff]
        %v7216 = vld [vmem:[%s7214 + $0x8] sm:$0xff]
        %v7217 = vld [vmem:[%s7214 + $0x10] sm:$0xff]
        %v7218 = vld [vmem:[%s7214 + $0x18] sm:$0xff]
        %v7219 = vld [vmem:[%s7214 + $0x20] sm:$0xff]
        %v7220 = vld [vmem:[%s7214 + $0x28] sm:$0xff]
        %v7221 = vld [vmem:[%s7214 + $0x30] sm:$0xff]
        %v7222 = vld [vmem:[%s7214 + $0x38] sm:$0xff]
        %v7223 = vld [vmem:[%s7214 + $0x40] sm:$0xff]
        %v7224 = vld [vmem:[%s7214 + $0x48] sm:$0xff]
        %v7225 = vld [vmem:[%s7214 + $0x50] sm:$0xff]
        %v7226 = vld [vmem:[%s7214 + $0x58] sm:$0xff]
        %v7227 = vld [vmem:[%s7214 + $0x60] sm:$0xff]
        %v7228 = vld [vmem:[%s7214 + $0x68] sm:$0xff]
        %v7229 = vld [vmem:[%s7214 + $0x70] sm:$0x11]
        %7230 = vrot.lane.b32.xlu0 %v6917, 80
        %v7231 = vpop.permute.xlu0 %7230
        %7232 = vrot.lane.b32.xlu0 %v6925, 80
        %v7233 = vpop.permute.xlu0 %7232
        %v7234 = vsel %vm4899, %v7231, %v7233
        %v7250 = vunpack.c.l.b16 %v7215
        %v7251 = vunpack.c.h.b16 %v7215
        %v7252 = vunpack.c.l.b16 %v7216
        %v7253 = vunpack.c.h.b16 %v7216
        %v7254 = vunpack.c.l.b16 %v7217
        %v7255 = vunpack.c.h.b16 %v7217
        %v7256 = vunpack.c.l.b16 %v7218
        %v7257 = vunpack.c.h.b16 %v7218
        %v7258 = vunpack.c.l.b16 %v7219
        %v7259 = vunpack.c.h.b16 %v7219
        %v7260 = vunpack.c.l.b16 %v7220
        %v7261 = vunpack.c.h.b16 %v7220
        %v7262 = vunpack.c.l.b16 %v7221
        %v7263 = vunpack.c.h.b16 %v7221
        %v7264 = vunpack.c.l.b16 %v7222
        %v7265 = vunpack.c.h.b16 %v7222
        %v7266 = vunpack.c.l.b16 %v7223
        %v7267 = vunpack.c.h.b16 %v7223
        %v7268 = vunpack.c.l.b16 %v7224
        %v7269 = vunpack.c.h.b16 %v7224
        %v7270 = vunpack.c.l.b16 %v7225
        %v7271 = vunpack.c.h.b16 %v7225
        %v7272 = vunpack.c.l.b16 %v7226
        %v7273 = vunpack.c.h.b16 %v7226
        %v7274 = vunpack.c.l.b16 %v7227
        %v7275 = vunpack.c.h.b16 %v7227
        %v7276 = vunpack.c.l.b16 %v7228
        %v7277 = vunpack.c.h.b16 %v7228
        %v7278 = vunpack.c.l.b16 %v7229
        %v7279 = vunpack.c.h.b16 %v7229
        %v7280 = vpack.c.b16 %v7252, %v7250
        %v7281 = vpack.c.b16 %v7253, %v7251
        %v7282 = vpack.c.b16 %v7256, %v7254
        %v7283 = vpack.c.b16 %v7257, %v7255
        %v7284 = vpack.c.b16 %v7260, %v7258
        %v7285 = vpack.c.b16 %v7261, %v7259
        %v7286 = vpack.c.b16 %v7264, %v7262
        %v7287 = vpack.c.b16 %v7265, %v7263
        %v7288 = vpack.c.b16 %v7268, %v7266
        %v7289 = vpack.c.b16 %v7269, %v7267
        %v7290 = vpack.c.b16 %v7272, %v7270
        %v7291 = vpack.c.b16 %v7273, %v7271
        %v7292 = vpack.c.b16 %v7276, %v7274
        %v7293 = vpack.c.b16 %v7277, %v7275
        %v7294 = vpack.c.b16 %v7278, %v7278
        %v7295 = vpack.c.b16 %v7279, %v7279
        %v7311 = vsel %vm4384, %v7234, 0
        %v7314 = vsel %vm4388, %v7294, 0
        %v7317 = vsel %vm4388, %v7295, 0
        %7319 = vmatprep.subr.bf16.mxu0 %v7281
        %7320 = vmatpush1.bf16.msra.mxu0 %v7280
        %7321 = vmatprep.subr.bf16.mxu0 %v7283
        %7322 = vmatpush1.bf16.msra.mxu0 %v7282
        %7323 = vmatprep.subr.bf16.mxu0 %v7285
        %7324 = vmatpush1.bf16.msra.mxu0 %v7284
        %7325 = vmatprep.subr.bf16.mxu0 %v7287
        %7326 = vmatpush1.bf16.msra.mxu0 %v7286
        %7327 = vmatprep.subr.bf16.mxu0 %v7289
        %7328 = vmatpush1.bf16.msra.mxu0 %v7288
        %7329 = vmatprep.subr.bf16.mxu0 %v7291
        %7330 = vmatpush1.bf16.msra.mxu0 %v7290
        %7331 = vmatprep.subr.bf16.mxu0 %v7293
        %7332 = vmatpush1.bf16.msra.mxu0 %v7292
        %7333 = vmatprep.subr.bf16.mxu0 %v7317
        %7334 = vmatpush1.bf16.msra.mxu0 %v7314
        %7335 = vmatprep.subr.bf16.mxu0 0
        %7336 = vmatpush1.bf16.msra.mxu0 0
        %7337 = vmatprep.subr.bf16.mxu0 0
        %7338 = vmatpush1.bf16.msra.mxu0 0
        %7339 = vmatprep.subr.bf16.mxu0 0
        %7340 = vmatpush1.bf16.msra.mxu0 0
        %7341 = vmatprep.subr.bf16.mxu0 0
        %7342 = vmatpush1.bf16.msra.mxu0 0
        %7343 = vmatprep.subr.bf16.mxu0 0
        %7344 = vmatpush1.bf16.msra.mxu0 0
        %7345 = vmatprep.subr.bf16.mxu0 0
        %7346 = vmatpush1.bf16.msra.mxu0 0
        %7347 = vmatprep.subr.bf16.mxu0 0
        %7348 = vmatpush1.bf16.msra.mxu0 0
        %7349 = vmatprep.subr.bf16.mxu0 0
        %7350 = vmatpush1.bf16.msra.mxu0 0
        %7351 = vmatprep.mubr.bf16.mxu0 0
        %7352 = vmatmul.mubr.bf16.gmra.mrb[0].mxu0 %v7311
        %v7353 = vpop.f32.mrb[0].mxu0
        %v7354 = vadd.f32 0.0, %v7353
        %v7355 = vpop.f32.mrb[0].mxu0
        %v7356 = vadd.f32 0.0, %v7355
        %v7357 = vpop.f32.mrb[0].mxu0
        %v7358 = vadd.f32 0.0, %v7357
        %v7359 = vpop.f32.mrb[0].mxu0
        %v7360 = vadd.f32 0.0, %v7359
        %7361 = vdwg.mxu0
        %v7362 = vadd.f32 %v7210, %v7354
        %v7363 = vadd.f32 %v7211, %v7356
        %v7364 = vadd.f32 %v7212, %v7358
        %v7365 = vadd.f32 %v7213, %v7360
        %v7366 = vld [vmem:[#allocation2] sm:$0xf0]
        %v7367 = vld [vmem:[#allocation2 + $0x10] sm:$0x3f]
        %v7368 = vpack.c.bf16 %v7367, %v7366
        %s7369 = scalar_lea.vmem %s3, 2400
        %v7370 = vld [vmem:[%s7369] sm:$0xff]
        %v7371 = vld [vmem:[%s7369 + $0x8] sm:$0xff]
        %v7372 = vld [vmem:[%s7369 + $0x10] sm:$0xff]
        %v7373 = vld [vmem:[%s7369 + $0x18] sm:$0xff]
        %v7374 = vld [vmem:[%s7369 + $0x20] sm:$0xff]
        %v7375 = vld [vmem:[%s7369 + $0x28] sm:$0xff]
        %v7376 = vld [vmem:[%s7369 + $0x30] sm:$0xff]
        %v7377 = vld [vmem:[%s7369 + $0x38] sm:$0xff]
        %v7378 = vld [vmem:[%s7369 + $0x40] sm:$0xff]
        %v7379 = vld [vmem:[%s7369 + $0x48] sm:$0xff]
        %v7380 = vld [vmem:[%s7369 + $0x50] sm:$0xff]
        %v7381 = vld [vmem:[%s7369 + $0x58] sm:$0xff]
        %v7382 = vld [vmem:[%s7369 + $0x60] sm:$0xff]
        %v7383 = vld [vmem:[%s7369 + $0x68] sm:$0xff]
        %v7384 = vld [vmem:[%s7369 + $0x70] sm:$0x11]
        %v7386 = vrot.slane %v7368, 2
        %v7402 = vunpack.c.l.b16 %v7370
        %v7403 = vunpack.c.h.b16 %v7370
        %v7404 = vunpack.c.l.b16 %v7371
        %v7405 = vunpack.c.h.b16 %v7371
        %v7406 = vunpack.c.l.b16 %v7372
        %v7407 = vunpack.c.h.b16 %v7372
        %v7408 = vunpack.c.l.b16 %v7373
        %v7409 = vunpack.c.h.b16 %v7373
        %v7410 = vunpack.c.l.b16 %v7374
        %v7411 = vunpack.c.h.b16 %v7374
        %v7412 = vunpack.c.l.b16 %v7375
        %v7413 = vunpack.c.h.b16 %v7375
        %v7414 = vunpack.c.l.b16 %v7376
        %v7415 = vunpack.c.h.b16 %v7376
        %v7416 = vunpack.c.l.b16 %v7377
        %v7417 = vunpack.c.h.b16 %v7377
        %v7418 = vunpack.c.l.b16 %v7378
        %v7419 = vunpack.c.h.b16 %v7378
        %v7420 = vunpack.c.l.b16 %v7379
        %v7421 = vunpack.c.h.b16 %v7379
        %v7422 = vunpack.c.l.b16 %v7380
        %v7423 = vunpack.c.h.b16 %v7380
        %v7424 = vunpack.c.l.b16 %v7381
        %v7425 = vunpack.c.h.b16 %v7381
        %v7426 = vunpack.c.l.b16 %v7382
        %v7427 = vunpack.c.h.b16 %v7382
        %v7428 = vunpack.c.l.b16 %v7383
        %v7429 = vunpack.c.h.b16 %v7383
        %v7430 = vunpack.c.l.b16 %v7384
        %v7431 = vunpack.c.h.b16 %v7384
        %v7432 = vpack.c.b16 %v7404, %v7402
        %v7433 = vpack.c.b16 %v7405, %v7403
        %v7434 = vpack.c.b16 %v7408, %v7406
        %v7435 = vpack.c.b16 %v7409, %v7407
        %v7436 = vpack.c.b16 %v7412, %v7410
        %v7437 = vpack.c.b16 %v7413, %v7411
        %v7438 = vpack.c.b16 %v7416, %v7414
        %v7439 = vpack.c.b16 %v7417, %v7415
        %v7440 = vpack.c.b16 %v7420, %v7418
        %v7441 = vpack.c.b16 %v7421, %v7419
        %v7442 = vpack.c.b16 %v7424, %v7422
        %v7443 = vpack.c.b16 %v7425, %v7423
        %v7444 = vpack.c.b16 %v7428, %v7426
        %v7445 = vpack.c.b16 %v7429, %v7427
        %v7446 = vpack.c.b16 %v7430, %v7430
        %v7447 = vpack.c.b16 %v7431, %v7431
        %v7463 = vsel %vm4384, %v7386, 0
        %v7466 = vsel %vm4388, %v7446, 0
        %v7469 = vsel %vm4388, %v7447, 0
        %7471 = vmatprep.subr.bf16.mxu0 %v7433
        %7472 = vmatpush1.bf16.msra.mxu0 %v7432
        %7473 = vmatprep.subr.bf16.mxu0 %v7435
        %7474 = vmatpush1.bf16.msra.mxu0 %v7434
        %7475 = vmatprep.subr.bf16.mxu0 %v7437
        %7476 = vmatpush1.bf16.msra.mxu0 %v7436
        %7477 = vmatprep.subr.bf16.mxu0 %v7439
        %7478 = vmatpush1.bf16.msra.mxu0 %v7438
        %7479 = vmatprep.subr.bf16.mxu0 %v7441
        %7480 = vmatpush1.bf16.msra.mxu0 %v7440
        %7481 = vmatprep.subr.bf16.mxu0 %v7443
        %7482 = vmatpush1.bf16.msra.mxu0 %v7442
        %7483 = vmatprep.subr.bf16.mxu0 %v7445
        %7484 = vmatpush1.bf16.msra.mxu0 %v7444
        %7485 = vmatprep.subr.bf16.mxu0 %v7469
        %7486 = vmatpush1.bf16.msra.mxu0 %v7466
        %7487 = vmatprep.subr.bf16.mxu0 0
        %7488 = vmatpush1.bf16.msra.mxu0 0
        %7489 = vmatprep.subr.bf16.mxu0 0
        %7490 = vmatpush1.bf16.msra.mxu0 0
        %7491 = vmatprep.subr.bf16.mxu0 0
        %7492 = vmatpush1.bf16.msra.mxu0 0
        %7493 = vmatprep.subr.bf16.mxu0 0
        %7494 = vmatpush1.bf16.msra.mxu0 0
        %7495 = vmatprep.subr.bf16.mxu0 0
        %7496 = vmatpush1.bf16.msra.mxu0 0
        %7497 = vmatprep.subr.bf16.mxu0 0
        %7498 = vmatpush1.bf16.msra.mxu0 0
        %7499 = vmatprep.subr.bf16.mxu0 0
        %7500 = vmatpush1.bf16.msra.mxu0 0
        %7501 = vmatprep.subr.bf16.mxu0 0
        %7502 = vmatpush1.bf16.msra.mxu0 0
        %7503 = vmatprep.mubr.bf16.mxu0 0
        %7504 = vmatmul.mubr.bf16.gmra.mrb[0].mxu0 %v7463
        %v7505 = vpop.f32.mrb[0].mxu0
        %v7506 = vadd.f32 0.0, %v7505
        %v7507 = vpop.f32.mrb[0].mxu0
        %v7508 = vadd.f32 0.0, %v7507
        %v7509 = vpop.f32.mrb[0].mxu0
        %v7510 = vadd.f32 0.0, %v7509
        %v7511 = vpop.f32.mrb[0].mxu0
        %v7512 = vadd.f32 0.0, %v7511
        %7513 = vdwg.mxu0
        %v7514 = vadd.f32 %v7362, %v7506
        %v7515 = vadd.f32 %v7363, %v7508
        %v7516 = vadd.f32 %v7364, %v7510
        %v7517 = vadd.f32 %v7365, %v7512
        %s7518 = scalar_lea.vmem %s3, 2520
        %v7519 = vld [vmem:[%s7518] sm:$0xff]
        %v7520 = vld [vmem:[%s7518 + $0x8] sm:$0xff]
        %v7521 = vld [vmem:[%s7518 + $0x10] sm:$0xff]
        %v7522 = vld [vmem:[%s7518 + $0x18] sm:$0xff]
        %v7523 = vld [vmem:[%s7518 + $0x20] sm:$0xff]
        %v7524 = vld [vmem:[%s7518 + $0x28] sm:$0xff]
        %v7525 = vld [vmem:[%s7518 + $0x30] sm:$0xff]
        %v7526 = vld [vmem:[%s7518 + $0x38] sm:$0xff]
        %v7527 = vld [vmem:[%s7518 + $0x40] sm:$0xff]
        %v7528 = vld [vmem:[%s7518 + $0x48] sm:$0xff]
        %v7529 = vld [vmem:[%s7518 + $0x50] sm:$0xff]
        %v7530 = vld [vmem:[%s7518 + $0x58] sm:$0xff]
        %v7531 = vld [vmem:[%s7518 + $0x60] sm:$0xff]
        %v7532 = vld [vmem:[%s7518 + $0x68] sm:$0xff]
        %v7533 = vld [vmem:[%s7518 + $0x70] sm:$0x11]
        %7534 = vrot.lane.b32.xlu0 %v7386, 116
        %v7535 = vpop.permute.xlu0 %7534
        %v7551 = vunpack.c.l.b16 %v7519
        %v7552 = vunpack.c.h.b16 %v7519
        %v7553 = vunpack.c.l.b16 %v7520
        %v7554 = vunpack.c.h.b16 %v7520
        %v7555 = vunpack.c.l.b16 %v7521
        %v7556 = vunpack.c.h.b16 %v7521
        %v7557 = vunpack.c.l.b16 %v7522
        %v7558 = vunpack.c.h.b16 %v7522
        %v7559 = vunpack.c.l.b16 %v7523
        %v7560 = vunpack.c.h.b16 %v7523
        %v7561 = vunpack.c.l.b16 %v7524
        %v7562 = vunpack.c.h.b16 %v7524
        %v7563 = vunpack.c.l.b16 %v7525
        %v7564 = vunpack.c.h.b16 %v7525
        %v7565 = vunpack.c.l.b16 %v7526
        %v7566 = vunpack.c.h.b16 %v7526
        %v7567 = vunpack.c.l.b16 %v7527
        %v7568 = vunpack.c.h.b16 %v7527
        %v7569 = vunpack.c.l.b16 %v7528
        %v7570 = vunpack.c.h.b16 %v7528
        %v7571 = vunpack.c.l.b16 %v7529
        %v7572 = vunpack.c.h.b16 %v7529
        %v7573 = vunpack.c.l.b16 %v7530
        %v7574 = vunpack.c.h.b16 %v7530
        %v7575 = vunpack.c.l.b16 %v7531
        %v7576 = vunpack.c.h.b16 %v7531
        %v7577 = vunpack.c.l.b16 %v7532
        %v7578 = vunpack.c.h.b16 %v7532
        %v7579 = vunpack.c.l.b16 %v7533
        %v7580 = vunpack.c.h.b16 %v7533
        %v7581 = vpack.c.b16 %v7553, %v7551
        %v7582 = vpack.c.b16 %v7554, %v7552
        %v7583 = vpack.c.b16 %v7557, %v7555
        %v7584 = vpack.c.b16 %v7558, %v7556
        %v7585 = vpack.c.b16 %v7561, %v7559
        %v7586 = vpack.c.b16 %v7562, %v7560
        %v7587 = vpack.c.b16 %v7565, %v7563
        %v7588 = vpack.c.b16 %v7566, %v7564
        %v7589 = vpack.c.b16 %v7569, %v7567
        %v7590 = vpack.c.b16 %v7570, %v7568
        %v7591 = vpack.c.b16 %v7573, %v7571
        %v7592 = vpack.c.b16 %v7574, %v7572
        %v7593 = vpack.c.b16 %v7577, %v7575
        %v7594 = vpack.c.b16 %v7578, %v7576
        %v7595 = vpack.c.b16 %v7579, %v7579
        %v7596 = vpack.c.b16 %v7580, %v7580
        %v7612 = vsel %vm4384, %v7535, 0
        %v7615 = vsel %vm4388, %v7595, 0
        %v7618 = vsel %vm4388, %v7596, 0
        %7620 = vmatprep.subr.bf16.mxu0 %v7582
        %7621 = vmatpush1.bf16.msra.mxu0 %v7581
        %7622 = vmatprep.subr.bf16.mxu0 %v7584
        %7623 = vmatpush1.bf16.msra.mxu0 %v7583
        %7624 = vmatprep.subr.bf16.mxu0 %v7586
        %7625 = vmatpush1.bf16.msra.mxu0 %v7585
        %7626 = vmatprep.subr.bf16.mxu0 %v7588
        %7627 = vmatpush1.bf16.msra.mxu0 %v7587
        %7628 = vmatprep.subr.bf16.mxu0 %v7590
        %7629 = vmatpush1.bf16.msra.mxu0 %v7589
        %7630 = vmatprep.subr.bf16.mxu0 %v7592
        %7631 = vmatpush1.bf16.msra.mxu0 %v7591
        %7632 = vmatprep.subr.bf16.mxu0 %v7594
        %7633 = vmatpush1.bf16.msra.mxu0 %v7593
        %7634 = vmatprep.subr.bf16.mxu0 %v7618
        %7635 = vmatpush1.bf16.msra.mxu0 %v7615
        %7636 = vmatprep.subr.bf16.mxu0 0
        %7637 = vmatpush1.bf16.msra.mxu0 0
        %7638 = vmatprep.subr.bf16.mxu0 0
        %7639 = vmatpush1.bf16.msra.mxu0 0
        %7640 = vmatprep.subr.bf16.mxu0 0
        %7641 = vmatpush1.bf16.msra.mxu0 0
        %7642 = vmatprep.subr.bf16.mxu0 0
        %7643 = vmatpush1.bf16.msra.mxu0 0
        %7644 = vmatprep.subr.bf16.mxu0 0
        %7645 = vmatpush1.bf16.msra.mxu0 0
        %7646 = vmatprep.subr.bf16.mxu0 0
        %7647 = vmatpush1.bf16.msra.mxu0 0
        %7648 = vmatprep.subr.bf16.mxu0 0
        %7649 = vmatpush1.bf16.msra.mxu0 0
        %7650 = vmatprep.subr.bf16.mxu0 0
        %7651 = vmatpush1.bf16.msra.mxu0 0
        %7652 = vmatprep.mubr.bf16.mxu0 0
        %7653 = vmatmul.mubr.bf16.gmra.mrb[0].mxu0 %v7612
        %v7654 = vpop.f32.mrb[0].mxu0
        %v7655 = vadd.f32 0.0, %v7654
        %v7656 = vpop.f32.mrb[0].mxu0
        %v7657 = vadd.f32 0.0, %v7656
        %v7658 = vpop.f32.mrb[0].mxu0
        %v7659 = vadd.f32 0.0, %v7658
        %v7660 = vpop.f32.mrb[0].mxu0
        %v7661 = vadd.f32 0.0, %v7660
        %7662 = vdwg.mxu0
        %v7663 = vadd.f32 %v7514, %v7655
        %v7664 = vadd.f32 %v7515, %v7657
        %v7665 = vadd.f32 %v7516, %v7659
        %v7666 = vadd.f32 %v7517, %v7661
        %v7667 = vld [vmem:[#allocation2] sm:$0xf0]
        %v7668 = vld [vmem:[#allocation2 + $0x8] sm:$0xf0]
        %v7669 = vld [vmem:[#allocation2 + $0x10] sm:$0x3f]
        %v7670 = vld [vmem:[#allocation2 + $0x18] sm:$0x3f]
        %v7671 = vpack.c.bf16 %v7669, %v7667
        %v7672 = vpack.c.bf16 %v7670, %v7668
        %s7673 = scalar_lea.vmem %s3, 2640
        %v7674 = vld [vmem:[%s7673] sm:$0xff]
        %v7675 = vld [vmem:[%s7673 + $0x8] sm:$0xff]
        %v7676 = vld [vmem:[%s7673 + $0x10] sm:$0xff]
        %v7677 = vld [vmem:[%s7673 + $0x18] sm:$0xff]
        %v7678 = vld [vmem:[%s7673 + $0x20] sm:$0xff]
        %v7679 = vld [vmem:[%s7673 + $0x28] sm:$0xff]
        %v7680 = vld [vmem:[%s7673 + $0x30] sm:$0xff]
        %v7681 = vld [vmem:[%s7673 + $0x38] sm:$0xff]
        %v7682 = vld [vmem:[%s7673 + $0x40] sm:$0xff]
        %v7683 = vld [vmem:[%s7673 + $0x48] sm:$0xff]
        %v7684 = vld [vmem:[%s7673 + $0x50] sm:$0xff]
        %v7685 = vld [vmem:[%s7673 + $0x58] sm:$0xff]
        %v7686 = vld [vmem:[%s7673 + $0x60] sm:$0xff]
        %v7687 = vld [vmem:[%s7673 + $0x68] sm:$0xff]
        %v7688 = vld [vmem:[%s7673 + $0x70] sm:$0x11]
        %v7691 = vrot.slane %v7671, 2
        %v7692 = vrot.slane %v7672, 2
        %7693 = vrot.lane.b32.xlu0 %v7691, 104
        %v7694 = vpop.permute.xlu0 %7693
        %7695 = vrot.lane.b32.xlu0 %v7692, 104
        %v7696 = vpop.permute.xlu0 %7695
        %v7697 = vsel %vm4593, %v7694, %v7696
        %v7713 = vunpack.c.l.b16 %v7674
        %v7714 = vunpack.c.h.b16 %v7674
        %v7715 = vunpack.c.l.b16 %v7675
        %v7716 = vunpack.c.h.b16 %v7675
        %v7717 = vunpack.c.l.b16 %v7676
        %v7718 = vunpack.c.h.b16 %v7676
        %v7719 = vunpack.c.l.b16 %v7677
        %v7720 = vunpack.c.h.b16 %v7677
        %v7721 = vunpack.c.l.b16 %v7678
        %v7722 = vunpack.c.h.b16 %v7678
        %v7723 = vunpack.c.l.b16 %v7679
        %v7724 = vunpack.c.h.b16 %v7679
        %v7725 = vunpack.c.l.b16 %v7680
        %v7726 = vunpack.c.h.b16 %v7680
        %v7727 = vunpack.c.l.b16 %v7681
        %v7728 = vunpack.c.h.b16 %v7681
        %v7729 = vunpack.c.l.b16 %v7682
        %v7730 = vunpack.c.h.b16 %v7682
        %v7731 = vunpack.c.l.b16 %v7683
        %v7732 = vunpack.c.h.b16 %v7683
        %v7733 = vunpack.c.l.b16 %v7684
        %v7734 = vunpack.c.h.b16 %v7684
        %v7735 = vunpack.c.l.b16 %v7685
        %v7736 = vunpack.c.h.b16 %v7685
        %v7737 = vunpack.c.l.b16 %v7686
        %v7738 = vunpack.c.h.b16 %v7686
        %v7739 = vunpack.c.l.b16 %v7687
        %v7740 = vunpack.c.h.b16 %v7687
        %v7741 = vunpack.c.l.b16 %v7688
        %v7742 = vunpack.c.h.b16 %v7688
        %v7743 = vpack.c.b16 %v7715, %v7713
        %v7744 = vpack.c.b16 %v7716, %v7714
        %v7745 = vpack.c.b16 %v7719, %v7717
        %v7746 = vpack.c.b16 %v7720, %v7718
        %v7747 = vpack.c.b16 %v7723, %v7721
        %v7748 = vpack.c.b16 %v7724, %v7722
        %v7749 = vpack.c.b16 %v7727, %v7725
        %v7750 = vpack.c.b16 %v7728, %v7726
        %v7751 = vpack.c.b16 %v7731, %v7729
        %v7752 = vpack.c.b16 %v7732, %v7730
        %v7753 = vpack.c.b16 %v7735, %v7733
        %v7754 = vpack.c.b16 %v7736, %v7734
        %v7755 = vpack.c.b16 %v7739, %v7737
        %v7756 = vpack.c.b16 %v7740, %v7738
        %v7757 = vpack.c.b16 %v7741, %v7741
        %v7758 = vpack.c.b16 %v7742, %v7742
        %v7774 = vsel %vm4384, %v7697, 0
        %v7777 = vsel %vm4388, %v7757, 0
        %v7780 = vsel %vm4388, %v7758, 0
        %7782 = vmatprep.subr.bf16.mxu0 %v7744
        %7783 = vmatpush1.bf16.msra.mxu0 %v7743
        %7784 = vmatprep.subr.bf16.mxu0 %v7746
        %7785 = vmatpush1.bf16.msra.mxu0 %v7745
        %7786 = vmatprep.subr.bf16.mxu0 %v7748
        %7787 = vmatpush1.bf16.msra.mxu0 %v7747
        %7788 = vmatprep.subr.bf16.mxu0 %v7750
        %7789 = vmatpush1.bf16.msra.mxu0 %v7749
        %7790 = vmatprep.subr.bf16.mxu0 %v7752
        %7791 = vmatpush1.bf16.msra.mxu0 %v7751
        %7792 = vmatprep.subr.bf16.mxu0 %v7754
        %7793 = vmatpush1.bf16.msra.mxu0 %v7753
        %7794 = vmatprep.subr.bf16.mxu0 %v7756
        %7795 = vmatpush1.bf16.msra.mxu0 %v7755
        %7796 = vmatprep.subr.bf16.mxu0 %v7780
        %7797 = vmatpush1.bf16.msra.mxu0 %v7777
        %7798 = vmatprep.subr.bf16.mxu0 0
        %7799 = vmatpush1.bf16.msra.mxu0 0
        %7800 = vmatprep.subr.bf16.mxu0 0
        %7801 = vmatpush1.bf16.msra.mxu0 0
        %7802 = vmatprep.subr.bf16.mxu0 0
        %7803 = vmatpush1.bf16.msra.mxu0 0
        %7804 = vmatprep.subr.bf16.mxu0 0
        %7805 = vmatpush1.bf16.msra.mxu0 0
        %7806 = vmatprep.subr.bf16.mxu0 0
        %7807 = vmatpush1.bf16.msra.mxu0 0
        %7808 = vmatprep.subr.bf16.mxu0 0
        %7809 = vmatpush1.bf16.msra.mxu0 0
        %7810 = vmatprep.subr.bf16.mxu0 0
        %7811 = vmatpush1.bf16.msra.mxu0 0
        %7812 = vmatprep.subr.bf16.mxu0 0
        %7813 = vmatpush1.bf16.msra.mxu0 0
        %7814 = vmatprep.mubr.bf16.mxu0 0
        %7815 = vmatmul.mubr.bf16.gmra.mrb[0].mxu0 %v7774
        %v7816 = vpop.f32.mrb[0].mxu0
        %v7817 = vadd.f32 0.0, %v7816
        %v7818 = vpop.f32.mrb[0].mxu0
        %v7819 = vadd.f32 0.0, %v7818
        %v7820 = vpop.f32.mrb[0].mxu0
        %v7821 = vadd.f32 0.0, %v7820
        %v7822 = vpop.f32.mrb[0].mxu0
        %v7823 = vadd.f32 0.0, %v7822
        %7824 = vdwg.mxu0
        %v7825 = vadd.f32 %v7663, %v7817
        %v7826 = vadd.f32 %v7664, %v7819
        %v7827 = vadd.f32 %v7665, %v7821
        %v7828 = vadd.f32 %v7666, %v7823
        %s7829 = scalar_lea.vmem %s3, 2760
        %v7830 = vld [vmem:[%s7829] sm:$0xff]
        %v7831 = vld [vmem:[%s7829 + $0x8] sm:$0xff]
        %v7832 = vld [vmem:[%s7829 + $0x10] sm:$0xff]
        %v7833 = vld [vmem:[%s7829 + $0x18] sm:$0xff]
        %v7834 = vld [vmem:[%s7829 + $0x20] sm:$0xff]
        %v7835 = vld [vmem:[%s7829 + $0x28] sm:$0xff]
        %v7836 = vld [vmem:[%s7829 + $0x30] sm:$0xff]
        %v7837 = vld [vmem:[%s7829 + $0x38] sm:$0xff]
        %v7838 = vld [vmem:[%s7829 + $0x40] sm:$0xff]
        %v7839 = vld [vmem:[%s7829 + $0x48] sm:$0xff]
        %v7840 = vld [vmem:[%s7829 + $0x50] sm:$0xff]
        %v7841 = vld [vmem:[%s7829 + $0x58] sm:$0xff]
        %v7842 = vld [vmem:[%s7829 + $0x60] sm:$0xff]
        %v7843 = vld [vmem:[%s7829 + $0x68] sm:$0xff]
        %v7844 = vld [vmem:[%s7829 + $0x70] sm:$0x11]
        %7845 = vrot.lane.b32.xlu0 %v7691, 92
        %v7846 = vpop.permute.xlu0 %7845
        %7847 = vrot.lane.b32.xlu0 %v7692, 92
        %v7848 = vpop.permute.xlu0 %7847
        %v7849 = vsel %vm4746, %v7846, %v7848
        %v7865 = vunpack.c.l.b16 %v7830
        %v7866 = vunpack.c.h.b16 %v7830
        %v7867 = vunpack.c.l.b16 %v7831
        %v7868 = vunpack.c.h.b16 %v7831
        %v7869 = vunpack.c.l.b16 %v7832
        %v7870 = vunpack.c.h.b16 %v7832
        %v7871 = vunpack.c.l.b16 %v7833
        %v7872 = vunpack.c.h.b16 %v7833
        %v7873 = vunpack.c.l.b16 %v7834
        %v7874 = vunpack.c.h.b16 %v7834
        %v7875 = vunpack.c.l.b16 %v7835
        %v7876 = vunpack.c.h.b16 %v7835
        %v7877 = vunpack.c.l.b16 %v7836
        %v7878 = vunpack.c.h.b16 %v7836
        %v7879 = vunpack.c.l.b16 %v7837
        %v7880 = vunpack.c.h.b16 %v7837
        %v7881 = vunpack.c.l.b16 %v7838
        %v7882 = vunpack.c.h.b16 %v7838
        %v7883 = vunpack.c.l.b16 %v7839
        %v7884 = vunpack.c.h.b16 %v7839
        %v7885 = vunpack.c.l.b16 %v7840
        %v7886 = vunpack.c.h.b16 %v7840
        %v7887 = vunpack.c.l.b16 %v7841
        %v7888 = vunpack.c.h.b16 %v7841
        %v7889 = vunpack.c.l.b16 %v7842
        %v7890 = vunpack.c.h.b16 %v7842
        %v7891 = vunpack.c.l.b16 %v7843
        %v7892 = vunpack.c.h.b16 %v7843
        %v7893 = vunpack.c.l.b16 %v7844
        %v7894 = vunpack.c.h.b16 %v7844
        %v7895 = vpack.c.b16 %v7867, %v7865
        %v7896 = vpack.c.b16 %v7868, %v7866
        %v7897 = vpack.c.b16 %v7871, %v7869
        %v7898 = vpack.c.b16 %v7872, %v7870
        %v7899 = vpack.c.b16 %v7875, %v7873
        %v7900 = vpack.c.b16 %v7876, %v7874
        %v7901 = vpack.c.b16 %v7879, %v7877
        %v7902 = vpack.c.b16 %v7880, %v7878
        %v7903 = vpack.c.b16 %v7883, %v7881
        %v7904 = vpack.c.b16 %v7884, %v7882
        %v7905 = vpack.c.b16 %v7887, %v7885
        %v7906 = vpack.c.b16 %v7888, %v7886
        %v7907 = vpack.c.b16 %v7891, %v7889
        %v7908 = vpack.c.b16 %v7892, %v7890
        %v7909 = vpack.c.b16 %v7893, %v7893
        %v7910 = vpack.c.b16 %v7894, %v7894
        %v7926 = vsel %vm4384, %v7849, 0
        %v7929 = vsel %vm4388, %v7909, 0
        %v7932 = vsel %vm4388, %v7910, 0
        %7934 = vmatprep.subr.bf16.mxu0 %v7896
        %7935 = vmatpush1.bf16.msra.mxu0 %v7895
        %7936 = vmatprep.subr.bf16.mxu0 %v7898
        %7937 = vmatpush1.bf16.msra.mxu0 %v7897
        %7938 = vmatprep.subr.bf16.mxu0 %v7900
        %7939 = vmatpush1.bf16.msra.mxu0 %v7899
        %7940 = vmatprep.subr.bf16.mxu0 %v7902
        %7941 = vmatpush1.bf16.msra.mxu0 %v7901
        %7942 = vmatprep.subr.bf16.mxu0 %v7904
        %7943 = vmatpush1.bf16.msra.mxu0 %v7903
        %7944 = vmatprep.subr.bf16.mxu0 %v7906
        %7945 = vmatpush1.bf16.msra.mxu0 %v7905
        %7946 = vmatprep.subr.bf16.mxu0 %v7908
        %7947 = vmatpush1.bf16.msra.mxu0 %v7907
        %7948 = vmatprep.subr.bf16.mxu0 %v7932
        %7949 = vmatpush1.bf16.msra.mxu0 %v7929
        %7950 = vmatprep.subr.bf16.mxu0 0
        %7951 = vmatpush1.bf16.msra.mxu0 0
        %7952 = vmatprep.subr.bf16.mxu0 0
        %7953 = vmatpush1.bf16.msra.mxu0 0
        %7954 = vmatprep.subr.bf16.mxu0 0
        %7955 = vmatpush1.bf16.msra.mxu0 0
        %7956 = vmatprep.subr.bf16.mxu0 0
        %7957 = vmatpush1.bf16.msra.mxu0 0
        %7958 = vmatprep.subr.bf16.mxu0 0
        %7959 = vmatpush1.bf16.msra.mxu0 0
        %7960 = vmatprep.subr.bf16.mxu0 0
        %7961 = vmatpush1.bf16.msra.mxu0 0
        %7962 = vmatprep.subr.bf16.mxu0 0
        %7963 = vmatpush1.bf16.msra.mxu0 0
        %7964 = vmatprep.subr.bf16.mxu0 0
        %7965 = vmatpush1.bf16.msra.mxu0 0
        %7966 = vmatprep.mubr.bf16.mxu0 0
        %7967 = vmatmul.mubr.bf16.gmra.mrb[0].mxu0 %v7926
        %v7968 = vpop.f32.mrb[0].mxu0
        %v7969 = vadd.f32 0.0, %v7968
        %v7970 = vpop.f32.mrb[0].mxu0
        %v7971 = vadd.f32 0.0, %v7970
        %v7972 = vpop.f32.mrb[0].mxu0
        %v7973 = vadd.f32 0.0, %v7972
        %v7974 = vpop.f32.mrb[0].mxu0
        %v7975 = vadd.f32 0.0, %v7974
        %7976 = vdwg.mxu0
        %v7977 = vadd.f32 %v7825, %v7969
        %v7978 = vadd.f32 %v7826, %v7971
        %v7979 = vadd.f32 %v7827, %v7973
        %v7980 = vadd.f32 %v7828, %v7975
        %s7981 = scalar_lea.vmem %s3, 2880
        %v7982 = vld [vmem:[%s7981] sm:$0xff]
        %v7983 = vld [vmem:[%s7981 + $0x8] sm:$0xff]
        %v7984 = vld [vmem:[%s7981 + $0x10] sm:$0xff]
        %v7985 = vld [vmem:[%s7981 + $0x18] sm:$0xff]
        %v7986 = vld [vmem:[%s7981 + $0x20] sm:$0xff]
        %v7987 = vld [vmem:[%s7981 + $0x28] sm:$0xff]
        %v7988 = vld [vmem:[%s7981 + $0x30] sm:$0xff]
        %v7989 = vld [vmem:[%s7981 + $0x38] sm:$0xff]
        %v7990 = vld [vmem:[%s7981 + $0x40] sm:$0xff]
        %v7991 = vld [vmem:[%s7981 + $0x48] sm:$0xff]
        %v7992 = vld [vmem:[%s7981 + $0x50] sm:$0xff]
        %v7993 = vld [vmem:[%s7981 + $0x58] sm:$0xff]
        %v7994 = vld [vmem:[%s7981 + $0x60] sm:$0xff]
        %v7995 = vld [vmem:[%s7981 + $0x68] sm:$0xff]
        %v7996 = vld [vmem:[%s7981 + $0x70] sm:$0x11]
        %7997 = vrot.lane.b32.xlu0 %v7691, 80
        %v7998 = vpop.permute.xlu0 %7997
        %7999 = vrot.lane.b32.xlu0 %v7692, 80
        %v8000 = vpop.permute.xlu0 %7999
        %v8001 = vsel %vm4899, %v7998, %v8000
        %v8017 = vunpack.c.l.b16 %v7982
        %v8018 = vunpack.c.h.b16 %v7982
        %v8019 = vunpack.c.l.b16 %v7983
        %v8020 = vunpack.c.h.b16 %v7983
        %v8021 = vunpack.c.l.b16 %v7984
        %v8022 = vunpack.c.h.b16 %v7984
        %v8023 = vunpack.c.l.b16 %v7985
        %v8024 = vunpack.c.h.b16 %v7985
        %v8025 = vunpack.c.l.b16 %v7986
        %v8026 = vunpack.c.h.b16 %v7986
        %v8027 = vunpack.c.l.b16 %v7987
        %v8028 = vunpack.c.h.b16 %v7987
        %v8029 = vunpack.c.l.b16 %v7988
        %v8030 = vunpack.c.h.b16 %v7988
        %v8031 = vunpack.c.l.b16 %v7989
        %v8032 = vunpack.c.h.b16 %v7989
        %v8033 = vunpack.c.l.b16 %v7990
        %v8034 = vunpack.c.h.b16 %v7990
        %v8035 = vunpack.c.l.b16 %v7991
        %v8036 = vunpack.c.h.b16 %v7991
        %v8037 = vunpack.c.l.b16 %v7992
        %v8038 = vunpack.c.h.b16 %v7992
        %v8039 = vunpack.c.l.b16 %v7993
        %v8040 = vunpack.c.h.b16 %v7993
        %v8041 = vunpack.c.l.b16 %v7994
        %v8042 = vunpack.c.h.b16 %v7994
        %v8043 = vunpack.c.l.b16 %v7995
        %v8044 = vunpack.c.h.b16 %v7995
        %v8045 = vunpack.c.l.b16 %v7996
        %v8046 = vunpack.c.h.b16 %v7996
        %v8047 = vpack.c.b16 %v8019, %v8017
        %v8048 = vpack.c.b16 %v8020, %v8018
        %v8049 = vpack.c.b16 %v8023, %v8021
        %v8050 = vpack.c.b16 %v8024, %v8022
        %v8051 = vpack.c.b16 %v8027, %v8025
        %v8052 = vpack.c.b16 %v8028, %v8026
        %v8053 = vpack.c.b16 %v8031, %v8029
        %v8054 = vpack.c.b16 %v8032, %v8030
        %v8055 = vpack.c.b16 %v8035, %v8033
        %v8056 = vpack.c.b16 %v8036, %v8034
        %v8057 = vpack.c.b16 %v8039, %v8037
        %v8058 = vpack.c.b16 %v8040, %v8038
        %v8059 = vpack.c.b16 %v8043, %v8041
        %v8060 = vpack.c.b16 %v8044, %v8042
        %v8061 = vpack.c.b16 %v8045, %v8045
        %v8062 = vpack.c.b16 %v8046, %v8046
        %v8078 = vsel %vm4384, %v8001, 0
        %v8081 = vsel %vm4388, %v8061, 0
        %v8084 = vsel %vm4388, %v8062, 0
        %8086 = vmatprep.subr.bf16.mxu0 %v8048
        %8087 = vmatpush1.bf16.msra.mxu0 %v8047
        %8088 = vmatprep.subr.bf16.mxu0 %v8050
        %8089 = vmatpush1.bf16.msra.mxu0 %v8049
        %8090 = vmatprep.subr.bf16.mxu0 %v8052
        %8091 = vmatpush1.bf16.msra.mxu0 %v8051
        %8092 = vmatprep.subr.bf16.mxu0 %v8054
        %8093 = vmatpush1.bf16.msra.mxu0 %v8053
        %8094 = vmatprep.subr.bf16.mxu0 %v8056
        %8095 = vmatpush1.bf16.msra.mxu0 %v8055
        %8096 = vmatprep.subr.bf16.mxu0 %v8058
        %8097 = vmatpush1.bf16.msra.mxu0 %v8057
        %8098 = vmatprep.subr.bf16.mxu0 %v8060
        %8099 = vmatpush1.bf16.msra.mxu0 %v8059
        %8100 = vmatprep.subr.bf16.mxu0 %v8084
        %8101 = vmatpush1.bf16.msra.mxu0 %v8081
        %8102 = vmatprep.subr.bf16.mxu0 0
        %8103 = vmatpush1.bf16.msra.mxu0 0
        %8104 = vmatprep.subr.bf16.mxu0 0
        %8105 = vmatpush1.bf16.msra.mxu0 0
        %8106 = vmatprep.subr.bf16.mxu0 0
        %8107 = vmatpush1.bf16.msra.mxu0 0
        %8108 = vmatprep.subr.bf16.mxu0 0
        %8109 = vmatpush1.bf16.msra.mxu0 0
        %8110 = vmatprep.subr.bf16.mxu0 0
        %8111 = vmatpush1.bf16.msra.mxu0 0
        %8112 = vmatprep.subr.bf16.mxu0 0
        %8113 = vmatpush1.bf16.msra.mxu0 0
        %8114 = vmatprep.subr.bf16.mxu0 0
        %8115 = vmatpush1.bf16.msra.mxu0 0
        %8116 = vmatprep.subr.bf16.mxu0 0
        %8117 = vmatpush1.bf16.msra.mxu0 0
        %8118 = vmatprep.mubr.bf16.mxu0 0
        %8119 = vmatmul.mubr.bf16.gmra.mrb[0].mxu0 %v8078
        %v8120 = vpop.f32.mrb[0].mxu0
        %v8121 = vadd.f32 0.0, %v8120
        %v8122 = vpop.f32.mrb[0].mxu0
        %v8123 = vadd.f32 0.0, %v8122
        %v8124 = vpop.f32.mrb[0].mxu0
        %v8125 = vadd.f32 0.0, %v8124
        %v8126 = vpop.f32.mrb[0].mxu0
        %v8127 = vadd.f32 0.0, %v8126
        %8128 = vdwg.mxu0
        %v8129 = vadd.f32 %v7977, %v8121
        %v8130 = vadd.f32 %v7978, %v8123
        %v8131 = vadd.f32 %v7979, %v8125
        %v8132 = vadd.f32 %v7980, %v8127
        %v8133 = vld [vmem:[%s4] sm:$0x3]
        %v8135 = vlaneseq
        %v8136 = vshrl.u32 %v8135, 7
        %v8137 = vsub.s32 0, %v8136
        %v8138 = vrot.slane %v8133, %v8137
        %v8139 = vlaneseq
        %v8140 = vshrl.u32 %v8139, 7
        %v8141 = vsub.s32 1, %v8140
        %v8142 = vrot.slane %v8133, %v8141
        %v8145 = vadd.f32 %v8129, %v8138
        %v8146 = vadd.f32 %v8130, %v8142
        %v8147 = vadd.f32 %v8131, %v8138
        %v8148 = vadd.f32 %v8132, %v8142
        %v8149 = vmax.f32 %v8145, 0.0
        %v8150 = vmax.f32 %v8146, 0.0
        %v8151 = vmax.f32 %v8147, 0.0
        %v8152 = vmax.f32 %v8148, 0.0
        %v8155 = vrot.slane %v8149, 1
        %v8156 = vrot.slane %v8150, 1
        %v8159 = vmax.f32 %v8149, %v8155
        %v8160 = vmax.f32 %v8150, %v8156
        %8163 = vrot.lane.b32.xlu0 %v8159, 112
        %v8164 = vpop.permute.xlu0 %8163
        %8165 = vrot.lane.b32.xlu0 %v8160, 112
        %v8166 = vpop.permute.xlu0 %8165
        %vm8167 = vcmask 916480
        %v8168 = vsel %vm8167, %v8164, %v8166
        %v8171 = vmax.f32 %v8159, %v8168
        %v8172 = vmax.f32 %v8160, %v8166
        %v8175 = vcombine.low %v8171, %v8172
        %v8177 = vunpack.c.l.s4 1966171168
        %v8178 = vunpack.c.0.s8 %v8177
        %v8179 = vlaneseq
        %v8180 = vshrl.u32 %v8179, 7
        %v8181 = vsub.s32 %v8178, %v8180
        %v8182 = vrot.slane %v8175, %v8181
        %v8184 = vunpack.c.l.s4 1966171168
        %v8185 = vunpack.c.0.s8 %v8184
        %v8186 = vlaneseq
        %v8187 = vshrl.u32 %v8186, 7
        %v8188 = vsub.s32 %v8185, %v8187
        %v8189 = vrot.slane %v8182, %v8188
        %vm8191 = vcmp.lt.s32.totalorder %v4054, 144
        %vm8192 = vmand %vm4055, %vm8191
        %8193 = vst.msk [vmem:[#allocation3] ss:$8 sm:$0x3] %vm8192, %v8189
        %8194 = vst.msk [vmem:[#allocation3] ss:$8 sm:$0x0] %vm8192, %v8189
        %v8195 = vcombine.high %v8189, %v8189
        %s8197 = scalar_lea.vmem [#allocation3], 1
        %8198 = vst.msk [vmem:[%s8197] ss:$8 sm:$0x3] %vm8192, %v8195
        %8199 = vst.msk [vmem:[%s8197] ss:$8 sm:$0x0] %vm8192, %v8195
        %v8200 = vcombine.high %v8171, %v8172
        %v8202 = vunpack.c.l.s4 1966171168
        %v8203 = vunpack.c.0.s8 %v8202
        %v8204 = vlaneseq
        %v8205 = vshrl.u32 %v8204, 7
        %v8206 = vsub.s32 %v8203, %v8205
        %v8207 = vrot.slane %v8200, %v8206
        %v8209 = vunpack.c.l.s4 1966171168
        %v8210 = vunpack.c.0.s8 %v8209
        %v8211 = vlaneseq
        %v8212 = vshrl.u32 %v8211, 7
        %v8213 = vsub.s32 %v8210, %v8212
        %v8214 = vrot.slane %v8207, %v8213
        %s8216 = scalar_lea.vmem [#allocation3], 2
        %8217 = vst.msk [vmem:[%s8216] ss:$8 sm:$0x3] %vm8192, %v8214
        %8218 = vst.msk [vmem:[%s8216] ss:$8 sm:$0x0] %vm8192, %v8214
        %v8219 = vcombine.high %v8214, %v8214
        %s8221 = scalar_lea.vmem [#allocation3], 3
        %8222 = vst.msk [vmem:[%s8221] ss:$8 sm:$0x3] %vm8192, %v8219
        %8223 = vst.msk [vmem:[%s8221] ss:$8 sm:$0x0] %vm8192, %v8219
        %v8226 = vrot.slane %v8151, 1
        %v8227 = vrot.slane %v8152, 1
        %v8230 = vmax.f32 %v8151, %v8226
        %v8231 = vmax.f32 %v8152, %v8227
        %8234 = vrot.lane.b32.xlu0 %v8230, 112
        %v8235 = vpop.permute.xlu0 %8234
        %8236 = vrot.lane.b32.xlu0 %v8231, 112
        %v8237 = vpop.permute.xlu0 %8236
        %v8238 = vsel %vm8167, %v8235, %v8237
        %v8241 = vmax.f32 %v8230, %v8238
        %v8242 = vmax.f32 %v8231, %v8237
        %v8245 = vcombine.low %v8241, %v8242
        %v8247 = vunpack.c.l.s4 1966171168
        %v8248 = vunpack.c.0.s8 %v8247
        %v8249 = vlaneseq
        %v8250 = vshrl.u32 %v8249, 7
        %v8251 = vsub.s32 %v8248, %v8250
        %v8252 = vrot.slane %v8245, %v8251
        %v8254 = vunpack.c.l.s4 1966171168
        %v8255 = vunpack.c.0.s8 %v8254
        %v8256 = vlaneseq
        %v8257 = vshrl.u32 %v8256, 7
        %v8258 = vsub.s32 %v8255, %v8257
        %v8259 = vrot.slane %v8252, %v8258
        %s8261 = scalar_lea.vmem [#allocation3], 4
        %8262 = vst.msk [vmem:[%s8261] ss:$8 sm:$0x3] %vm8192, %v8259
        %8263 = vst.msk [vmem:[%s8261] ss:$8 sm:$0x0] %vm8192, %v8259
        %v8264 = vld [vmem:[#allocation3] ss:$8 sm:$0x3]
        %v8266 = vlaneseq
        %v8267 = vshrl.u32 %v8266, 7
        %v8268 = vsub.s32 0, %v8267
        %v8269 = vrot.slane %v8264, %v8268
        %v8270 = vlaneseq
        %v8271 = vshrl.u32 %v8270, 7
        %v8272 = vsub.s32 1, %v8271
        %v8273 = vrot.slane %v8264, %v8272
        %v8276 = vpack.c.bf16 %v8269, %v8269
        %v8277 = vpack.c.bf16 %v8273, %v8273
        %v8278 = vld [vmem:[%s5] sm:$0xf]
        %v8279 = vld [vmem:[%s5 + $0x4] sm:$0xf]
        %v8280 = vld [vmem:[%s5 + $0x8] sm:$0xf]
        %v8281 = vld [vmem:[%s5 + $0xc] sm:$0xf]
        %v8282 = vld [vmem:[%s5 + $0x10] sm:$0xf]
        %v8283 = vld [vmem:[%s5 + $0x14] sm:$0xf]
        %v8284 = vld [vmem:[%s5 + $0x18] sm:$0xf]
        %v8285 = vld [vmem:[%s5 + $0x1c] sm:$0xf]
        %v8286 = vld [vmem:[%s5 + $0x20] sm:$0xf]
        %v8287 = vld [vmem:[%s5 + $0x24] sm:$0xf]
        %v8288 = vld [vmem:[%s5 + $0x28] sm:$0xf]
        %v8289 = vld [vmem:[%s5 + $0x2c] sm:$0xf]
        %v8290 = vld [vmem:[%s5 + $0x30] sm:$0xf]
        %v8291 = vld [vmem:[%s5 + $0x34] sm:$0xf]
        %v8292 = vld [vmem:[%s5 + $0x38] sm:$0xf]
        %v8293 = vld [vmem:[%s5 + $0x3c] sm:$0xf]
        %v8294 = vld [vmem:[%s5 + $0x40] sm:$0xf]
        %v8295 = vld [vmem:[%s5 + $0x44] sm:$0xf]
        %v8296 = vld [vmem:[%s8197] ss:$8 sm:$0x3]
        %v8298 = vlaneseq
        %v8299 = vshrl.u32 %v8298, 7
        %v8300 = vsub.s32 0, %v8299
        %v8301 = vrot.slane %v8296, %v8300
        %v8302 = vlaneseq
        %v8303 = vshrl.u32 %v8302, 7
        %v8304 = vsub.s32 1, %v8303
        %v8305 = vrot.slane %v8296, %v8304
        %v8308 = vpack.c.bf16 %v8301, %v8301
        %v8309 = vpack.c.bf16 %v8305, %v8305
        %s8310 = scalar_lea.vmem %s5, 72
        %v8311 = vld [vmem:[%s8310] sm:$0xf]
        %v8312 = vld [vmem:[%s8310 + $0x4] sm:$0xf]
        %v8313 = vld [vmem:[%s8310 + $0x8] sm:$0xf]
        %v8314 = vld [vmem:[%s8310 + $0xc] sm:$0xf]
        %v8315 = vld [vmem:[%s8310 + $0x10] sm:$0xf]
        %v8316 = vld [vmem:[%s8310 + $0x14] sm:$0xf]
        %v8317 = vld [vmem:[%s8310 + $0x18] sm:$0xf]
        %v8318 = vld [vmem:[%s8310 + $0x1c] sm:$0xf]
        %v8319 = vld [vmem:[%s8310 + $0x20] sm:$0xf]
        %v8320 = vld [vmem:[%s8310 + $0x24] sm:$0xf]
        %v8321 = vld [vmem:[%s8310 + $0x28] sm:$0xf]
        %v8322 = vld [vmem:[%s8310 + $0x2c] sm:$0xf]
        %v8323 = vld [vmem:[%s8310 + $0x30] sm:$0xf]
        %v8324 = vld [vmem:[%s8310 + $0x34] sm:$0xf]
        %v8325 = vld [vmem:[%s8310 + $0x38] sm:$0xf]
        %v8326 = vld [vmem:[%s8310 + $0x3c] sm:$0xf]
        %v8327 = vld [vmem:[%s8310 + $0x40] sm:$0xf]
        %v8328 = vld [vmem:[%s8310 + $0x44] sm:$0xf]
        %v8347 = vunpack.c.l.b16 %v8311
        %v8348 = vunpack.c.l.b16 %v8312
        %v8349 = vunpack.c.l.b16 %v8313
        %v8350 = vunpack.c.l.b16 %v8314
        %v8351 = vunpack.c.l.b16 %v8315
        %v8352 = vunpack.c.l.b16 %v8316
        %v8353 = vunpack.c.l.b16 %v8317
        %v8354 = vunpack.c.l.b16 %v8318
        %v8355 = vunpack.c.l.b16 %v8319
        %v8356 = vunpack.c.l.b16 %v8320
        %v8357 = vunpack.c.l.b16 %v8321
        %v8358 = vunpack.c.l.b16 %v8322
        %v8359 = vunpack.c.l.b16 %v8323
        %v8360 = vunpack.c.l.b16 %v8324
        %v8361 = vunpack.c.l.b16 %v8325
        %v8362 = vunpack.c.l.b16 %v8326
        %v8363 = vunpack.c.l.b16 %v8327
        %v8364 = vunpack.c.l.b16 %v8328
        %v8365 = vpack.c.b16 %v8348, %v8347
        %v8366 = vpack.c.b16 %v8350, %v8349
        %v8367 = vpack.c.b16 %v8352, %v8351
        %v8368 = vpack.c.b16 %v8354, %v8353
        %v8369 = vpack.c.b16 %v8356, %v8355
        %v8370 = vpack.c.b16 %v8358, %v8357
        %v8371 = vpack.c.b16 %v8360, %v8359
        %v8372 = vpack.c.b16 %v8362, %v8361
        %v8373 = vpack.c.b16 %v8364, %v8363
        %vm8383 = vcmask 130048
        %v8385 = vsel %vm8383, %v8309, 0
        %8387 = vmatprep.subr.bf16.mxu0 0
        %8388 = vmatpush1.bf16.msra.mxu0 %v8365
        %8389 = vmatprep.subr.bf16.mxu0 0
        %8390 = vmatpush1.bf16.msra.mxu0 %v8366
        %8391 = vmatprep.subr.bf16.mxu0 0
        %8392 = vmatpush1.bf16.msra.mxu0 %v8367
        %8393 = vmatprep.subr.bf16.mxu0 0
        %8394 = vmatpush1.bf16.msra.mxu0 %v8368
        %8395 = vmatprep.subr.bf16.mxu0 0
        %8396 = vmatpush1.bf16.msra.mxu0 %v8369
        %8397 = vmatprep.subr.bf16.mxu0 0
        %8398 = vmatpush1.bf16.msra.mxu0 %v8370
        %8399 = vmatprep.subr.bf16.mxu0 0
        %8400 = vmatpush1.bf16.msra.mxu0 %v8371
        %8401 = vmatprep.subr.bf16.mxu0 0
        %8402 = vmatpush1.bf16.msra.mxu0 %v8372
        %8403 = vmatprep.subr.bf16.mxu0 0
        %8404 = vmatpush1.bf16.msra.mxu0 %v8373
        %8405 = vmatprep.subr.bf16.mxu0 0
        %8406 = vmatpush1.bf16.msra.mxu0 0
        %8407 = vmatprep.subr.bf16.mxu0 0
        %8408 = vmatpush1.bf16.msra.mxu0 0
        %8409 = vmatprep.subr.bf16.mxu0 0
        %8410 = vmatpush1.bf16.msra.mxu0 0
        %8411 = vmatprep.subr.bf16.mxu0 0
        %8412 = vmatpush1.bf16.msra.mxu0 0
        %8413 = vmatprep.subr.bf16.mxu0 0
        %8414 = vmatpush1.bf16.msra.mxu0 0
        %8415 = vmatprep.subr.bf16.mxu0 0
        %8416 = vmatpush1.bf16.msra.mxu0 0
        %8417 = vmatprep.subr.bf16.mxu0 0
        %8418 = vmatpush1.bf16.msra.mxu0 0
        %8419 = vmatprep.mubr.bf16.mxu0 %v8385
        %8420 = vmatmul.mubr.bf16.gmra.mrb[0].mxu0 %v8308
        %v8421 = vpop.f32.mrb[0].mxu0
        %v8422 = vadd.f32 0.0, %v8421
        %v8423 = vpop.f32.mrb[0].mxu0
        %v8424 = vpop.f32.mrb[0].mxu0
        %v8425 = vpop.f32.mrb[0].mxu0
        %8426 = vdwg.mxu0
        %v8445 = vunpack.c.l.b16 %v8278
        %v8446 = vunpack.c.l.b16 %v8279
        %v8447 = vunpack.c.l.b16 %v8280
        %v8448 = vunpack.c.l.b16 %v8281
        %v8449 = vunpack.c.l.b16 %v8282
        %v8450 = vunpack.c.l.b16 %v8283
        %v8451 = vunpack.c.l.b16 %v8284
        %v8452 = vunpack.c.l.b16 %v8285
        %v8453 = vunpack.c.l.b16 %v8286
        %v8454 = vunpack.c.l.b16 %v8287
        %v8455 = vunpack.c.l.b16 %v8288
        %v8456 = vunpack.c.l.b16 %v8289
        %v8457 = vunpack.c.l.b16 %v8290
        %v8458 = vunpack.c.l.b16 %v8291
        %v8459 = vunpack.c.l.b16 %v8292
        %v8460 = vunpack.c.l.b16 %v8293
        %v8461 = vunpack.c.l.b16 %v8294
        %v8462 = vunpack.c.l.b16 %v8295
        %v8463 = vpack.c.b16 %v8446, %v8445
        %v8464 = vpack.c.b16 %v8448, %v8447
        %v8465 = vpack.c.b16 %v8450, %v8449
        %v8466 = vpack.c.b16 %v8452, %v8451
        %v8467 = vpack.c.b16 %v8454, %v8453
        %v8468 = vpack.c.b16 %v8456, %v8455
        %v8469 = vpack.c.b16 %v8458, %v8457
        %v8470 = vpack.c.b16 %v8460, %v8459
        %v8471 = vpack.c.b16 %v8462, %v8461
        %v8482 = vsel %vm8383, %v8277, 0
        %8484 = vmatprep.subr.bf16.mxu0 0
        %8485 = vmatpush1.bf16.msra.mxu0 %v8463
        %8486 = vmatprep.subr.bf16.mxu0 0
        %8487 = vmatpush1.bf16.msra.mxu0 %v8464
        %8488 = vmatprep.subr.bf16.mxu0 0
        %8489 = vmatpush1.bf16.msra.mxu0 %v8465
        %8490 = vmatprep.subr.bf16.mxu0 0
        %8491 = vmatpush1.bf16.msra.mxu0 %v8466
        %8492 = vmatprep.subr.bf16.mxu0 0
        %8493 = vmatpush1.bf16.msra.mxu0 %v8467
        %8494 = vmatprep.subr.bf16.mxu0 0
        %8495 = vmatpush1.bf16.msra.mxu0 %v8468
        %8496 = vmatprep.subr.bf16.mxu0 0
        %8497 = vmatpush1.bf16.msra.mxu0 %v8469
        %8498 = vmatprep.subr.bf16.mxu0 0
        %8499 = vmatpush1.bf16.msra.mxu0 %v8470
        %8500 = vmatprep.subr.bf16.mxu0 0
        %8501 = vmatpush1.bf16.msra.mxu0 %v8471
        %8502 = vmatprep.subr.bf16.mxu0 0
        %8503 = vmatpush1.bf16.msra.mxu0 0
        %8504 = vmatprep.subr.bf16.mxu0 0
        %8505 = vmatpush1.bf16.msra.mxu0 0
        %8506 = vmatprep.subr.bf16.mxu0 0
        %8507 = vmatpush1.bf16.msra.mxu0 0
        %8508 = vmatprep.subr.bf16.mxu0 0
        %8509 = vmatpush1.bf16.msra.mxu0 0
        %8510 = vmatprep.subr.bf16.mxu0 0
        %8511 = vmatpush1.bf16.msra.mxu0 0
        %8512 = vmatprep.subr.bf16.mxu0 0
        %8513 = vmatpush1.bf16.msra.mxu0 0
        %8514 = vmatprep.subr.bf16.mxu0 0
        %8515 = vmatpush1.bf16.msra.mxu0 0
        %8516 = vmatprep.mubr.bf16.mxu0 %v8482
        %8517 = vmatmul.mubr.bf16.gmra.mrb[0].mxu0 %v8276
        %v8518 = vpop.f32.mrb[0].mxu0
        %v8519 = vadd.f32 %v8422, %v8518
        %v8520 = vpop.f32.mrb[0].mxu0
        %v8521 = vpop.f32.mrb[0].mxu0
        %v8522 = vpop.f32.mrb[0].mxu0
        %8523 = vdwg.mxu0
        %v8524 = vld [vmem:[%s8216] ss:$8 sm:$0x3]
        %v8526 = vlaneseq
        %v8527 = vshrl.u32 %v8526, 7
        %v8528 = vsub.s32 0, %v8527
        %v8529 = vrot.slane %v8524, %v8528
        %v8530 = vlaneseq
        %v8531 = vshrl.u32 %v8530, 7
        %v8532 = vsub.s32 1, %v8531
        %v8533 = vrot.slane %v8524, %v8532
        %v8536 = vpack.c.bf16 %v8529, %v8529
        %v8537 = vpack.c.bf16 %v8533, %v8533
        %s8538 = scalar_lea.vmem %s5, 144
        %v8539 = vld [vmem:[%s8538] sm:$0xf]
        %v8540 = vld [vmem:[%s8538 + $0x4] sm:$0xf]
        %v8541 = vld [vmem:[%s8538 + $0x8] sm:$0xf]
        %v8542 = vld [vmem:[%s8538 + $0xc] sm:$0xf]
        %v8543 = vld [vmem:[%s8538 + $0x10] sm:$0xf]
        %v8544 = vld [vmem:[%s8538 + $0x14] sm:$0xf]
        %v8545 = vld [vmem:[%s8538 + $0x18] sm:$0xf]
        %v8546 = vld [vmem:[%s8538 + $0x1c] sm:$0xf]
        %v8547 = vld [vmem:[%s8538 + $0x20] sm:$0xf]
        %v8548 = vld [vmem:[%s8538 + $0x24] sm:$0xf]
        %v8549 = vld [vmem:[%s8538 + $0x28] sm:$0xf]
        %v8550 = vld [vmem:[%s8538 + $0x2c] sm:$0xf]
        %v8551 = vld [vmem:[%s8538 + $0x30] sm:$0xf]
        %v8552 = vld [vmem:[%s8538 + $0x34] sm:$0xf]
        %v8553 = vld [vmem:[%s8538 + $0x38] sm:$0xf]
        %v8554 = vld [vmem:[%s8538 + $0x3c] sm:$0xf]
        %v8555 = vld [vmem:[%s8538 + $0x40] sm:$0xf]
        %v8556 = vld [vmem:[%s8538 + $0x44] sm:$0xf]
        %v8575 = vunpack.c.l.b16 %v8539
        %v8576 = vunpack.c.l.b16 %v8540
        %v8577 = vunpack.c.l.b16 %v8541
        %v8578 = vunpack.c.l.b16 %v8542
        %v8579 = vunpack.c.l.b16 %v8543
        %v8580 = vunpack.c.l.b16 %v8544
        %v8581 = vunpack.c.l.b16 %v8545
        %v8582 = vunpack.c.l.b16 %v8546
        %v8583 = vunpack.c.l.b16 %v8547
        %v8584 = vunpack.c.l.b16 %v8548
        %v8585 = vunpack.c.l.b16 %v8549
        %v8586 = vunpack.c.l.b16 %v8550
        %v8587 = vunpack.c.l.b16 %v8551
        %v8588 = vunpack.c.l.b16 %v8552
        %v8589 = vunpack.c.l.b16 %v8553
        %v8590 = vunpack.c.l.b16 %v8554
        %v8591 = vunpack.c.l.b16 %v8555
        %v8592 = vunpack.c.l.b16 %v8556
        %v8593 = vpack.c.b16 %v8576, %v8575
        %v8594 = vpack.c.b16 %v8578, %v8577
        %v8595 = vpack.c.b16 %v8580, %v8579
        %v8596 = vpack.c.b16 %v8582, %v8581
        %v8597 = vpack.c.b16 %v8584, %v8583
        %v8598 = vpack.c.b16 %v8586, %v8585
        %v8599 = vpack.c.b16 %v8588, %v8587
        %v8600 = vpack.c.b16 %v8590, %v8589
        %v8601 = vpack.c.b16 %v8592, %v8591
        %v8612 = vsel %vm8383, %v8537, 0
        %8614 = vmatprep.subr.bf16.mxu0 0
        %8615 = vmatpush1.bf16.msra.mxu0 %v8593
        %8616 = vmatprep.subr.bf16.mxu0 0
        %8617 = vmatpush1.bf16.msra.mxu0 %v8594
        %8618 = vmatprep.subr.bf16.mxu0 0
        %8619 = vmatpush1.bf16.msra.mxu0 %v8595
        %8620 = vmatprep.subr.bf16.mxu0 0
        %8621 = vmatpush1.bf16.msra.mxu0 %v8596
        %8622 = vmatprep.subr.bf16.mxu0 0
        %8623 = vmatpush1.bf16.msra.mxu0 %v8597
        %8624 = vmatprep.subr.bf16.mxu0 0
        %8625 = vmatpush1.bf16.msra.mxu0 %v8598
        %8626 = vmatprep.subr.bf16.mxu0 0
        %8627 = vmatpush1.bf16.msra.mxu0 %v8599
        %8628 = vmatprep.subr.bf16.mxu0 0
        %8629 = vmatpush1.bf16.msra.mxu0 %v8600
        %8630 = vmatprep.subr.bf16.mxu0 0
        %8631 = vmatpush1.bf16.msra.mxu0 %v8601
        %8632 = vmatprep.subr.bf16.mxu0 0
        %8633 = vmatpush1.bf16.msra.mxu0 0
        %8634 = vmatprep.subr.bf16.mxu0 0
        %8635 = vmatpush1.bf16.msra.mxu0 0
        %8636 = vmatprep.subr.bf16.mxu0 0
        %8637 = vmatpush1.bf16.msra.mxu0 0
        %8638 = vmatprep.subr.bf16.mxu0 0
        %8639 = vmatpush1.bf16.msra.mxu0 0
        %8640 = vmatprep.subr.bf16.mxu0 0
        %8641 = vmatpush1.bf16.msra.mxu0 0
        %8642 = vmatprep.subr.bf16.mxu0 0
        %8643 = vmatpush1.bf16.msra.mxu0 0
        %8644 = vmatprep.subr.bf16.mxu0 0
        %8645 = vmatpush1.bf16.msra.mxu0 0
        %8646 = vmatprep.mubr.bf16.mxu0 %v8612
        %8647 = vmatmul.mubr.bf16.gmra.mrb[0].mxu0 %v8536
        %v8648 = vpop.f32.mrb[0].mxu0
        %v8649 = vadd.f32 0.0, %v8648
        %v8650 = vpop.f32.mrb[0].mxu0
        %v8651 = vpop.f32.mrb[0].mxu0
        %v8652 = vpop.f32.mrb[0].mxu0
        %8653 = vdwg.mxu0
        %v8654 = vadd.f32 %v8519, %v8649
        %v8655 = vld [vmem:[%s8221] ss:$8 sm:$0x3]
        %v8657 = vlaneseq
        %v8658 = vshrl.u32 %v8657, 7
        %v8659 = vsub.s32 0, %v8658
        %v8660 = vrot.slane %v8655, %v8659
        %v8661 = vlaneseq
        %v8662 = vshrl.u32 %v8661, 7
        %v8663 = vsub.s32 1, %v8662
        %v8664 = vrot.slane %v8655, %v8663
        %v8667 = vpack.c.bf16 %v8660, %v8660
        %v8668 = vpack.c.bf16 %v8664, %v8664
        %s8669 = scalar_lea.vmem %s5, 216
        %v8670 = vld [vmem:[%s8669] sm:$0xf]
        %v8671 = vld [vmem:[%s8669 + $0x4] sm:$0xf]
        %v8672 = vld [vmem:[%s8669 + $0x8] sm:$0xf]
        %v8673 = vld [vmem:[%s8669 + $0xc] sm:$0xf]
        %v8674 = vld [vmem:[%s8669 + $0x10] sm:$0xf]
        %v8675 = vld [vmem:[%s8669 + $0x14] sm:$0xf]
        %v8676 = vld [vmem:[%s8669 + $0x18] sm:$0xf]
        %v8677 = vld [vmem:[%s8669 + $0x1c] sm:$0xf]
        %v8678 = vld [vmem:[%s8669 + $0x20] sm:$0xf]
        %v8679 = vld [vmem:[%s8669 + $0x24] sm:$0xf]
        %v8680 = vld [vmem:[%s8669 + $0x28] sm:$0xf]
        %v8681 = vld [vmem:[%s8669 + $0x2c] sm:$0xf]
        %v8682 = vld [vmem:[%s8669 + $0x30] sm:$0xf]
        %v8683 = vld [vmem:[%s8669 + $0x34] sm:$0xf]
        %v8684 = vld [vmem:[%s8669 + $0x38] sm:$0xf]
        %v8685 = vld [vmem:[%s8669 + $0x3c] sm:$0xf]
        %v8686 = vld [vmem:[%s8669 + $0x40] sm:$0xf]
        %v8687 = vld [vmem:[%s8669 + $0x44] sm:$0xf]
        %v8706 = vunpack.c.l.b16 %v8670
        %v8707 = vunpack.c.l.b16 %v8671
        %v8708 = vunpack.c.l.b16 %v8672
        %v8709 = vunpack.c.l.b16 %v8673
        %v8710 = vunpack.c.l.b16 %v8674
        %v8711 = vunpack.c.l.b16 %v8675
        %v8712 = vunpack.c.l.b16 %v8676
        %v8713 = vunpack.c.l.b16 %v8677
        %v8714 = vunpack.c.l.b16 %v8678
        %v8715 = vunpack.c.l.b16 %v8679
        %v8716 = vunpack.c.l.b16 %v8680
        %v8717 = vunpack.c.l.b16 %v8681
        %v8718 = vunpack.c.l.b16 %v8682
        %v8719 = vunpack.c.l.b16 %v8683
        %v8720 = vunpack.c.l.b16 %v8684
        %v8721 = vunpack.c.l.b16 %v8685
        %v8722 = vunpack.c.l.b16 %v8686
        %v8723 = vunpack.c.l.b16 %v8687
        %v8724 = vpack.c.b16 %v8707, %v8706
        %v8725 = vpack.c.b16 %v8709, %v8708
        %v8726 = vpack.c.b16 %v8711, %v8710
        %v8727 = vpack.c.b16 %v8713, %v8712
        %v8728 = vpack.c.b16 %v8715, %v8714
        %v8729 = vpack.c.b16 %v8717, %v8716
        %v8730 = vpack.c.b16 %v8719, %v8718
        %v8731 = vpack.c.b16 %v8721, %v8720
        %v8732 = vpack.c.b16 %v8723, %v8722
        %v8743 = vsel %vm8383, %v8668, 0
        %8745 = vmatprep.subr.bf16.mxu0 0
        %8746 = vmatpush1.bf16.msra.mxu0 %v8724
        %8747 = vmatprep.subr.bf16.mxu0 0
        %8748 = vmatpush1.bf16.msra.mxu0 %v8725
        %8749 = vmatprep.subr.bf16.mxu0 0
        %8750 = vmatpush1.bf16.msra.mxu0 %v8726
        %8751 = vmatprep.subr.bf16.mxu0 0
        %8752 = vmatpush1.bf16.msra.mxu0 %v8727
        %8753 = vmatprep.subr.bf16.mxu0 0
        %8754 = vmatpush1.bf16.msra.mxu0 %v8728
        %8755 = vmatprep.subr.bf16.mxu0 0
        %8756 = vmatpush1.bf16.msra.mxu0 %v8729
        %8757 = vmatprep.subr.bf16.mxu0 0
        %8758 = vmatpush1.bf16.msra.mxu0 %v8730
        %8759 = vmatprep.subr.bf16.mxu0 0
        %8760 = vmatpush1.bf16.msra.mxu0 %v8731
        %8761 = vmatprep.subr.bf16.mxu0 0
        %8762 = vmatpush1.bf16.msra.mxu0 %v8732
        %8763 = vmatprep.subr.bf16.mxu0 0
        %8764 = vmatpush1.bf16.msra.mxu0 0
        %8765 = vmatprep.subr.bf16.mxu0 0
        %8766 = vmatpush1.bf16.msra.mxu0 0
        %8767 = vmatprep.subr.bf16.mxu0 0
        %8768 = vmatpush1.bf16.msra.mxu0 0
        %8769 = vmatprep.subr.bf16.mxu0 0
        %8770 = vmatpush1.bf16.msra.mxu0 0
        %8771 = vmatprep.subr.bf16.mxu0 0
        %8772 = vmatpush1.bf16.msra.mxu0 0
        %8773 = vmatprep.subr.bf16.mxu0 0
        %8774 = vmatpush1.bf16.msra.mxu0 0
        %8775 = vmatprep.subr.bf16.mxu0 0
        %8776 = vmatpush1.bf16.msra.mxu0 0
        %8777 = vmatprep.mubr.bf16.mxu0 %v8743
        %8778 = vmatmul.mubr.bf16.gmra.mrb[0].mxu0 %v8667
        %v8779 = vpop.f32.mrb[0].mxu0
        %v8780 = vadd.f32 0.0, %v8779
        %v8781 = vpop.f32.mrb[0].mxu0
        %v8782 = vpop.f32.mrb[0].mxu0
        %v8783 = vpop.f32.mrb[0].mxu0
        %8784 = vdwg.mxu0
        %v8785 = vadd.f32 %v8654, %v8780
        %v8786 = vld [vmem:[%s8261] ss:$8 sm:$0x3]
        %v8788 = vlaneseq
        %v8789 = vshrl.u32 %v8788, 7
        %v8790 = vsub.s32 0, %v8789
        %v8791 = vrot.slane %v8786, %v8790
        %v8792 = vlaneseq
        %v8793 = vshrl.u32 %v8792, 7
        %v8794 = vsub.s32 1, %v8793
        %v8795 = vrot.slane %v8786, %v8794
        %v8798 = vpack.c.bf16 %v8791, %v8791
        %v8799 = vpack.c.bf16 %v8795, %v8795
        %s8800 = scalar_lea.vmem %s5, 288
        %v8801 = vld [vmem:[%s8800] sm:$0xf]
        %v8802 = vld [vmem:[%s8800 + $0x4] sm:$0xf]
        %v8803 = vld [vmem:[%s8800 + $0x8] sm:$0xf]
        %v8804 = vld [vmem:[%s8800 + $0xc] sm:$0xf]
        %v8805 = vld [vmem:[%s8800 + $0x10] sm:$0xf]
        %v8806 = vld [vmem:[%s8800 + $0x14] sm:$0xf]
        %v8807 = vld [vmem:[%s8800 + $0x18] sm:$0xf]
        %v8808 = vld [vmem:[%s8800 + $0x1c] sm:$0xf]
        %v8809 = vld [vmem:[%s8800 + $0x20] sm:$0xf]
        %v8810 = vld [vmem:[%s8800 + $0x24] sm:$0xf]
        %v8811 = vld [vmem:[%s8800 + $0x28] sm:$0xf]
        %v8812 = vld [vmem:[%s8800 + $0x2c] sm:$0xf]
        %v8813 = vld [vmem:[%s8800 + $0x30] sm:$0xf]
        %v8814 = vld [vmem:[%s8800 + $0x34] sm:$0xf]
        %v8815 = vld [vmem:[%s8800 + $0x38] sm:$0xf]
        %v8816 = vld [vmem:[%s8800 + $0x3c] sm:$0xf]
        %v8817 = vld [vmem:[%s8800 + $0x40] sm:$0xf]
        %v8818 = vld [vmem:[%s8800 + $0x44] sm:$0xf]
        %v8837 = vunpack.c.l.b16 %v8801
        %v8838 = vunpack.c.l.b16 %v8802
        %v8839 = vunpack.c.l.b16 %v8803
        %v8840 = vunpack.c.l.b16 %v8804
        %v8841 = vunpack.c.l.b16 %v8805
        %v8842 = vunpack.c.l.b16 %v8806
        %v8843 = vunpack.c.l.b16 %v8807
        %v8844 = vunpack.c.l.b16 %v8808
        %v8845 = vunpack.c.l.b16 %v8809
        %v8846 = vunpack.c.l.b16 %v8810
        %v8847 = vunpack.c.l.b16 %v8811
        %v8848 = vunpack.c.l.b16 %v8812
        %v8849 = vunpack.c.l.b16 %v8813
        %v8850 = vunpack.c.l.b16 %v8814
        %v8851 = vunpack.c.l.b16 %v8815
        %v8852 = vunpack.c.l.b16 %v8816
        %v8853 = vunpack.c.l.b16 %v8817
        %v8854 = vunpack.c.l.b16 %v8818
        %v8855 = vpack.c.b16 %v8838, %v8837
        %v8856 = vpack.c.b16 %v8840, %v8839
        %v8857 = vpack.c.b16 %v8842, %v8841
        %v8858 = vpack.c.b16 %v8844, %v8843
        %v8859 = vpack.c.b16 %v8846, %v8845
        %v8860 = vpack.c.b16 %v8848, %v8847
        %v8861 = vpack.c.b16 %v8850, %v8849
        %v8862 = vpack.c.b16 %v8852, %v8851
        %v8863 = vpack.c.b16 %v8854, %v8853
        %v8874 = vsel %vm8383, %v8799, 0
        %8876 = vmatprep.subr.bf16.mxu0 0
        %8877 = vmatpush1.bf16.msra.mxu0 %v8855
        %8878 = vmatprep.subr.bf16.mxu0 0
        %8879 = vmatpush1.bf16.msra.mxu0 %v8856
        %8880 = vmatprep.subr.bf16.mxu0 0
        %8881 = vmatpush1.bf16.msra.mxu0 %v8857
        %8882 = vmatprep.subr.bf16.mxu0 0
        %8883 = vmatpush1.bf16.msra.mxu0 %v8858
        %8884 = vmatprep.subr.bf16.mxu0 0
        %8885 = vmatpush1.bf16.msra.mxu0 %v8859
        %8886 = vmatprep.subr.bf16.mxu0 0
        %8887 = vmatpush1.bf16.msra.mxu0 %v8860
        %8888 = vmatprep.subr.bf16.mxu0 0
        %8889 = vmatpush1.bf16.msra.mxu0 %v8861
        %8890 = vmatprep.subr.bf16.mxu0 0
        %8891 = vmatpush1.bf16.msra.mxu0 %v8862
        %8892 = vmatprep.subr.bf16.mxu0 0
        %8893 = vmatpush1.bf16.msra.mxu0 %v8863
        %8894 = vmatprep.subr.bf16.mxu0 0
        %8895 = vmatpush1.bf16.msra.mxu0 0
        %8896 = vmatprep.subr.bf16.mxu0 0
        %8897 = vmatpush1.bf16.msra.mxu0 0
        %8898 = vmatprep.subr.bf16.mxu0 0
        %8899 = vmatpush1.bf16.msra.mxu0 0
        %8900 = vmatprep.subr.bf16.mxu0 0
        %8901 = vmatpush1.bf16.msra.mxu0 0
        %8902 = vmatprep.subr.bf16.mxu0 0
        %8903 = vmatpush1.bf16.msra.mxu0 0
        %8904 = vmatprep.subr.bf16.mxu0 0
        %8905 = vmatpush1.bf16.msra.mxu0 0
        %8906 = vmatprep.subr.bf16.mxu0 0
        %8907 = vmatpush1.bf16.msra.mxu0 0
        %8908 = vmatprep.mubr.bf16.mxu0 %v8874
        %8909 = vmatmul.mubr.bf16.gmra.mrb[0].mxu0 %v8798
        %v8910 = vpop.f32.mrb[0].mxu0
        %v8911 = vadd.f32 0.0, %v8910
        %v8912 = vpop.f32.mrb[0].mxu0
        %v8913 = vpop.f32.mrb[0].mxu0
        %v8914 = vpop.f32.mrb[0].mxu0
        %8915 = vdwg.mxu0
        %v8916 = vadd.f32 %v8785, %v8911
        %v8917 = vld [vmem:[%s6] sm:$0x1]
        %v8918 = vadd.f32 %v8916, %v8917
        %v8919 = vmax.f32 %v8918, 0.0
        %v8920 = vpack.c.bf16 %v8919, %v8919
        %v8921 = vld [vmem:[%s7] sm:$0xf]
        %v8922 = vld [vmem:[%s7 + $0x4] sm:$0xf]
        %v8923 = vld [vmem:[%s7 + $0x8] sm:$0xf]
        %v8924 = vld [vmem:[%s7 + $0xc] sm:$0xf]
        %v8925 = vld [vmem:[%s7 + $0x10] sm:$0xf]
        %v8926 = vld [vmem:[%s7 + $0x14] sm:$0xf]
        %v8927 = vld [vmem:[%s7 + $0x18] sm:$0xf]
        %v8928 = vld [vmem:[%s7 + $0x1c] sm:$0xf]
        %v8929 = vld [vmem:[%s7 + $0x20] sm:$0xf]
        %v8930 = vld [vmem:[%s7 + $0x24] sm:$0xf]
        %v8931 = vld [vmem:[%s7 + $0x28] sm:$0xf]
        %v8932 = vld [vmem:[%s7 + $0x2c] sm:$0xf]
        %v8933 = vld [vmem:[%s7 + $0x30] sm:$0xf]
        %v8934 = vld [vmem:[%s7 + $0x34] sm:$0xf]
        %v8935 = vld [vmem:[%s7 + $0x38] sm:$0xf]
        %v8936 = vld [vmem:[%s8] sm:$0x1]
        %v8952 = vunpack.c.l.b16 %v8921
        %v8953 = vunpack.c.l.b16 %v8922
        %v8954 = vunpack.c.l.b16 %v8923
        %v8955 = vunpack.c.l.b16 %v8924
        %v8956 = vunpack.c.l.b16 %v8925
        %v8957 = vunpack.c.l.b16 %v8926
        %v8958 = vunpack.c.l.b16 %v8927
        %v8959 = vunpack.c.l.b16 %v8928
        %v8960 = vunpack.c.l.b16 %v8929
        %v8961 = vunpack.c.l.b16 %v8930
        %v8962 = vunpack.c.l.b16 %v8931
        %v8963 = vunpack.c.l.b16 %v8932
        %v8964 = vunpack.c.l.b16 %v8933
        %v8965 = vunpack.c.l.b16 %v8934
        %v8966 = vunpack.c.l.b16 %v8935
        %v8967 = vpack.c.b16 %v8953, %v8952
        %v8968 = vpack.c.b16 %v8955, %v8954
        %v8969 = vpack.c.b16 %v8957, %v8956
        %v8970 = vpack.c.b16 %v8959, %v8958
        %v8971 = vpack.c.b16 %v8961, %v8960
        %v8972 = vpack.c.b16 %v8963, %v8962
        %v8973 = vpack.c.b16 %v8965, %v8964
        %v8974 = vpack.c.b16 %v8966, %v8966
        %vm8982 = vcmask 982016
        %v8984 = vsel %vm8982, %v8920, 0
        %vm8986 = vcmask 1043456
        %v8988 = vsel %vm8986, %v8974, 0
        %8990 = vmatprep.subr.bf16.mxu0 0
        %8991 = vmatpush1.bf16.msra.mxu0 %v8967
        %8992 = vmatprep.subr.bf16.mxu0 0
        %8993 = vmatpush1.bf16.msra.mxu0 %v8968
        %8994 = vmatprep.subr.bf16.mxu0 0
        %8995 = vmatpush1.bf16.msra.mxu0 %v8969
        %8996 = vmatprep.subr.bf16.mxu0 0
        %8997 = vmatpush1.bf16.msra.mxu0 %v8970
        %8998 = vmatprep.subr.bf16.mxu0 0
        %8999 = vmatpush1.bf16.msra.mxu0 %v8971
        %9000 = vmatprep.subr.bf16.mxu0 0
        %9001 = vmatpush1.bf16.msra.mxu0 %v8972
        %9002 = vmatprep.subr.bf16.mxu0 0
        %9003 = vmatpush1.bf16.msra.mxu0 %v8973
        %9004 = vmatprep.subr.bf16.mxu0 0
        %9005 = vmatpush1.bf16.msra.mxu0 %v8988
        %9006 = vmatprep.subr.bf16.mxu0 0
        %9007 = vmatpush1.bf16.msra.mxu0 0
        %9008 = vmatprep.subr.bf16.mxu0 0
        %9009 = vmatpush1.bf16.msra.mxu0 0
        %9010 = vmatprep.subr.bf16.mxu0 0
        %9011 = vmatpush1.bf16.msra.mxu0 0
        %9012 = vmatprep.subr.bf16.mxu0 0
        %9013 = vmatpush1.bf16.msra.mxu0 0
        %9014 = vmatprep.subr.bf16.mxu0 0
        %9015 = vmatpush1.bf16.msra.mxu0 0
        %9016 = vmatprep.subr.bf16.mxu0 0
        %9017 = vmatpush1.bf16.msra.mxu0 0
        %9018 = vmatprep.subr.bf16.mxu0 0
        %9019 = vmatpush1.bf16.msra.mxu0 0
        %9020 = vmatprep.subr.bf16.mxu0 0
        %9021 = vmatpush1.bf16.msra.mxu0 0
        %9022 = vmatprep.mubr.bf16.mxu0 0
        %9023 = vmatmul.mubr.bf16.gmra.mrb[0].mxu0 %v8984
        %v9024 = vpop.f32.mrb[0].mxu0
        %v9025 = vadd.f32 %v8936, %v9024
        %v9026 = vpop.f32.mrb[0].mxu0
        %v9027 = vpop.f32.mrb[0].mxu0
        %v9028 = vpop.f32.mrb[0].mxu0
        %9029 = vdwg.mxu0
        %v9030 = vmax.f32 %v9025, 0.0
        %v9031 = vpack.c.bf16 %v9030, %v9030
        %v9032 = vld [vmem:[%s9] sm:$0xf]
        %v9033 = vld [vmem:[%s9 + $0x4] sm:$0xf]
        %v9034 = vld [vmem:[%s9 + $0x8] sm:$0xf]
        %v9035 = vld [vmem:[%s9 + $0xc] sm:$0xf]
        %v9036 = vld [vmem:[%s9 + $0x10] sm:$0xf]
        %v9037 = vld [vmem:[%s9 + $0x14] sm:$0xf]
        %v9038 = vld [vmem:[%s9 + $0x18] sm:$0xf]
        %v9039 = vld [vmem:[%s9 + $0x1c] sm:$0xf]
        %v9040 = vld [vmem:[%s9 + $0x20] sm:$0xf]
        %v9041 = vld [vmem:[%s9 + $0x24] sm:$0xf]
        %v9042 = vld [vmem:[%s9 + $0x28] sm:$0x3]
        %v9043 = vld [vmem:[%s10] sm:$0x1]
        %v9055 = vunpack.c.l.b16 %v9032
        %v9056 = vunpack.c.l.b16 %v9033
        %v9057 = vunpack.c.l.b16 %v9034
        %v9058 = vunpack.c.l.b16 %v9035
        %v9059 = vunpack.c.l.b16 %v9036
        %v9060 = vunpack.c.l.b16 %v9037
        %v9061 = vunpack.c.l.b16 %v9038
        %v9062 = vunpack.c.l.b16 %v9039
        %v9063 = vunpack.c.l.b16 %v9040
        %v9064 = vunpack.c.l.b16 %v9041
        %v9065 = vunpack.c.l.b16 %v9042
        %v9066 = vpack.c.b16 %v9056, %v9055
        %v9067 = vpack.c.b16 %v9058, %v9057
        %v9068 = vpack.c.b16 %v9060, %v9059
        %v9069 = vpack.c.b16 %v9062, %v9061
        %v9070 = vpack.c.b16 %v9064, %v9063
        %v9071 = vpack.c.b16 %v9065, %v9065
        %v9078 = vsel %vm475, %v9031, 0
        %v9081 = vsel %vm482, %v9071, 0
        %9083 = vmatprep.subr.bf16.mxu0 0
        %9084 = vmatpush1.bf16.msra.mxu0 %v9066
        %9085 = vmatprep.subr.bf16.mxu0 0
        %9086 = vmatpush1.bf16.msra.mxu0 %v9067
        %9087 = vmatprep.subr.bf16.mxu0 0
        %9088 = vmatpush1.bf16.msra.mxu0 %v9068
        %9089 = vmatprep.subr.bf16.mxu0 0
        %9090 = vmatpush1.bf16.msra.mxu0 %v9069
        %9091 = vmatprep.subr.bf16.mxu0 0
        %9092 = vmatpush1.bf16.msra.mxu0 %v9070
        %9093 = vmatprep.subr.bf16.mxu0 0
        %9094 = vmatpush1.bf16.msra.mxu0 %v9081
        %9095 = vmatprep.subr.bf16.mxu0 0
        %9096 = vmatpush1.bf16.msra.mxu0 0
        %9097 = vmatprep.subr.bf16.mxu0 0
        %9098 = vmatpush1.bf16.msra.mxu0 0
        %9099 = vmatprep.subr.bf16.mxu0 0
        %9100 = vmatpush1.bf16.msra.mxu0 0
        %9101 = vmatprep.subr.bf16.mxu0 0
        %9102 = vmatpush1.bf16.msra.mxu0 0
        %9103 = vmatprep.subr.bf16.mxu0 0
        %9104 = vmatpush1.bf16.msra.mxu0 0
        %9105 = vmatprep.subr.bf16.mxu0 0
        %9106 = vmatpush1.bf16.msra.mxu0 0
        %9107 = vmatprep.subr.bf16.mxu0 0
        %9108 = vmatpush1.bf16.msra.mxu0 0
        %9109 = vmatprep.subr.bf16.mxu0 0
        %9110 = vmatpush1.bf16.msra.mxu0 0
        %9111 = vmatprep.subr.bf16.mxu0 0
        %9112 = vmatpush1.bf16.msra.mxu0 0
        %9113 = vmatprep.subr.bf16.mxu0 0
        %9114 = vmatpush1.bf16.msra.mxu0 0
        %9115 = vmatprep.mubr.bf16.mxu0 0
        %9116 = vmatmul.mubr.bf16.gmra.mrb[0].mxu0 %v9078
        %v9117 = vpop.f32.mrb[0].mxu0
        %v9118 = vadd.f32 %v9043, %v9117
        %v9119 = vpop.f32.mrb[0].mxu0
        %v9120 = vpop.f32.mrb[0].mxu0
        %v9121 = vpop.f32.mrb[0].mxu0
        %9122 = vdwg.mxu0
        %vm9123 = vcmask 73728
        %9124 = vst.msk [vmem:[%s378] sm:$0x1] %vm9123, %v9118
        %s9125 = sand.u32 %s269, 1
        %s9126 = scalar_lea.sflag [#allocation5], %s9125
        %s9127 = sand.u32 %s269, 1
        %s9128 = scalar_lea.vmem [#allocation4], %s9127
        // Predicated region
        $region65: #{lenet_forward.1} parent=63 // pred_check
          %p9129 = pneg %p279
        $region66: #{lenet_forward.1} parent=63 // pred_check_branch
          %9131 = sbr.rel (%p9129) target = $region68
        $region67: #{lenet_forward.1} parent=63 // pred_region
          %s9133 = ssub.s32 16, 16
          %9134 = vsyncadd %s9126, %s9133
          %s9135 = smul.addr %s25, 16
          %s9136 = scalar_lea.hbm %s11, %s9135
          %s9138 = sshll.u32 %s9128, 4
          %s9139 = int_to_ptr.vmem [resolvable:$true] %s9138
          %9141 = dma.vmem_to_hbm [thread:$0]  %s9139, 16, %s9136, %s9126
        $region68: #{lenet_forward.1} parent=63 // pred_fallthru
          _
      $region64: #{lenet_forward.1} parent=5 // pred_fallthru
        _
      %p9142 = scmp.le.s32.totalorder 2, %s20
      // Predicated region
      $region69: #{lenet_forward.1} parent=5 // pred_check
        %p9143 = pneg %p9142
      $region70: #{lenet_forward.1} parent=5 // pred_check_branch
        %9145 = sbr.rel (%p9143) target = $region72
      $region71: #{lenet_forward.1} parent=5 // pred_region
        %s9146 = ssub.s32 %s20, 2
        // Predicated region
        $region73: #{lenet_forward.1} parent=71 // pred_check
          %p9147 = pneg %p285
        $region74: #{lenet_forward.1} parent=71 // pred_check_branch
          %9149 = sbr.rel (%p9147) target = $region76
        $region75: #{lenet_forward.1} parent=71 // pred_region
          %s9150 = sand.u32 %s270, 1
          %s9151 = scalar_lea.sflag [#allocation5], %s9150
          %s9152 = sand.u32 %s270, 1
          %s9153 = scalar_lea.vmem [#allocation4], %s9152
          %9154 = dma.done %s9151, 16
        $region76: #{lenet_forward.1} parent=71 // pred_fallthru
          _
      $region72: #{lenet_forward.1} parent=5 // pred_fallthru
        _
    $region6: #{lenet_forward.1} parent=1 // loop_footer
      %s24 = sadd.s32 1, %s20
    $region7: #{lenet_forward.1} parent=1 // loop_footer_branch
      %19 = sbr.rel target = $region3
    $region8: #{lenet_forward.1} parent=1 // loop_exit
      _
    %9155 = vsyncpa [#allocation5], 1
    %s9156 = scalar_lea.sflag [#allocation5], 1
    %9157 = vsyncpa %s9156, 1

</llo_original>
